<compile_context>
chip_gen: v6e
topology: v6e:2x2x1
jax: 0.10.0
libtpu: 0.0.40
codegen_flags: <defaults>
</compile_context>

<pallas_src>
import numpy as np
import jax
import jax.numpy as jnp
from jax import lax
from jax.experimental import pallas as pl
from jax.experimental.pallas import tpu as pltpu

OUT_H = 224
OUT_W = 224

_MAX_PLANES_PER_STEP = 32               # hard cap on planes per grid step
_VMEM_BLOCK_BUDGET = 28 * 1024 * 1024   # per-step VMEM budget (v7x headroom)
_VMEM_LIMIT_BYTES = 48 << 20            # scoped-VMEM limit requested from Mosaic


def _bilinear_matrix_np(in_size: int, out_size: int) -> np.ndarray:
    """Interpolation matrix (out_size, in_size) matching PyTorch
    nn.Upsample(mode='bilinear', align_corners=False). Built on host."""
    scale = in_size / out_size
    o = np.arange(out_size, dtype=np.float64)
    src = (o + 0.5) * scale - 0.5
    src = np.maximum(src, 0.0)                       # PyTorch clamps negatives to 0
    idx0 = np.minimum(np.floor(src).astype(np.int64), in_size - 1)
    idx1 = np.minimum(idx0 + 1, in_size - 1)
    lam1 = (src - idx0).astype(np.float32)
    lam0 = (1.0 - lam1).astype(np.float32)
    w = np.zeros((out_size, in_size), dtype=np.float32)
    rows = np.arange(out_size)
    np.add.at(w, (rows, idx0), lam0)
    np.add.at(w, (rows, idx1), lam1)
    return w


def _step_vmem_bytes(b: int, h: int, w: int) -> int:
    """Explicit per-step VMEM budget: double-buffered out + in, scratch, weights."""
    out_b = 2 * b * OUT_H * OUT_W * 4           # double-buffered output block
    in_b = 2 * b * h * w * 4                    # double-buffered input block
    tmp_b = b * h * OUT_W * 4                   # W-interp scratch (single buffer)
    wt_b = 2 * (OUT_H * h + w * OUT_W) * 4      # resident weight blocks
    return out_b + in_b + tmp_b + wt_b


def _pick_planes_per_step(nc: int, h: int, w: int) -> int:
    """Largest divisor of nc (<= cap) that fits the VMEM budget, keeps >= 2
    grid steps (so the pipeline and v7x megacore split work), and prefers an
    even number of steps."""
    best_b, best_key = 1, (-1, -1)
    for b in range(1, min(_MAX_PLANES_PER_STEP, nc) + 1):
        if nc % b:
            continue
        steps = nc // b
        if nc >= 2 and steps < 2:               # keep the software pipeline alive
            continue
        if _step_vmem_bytes(b, h, w) > _VMEM_BLOCK_BUDGET:
            continue
        key = (1 if steps % 2 == 0 else 0, b)   # prefer even steps, then larger blocks
        if key > best_key:
            best_key, best_b = key, b
    return best_b


def _upsample_kernel(wh_ref, wwt_ref, x_ref, o_ref, tmp_ref):
    # wh_ref : (OUT_H, h)        H-interpolation matrix (resident)
    # wwt_ref: (w, OUT_W)        W-interpolation matrix, pre-transposed (resident)
    # x_ref  : (B*h, w)          B flattened planes (h already padded to %8==0)
    # o_ref  : (B, OUT_H, OUT_W) B upsampled planes
    # tmp_ref: (B*h, OUT_W)      VMEM scratch holding the W-interpolated planes
    b_planes = o_ref.shape[0]
    h = wh_ref.shape[1]

    # W-interpolation for all B planes fused into one lane-dense MXU matmul.
    x = x_ref[...].astype(jnp.float32)
    tmp_ref[...] = jnp.dot(x, wwt_ref[...],
                           preferred_element_type=jnp.float32,
                           precision=lax.Precision.HIGHEST)

    wh = wh_ref[...]

    def body(b, carry):
        start = pl.multiple_of(b * h, 8)        # h % 8 == 0 -> slices sublane-aligned
        plane = tmp_ref[pl.ds(start, h), :]     # (h, OUT_W)
        o_ref[b] = jnp.dot(wh, plane,
                           preferred_element_type=jnp.float32,
                           precision=lax.Precision.HIGHEST).astype(o_ref.dtype)
        return carry

    # fori_loop bounds live ranges (important once B is large); fully unroll
    # only short loops to keep code size / vreg pressure in check.
    lax.fori_loop(0, b_planes, body, 0,
                  unroll=True if b_planes <= 8 else 2)


@jax.jit
def pre_transformer_forward(x: jnp.ndarray) -> jnp.ndarray:
    """Bilinear upsample of NCHW input to (N, C, 224, 224), preserving dtype."""
    n, c, h, w = x.shape
    nc = n * c

    # Sublane-align the H axis (zero-pad) so every per-plane slice of the
    # scratch starts on a multiple of 8; matching zero columns are appended to
    # Wh, so results are unchanged.
    h_pad = ((h + 7) // 8) * 8
    if h_pad != h:
        x = jnp.pad(x, ((0, 0), (0, 0), (0, h_pad - h), (0, 0)))

    bpp = _pick_planes_per_step(nc, h_pad, w)
    grid_steps = nc // bpp

    # Keep caller dtype (cast happens inside the kernel -> no extra HBM pass).
    x_flat = x.reshape(nc * h_pad, w)

    wh_np = _bilinear_matrix_np(h, OUT_H)                      # (224, h)
    if h_pad != h:
        wh_np = np.pad(wh_np, ((0, 0), (0, h_pad - h)))        # zero cols for pad rows
    wh = jnp.asarray(wh_np)                                    # (224, h_pad)
    wwt = jnp.asarray(_bilinear_matrix_np(w, OUT_W).T)         # (w, 224)

    itemsize = jnp.dtype(x.dtype).itemsize
    cost = pl.CostEstimate(
        flops=2 * nc * (h_pad * w * OUT_W + OUT_H * h_pad * OUT_W),
        transcendentals=0,
        bytes_accessed=itemsize * nc * (h_pad * w + OUT_H * OUT_W)
                       + 4 * (OUT_H * h_pad + w * OUT_W),
    )

    out_flat = pl.pallas_call(
        _upsample_kernel,
        out_shape=jax.ShapeDtypeStruct((nc, OUT_H, OUT_W), x.dtype),
        grid_spec=pltpu.PrefetchScalarGridSpec(
            num_scalar_prefetch=0,
            grid=(grid_steps,),
            in_specs=[
                pl.BlockSpec((OUT_H, h_pad), lambda i: (0, 0)),     # Wh (resident)
                pl.BlockSpec((w, OUT_W), lambda i: (0, 0)),         # Ww^T (resident)
                pl.BlockSpec((bpp * h_pad, w), lambda i: (i, 0)),   # B input planes
            ],
            out_specs=pl.BlockSpec((bpp, OUT_H, OUT_W), lambda i: (i, 0, 0)),
            scratch_shapes=[pltpu.VMEM((bpp * h_pad, OUT_W), jnp.float32)],
        ),
        compiler_params=pltpu.CompilerParams(
            dimension_semantics=("parallel",),
            vmem_limit_bytes=_VMEM_LIMIT_BYTES,
        ),
        cost_estimate=cost,
    )(wh, wwt, x_flat)

    return out_flat.reshape(n, c, OUT_H, OUT_W)


if __name__ == "__main__":
    key = jax.random.PRNGKey(0)
    # Small NCHW image tensor consistent with the module's forward.
    x = jax.random.normal(key, (2, 4, 16, 16), dtype=jnp.float32)

    y = pre_transformer_forward(x)
    jax.block_until_ready(y)

    assert y.shape == (2, 4, 224, 224), y.shape
    assert y.dtype == x.dtype, y.dtype
    assert bool(jnp.all(jnp.isfinite(y))), "non-finite values in output"
    print("KERNEL_OK")
</pallas_src>

<mosaic_0001>
module attributes {stable_mosaic.version = 11 : i64} {
  func.func @_upsample_kernel(%arg0: i32, %arg1: memref<224x16xf32, #tpu.memory_space<vmem>>, %arg2: memref<16x224xf32, #tpu.memory_space<vmem>>, %arg3: memref<64x16xf32, #tpu.memory_space<vmem>>, %arg4: memref<4x224x224xf32, #tpu.memory_space<vmem>>, %arg5: memref<64x224xf32, #tpu.memory_space<vmem>>) attributes {dimension_semantics = [#tpu.dimension_semantics<parallel>], iteration_bounds = array<i64: 2>, scalar_prefetch = 0 : i64, scratch_operands = 1 : i64, tpu.core_type = #tpu.core_type<tc>, window_params = [{pipeline_mode = #tpu.pipeline_mode<synchronous>, transform_indices = @transform_0, window_bounds = array<i64: 224, 16>}, {pipeline_mode = #tpu.pipeline_mode<synchronous>, transform_indices = @transform_1, window_bounds = array<i64: 16, 224>}, {transform_indices = @transform_2, window_bounds = array<i64: 64, 16>}, {transform_indices = @transform_3, window_bounds = array<i64: 4, 224, 224>}]} {
    %c0 = arith.constant 0 : index
    %c0_0 = arith.constant 0 : index
    %0 = vector.load %arg3[%c0, %c0_0] : memref<64x16xf32, #tpu.memory_space<vmem>>, vector<64x16xf32>
    %c0_1 = arith.constant 0 : index
    %c0_2 = arith.constant 0 : index
    %1 = vector.load %arg2[%c0_1, %c0_2] : memref<16x224xf32, #tpu.memory_space<vmem>>, vector<16x224xf32>
    %cst = arith.constant dense<0.000000e+00> : vector<64x224xf32>
    %2 = tpu.matmul %0, %1, %cst {dimension_numbers = #tpu.dot_dimension_numbers<[1], [0], [0], [1], [0, 0, 1, 1], [], []>, precision = #tpu.contract_precision<fp32>} : vector<64x16xf32>, vector<16x224xf32>, vector<64x224xf32> -> vector<64x224xf32>
    %c0_3 = arith.constant 0 : index
    %c0_4 = arith.constant 0 : index
    %3 = vector.load %arg5[%c0_3, %c0_4] : memref<64x224xf32, #tpu.memory_space<vmem>>, vector<64x224xf32>
    tpu.vector_store %arg5[%c0_3, %c0_4], %2 {strides = array<i32>} : memref<64x224xf32, #tpu.memory_space<vmem>>, vector<64x224xf32>,
    %c0_5 = arith.constant 0 : index
    %c0_6 = arith.constant 0 : index
    %4 = vector.load %arg1[%c0_5, %c0_6] : memref<224x16xf32, #tpu.memory_space<vmem>>, vector<224x16xf32>
    %c0_i32 = arith.constant 0 : i32
    %c16_i32 = arith.constant 16 : i32
    %5 = arith.muli %c0_i32, %c16_i32 : i32
    %6 = tpu.assume_multiple %5, 8 : i32
    %7 = arith.index_cast %6 : i32 to index
    %c0_7 = arith.constant 0 : index
    %8 = vector.load %arg5[%7, %c0_7] : memref<64x224xf32, #tpu.memory_space<vmem>>, vector<16x224xf32>
    %cst_8 = arith.constant dense<0.000000e+00> : vector<224x224xf32>
    %9 = tpu.matmul %4, %8, %cst_8 {dimension_numbers = #tpu.dot_dimension_numbers<[1], [0], [0], [1], [0, 0, 1, 1], [], []>, precision = #tpu.contract_precision<fp32>} : vector<224x16xf32>, vector<16x224xf32>, vector<224x224xf32> -> vector<224x224xf32>
    %10 = arith.index_cast %c0_i32 : i32 to index
    %c0_9 = arith.constant 0 : index
    %c0_10 = arith.constant 0 : index
    %11 = vector.load %arg4[%10, %c0_9, %c0_10] : memref<4x224x224xf32, #tpu.memory_space<vmem>>, vector<1x224x224xf32>
    %12 = vector.shape_cast %11 : vector<1x224x224xf32> to vector<224x224xf32>
    %13 = vector.shape_cast %9 : vector<224x224xf32> to vector<1x224x224xf32>
    tpu.vector_store %arg4[%10, %c0_9, %c0_10], %13 {strides = array<i32>} : memref<4x224x224xf32, #tpu.memory_space<vmem>>, vector<1x224x224xf32>,
    %c1_i32 = arith.constant 1 : i32
    %c16_i32_11 = arith.constant 16 : i32
    %14 = arith.muli %c1_i32, %c16_i32_11 : i32
    %15 = tpu.assume_multiple %14, 8 : i32
    %16 = arith.index_cast %15 : i32 to index
    %c0_12 = arith.constant 0 : index
    %17 = vector.load %arg5[%16, %c0_12] : memref<64x224xf32, #tpu.memory_space<vmem>>, vector<16x224xf32>
    %cst_13 = arith.constant dense<0.000000e+00> : vector<224x224xf32>
    %18 = tpu.matmul %4, %17, %cst_13 {dimension_numbers = #tpu.dot_dimension_numbers<[1], [0], [0], [1], [0, 0, 1, 1], [], []>, precision = #tpu.contract_precision<fp32>} : vector<224x16xf32>, vector<16x224xf32>, vector<224x224xf32> -> vector<224x224xf32>
    %19 = arith.index_cast %c1_i32 : i32 to index
    %c0_14 = arith.constant 0 : index
    %c0_15 = arith.constant 0 : index
    %20 = vector.load %arg4[%19, %c0_14, %c0_15] : memref<4x224x224xf32, #tpu.memory_space<vmem>>, vector<1x224x224xf32>
    %21 = vector.shape_cast %20 : vector<1x224x224xf32> to vector<224x224xf32>
    %22 = vector.shape_cast %18 : vector<224x224xf32> to vector<1x224x224xf32>
    tpu.vector_store %arg4[%19, %c0_14, %c0_15], %22 {strides = array<i32>} : memref<4x224x224xf32, #tpu.memory_space<vmem>>, vector<1x224x224xf32>,
    %c2_i32 = arith.constant 2 : i32
    %c16_i32_16 = arith.constant 16 : i32
    %23 = arith.muli %c2_i32, %c16_i32_16 : i32
    %24 = tpu.assume_multiple %23, 8 : i32
    %25 = arith.index_cast %24 : i32 to index
    %c0_17 = arith.constant 0 : index
    %26 = vector.load %arg5[%25, %c0_17] : memref<64x224xf32, #tpu.memory_space<vmem>>, vector<16x224xf32>
    %cst_18 = arith.constant dense<0.000000e+00> : vector<224x224xf32>
    %27 = tpu.matmul %4, %26, %cst_18 {dimension_numbers = #tpu.dot_dimension_numbers<[1], [0], [0], [1], [0, 0, 1, 1], [], []>, precision = #tpu.contract_precision<fp32>} : vector<224x16xf32>, vector<16x224xf32>, vector<224x224xf32> -> vector<224x224xf32>
    %28 = arith.index_cast %c2_i32 : i32 to index
    %c0_19 = arith.constant 0 : index
    %c0_20 = arith.constant 0 : index
    %29 = vector.load %arg4[%28, %c0_19, %c0_20] : memref<4x224x224xf32, #tpu.memory_space<vmem>>, vector<1x224x224xf32>
    %30 = vector.shape_cast %29 : vector<1x224x224xf32> to vector<224x224xf32>
    %31 = vector.shape_cast %27 : vector<224x224xf32> to vector<1x224x224xf32>
    tpu.vector_store %arg4[%28, %c0_19, %c0_20], %31 {strides = array<i32>} : memref<4x224x224xf32, #tpu.memory_space<vmem>>, vector<1x224x224xf32>,
    %c3_i32 = arith.constant 3 : i32
    %c16_i32_21 = arith.constant 16 : i32
    %32 = arith.muli %c3_i32, %c16_i32_21 : i32
    %33 = tpu.assume_multiple %32, 8 : i32
    %34 = arith.index_cast %33 : i32 to index
    %c0_22 = arith.constant 0 : index
    %35 = vector.load %arg5[%34, %c0_22] : memref<64x224xf32, #tpu.memory_space<vmem>>, vector<16x224xf32>
    %cst_23 = arith.constant dense<0.000000e+00> : vector<224x224xf32>
    %36 = tpu.matmul %4, %35, %cst_23 {dimension_numbers = #tpu.dot_dimension_numbers<[1], [0], [0], [1], [0, 0, 1, 1], [], []>, precision = #tpu.contract_precision<fp32>} : vector<224x16xf32>, vector<16x224xf32>, vector<224x224xf32> -> vector<224x224xf32>
    %37 = arith.index_cast %c3_i32 : i32 to index
    %c0_24 = arith.constant 0 : index
    %c0_25 = arith.constant 0 : index
    %38 = vector.load %arg4[%37, %c0_24, %c0_25] : memref<4x224x224xf32, #tpu.memory_space<vmem>>, vector<1x224x224xf32>
    %39 = vector.shape_cast %38 : vector<1x224x224xf32> to vector<224x224xf32>
    %40 = vector.shape_cast %36 : vector<224x224xf32> to vector<1x224x224xf32>
    tpu.vector_store %arg4[%37, %c0_24, %c0_25], %40 {strides = array<i32>} : memref<4x224x224xf32, #tpu.memory_space<vmem>>, vector<1x224x224xf32>,
    %c4_i32 = arith.constant 4 : i32
    return
  }
  func.func @transform_0(%arg0: i32) -> (i32, i32) {
    %c0_i32 = arith.constant 0 : i32
    %c0_i32_0 = arith.constant 0 : i32
    %c0_i32_1 = arith.constant 0 : i32
    return %c0_i32, %c0_i32_0 : i32, i32
  }
  func.func @transform_1(%arg0: i32) -> (i32, i32) {
    %c0_i32 = arith.constant 0 : i32
    %c0_i32_0 = arith.constant 0 : i32
    %c0_i32_1 = arith.constant 0 : i32
    return %c0_i32, %c0_i32_0 : i32, i32
  }
  func.func @transform_2(%arg0: i32) -> (i32, i32) {
    %c0_i32 = arith.constant 0 : i32
    %c0_i32_0 = arith.constant 0 : i32
    return %arg0, %c0_i32 : i32, i32
  }
  func.func @transform_3(%arg0: i32) -> (i32, i32, i32) {
    %c0_i32 = arith.constant 0 : i32
    %c0_i32_0 = arith.constant 0 : i32
    %c0_i32_1 = arith.constant 0 : i32
    return %arg0, %c0_i32, %c0_i32_0 : i32, i32, i32
  }
}

</mosaic_0001>

<llo_original>
// kernel: pre_transformer_forward.1
$region0: #{pre_transformer_forward.1}
  #allocation0 [shape = 'u32[]', space=smem, size = 0x4, offset = 0x4, fixed_abs, tag = 'smem constant byte address 0x4 - core index']
  #allocation1 [shape = 'u32[144,128]{1,0:T(1,128)}', space=vmem, size = 0x12000, scoped, tag = 'internal scratch']
  #allocation2 [shape = 'f32[64,224]{1,0:T(8,128)}', space=vmem, size = 0x10000, scoped, tag = 'scratch operand']
  %s0 = inlined_call_operand.hbm [shape: f32[224,16], index: 0, kind: input, shape index: {}]
  %s1 = inlined_call_operand.hbm [shape: f32[16,224], index: 1, kind: input, shape index: {}]
  %s2 = inlined_call_operand.hbm [shape: f32[128,16], index: 2, kind: input, shape index: {}]
  %s3 = inlined_call_operand.hbm [shape: f32[8,224,224], index: 3, kind: output, shape index: {}]
  %s4 = sld [smem:[#allocation0]]
  $region57: #{pre_transformer_forward.1} parent=0
    _
  %s6 = ssub.s32 1, %s4
  %s7 = scalar_select 0, %s6, %s4
  $region1: #{pre_transformer_forward.1} parent=0
    #allocation3 [shape = 'u8[114688]{0}', space=vmem, size = 0x1c000, scoped, tag = 'input window, operand 0, single buffered']
    #allocation4 [shape = 's32[2]{0}', space=sflag, size = 0x8, scoped, tag = 'scoped memory for pre_transformer_forward.1']
    #allocation5 [shape = 's32[2]{0}', space=sflag, size = 0x8, scoped, tag = 'scoped memory for pre_transformer_forward.1']
    #allocation6 [shape = 'u8[16384]{0}', space=vmem, size = 0x4000, scoped, tag = 'input window, operand 1, single buffered']
    #allocation7 [shape = 's32[1]{0}', space=sflag, size = 0x4, scoped, tag = 'scoped memory for pre_transformer_forward.1']
    #allocation8 [shape = 'u8[65536]{0}', space=vmem, size = 0x10000, scoped, tag = 'input window, operand 2']
    #allocation9 [shape = 'u8[1835008]{0}', space=vmem, size = 0x1c0000, scoped, tag = 'output window, operand 0']
    %8 = vsyncpa [#allocation4], 0
    %9 = vsyncpa [#allocation7], 0
    %10 = vsyncpa [#allocation5], 0
    %s11 = scalar_lea.sflag [#allocation5], 1
    %12 = vsyncpa %s11, 0
    loop: start=0, step=1, limit=4
    $region2: #{pre_transformer_forward.1} parent=1 // loop_pre_header
      _
    $region3: #{pre_transformer_forward.1} parent=1 // loop_header
      %s14 = sphi 0, %s18
      %p15 = scmp.ge.s32.totalorder %s14, 4
      %s22 = sphi 0, %s22
      %s24 = sphi 0, %s22
      %s25 = sphi 0, %s24
      %s39 = sphi 0, %s25
      %s43 = sphi 0, %s43
      %s45 = sphi 0, %s43
      %s46 = sphi 0, %s45
      %s60 = sphi 0, %s46
      %s66 = sphi 0, %s68
      %s69 = sphi 0, %s66
      %s70 = sphi 0, %s69
      %s86 = sphi 0, %s70
      %s92 = sphi 0, %s94
      %s95 = sphi 0, %s92
      %s96 = sphi 0, %s95
      %s112 = sphi 0, %s96
    $region4: #{pre_transformer_forward.1} parent=1 // loop_header_branch
      %17 = sbr.rel (%p15) target = $region8
    $region5: #{pre_transformer_forward.1} parent=1 // loop_body
      %s19 = ssub.s32 %s14, 1
      %s20 = ssub.s32 %s14, 2
      %s21 = sadd.s32 %s14, 1
      %s23 = sadd.s32 %s22, 1
      %p26 = scmp.eq.s32.totalorder %s14, 1
      %p27 = scmp.ne.s32.totalorder %s22, %s24
      %p28 = scmp.eq.s32.totalorder %s14, 0
      %p29 = por %p27, %p28
      %p30 = scmp.ne.s32.totalorder %s22, %s24
      %p31 = scmp.eq.s32.totalorder %s19, 1
      %p32 = por %p30, %p31
      %p33 = scmp.ne.s32.totalorder %s24, %s25
      %p34 = scmp.eq.s32.totalorder %s19, 0
      %p35 = por %p33, %p34
      %p36 = scmp.ne.s32.totalorder %s24, %s25
      %p37 = scmp.eq.s32.totalorder %s20, 1
      %p38 = por %p36, %p37
      %p40 = scmp.ne.s32.totalorder %s25, %s39
      %p41 = scmp.eq.s32.totalorder %s20, 0
      %p42 = por %p40, %p41
      %s44 = sadd.s32 %s43, 1
      %p47 = scmp.eq.s32.totalorder %s14, 1
      %p48 = scmp.ne.s32.totalorder %s43, %s45
      %p49 = scmp.eq.s32.totalorder %s14, 0
      %p50 = por %p48, %p49
      %p51 = scmp.ne.s32.totalorder %s43, %s45
      %p52 = scmp.eq.s32.totalorder %s19, 1
      %p53 = por %p51, %p52
      %p54 = scmp.ne.s32.totalorder %s45, %s46
      %p55 = scmp.eq.s32.totalorder %s19, 0
      %p56 = por %p54, %p55
      %p57 = scmp.ne.s32.totalorder %s45, %s46
      %p58 = scmp.eq.s32.totalorder %s20, 1
      %p59 = por %p57, %p58
      %p61 = scmp.ne.s32.totalorder %s46, %s60
      %p62 = scmp.eq.s32.totalorder %s20, 0
      %p63 = por %p61, %p62
      %s64 = ssub.s32 %s14, %s21
      %p65 = scmp.eq.s32.totalorder %s64, 0
      %s67 = sadd.s32 %s66, 1
      %s68 = scalar_select %p65, %s66, %s67
      %p71 = pneg %p65
      %p72 = scmp.eq.s32.totalorder %s14, 1
      %p73 = por %p71, %p72
      %p74 = scmp.ne.s32.totalorder %s66, %s69
      %p75 = scmp.eq.s32.totalorder %s14, 0
      %p76 = por %p74, %p75
      %p77 = scmp.ne.s32.totalorder %s66, %s69
      %p78 = scmp.eq.s32.totalorder %s19, 1
      %p79 = por %p77, %p78
      %p80 = scmp.ne.s32.totalorder %s69, %s70
      %p81 = scmp.eq.s32.totalorder %s19, 0
      %p82 = por %p80, %p81
      %p83 = scmp.ne.s32.totalorder %s69, %s70
      %p84 = scmp.eq.s32.totalorder %s20, 1
      %p85 = por %p83, %p84
      %p87 = scmp.ne.s32.totalorder %s70, %s86
      %p88 = scmp.eq.s32.totalorder %s20, 0
      %p89 = por %p87, %p88
      %s90 = ssub.s32 %s14, %s21
      %p91 = scmp.eq.s32.totalorder %s90, 0
      %s93 = sadd.s32 %s92, 1
      %s94 = scalar_select %p91, %s92, %s93
      %p97 = pneg %p91
      %p98 = scmp.eq.s32.totalorder %s14, 1
      %p99 = por %p97, %p98
      %p100 = scmp.ne.s32.totalorder %s92, %s95
      %p101 = scmp.eq.s32.totalorder %s14, 0
      %p102 = por %p100, %p101
      %p103 = scmp.ne.s32.totalorder %s92, %s95
      %p104 = scmp.eq.s32.totalorder %s19, 1
      %p105 = por %p103, %p104
      %p106 = scmp.ne.s32.totalorder %s95, %s96
      %p107 = scmp.eq.s32.totalorder %s19, 0
      %p108 = por %p106, %p107
      %p109 = scmp.ne.s32.totalorder %s95, %s96
      %p110 = scmp.eq.s32.totalorder %s20, 1
      %p111 = por %p109, %p110
      %p113 = scmp.ne.s32.totalorder %s96, %s112
      %p114 = scmp.eq.s32.totalorder %s20, 0
      %p115 = por %p113, %p114
      %p116 = scmp.le.s32.totalorder 1, %s14
      %p117 = scmp.lt.s32.totalorder %s14, 3
      %p118 = pnand %p116, %p117
      %p119 = pneg %p118
      // Predicated region
      $region9: #{pre_transformer_forward.1} parent=5 // pred_check
        _
      $region10: #{pre_transformer_forward.1} parent=5 // pred_check_branch
        %121 = sbr.rel (%p118) target = $region12
      $region11: #{pre_transformer_forward.1} parent=5 // pred_region
        %s122 = ssub.s32 %s14, 1
        // Predicated region
        $region13: #{pre_transformer_forward.1} parent=11 // pred_check
          %p123 = pneg %p35
        $region14: #{pre_transformer_forward.1} parent=11 // pred_check_branch
          %125 = sbr.rel (%p123) target = $region16
        $region15: #{pre_transformer_forward.1} parent=11 // pred_region
          %s127 = ssub.s32 3584, 3584
          %128 = vsyncadd [#allocation4], %s127
          %s129 = sshll.u32 [#allocation3], 4
          %s130 = int_to_ptr.vmem [resolvable:$true] %s129
          %135 = dma.hbm_to_vmem [thread:$0]  %s0, 3584, %s130, [#allocation4], 128, 128, 8
        $region16: #{pre_transformer_forward.1} parent=11 // pred_fallthru
          _
        // Predicated region
        $region17: #{pre_transformer_forward.1} parent=11 // pred_check
          %p136 = pneg %p56
        $region18: #{pre_transformer_forward.1} parent=11 // pred_check_branch
          %138 = sbr.rel (%p136) target = $region20
        $region19: #{pre_transformer_forward.1} parent=11 // pred_region
          %s140 = ssub.s32 512, 512
          %141 = vsyncadd [#allocation7], %s140
          %s142 = sshll.u32 [#allocation6], 4
          %s143 = int_to_ptr.vmem [resolvable:$true] %s142
          %148 = dma.hbm_to_vmem [thread:$0]  %s1, 512, %s143, [#allocation7], 256, 256, 16
        $region20: #{pre_transformer_forward.1} parent=11 // pred_fallthru
          _
      $region12: #{pre_transformer_forward.1} parent=5 // pred_fallthru
        _
      %p149 = scmp.lt.s32.totalorder %s14, 2
      // Predicated region
      $region21: #{pre_transformer_forward.1} parent=5 // pred_check
        %p150 = pneg %p149
      $region22: #{pre_transformer_forward.1} parent=5 // pred_check_branch
        %152 = sbr.rel (%p150) target = $region24
      $region23: #{pre_transformer_forward.1} parent=5 // pred_region
        // Predicated region
        $region25: #{pre_transformer_forward.1} parent=23 // pred_check
          %p153 = pneg %p76
        $region26: #{pre_transformer_forward.1} parent=23 // pred_check_branch
          %155 = sbr.rel (%p153) target = $region28
        $region27: #{pre_transformer_forward.1} parent=23 // pred_region
          %s156 = sand.u32 %s14, 1
          %s157 = scalar_lea.sflag [#allocation4], %s156
          %s158 = sand.u32 %s66, 1
          %s159 = smul.addr %s158, 64
          %s160 = scalar_lea.vmem [#allocation8], %s159
          %s161 = smul.u32 8, %s14
          %s163 = ssub.s32 1024, 1024
          %164 = vsyncadd %s157, %s163
          %s165 = smul.addr %s161, 128
          %s166 = scalar_lea.hbm %s2, %s165
          %s167 = sshll.u32 %s160, 4
          %s168 = int_to_ptr.vmem [resolvable:$true] %s167
          %173 = dma.hbm_to_vmem [thread:$0]  %s166, 1024, %s168, %s157, 128, 128, 8
        $region28: #{pre_transformer_forward.1} parent=23 // pred_fallthru
          _
      $region24: #{pre_transformer_forward.1} parent=5 // pred_fallthru
        _
      %p174 = scmp.le.s32.totalorder 1, %s14
      %p175 = scmp.lt.s32.totalorder %s14, 3
      %p176 = pnand %p174, %p175
      %p177 = pneg %p176
      // Predicated region
      $region29: #{pre_transformer_forward.1} parent=5 // pred_check
        _
      $region30: #{pre_transformer_forward.1} parent=5 // pred_check_branch
        %179 = sbr.rel (%p176) target = $region32
      $region31: #{pre_transformer_forward.1} parent=5 // pred_region
        %s180 = ssub.s32 %s14, 1
        // Predicated region
        $region33: #{pre_transformer_forward.1} parent=31 // pred_check
          %p181 = pneg %p35
        $region34: #{pre_transformer_forward.1} parent=31 // pred_check_branch
          %183 = sbr.rel (%p181) target = $region36
        $region35: #{pre_transformer_forward.1} parent=31 // pred_region
          %184 = dma.done [#allocation4], 3584
        $region36: #{pre_transformer_forward.1} parent=31 // pred_fallthru
          _
        // Predicated region
        $region37: #{pre_transformer_forward.1} parent=31 // pred_check
          %p185 = pneg %p56
        $region38: #{pre_transformer_forward.1} parent=31 // pred_check_branch
          %187 = sbr.rel (%p185) target = $region40
        $region39: #{pre_transformer_forward.1} parent=31 // pred_region
          %188 = dma.done [#allocation7], 512
        $region40: #{pre_transformer_forward.1} parent=31 // pred_fallthru
          _
        %s189 = sand.u32 %s19, 1
        %s190 = scalar_lea.sflag [#allocation4], %s189
        %s191 = sand.u32 %s69, 1
        %s192 = smul.addr %s191, 64
        %s193 = scalar_lea.vmem [#allocation8], %s192
        // Predicated region
        $region41: #{pre_transformer_forward.1} parent=31 // pred_check
          %p194 = pneg %p82
        $region42: #{pre_transformer_forward.1} parent=31 // pred_check_branch
          %196 = sbr.rel (%p194) target = $region44
        $region43: #{pre_transformer_forward.1} parent=31 // pred_region
          %197 = dma.done %s190, 1024
        $region44: #{pre_transformer_forward.1} parent=31 // pred_fallthru
          _
        %p198 = pneg %p35
        %p199 = pneg %p32
        %p200 = pneg %p56
        %p201 = pneg %p53
        %s202 = sand.u32 %s19, 1
        %s203 = scalar_lea.sflag [#allocation4], %s202
        %s204 = sand.u32 %s69, 1
        %s205 = smul.addr %s204, 64
        %s206 = scalar_lea.vmem [#allocation8], %s205
        %p207 = pneg %p82
        %p208 = pneg %p79
        %p209 = pneg %p108
        %p210 = pneg %p105
        %s211 = sand.u32 %s95, 1
        %s212 = scalar_lea.sflag [#allocation5], %s211
        %s213 = sand.u32 %s95, 1
        %s214 = smul.addr %s213, 1792
        %s215 = scalar_lea.vmem [#allocation9], %s214
        %s216 = smul.u32 8, %s19
        %s217 = smul.u32 4, %s19
        %v218 = vld [vmem:[%s193] sm:$0xff]
        %v219 = vld [vmem:[%s193 + $0x8] sm:$0xff]
        %v220 = vld [vmem:[%s193 + $0x10] sm:$0xff]
        %v221 = vld [vmem:[%s193 + $0x18] sm:$0xff]
        %v222 = vld [vmem:[%s193 + $0x20] sm:$0xff]
        %v223 = vld [vmem:[%s193 + $0x28] sm:$0xff]
        %v224 = vld [vmem:[%s193 + $0x30] sm:$0xff]
        %v225 = vld [vmem:[%s193 + $0x38] sm:$0xff]
        %v226 = vld [vmem:[#allocation6] sm:$0xff]
        %v227 = vld [vmem:[#allocation6 + $0x8] sm:$0xff]
        %v228 = vld [vmem:[#allocation6 + $0x10] sm:$0xff]
        %v229 = vld [vmem:[#allocation6 + $0x18] sm:$0xff]
        %vm230 = vcmask 130048
        %v232 = vsel %vm230, %v218, 0
        %v235 = vsel %vm230, %v219, 0
        %v238 = vsel %vm230, %v220, 0
        %v241 = vsel %vm230, %v221, 0
        %v244 = vsel %vm230, %v222, 0
        %v247 = vsel %vm230, %v223, 0
        %v250 = vsel %vm230, %v224, 0
        %v253 = vsel %vm230, %v225, 0
        %255 = vmatprep.subr.mxu0 0.0
        %256 = vmatpush1.msra.mxu0 0.0
        %257 = vmatprep.subr.mxu0 0.0
        %258 = vmatpush1.msra.mxu0 0.0
        %259 = vmatprep.subr.mxu0 0.0
        %260 = vmatpush1.msra.mxu0 0.0
        %261 = vmatprep.subr.mxu0 0.0
        %262 = vmatpush1.msra.mxu0 0.0
        %263 = vmatprep.subr.mxu0 0.0
        %264 = vmatpush1.msra.mxu0 0.0
        %265 = vmatprep.subr.mxu0 0.0
        %266 = vmatpush1.msra.mxu0 0.0
        %267 = vmatprep.subr.mxu0 0.0
        %268 = vmatpush1.msra.mxu0 0.0
        %269 = vmatprep.subr.mxu0 0.0
        %270 = vmatpush1.msra.mxu0 0.0
        %271 = vmatprep.subr.mxu0 0.0
        %272 = vmatpush1.msra.mxu0 0.0
        %273 = vmatprep.subr.mxu0 0.0
        %274 = vmatpush1.msra.mxu0 0.0
        %275 = vmatprep.subr.mxu0 0.0
        %276 = vmatpush1.msra.mxu0 0.0
        %277 = vmatprep.subr.mxu0 0.0
        %278 = vmatpush1.msra.mxu0 0.0
        %279 = vmatprep.subr.mxu0 0.0
        %280 = vmatpush1.msra.mxu0 0.0
        %281 = vmatprep.subr.mxu0 0.0
        %282 = vmatpush1.msra.mxu0 0.0
        %v283 = vand.u32 %v229, 4294901760
        %284 = vmatprep.subr.mxu0 %v283
        %v285 = vand.u32 %v228, 4294901760
        %286 = vmatpush1.msra.mxu0 %v285
        %v287 = vand.u32 %v227, 4294901760
        %288 = vmatprep.subr.mxu0 %v287
        %v289 = vand.u32 %v226, 4294901760
        %290 = vmatpush1.msra.mxu0 %v289
        %291 = vmatprep.subr.mxu0 0.0
        %292 = vmatpush2.msra.mxu0 0.0
        %293 = vmatprep.subr.mxu0 0.0
        %294 = vmatpush2.msra.mxu0 0.0
        %295 = vmatprep.subr.mxu0 0.0
        %296 = vmatpush2.msra.mxu0 0.0
        %297 = vmatprep.subr.mxu0 0.0
        %298 = vmatpush2.msra.mxu0 0.0
        %299 = vmatprep.subr.mxu0 0.0
        %300 = vmatpush2.msra.mxu0 0.0
        %301 = vmatprep.subr.mxu0 0.0
        %302 = vmatpush2.msra.mxu0 0.0
        %303 = vmatprep.subr.mxu0 0.0
        %304 = vmatpush2.msra.mxu0 0.0
        %305 = vmatprep.subr.mxu0 0.0
        %306 = vmatpush2.msra.mxu0 0.0
        %307 = vmatprep.subr.mxu0 0.0
        %308 = vmatpush2.msra.mxu0 0.0
        %309 = vmatprep.subr.mxu0 0.0
        %310 = vmatpush2.msra.mxu0 0.0
        %311 = vmatprep.subr.mxu0 0.0
        %312 = vmatpush2.msra.mxu0 0.0
        %313 = vmatprep.subr.mxu0 0.0
        %314 = vmatpush2.msra.mxu0 0.0
        %315 = vmatprep.subr.mxu0 0.0
        %316 = vmatpush2.msra.mxu0 0.0
        %317 = vmatprep.subr.mxu0 0.0
        %318 = vmatpush2.msra.mxu0 0.0
        %319 = vmatprep.subr.mxu0 0.0
        %320 = vmatpush2.msra.mxu0 0.0
        %321 = vmatprep.subr.mxu0 0.0
        %322 = vmatpush2.msra.mxu0 0.0
        %323 = vmatprep.mubr.f32.mxu0 0.0
        %v324 = vand.u32 %v232, 4294901760
        %v325 = vsub.f32 %v232, %v324
        %v326 = vand.u32 %v325, 4294901760
        %v327 = vsub.f32 %v325, %v326
        %v328 = vand.u32 %v327, 4294901760
        %329 = vmatmul.mubr.f32.gmra.mxu0 %v328
        %v330 = vpop.f32.mrf.mxu0
        %v331 = vadd.f32 0.0, %v330
        %v332 = vpop.f32.mrf.mxu0
        %v333 = vadd.f32 0.0, %v332
        %334 = vmatprep.mubr.f32.mxu0 0.0
        %v335 = vand.u32 %v235, 4294901760
        %v336 = vsub.f32 %v235, %v335
        %v337 = vand.u32 %v336, 4294901760
        %v338 = vsub.f32 %v336, %v337
        %v339 = vand.u32 %v338, 4294901760
        %340 = vmatmul.mubr.f32.gmra.mxu0 %v339
        %v341 = vpop.f32.mrf.mxu0
        %v342 = vadd.f32 0.0, %v341
        %v343 = vpop.f32.mrf.mxu0
        %v344 = vadd.f32 0.0, %v343
        %345 = vmatprep.mubr.f32.mxu0 0.0
        %v346 = vand.u32 %v238, 4294901760
        %v347 = vsub.f32 %v238, %v346
        %v348 = vand.u32 %v347, 4294901760
        %v349 = vsub.f32 %v347, %v348
        %v350 = vand.u32 %v349, 4294901760
        %351 = vmatmul.mubr.f32.gmra.mxu0 %v350
        %v352 = vpop.f32.mrf.mxu0
        %v353 = vadd.f32 0.0, %v352
        %v354 = vpop.f32.mrf.mxu0
        %v355 = vadd.f32 0.0, %v354
        %356 = vmatprep.mubr.f32.mxu0 0.0
        %v357 = vand.u32 %v241, 4294901760
        %v358 = vsub.f32 %v241, %v357
        %v359 = vand.u32 %v358, 4294901760
        %v360 = vsub.f32 %v358, %v359
        %v361 = vand.u32 %v360, 4294901760
        %362 = vmatmul.mubr.f32.gmra.mxu0 %v361
        %v363 = vpop.f32.mrf.mxu0
        %v364 = vadd.f32 0.0, %v363
        %v365 = vpop.f32.mrf.mxu0
        %v366 = vadd.f32 0.0, %v365
        %367 = vmatprep.mubr.f32.mxu0 0.0
        %v368 = vand.u32 %v244, 4294901760
        %v369 = vsub.f32 %v244, %v368
        %v370 = vand.u32 %v369, 4294901760
        %v371 = vsub.f32 %v369, %v370
        %v372 = vand.u32 %v371, 4294901760
        %373 = vmatmul.mubr.f32.gmra.mxu0 %v372
        %v374 = vpop.f32.mrf.mxu0
        %v375 = vadd.f32 0.0, %v374
        %v376 = vpop.f32.mrf.mxu0
        %v377 = vadd.f32 0.0, %v376
        %378 = vmatprep.mubr.f32.mxu0 0.0
        %v379 = vand.u32 %v247, 4294901760
        %v380 = vsub.f32 %v247, %v379
        %v381 = vand.u32 %v380, 4294901760
        %v382 = vsub.f32 %v380, %v381
        %v383 = vand.u32 %v382, 4294901760
        %384 = vmatmul.mubr.f32.gmra.mxu0 %v383
        %v385 = vpop.f32.mrf.mxu0
        %v386 = vadd.f32 0.0, %v385
        %v387 = vpop.f32.mrf.mxu0
        %v388 = vadd.f32 0.0, %v387
        %389 = vmatprep.mubr.f32.mxu0 0.0
        %v390 = vand.u32 %v250, 4294901760
        %v391 = vsub.f32 %v250, %v390
        %v392 = vand.u32 %v391, 4294901760
        %v393 = vsub.f32 %v391, %v392
        %v394 = vand.u32 %v393, 4294901760
        %395 = vmatmul.mubr.f32.gmra.mxu0 %v394
        %v396 = vpop.f32.mrf.mxu0
        %v397 = vadd.f32 0.0, %v396
        %v398 = vpop.f32.mrf.mxu0
        %v399 = vadd.f32 0.0, %v398
        %400 = vmatprep.mubr.f32.mxu0 0.0
        %v401 = vand.u32 %v253, 4294901760
        %v402 = vsub.f32 %v253, %v401
        %v403 = vand.u32 %v402, 4294901760
        %v404 = vsub.f32 %v402, %v403
        %v405 = vand.u32 %v404, 4294901760
        %406 = vmatmul.mubr.f32.gmra.mxu0 %v405
        %v407 = vpop.f32.mrf.mxu0
        %v408 = vadd.f32 0.0, %v407
        %v409 = vpop.f32.mrf.mxu0
        %v410 = vadd.f32 0.0, %v409
        %411 = vdwg.mxu0
        %412 = vmatprep.subr.mxu0 0.0
        %413 = vmatpush1.msra.mxu0 0.0
        %414 = vmatprep.subr.mxu0 0.0
        %415 = vmatpush1.msra.mxu0 0.0
        %416 = vmatprep.subr.mxu0 0.0
        %417 = vmatpush1.msra.mxu0 0.0
        %418 = vmatprep.subr.mxu0 0.0
        %419 = vmatpush1.msra.mxu0 0.0
        %420 = vmatprep.subr.mxu0 0.0
        %421 = vmatpush1.msra.mxu0 0.0
        %422 = vmatprep.subr.mxu0 0.0
        %423 = vmatpush1.msra.mxu0 0.0
        %424 = vmatprep.subr.mxu0 0.0
        %425 = vmatpush1.msra.mxu0 0.0
        %426 = vmatprep.subr.mxu0 0.0
        %427 = vmatpush1.msra.mxu0 0.0
        %428 = vmatprep.subr.mxu0 0.0
        %429 = vmatpush1.msra.mxu0 0.0
        %430 = vmatprep.subr.mxu0 0.0
        %431 = vmatpush1.msra.mxu0 0.0
        %432 = vmatprep.subr.mxu0 0.0
        %433 = vmatpush1.msra.mxu0 0.0
        %434 = vmatprep.subr.mxu0 0.0
        %435 = vmatpush1.msra.mxu0 0.0
        %436 = vmatprep.subr.mxu0 0.0
        %437 = vmatpush1.msra.mxu0 0.0
        %438 = vmatprep.subr.mxu0 0.0
        %439 = vmatpush1.msra.mxu0 0.0
        %v440 = vand.u32 %v229, 4294901760
        %v441 = vsub.f32 %v229, %v440
        %v442 = vand.u32 %v441, 4294901760
        %v443 = vsub.f32 %v441, %v442
        %v444 = vand.u32 %v443, 4294901760
        %445 = vmatprep.subr.mxu0 %v444
        %v446 = vand.u32 %v228, 4294901760
        %v447 = vsub.f32 %v228, %v446
        %v448 = vand.u32 %v447, 4294901760
        %v449 = vsub.f32 %v447, %v448
        %v450 = vand.u32 %v449, 4294901760
        %451 = vmatpush1.msra.mxu0 %v450
        %v452 = vand.u32 %v227, 4294901760
        %v453 = vsub.f32 %v227, %v452
        %v454 = vand.u32 %v453, 4294901760
        %v455 = vsub.f32 %v453, %v454
        %v456 = vand.u32 %v455, 4294901760
        %457 = vmatprep.subr.mxu0 %v456
        %v458 = vand.u32 %v226, 4294901760
        %v459 = vsub.f32 %v226, %v458
        %v460 = vand.u32 %v459, 4294901760
        %v461 = vsub.f32 %v459, %v460
        %v462 = vand.u32 %v461, 4294901760
        %463 = vmatpush1.msra.mxu0 %v462
        %464 = vmatprep.subr.mxu0 0.0
        %465 = vmatpush2.msra.mxu0 0.0
        %466 = vmatprep.subr.mxu0 0.0
        %467 = vmatpush2.msra.mxu0 0.0
        %468 = vmatprep.subr.mxu0 0.0
        %469 = vmatpush2.msra.mxu0 0.0
        %470 = vmatprep.subr.mxu0 0.0
        %471 = vmatpush2.msra.mxu0 0.0
        %472 = vmatprep.subr.mxu0 0.0
        %473 = vmatpush2.msra.mxu0 0.0
        %474 = vmatprep.subr.mxu0 0.0
        %475 = vmatpush2.msra.mxu0 0.0
        %476 = vmatprep.subr.mxu0 0.0
        %477 = vmatpush2.msra.mxu0 0.0
        %478 = vmatprep.subr.mxu0 0.0
        %479 = vmatpush2.msra.mxu0 0.0
        %480 = vmatprep.subr.mxu0 0.0
        %481 = vmatpush2.msra.mxu0 0.0
        %482 = vmatprep.subr.mxu0 0.0
        %483 = vmatpush2.msra.mxu0 0.0
        %484 = vmatprep.subr.mxu0 0.0
        %485 = vmatpush2.msra.mxu0 0.0
        %486 = vmatprep.subr.mxu0 0.0
        %487 = vmatpush2.msra.mxu0 0.0
        %488 = vmatprep.subr.mxu0 0.0
        %489 = vmatpush2.msra.mxu0 0.0
        %490 = vmatprep.subr.mxu0 0.0
        %491 = vmatpush2.msra.mxu0 0.0
        %492 = vmatprep.subr.mxu0 0.0
        %493 = vmatpush2.msra.mxu0 0.0
        %494 = vmatprep.subr.mxu0 0.0
        %495 = vmatpush2.msra.mxu0 0.0
        %496 = vmatprep.mubr.f32.mxu0 0.0
        %v497 = vand.u32 %v232, 4294901760
        %498 = vmatmul.mubr.f32.gmra.mxu0 %v497
        %v499 = vpop.f32.mrf.mxu0
        %v500 = vadd.f32 %v331, %v499
        %v501 = vpop.f32.mrf.mxu0
        %v502 = vadd.f32 %v333, %v501
        %503 = vmatprep.mubr.f32.mxu0 0.0
        %v504 = vand.u32 %v235, 4294901760
        %505 = vmatmul.mubr.f32.gmra.mxu0 %v504
        %v506 = vpop.f32.mrf.mxu0
        %v507 = vadd.f32 %v342, %v506
        %v508 = vpop.f32.mrf.mxu0
        %v509 = vadd.f32 %v344, %v508
        %510 = vmatprep.mubr.f32.mxu0 0.0
        %v511 = vand.u32 %v238, 4294901760
        %512 = vmatmul.mubr.f32.gmra.mxu0 %v511
        %v513 = vpop.f32.mrf.mxu0
        %v514 = vadd.f32 %v353, %v513
        %v515 = vpop.f32.mrf.mxu0
        %v516 = vadd.f32 %v355, %v515
        %517 = vmatprep.mubr.f32.mxu0 0.0
        %v518 = vand.u32 %v241, 4294901760
        %519 = vmatmul.mubr.f32.gmra.mxu0 %v518
        %v520 = vpop.f32.mrf.mxu0
        %v521 = vadd.f32 %v364, %v520
        %v522 = vpop.f32.mrf.mxu0
        %v523 = vadd.f32 %v366, %v522
        %524 = vmatprep.mubr.f32.mxu0 0.0
        %v525 = vand.u32 %v244, 4294901760
        %526 = vmatmul.mubr.f32.gmra.mxu0 %v525
        %v527 = vpop.f32.mrf.mxu0
        %v528 = vadd.f32 %v375, %v527
        %v529 = vpop.f32.mrf.mxu0
        %v530 = vadd.f32 %v377, %v529
        %531 = vmatprep.mubr.f32.mxu0 0.0
        %v532 = vand.u32 %v247, 4294901760
        %533 = vmatmul.mubr.f32.gmra.mxu0 %v532
        %v534 = vpop.f32.mrf.mxu0
        %v535 = vadd.f32 %v386, %v534
        %v536 = vpop.f32.mrf.mxu0
        %v537 = vadd.f32 %v388, %v536
        %538 = vmatprep.mubr.f32.mxu0 0.0
        %v539 = vand.u32 %v250, 4294901760
        %540 = vmatmul.mubr.f32.gmra.mxu0 %v539
        %v541 = vpop.f32.mrf.mxu0
        %v542 = vadd.f32 %v397, %v541
        %v543 = vpop.f32.mrf.mxu0
        %v544 = vadd.f32 %v399, %v543
        %545 = vmatprep.mubr.f32.mxu0 0.0
        %v546 = vand.u32 %v253, 4294901760
        %547 = vmatmul.mubr.f32.gmra.mxu0 %v546
        %v548 = vpop.f32.mrf.mxu0
        %v549 = vadd.f32 %v408, %v548
        %v550 = vpop.f32.mrf.mxu0
        %v551 = vadd.f32 %v410, %v550
        %552 = vdwg.mxu0
        %553 = vmatprep.subr.mxu0 0.0
        %554 = vmatpush1.msra.mxu0 0.0
        %555 = vmatprep.subr.mxu0 0.0
        %556 = vmatpush1.msra.mxu0 0.0
        %557 = vmatprep.subr.mxu0 0.0
        %558 = vmatpush1.msra.mxu0 0.0
        %559 = vmatprep.subr.mxu0 0.0
        %560 = vmatpush1.msra.mxu0 0.0
        %561 = vmatprep.subr.mxu0 0.0
        %562 = vmatpush1.msra.mxu0 0.0
        %563 = vmatprep.subr.mxu0 0.0
        %564 = vmatpush1.msra.mxu0 0.0
        %565 = vmatprep.subr.mxu0 0.0
        %566 = vmatpush1.msra.mxu0 0.0
        %567 = vmatprep.subr.mxu0 0.0
        %568 = vmatpush1.msra.mxu0 0.0
        %569 = vmatprep.subr.mxu0 0.0
        %570 = vmatpush1.msra.mxu0 0.0
        %571 = vmatprep.subr.mxu0 0.0
        %572 = vmatpush1.msra.mxu0 0.0
        %573 = vmatprep.subr.mxu0 0.0
        %574 = vmatpush1.msra.mxu0 0.0
        %575 = vmatprep.subr.mxu0 0.0
        %576 = vmatpush1.msra.mxu0 0.0
        %577 = vmatprep.subr.mxu0 0.0
        %578 = vmatpush1.msra.mxu0 0.0
        %579 = vmatprep.subr.mxu0 0.0
        %580 = vmatpush1.msra.mxu0 0.0
        %v581 = vand.u32 %v229, 4294901760
        %v582 = vsub.f32 %v229, %v581
        %583 = vmatprep.subr.mxu0 %v582
        %v584 = vand.u32 %v228, 4294901760
        %v585 = vsub.f32 %v228, %v584
        %586 = vmatpush1.msra.mxu0 %v585
        %v587 = vand.u32 %v227, 4294901760
        %v588 = vsub.f32 %v227, %v587
        %589 = vmatprep.subr.mxu0 %v588
        %v590 = vand.u32 %v226, 4294901760
        %v591 = vsub.f32 %v226, %v590
        %592 = vmatpush1.msra.mxu0 %v591
        %593 = vmatprep.subr.mxu0 0.0
        %594 = vmatpush2.msra.mxu0 0.0
        %595 = vmatprep.subr.mxu0 0.0
        %596 = vmatpush2.msra.mxu0 0.0
        %597 = vmatprep.subr.mxu0 0.0
        %598 = vmatpush2.msra.mxu0 0.0
        %599 = vmatprep.subr.mxu0 0.0
        %600 = vmatpush2.msra.mxu0 0.0
        %601 = vmatprep.subr.mxu0 0.0
        %602 = vmatpush2.msra.mxu0 0.0
        %603 = vmatprep.subr.mxu0 0.0
        %604 = vmatpush2.msra.mxu0 0.0
        %605 = vmatprep.subr.mxu0 0.0
        %606 = vmatpush2.msra.mxu0 0.0
        %607 = vmatprep.subr.mxu0 0.0
        %608 = vmatpush2.msra.mxu0 0.0
        %609 = vmatprep.subr.mxu0 0.0
        %610 = vmatpush2.msra.mxu0 0.0
        %611 = vmatprep.subr.mxu0 0.0
        %612 = vmatpush2.msra.mxu0 0.0
        %613 = vmatprep.subr.mxu0 0.0
        %614 = vmatpush2.msra.mxu0 0.0
        %615 = vmatprep.subr.mxu0 0.0
        %616 = vmatpush2.msra.mxu0 0.0
        %617 = vmatprep.subr.mxu0 0.0
        %618 = vmatpush2.msra.mxu0 0.0
        %619 = vmatprep.subr.mxu0 0.0
        %620 = vmatpush2.msra.mxu0 0.0
        %621 = vmatprep.subr.mxu0 0.0
        %622 = vmatpush2.msra.mxu0 0.0
        %623 = vmatprep.subr.mxu0 0.0
        %624 = vmatpush2.msra.mxu0 0.0
        %625 = vmatprep.mubr.f32.mxu0 0.0
        %v626 = vand.u32 %v232, 4294901760
        %v627 = vsub.f32 %v232, %v626
        %628 = vmatmul.mubr.f32.gmra.mxu0 %v627
        %v629 = vpop.f32.mrf.mxu0
        %v630 = vadd.f32 %v500, %v629
        %v631 = vpop.f32.mrf.mxu0
        %v632 = vadd.f32 %v502, %v631
        %633 = vmatprep.mubr.f32.mxu0 0.0
        %v634 = vand.u32 %v235, 4294901760
        %v635 = vsub.f32 %v235, %v634
        %636 = vmatmul.mubr.f32.gmra.mxu0 %v635
        %v637 = vpop.f32.mrf.mxu0
        %v638 = vadd.f32 %v507, %v637
        %v639 = vpop.f32.mrf.mxu0
        %v640 = vadd.f32 %v509, %v639
        %641 = vmatprep.mubr.f32.mxu0 0.0
        %v642 = vand.u32 %v238, 4294901760
        %v643 = vsub.f32 %v238, %v642
        %644 = vmatmul.mubr.f32.gmra.mxu0 %v643
        %v645 = vpop.f32.mrf.mxu0
        %v646 = vadd.f32 %v514, %v645
        %v647 = vpop.f32.mrf.mxu0
        %v648 = vadd.f32 %v516, %v647
        %649 = vmatprep.mubr.f32.mxu0 0.0
        %v650 = vand.u32 %v241, 4294901760
        %v651 = vsub.f32 %v241, %v650
        %652 = vmatmul.mubr.f32.gmra.mxu0 %v651
        %v653 = vpop.f32.mrf.mxu0
        %v654 = vadd.f32 %v521, %v653
        %v655 = vpop.f32.mrf.mxu0
        %v656 = vadd.f32 %v523, %v655
        %657 = vmatprep.mubr.f32.mxu0 0.0
        %v658 = vand.u32 %v244, 4294901760
        %v659 = vsub.f32 %v244, %v658
        %660 = vmatmul.mubr.f32.gmra.mxu0 %v659
        %v661 = vpop.f32.mrf.mxu0
        %v662 = vadd.f32 %v528, %v661
        %v663 = vpop.f32.mrf.mxu0
        %v664 = vadd.f32 %v530, %v663
        %665 = vmatprep.mubr.f32.mxu0 0.0
        %v666 = vand.u32 %v247, 4294901760
        %v667 = vsub.f32 %v247, %v666
        %668 = vmatmul.mubr.f32.gmra.mxu0 %v667
        %v669 = vpop.f32.mrf.mxu0
        %v670 = vadd.f32 %v535, %v669
        %v671 = vpop.f32.mrf.mxu0
        %v672 = vadd.f32 %v537, %v671
        %673 = vmatprep.mubr.f32.mxu0 0.0
        %v674 = vand.u32 %v250, 4294901760
        %v675 = vsub.f32 %v250, %v674
        %676 = vmatmul.mubr.f32.gmra.mxu0 %v675
        %v677 = vpop.f32.mrf.mxu0
        %v678 = vadd.f32 %v542, %v677
        %v679 = vpop.f32.mrf.mxu0
        %v680 = vadd.f32 %v544, %v679
        %681 = vmatprep.mubr.f32.mxu0 0.0
        %v682 = vand.u32 %v253, 4294901760
        %v683 = vsub.f32 %v253, %v682
        %684 = vmatmul.mubr.f32.gmra.mxu0 %v683
        %v685 = vpop.f32.mrf.mxu0
        %v686 = vadd.f32 %v549, %v685
        %v687 = vpop.f32.mrf.mxu0
        %v688 = vadd.f32 %v551, %v687
        %689 = vdwg.mxu0
        %690 = vmatprep.subr.mxu0 0.0
        %691 = vmatpush1.msra.mxu0 0.0
        %692 = vmatprep.subr.mxu0 0.0
        %693 = vmatpush1.msra.mxu0 0.0
        %694 = vmatprep.subr.mxu0 0.0
        %695 = vmatpush1.msra.mxu0 0.0
        %696 = vmatprep.subr.mxu0 0.0
        %697 = vmatpush1.msra.mxu0 0.0
        %698 = vmatprep.subr.mxu0 0.0
        %699 = vmatpush1.msra.mxu0 0.0
        %700 = vmatprep.subr.mxu0 0.0
        %701 = vmatpush1.msra.mxu0 0.0
        %702 = vmatprep.subr.mxu0 0.0
        %703 = vmatpush1.msra.mxu0 0.0
        %704 = vmatprep.subr.mxu0 0.0
        %705 = vmatpush1.msra.mxu0 0.0
        %706 = vmatprep.subr.mxu0 0.0
        %707 = vmatpush1.msra.mxu0 0.0
        %708 = vmatprep.subr.mxu0 0.0
        %709 = vmatpush1.msra.mxu0 0.0
        %710 = vmatprep.subr.mxu0 0.0
        %711 = vmatpush1.msra.mxu0 0.0
        %712 = vmatprep.subr.mxu0 0.0
        %713 = vmatpush1.msra.mxu0 0.0
        %714 = vmatprep.subr.mxu0 0.0
        %715 = vmatpush1.msra.mxu0 0.0
        %716 = vmatprep.subr.mxu0 0.0
        %717 = vmatpush1.msra.mxu0 0.0
        %v718 = vand.u32 %v229, 4294901760
        %719 = vmatprep.subr.mxu0 %v718
        %v720 = vand.u32 %v228, 4294901760
        %721 = vmatpush1.msra.mxu0 %v720
        %v722 = vand.u32 %v227, 4294901760
        %723 = vmatprep.subr.mxu0 %v722
        %v724 = vand.u32 %v226, 4294901760
        %725 = vmatpush1.msra.mxu0 %v724
        %726 = vmatprep.subr.mxu0 0.0
        %727 = vmatpush2.msra.mxu0 0.0
        %728 = vmatprep.subr.mxu0 0.0
        %729 = vmatpush2.msra.mxu0 0.0
        %730 = vmatprep.subr.mxu0 0.0
        %731 = vmatpush2.msra.mxu0 0.0
        %732 = vmatprep.subr.mxu0 0.0
        %733 = vmatpush2.msra.mxu0 0.0
        %734 = vmatprep.subr.mxu0 0.0
        %735 = vmatpush2.msra.mxu0 0.0
        %736 = vmatprep.subr.mxu0 0.0
        %737 = vmatpush2.msra.mxu0 0.0
        %738 = vmatprep.subr.mxu0 0.0
        %739 = vmatpush2.msra.mxu0 0.0
        %740 = vmatprep.subr.mxu0 0.0
        %741 = vmatpush2.msra.mxu0 0.0
        %742 = vmatprep.subr.mxu0 0.0
        %743 = vmatpush2.msra.mxu0 0.0
        %744 = vmatprep.subr.mxu0 0.0
        %745 = vmatpush2.msra.mxu0 0.0
        %746 = vmatprep.subr.mxu0 0.0
        %747 = vmatpush2.msra.mxu0 0.0
        %748 = vmatprep.subr.mxu0 0.0
        %749 = vmatpush2.msra.mxu0 0.0
        %750 = vmatprep.subr.mxu0 0.0
        %751 = vmatpush2.msra.mxu0 0.0
        %752 = vmatprep.subr.mxu0 0.0
        %753 = vmatpush2.msra.mxu0 0.0
        %754 = vmatprep.subr.mxu0 0.0
        %755 = vmatpush2.msra.mxu0 0.0
        %756 = vmatprep.subr.mxu0 0.0
        %757 = vmatpush2.msra.mxu0 0.0
        %758 = vmatprep.mubr.f32.mxu0 0.0
        %v759 = vand.u32 %v232, 4294901760
        %v760 = vsub.f32 %v232, %v759
        %v761 = vand.u32 %v760, 4294901760
        %762 = vmatmul.mubr.f32.gmra.mxu0 %v761
        %v763 = vpop.f32.mrf.mxu0
        %v764 = vadd.f32 %v630, %v763
        %v765 = vpop.f32.mrf.mxu0
        %v766 = vadd.f32 %v632, %v765
        %767 = vmatprep.mubr.f32.mxu0 0.0
        %v768 = vand.u32 %v235, 4294901760
        %v769 = vsub.f32 %v235, %v768
        %v770 = vand.u32 %v769, 4294901760
        %771 = vmatmul.mubr.f32.gmra.mxu0 %v770
        %v772 = vpop.f32.mrf.mxu0
        %v773 = vadd.f32 %v638, %v772
        %v774 = vpop.f32.mrf.mxu0
        %v775 = vadd.f32 %v640, %v774
        %776 = vmatprep.mubr.f32.mxu0 0.0
        %v777 = vand.u32 %v238, 4294901760
        %v778 = vsub.f32 %v238, %v777
        %v779 = vand.u32 %v778, 4294901760
        %780 = vmatmul.mubr.f32.gmra.mxu0 %v779
        %v781 = vpop.f32.mrf.mxu0
        %v782 = vadd.f32 %v646, %v781
        %v783 = vpop.f32.mrf.mxu0
        %v784 = vadd.f32 %v648, %v783
        %785 = vmatprep.mubr.f32.mxu0 0.0
        %v786 = vand.u32 %v241, 4294901760
        %v787 = vsub.f32 %v241, %v786
        %v788 = vand.u32 %v787, 4294901760
        %789 = vmatmul.mubr.f32.gmra.mxu0 %v788
        %v790 = vpop.f32.mrf.mxu0
        %v791 = vadd.f32 %v654, %v790
        %v792 = vpop.f32.mrf.mxu0
        %v793 = vadd.f32 %v656, %v792
        %794 = vmatprep.mubr.f32.mxu0 0.0
        %v795 = vand.u32 %v244, 4294901760
        %v796 = vsub.f32 %v244, %v795
        %v797 = vand.u32 %v796, 4294901760
        %798 = vmatmul.mubr.f32.gmra.mxu0 %v797
        %v799 = vpop.f32.mrf.mxu0
        %v800 = vadd.f32 %v662, %v799
        %v801 = vpop.f32.mrf.mxu0
        %v802 = vadd.f32 %v664, %v801
        %803 = vmatprep.mubr.f32.mxu0 0.0
        %v804 = vand.u32 %v247, 4294901760
        %v805 = vsub.f32 %v247, %v804
        %v806 = vand.u32 %v805, 4294901760
        %807 = vmatmul.mubr.f32.gmra.mxu0 %v806
        %v808 = vpop.f32.mrf.mxu0
        %v809 = vadd.f32 %v670, %v808
        %v810 = vpop.f32.mrf.mxu0
        %v811 = vadd.f32 %v672, %v810
        %812 = vmatprep.mubr.f32.mxu0 0.0
        %v813 = vand.u32 %v250, 4294901760
        %v814 = vsub.f32 %v250, %v813
        %v815 = vand.u32 %v814, 4294901760
        %816 = vmatmul.mubr.f32.gmra.mxu0 %v815
        %v817 = vpop.f32.mrf.mxu0
        %v818 = vadd.f32 %v678, %v817
        %v819 = vpop.f32.mrf.mxu0
        %v820 = vadd.f32 %v680, %v819
        %821 = vmatprep.mubr.f32.mxu0 0.0
        %v822 = vand.u32 %v253, 4294901760
        %v823 = vsub.f32 %v253, %v822
        %v824 = vand.u32 %v823, 4294901760
        %825 = vmatmul.mubr.f32.gmra.mxu0 %v824
        %v826 = vpop.f32.mrf.mxu0
        %v827 = vadd.f32 %v686, %v826
        %v828 = vpop.f32.mrf.mxu0
        %v829 = vadd.f32 %v688, %v828
        %830 = vdwg.mxu0
        %831 = vmatprep.subr.mxu0 0.0
        %832 = vmatpush1.msra.mxu0 0.0
        %833 = vmatprep.subr.mxu0 0.0
        %834 = vmatpush1.msra.mxu0 0.0
        %835 = vmatprep.subr.mxu0 0.0
        %836 = vmatpush1.msra.mxu0 0.0
        %837 = vmatprep.subr.mxu0 0.0
        %838 = vmatpush1.msra.mxu0 0.0
        %839 = vmatprep.subr.mxu0 0.0
        %840 = vmatpush1.msra.mxu0 0.0
        %841 = vmatprep.subr.mxu0 0.0
        %842 = vmatpush1.msra.mxu0 0.0
        %843 = vmatprep.subr.mxu0 0.0
        %844 = vmatpush1.msra.mxu0 0.0
        %845 = vmatprep.subr.mxu0 0.0
        %846 = vmatpush1.msra.mxu0 0.0
        %847 = vmatprep.subr.mxu0 0.0
        %848 = vmatpush1.msra.mxu0 0.0
        %849 = vmatprep.subr.mxu0 0.0
        %850 = vmatpush1.msra.mxu0 0.0
        %851 = vmatprep.subr.mxu0 0.0
        %852 = vmatpush1.msra.mxu0 0.0
        %853 = vmatprep.subr.mxu0 0.0
        %854 = vmatpush1.msra.mxu0 0.0
        %855 = vmatprep.subr.mxu0 0.0
        %856 = vmatpush1.msra.mxu0 0.0
        %857 = vmatprep.subr.mxu0 0.0
        %858 = vmatpush1.msra.mxu0 0.0
        %v859 = vand.u32 %v229, 4294901760
        %v860 = vsub.f32 %v229, %v859
        %v861 = vand.u32 %v860, 4294901760
        %862 = vmatprep.subr.mxu0 %v861
        %v863 = vand.u32 %v228, 4294901760
        %v864 = vsub.f32 %v228, %v863
        %v865 = vand.u32 %v864, 4294901760
        %866 = vmatpush1.msra.mxu0 %v865
        %v867 = vand.u32 %v227, 4294901760
        %v868 = vsub.f32 %v227, %v867
        %v869 = vand.u32 %v868, 4294901760
        %870 = vmatprep.subr.mxu0 %v869
        %v871 = vand.u32 %v226, 4294901760
        %v872 = vsub.f32 %v226, %v871
        %v873 = vand.u32 %v872, 4294901760
        %874 = vmatpush1.msra.mxu0 %v873
        %875 = vmatprep.subr.mxu0 0.0
        %876 = vmatpush2.msra.mxu0 0.0
        %877 = vmatprep.subr.mxu0 0.0
        %878 = vmatpush2.msra.mxu0 0.0
        %879 = vmatprep.subr.mxu0 0.0
        %880 = vmatpush2.msra.mxu0 0.0
        %881 = vmatprep.subr.mxu0 0.0
        %882 = vmatpush2.msra.mxu0 0.0
        %883 = vmatprep.subr.mxu0 0.0
        %884 = vmatpush2.msra.mxu0 0.0
        %885 = vmatprep.subr.mxu0 0.0
        %886 = vmatpush2.msra.mxu0 0.0
        %887 = vmatprep.subr.mxu0 0.0
        %888 = vmatpush2.msra.mxu0 0.0
        %889 = vmatprep.subr.mxu0 0.0
        %890 = vmatpush2.msra.mxu0 0.0
        %891 = vmatprep.subr.mxu0 0.0
        %892 = vmatpush2.msra.mxu0 0.0
        %893 = vmatprep.subr.mxu0 0.0
        %894 = vmatpush2.msra.mxu0 0.0
        %895 = vmatprep.subr.mxu0 0.0
        %896 = vmatpush2.msra.mxu0 0.0
        %897 = vmatprep.subr.mxu0 0.0
        %898 = vmatpush2.msra.mxu0 0.0
        %899 = vmatprep.subr.mxu0 0.0
        %900 = vmatpush2.msra.mxu0 0.0
        %901 = vmatprep.subr.mxu0 0.0
        %902 = vmatpush2.msra.mxu0 0.0
        %903 = vmatprep.subr.mxu0 0.0
        %904 = vmatpush2.msra.mxu0 0.0
        %905 = vmatprep.subr.mxu0 0.0
        %906 = vmatpush2.msra.mxu0 0.0
        %907 = vmatprep.mubr.f32.mxu0 0.0
        %v908 = vand.u32 %v232, 4294901760
        %909 = vmatmul.mubr.f32.gmra.mxu0 %v908
        %v910 = vpop.f32.mrf.mxu0
        %v911 = vadd.f32 %v764, %v910
        %v912 = vpop.f32.mrf.mxu0
        %v913 = vadd.f32 %v766, %v912
        %914 = vmatprep.mubr.f32.mxu0 0.0
        %v915 = vand.u32 %v235, 4294901760
        %916 = vmatmul.mubr.f32.gmra.mxu0 %v915
        %v917 = vpop.f32.mrf.mxu0
        %v918 = vadd.f32 %v773, %v917
        %v919 = vpop.f32.mrf.mxu0
        %v920 = vadd.f32 %v775, %v919
        %921 = vmatprep.mubr.f32.mxu0 0.0
        %v922 = vand.u32 %v238, 4294901760
        %923 = vmatmul.mubr.f32.gmra.mxu0 %v922
        %v924 = vpop.f32.mrf.mxu0
        %v925 = vadd.f32 %v782, %v924
        %v926 = vpop.f32.mrf.mxu0
        %v927 = vadd.f32 %v784, %v926
        %928 = vmatprep.mubr.f32.mxu0 0.0
        %v929 = vand.u32 %v241, 4294901760
        %930 = vmatmul.mubr.f32.gmra.mxu0 %v929
        %v931 = vpop.f32.mrf.mxu0
        %v932 = vadd.f32 %v791, %v931
        %v933 = vpop.f32.mrf.mxu0
        %v934 = vadd.f32 %v793, %v933
        %935 = vmatprep.mubr.f32.mxu0 0.0
        %v936 = vand.u32 %v244, 4294901760
        %937 = vmatmul.mubr.f32.gmra.mxu0 %v936
        %v938 = vpop.f32.mrf.mxu0
        %v939 = vadd.f32 %v800, %v938
        %v940 = vpop.f32.mrf.mxu0
        %v941 = vadd.f32 %v802, %v940
        %942 = vmatprep.mubr.f32.mxu0 0.0
        %v943 = vand.u32 %v247, 4294901760
        %944 = vmatmul.mubr.f32.gmra.mxu0 %v943
        %v945 = vpop.f32.mrf.mxu0
        %v946 = vadd.f32 %v809, %v945
        %v947 = vpop.f32.mrf.mxu0
        %v948 = vadd.f32 %v811, %v947
        %949 = vmatprep.mubr.f32.mxu0 0.0
        %v950 = vand.u32 %v250, 4294901760
        %951 = vmatmul.mubr.f32.gmra.mxu0 %v950
        %v952 = vpop.f32.mrf.mxu0
        %v953 = vadd.f32 %v818, %v952
        %v954 = vpop.f32.mrf.mxu0
        %v955 = vadd.f32 %v820, %v954
        %956 = vmatprep.mubr.f32.mxu0 0.0
        %v957 = vand.u32 %v253, 4294901760
        %958 = vmatmul.mubr.f32.gmra.mxu0 %v957
        %v959 = vpop.f32.mrf.mxu0
        %v960 = vadd.f32 %v827, %v959
        %v961 = vpop.f32.mrf.mxu0
        %v962 = vadd.f32 %v829, %v961
        %963 = vdwg.mxu0
        %964 = vmatprep.subr.mxu0 0.0
        %965 = vmatpush1.msra.mxu0 0.0
        %966 = vmatprep.subr.mxu0 0.0
        %967 = vmatpush1.msra.mxu0 0.0
        %968 = vmatprep.subr.mxu0 0.0
        %969 = vmatpush1.msra.mxu0 0.0
        %970 = vmatprep.subr.mxu0 0.0
        %971 = vmatpush1.msra.mxu0 0.0
        %972 = vmatprep.subr.mxu0 0.0
        %973 = vmatpush1.msra.mxu0 0.0
        %974 = vmatprep.subr.mxu0 0.0
        %975 = vmatpush1.msra.mxu0 0.0
        %976 = vmatprep.subr.mxu0 0.0
        %977 = vmatpush1.msra.mxu0 0.0
        %978 = vmatprep.subr.mxu0 0.0
        %979 = vmatpush1.msra.mxu0 0.0
        %980 = vmatprep.subr.mxu0 0.0
        %981 = vmatpush1.msra.mxu0 0.0
        %982 = vmatprep.subr.mxu0 0.0
        %983 = vmatpush1.msra.mxu0 0.0
        %984 = vmatprep.subr.mxu0 0.0
        %985 = vmatpush1.msra.mxu0 0.0
        %986 = vmatprep.subr.mxu0 0.0
        %987 = vmatpush1.msra.mxu0 0.0
        %988 = vmatprep.subr.mxu0 0.0
        %989 = vmatpush1.msra.mxu0 0.0
        %990 = vmatprep.subr.mxu0 0.0
        %991 = vmatpush1.msra.mxu0 0.0
        %v992 = vand.u32 %v229, 4294901760
        %993 = vmatprep.subr.mxu0 %v992
        %v994 = vand.u32 %v228, 4294901760
        %995 = vmatpush1.msra.mxu0 %v994
        %v996 = vand.u32 %v227, 4294901760
        %997 = vmatprep.subr.mxu0 %v996
        %v998 = vand.u32 %v226, 4294901760
        %999 = vmatpush1.msra.mxu0 %v998
        %1000 = vmatprep.subr.mxu0 0.0
        %1001 = vmatpush2.msra.mxu0 0.0
        %1002 = vmatprep.subr.mxu0 0.0
        %1003 = vmatpush2.msra.mxu0 0.0
        %1004 = vmatprep.subr.mxu0 0.0
        %1005 = vmatpush2.msra.mxu0 0.0
        %1006 = vmatprep.subr.mxu0 0.0
        %1007 = vmatpush2.msra.mxu0 0.0
        %1008 = vmatprep.subr.mxu0 0.0
        %1009 = vmatpush2.msra.mxu0 0.0
        %1010 = vmatprep.subr.mxu0 0.0
        %1011 = vmatpush2.msra.mxu0 0.0
        %1012 = vmatprep.subr.mxu0 0.0
        %1013 = vmatpush2.msra.mxu0 0.0
        %1014 = vmatprep.subr.mxu0 0.0
        %1015 = vmatpush2.msra.mxu0 0.0
        %1016 = vmatprep.subr.mxu0 0.0
        %1017 = vmatpush2.msra.mxu0 0.0
        %1018 = vmatprep.subr.mxu0 0.0
        %1019 = vmatpush2.msra.mxu0 0.0
        %1020 = vmatprep.subr.mxu0 0.0
        %1021 = vmatpush2.msra.mxu0 0.0
        %1022 = vmatprep.subr.mxu0 0.0
        %1023 = vmatpush2.msra.mxu0 0.0
        %1024 = vmatprep.subr.mxu0 0.0
        %1025 = vmatpush2.msra.mxu0 0.0
        %1026 = vmatprep.subr.mxu0 0.0
        %1027 = vmatpush2.msra.mxu0 0.0
        %1028 = vmatprep.subr.mxu0 0.0
        %1029 = vmatpush2.msra.mxu0 0.0
        %1030 = vmatprep.subr.mxu0 0.0
        %1031 = vmatpush2.msra.mxu0 0.0
        %1032 = vmatprep.mubr.f32.mxu0 0.0
        %v1033 = vand.u32 %v232, 4294901760
        %1034 = vmatmul.mubr.f32.gmra.mxu0 %v1033
        %v1035 = vpop.f32.mrf.mxu0
        %v1036 = vadd.f32 %v911, %v1035
        %v1037 = vpop.f32.mrf.mxu0
        %v1038 = vadd.f32 %v913, %v1037
        %1039 = vmatprep.mubr.f32.mxu0 0.0
        %v1040 = vand.u32 %v235, 4294901760
        %1041 = vmatmul.mubr.f32.gmra.mxu0 %v1040
        %v1042 = vpop.f32.mrf.mxu0
        %v1043 = vadd.f32 %v918, %v1042
        %v1044 = vpop.f32.mrf.mxu0
        %v1045 = vadd.f32 %v920, %v1044
        %1046 = vmatprep.mubr.f32.mxu0 0.0
        %v1047 = vand.u32 %v238, 4294901760
        %1048 = vmatmul.mubr.f32.gmra.mxu0 %v1047
        %v1049 = vpop.f32.mrf.mxu0
        %v1050 = vadd.f32 %v925, %v1049
        %v1051 = vpop.f32.mrf.mxu0
        %v1052 = vadd.f32 %v927, %v1051
        %1053 = vmatprep.mubr.f32.mxu0 0.0
        %v1054 = vand.u32 %v241, 4294901760
        %1055 = vmatmul.mubr.f32.gmra.mxu0 %v1054
        %v1056 = vpop.f32.mrf.mxu0
        %v1057 = vadd.f32 %v932, %v1056
        %v1058 = vpop.f32.mrf.mxu0
        %v1059 = vadd.f32 %v934, %v1058
        %1060 = vmatprep.mubr.f32.mxu0 0.0
        %v1061 = vand.u32 %v244, 4294901760
        %1062 = vmatmul.mubr.f32.gmra.mxu0 %v1061
        %v1063 = vpop.f32.mrf.mxu0
        %v1064 = vadd.f32 %v939, %v1063
        %v1065 = vpop.f32.mrf.mxu0
        %v1066 = vadd.f32 %v941, %v1065
        %1067 = vmatprep.mubr.f32.mxu0 0.0
        %v1068 = vand.u32 %v247, 4294901760
        %1069 = vmatmul.mubr.f32.gmra.mxu0 %v1068
        %v1070 = vpop.f32.mrf.mxu0
        %v1071 = vadd.f32 %v946, %v1070
        %v1072 = vpop.f32.mrf.mxu0
        %v1073 = vadd.f32 %v948, %v1072
        %1074 = vmatprep.mubr.f32.mxu0 0.0
        %v1075 = vand.u32 %v250, 4294901760
        %1076 = vmatmul.mubr.f32.gmra.mxu0 %v1075
        %v1077 = vpop.f32.mrf.mxu0
        %v1078 = vadd.f32 %v953, %v1077
        %v1079 = vpop.f32.mrf.mxu0
        %v1080 = vadd.f32 %v955, %v1079
        %1081 = vmatprep.mubr.f32.mxu0 0.0
        %v1082 = vand.u32 %v253, 4294901760
        %1083 = vmatmul.mubr.f32.gmra.mxu0 %v1082
        %v1084 = vpop.f32.mrf.mxu0
        %v1085 = vadd.f32 %v960, %v1084
        %v1086 = vpop.f32.mrf.mxu0
        %v1087 = vadd.f32 %v962, %v1086
        %1088 = vdwg.mxu0
        %1089 = vst [vmem:[#allocation2] sm:$0xff] %v1036
        %vm1090 = vcmask 785408
        %1091 = vst.msk [vmem:[#allocation2 + $0x8] sm:$0xff] %vm1090, %v1038
        %1092 = vst [vmem:[#allocation2 + $0x10] sm:$0xff] %v1043
        %1093 = vst.msk [vmem:[#allocation2 + $0x18] sm:$0xff] %vm1090, %v1045
        %1094 = vst [vmem:[#allocation2 + $0x20] sm:$0xff] %v1050
        %1095 = vst.msk [vmem:[#allocation2 + $0x28] sm:$0xff] %vm1090, %v1052
        %1096 = vst [vmem:[#allocation2 + $0x30] sm:$0xff] %v1057
        %1097 = vst.msk [vmem:[#allocation2 + $0x38] sm:$0xff] %vm1090, %v1059
        %1098 = vst [vmem:[#allocation2 + $0x40] sm:$0xff] %v1064
        %1099 = vst.msk [vmem:[#allocation2 + $0x48] sm:$0xff] %vm1090, %v1066
        %1100 = vst [vmem:[#allocation2 + $0x50] sm:$0xff] %v1071
        %1101 = vst.msk [vmem:[#allocation2 + $0x58] sm:$0xff] %vm1090, %v1073
        %1102 = vst [vmem:[#allocation2 + $0x60] sm:$0xff] %v1078
        %1103 = vst.msk [vmem:[#allocation2 + $0x68] sm:$0xff] %vm1090, %v1080
        %1104 = vst [vmem:[#allocation2 + $0x70] sm:$0xff] %v1085
        %1105 = vst.msk [vmem:[#allocation2 + $0x78] sm:$0xff] %vm1090, %v1087
        %v1106 = vld [vmem:[#allocation3] sm:$0xff]
        %v1107 = vld [vmem:[#allocation3 + $0x8] sm:$0xff]
        %v1108 = vld [vmem:[#allocation3 + $0x10] sm:$0xff]
        %v1109 = vld [vmem:[#allocation3 + $0x18] sm:$0xff]
        %v1110 = vld [vmem:[#allocation3 + $0x20] sm:$0xff]
        %v1111 = vld [vmem:[#allocation3 + $0x28] sm:$0xff]
        %v1112 = vld [vmem:[#allocation3 + $0x30] sm:$0xff]
        %v1113 = vld [vmem:[#allocation3 + $0x38] sm:$0xff]
        %v1114 = vld [vmem:[#allocation3 + $0x40] sm:$0xff]
        %v1115 = vld [vmem:[#allocation3 + $0x48] sm:$0xff]
        %v1116 = vld [vmem:[#allocation3 + $0x50] sm:$0xff]
        %v1117 = vld [vmem:[#allocation3 + $0x58] sm:$0xff]
        %v1118 = vld [vmem:[#allocation3 + $0x60] sm:$0xff]
        %v1119 = vld [vmem:[#allocation3 + $0x68] sm:$0xff]
        %v1120 = vld [vmem:[#allocation3 + $0x70] sm:$0xff]
        %v1121 = vld [vmem:[#allocation3 + $0x78] sm:$0xff]
        %v1122 = vld [vmem:[#allocation3 + $0x80] sm:$0xff]
        %v1123 = vld [vmem:[#allocation3 + $0x88] sm:$0xff]
        %v1124 = vld [vmem:[#allocation3 + $0x90] sm:$0xff]
        %v1125 = vld [vmem:[#allocation3 + $0x98] sm:$0xff]
        %v1126 = vld [vmem:[#allocation3 + $0xa0] sm:$0xff]
        %v1127 = vld [vmem:[#allocation3 + $0xa8] sm:$0xff]
        %v1128 = vld [vmem:[#allocation3 + $0xb0] sm:$0xff]
        %v1129 = vld [vmem:[#allocation3 + $0xb8] sm:$0xff]
        %v1130 = vld [vmem:[#allocation3 + $0xc0] sm:$0xff]
        %v1131 = vld [vmem:[#allocation3 + $0xc8] sm:$0xff]
        %v1132 = vld [vmem:[#allocation3 + $0xd0] sm:$0xff]
        %v1133 = vld [vmem:[#allocation3 + $0xd8] sm:$0xff]
        %s1134 = smul.u32 0, 2
        %s1135 = smul.addr %s1134, 8
        %s1136 = scalar_lea.vmem [#allocation2], %s1135
        %v1137 = vld [vmem:[%s1136] sm:$0xff]
        %v1138 = vld [vmem:[%s1136 + $0x8] sm:$0xff]
        %v1139 = vld [vmem:[%s1136 + $0x10] sm:$0xff]
        %v1140 = vld [vmem:[%s1136 + $0x18] sm:$0xff]
        %v1142 = vsel %vm230, %v1106, 0
        %v1145 = vsel %vm230, %v1107, 0
        %v1148 = vsel %vm230, %v1108, 0
        %v1151 = vsel %vm230, %v1109, 0
        %v1154 = vsel %vm230, %v1110, 0
        %v1157 = vsel %vm230, %v1111, 0
        %v1160 = vsel %vm230, %v1112, 0
        %v1163 = vsel %vm230, %v1113, 0
        %v1166 = vsel %vm230, %v1114, 0
        %v1169 = vsel %vm230, %v1115, 0
        %v1172 = vsel %vm230, %v1116, 0
        %v1175 = vsel %vm230, %v1117, 0
        %v1178 = vsel %vm230, %v1118, 0
        %v1181 = vsel %vm230, %v1119, 0
        %v1184 = vsel %vm230, %v1120, 0
        %v1187 = vsel %vm230, %v1121, 0
        %v1190 = vsel %vm230, %v1122, 0
        %v1193 = vsel %vm230, %v1123, 0
        %v1196 = vsel %vm230, %v1124, 0
        %v1199 = vsel %vm230, %v1125, 0
        %v1202 = vsel %vm230, %v1126, 0
        %v1205 = vsel %vm230, %v1127, 0
        %v1208 = vsel %vm230, %v1128, 0
        %v1211 = vsel %vm230, %v1129, 0
        %v1214 = vsel %vm230, %v1130, 0
        %v1217 = vsel %vm230, %v1131, 0
        %v1220 = vsel %vm230, %v1132, 0
        %v1223 = vsel %vm230, %v1133, 0
        %1225 = vmatprep.subr.mxu0 0.0
        %1226 = vmatpush1.msra.mxu0 0.0
        %1227 = vmatprep.subr.mxu0 0.0
        %1228 = vmatpush1.msra.mxu0 0.0
        %1229 = vmatprep.subr.mxu0 0.0
        %1230 = vmatpush1.msra.mxu0 0.0
        %1231 = vmatprep.subr.mxu0 0.0
        %1232 = vmatpush1.msra.mxu0 0.0
        %1233 = vmatprep.subr.mxu0 0.0
        %1234 = vmatpush1.msra.mxu0 0.0
        %1235 = vmatprep.subr.mxu0 0.0
        %1236 = vmatpush1.msra.mxu0 0.0
        %1237 = vmatprep.subr.mxu0 0.0
        %1238 = vmatpush1.msra.mxu0 0.0
        %1239 = vmatprep.subr.mxu0 0.0
        %1240 = vmatpush1.msra.mxu0 0.0
        %1241 = vmatprep.subr.mxu0 0.0
        %1242 = vmatpush1.msra.mxu0 0.0
        %1243 = vmatprep.subr.mxu0 0.0
        %1244 = vmatpush1.msra.mxu0 0.0
        %1245 = vmatprep.subr.mxu0 0.0
        %1246 = vmatpush1.msra.mxu0 0.0
        %1247 = vmatprep.subr.mxu0 0.0
        %1248 = vmatpush1.msra.mxu0 0.0
        %1249 = vmatprep.subr.mxu0 0.0
        %1250 = vmatpush1.msra.mxu0 0.0
        %1251 = vmatprep.subr.mxu0 0.0
        %1252 = vmatpush1.msra.mxu0 0.0
        %v1253 = vand.u32 %v1140, 4294901760
        %1254 = vmatprep.subr.mxu0 %v1253
        %v1255 = vand.u32 %v1139, 4294901760
        %1256 = vmatpush1.msra.mxu0 %v1255
        %v1257 = vand.u32 %v1138, 4294901760
        %1258 = vmatprep.subr.mxu0 %v1257
        %v1259 = vand.u32 %v1137, 4294901760
        %1260 = vmatpush1.msra.mxu0 %v1259
        %1261 = vmatprep.subr.mxu0 0.0
        %1262 = vmatpush2.msra.mxu0 0.0
        %1263 = vmatprep.subr.mxu0 0.0
        %1264 = vmatpush2.msra.mxu0 0.0
        %1265 = vmatprep.subr.mxu0 0.0
        %1266 = vmatpush2.msra.mxu0 0.0
        %1267 = vmatprep.subr.mxu0 0.0
        %1268 = vmatpush2.msra.mxu0 0.0
        %1269 = vmatprep.subr.mxu0 0.0
        %1270 = vmatpush2.msra.mxu0 0.0
        %1271 = vmatprep.subr.mxu0 0.0
        %1272 = vmatpush2.msra.mxu0 0.0
        %1273 = vmatprep.subr.mxu0 0.0
        %1274 = vmatpush2.msra.mxu0 0.0
        %1275 = vmatprep.subr.mxu0 0.0
        %1276 = vmatpush2.msra.mxu0 0.0
        %1277 = vmatprep.subr.mxu0 0.0
        %1278 = vmatpush2.msra.mxu0 0.0
        %1279 = vmatprep.subr.mxu0 0.0
        %1280 = vmatpush2.msra.mxu0 0.0
        %1281 = vmatprep.subr.mxu0 0.0
        %1282 = vmatpush2.msra.mxu0 0.0
        %1283 = vmatprep.subr.mxu0 0.0
        %1284 = vmatpush2.msra.mxu0 0.0
        %1285 = vmatprep.subr.mxu0 0.0
        %1286 = vmatpush2.msra.mxu0 0.0
        %1287 = vmatprep.subr.mxu0 0.0
        %1288 = vmatpush2.msra.mxu0 0.0
        %1289 = vmatprep.subr.mxu0 0.0
        %1290 = vmatpush2.msra.mxu0 0.0
        %1291 = vmatprep.subr.mxu0 0.0
        %1292 = vmatpush2.msra.mxu0 0.0
        %1293 = vmatprep.mubr.f32.mxu0 0.0
        %v1294 = vand.u32 %v1142, 4294901760
        %v1295 = vsub.f32 %v1142, %v1294
        %v1296 = vand.u32 %v1295, 4294901760
        %v1297 = vsub.f32 %v1295, %v1296
        %v1298 = vand.u32 %v1297, 4294901760
        %1299 = vmatmul.mubr.f32.gmra.mxu0 %v1298
        %v1300 = vpop.f32.mrf.mxu0
        %v1301 = vadd.f32 0.0, %v1300
        %v1302 = vpop.f32.mrf.mxu0
        %v1303 = vadd.f32 0.0, %v1302
        %1304 = vmatprep.mubr.f32.mxu0 0.0
        %v1305 = vand.u32 %v1145, 4294901760
        %v1306 = vsub.f32 %v1145, %v1305
        %v1307 = vand.u32 %v1306, 4294901760
        %v1308 = vsub.f32 %v1306, %v1307
        %v1309 = vand.u32 %v1308, 4294901760
        %1310 = vmatmul.mubr.f32.gmra.mxu0 %v1309
        %v1311 = vpop.f32.mrf.mxu0
        %v1312 = vadd.f32 0.0, %v1311
        %v1313 = vpop.f32.mrf.mxu0
        %v1314 = vadd.f32 0.0, %v1313
        %1315 = vmatprep.mubr.f32.mxu0 0.0
        %v1316 = vand.u32 %v1148, 4294901760
        %v1317 = vsub.f32 %v1148, %v1316
        %v1318 = vand.u32 %v1317, 4294901760
        %v1319 = vsub.f32 %v1317, %v1318
        %v1320 = vand.u32 %v1319, 4294901760
        %1321 = vmatmul.mubr.f32.gmra.mxu0 %v1320
        %v1322 = vpop.f32.mrf.mxu0
        %v1323 = vadd.f32 0.0, %v1322
        %v1324 = vpop.f32.mrf.mxu0
        %v1325 = vadd.f32 0.0, %v1324
        %1326 = vmatprep.mubr.f32.mxu0 0.0
        %v1327 = vand.u32 %v1151, 4294901760
        %v1328 = vsub.f32 %v1151, %v1327
        %v1329 = vand.u32 %v1328, 4294901760
        %v1330 = vsub.f32 %v1328, %v1329
        %v1331 = vand.u32 %v1330, 4294901760
        %1332 = vmatmul.mubr.f32.gmra.mxu0 %v1331
        %v1333 = vpop.f32.mrf.mxu0
        %v1334 = vadd.f32 0.0, %v1333
        %v1335 = vpop.f32.mrf.mxu0
        %v1336 = vadd.f32 0.0, %v1335
        %1337 = vmatprep.mubr.f32.mxu0 0.0
        %v1338 = vand.u32 %v1154, 4294901760
        %v1339 = vsub.f32 %v1154, %v1338
        %v1340 = vand.u32 %v1339, 4294901760
        %v1341 = vsub.f32 %v1339, %v1340
        %v1342 = vand.u32 %v1341, 4294901760
        %1343 = vmatmul.mubr.f32.gmra.mxu0 %v1342
        %v1344 = vpop.f32.mrf.mxu0
        %v1345 = vadd.f32 0.0, %v1344
        %v1346 = vpop.f32.mrf.mxu0
        %v1347 = vadd.f32 0.0, %v1346
        %1348 = vmatprep.mubr.f32.mxu0 0.0
        %v1349 = vand.u32 %v1157, 4294901760
        %v1350 = vsub.f32 %v1157, %v1349
        %v1351 = vand.u32 %v1350, 4294901760
        %v1352 = vsub.f32 %v1350, %v1351
        %v1353 = vand.u32 %v1352, 4294901760
        %1354 = vmatmul.mubr.f32.gmra.mxu0 %v1353
        %v1355 = vpop.f32.mrf.mxu0
        %v1356 = vadd.f32 0.0, %v1355
        %v1357 = vpop.f32.mrf.mxu0
        %v1358 = vadd.f32 0.0, %v1357
        %1359 = vmatprep.mubr.f32.mxu0 0.0
        %v1360 = vand.u32 %v1160, 4294901760
        %v1361 = vsub.f32 %v1160, %v1360
        %v1362 = vand.u32 %v1361, 4294901760
        %v1363 = vsub.f32 %v1361, %v1362
        %v1364 = vand.u32 %v1363, 4294901760
        %1365 = vmatmul.mubr.f32.gmra.mxu0 %v1364
        %v1366 = vpop.f32.mrf.mxu0
        %v1367 = vadd.f32 0.0, %v1366
        %v1368 = vpop.f32.mrf.mxu0
        %v1369 = vadd.f32 0.0, %v1368
        %1370 = vmatprep.mubr.f32.mxu0 0.0
        %v1371 = vand.u32 %v1163, 4294901760
        %v1372 = vsub.f32 %v1163, %v1371
        %v1373 = vand.u32 %v1372, 4294901760
        %v1374 = vsub.f32 %v1372, %v1373
        %v1375 = vand.u32 %v1374, 4294901760
        %1376 = vmatmul.mubr.f32.gmra.mxu0 %v1375
        %v1377 = vpop.f32.mrf.mxu0
        %v1378 = vadd.f32 0.0, %v1377
        %v1379 = vpop.f32.mrf.mxu0
        %v1380 = vadd.f32 0.0, %v1379
        %1381 = vmatprep.mubr.f32.mxu0 0.0
        %v1382 = vand.u32 %v1166, 4294901760
        %v1383 = vsub.f32 %v1166, %v1382
        %v1384 = vand.u32 %v1383, 4294901760
        %v1385 = vsub.f32 %v1383, %v1384
        %v1386 = vand.u32 %v1385, 4294901760
        %1387 = vmatmul.mubr.f32.gmra.mxu0 %v1386
        %v1388 = vpop.f32.mrf.mxu0
        %v1389 = vadd.f32 0.0, %v1388
        %v1390 = vpop.f32.mrf.mxu0
        %v1391 = vadd.f32 0.0, %v1390
        %1392 = vmatprep.mubr.f32.mxu0 0.0
        %v1393 = vand.u32 %v1169, 4294901760
        %v1394 = vsub.f32 %v1169, %v1393
        %v1395 = vand.u32 %v1394, 4294901760
        %v1396 = vsub.f32 %v1394, %v1395
        %v1397 = vand.u32 %v1396, 4294901760
        %1398 = vmatmul.mubr.f32.gmra.mxu0 %v1397
        %v1399 = vpop.f32.mrf.mxu0
        %v1400 = vadd.f32 0.0, %v1399
        %v1401 = vpop.f32.mrf.mxu0
        %v1402 = vadd.f32 0.0, %v1401
        %1403 = vmatprep.mubr.f32.mxu0 0.0
        %v1404 = vand.u32 %v1172, 4294901760
        %v1405 = vsub.f32 %v1172, %v1404
        %v1406 = vand.u32 %v1405, 4294901760
        %v1407 = vsub.f32 %v1405, %v1406
        %v1408 = vand.u32 %v1407, 4294901760
        %1409 = vmatmul.mubr.f32.gmra.mxu0 %v1408
        %v1410 = vpop.f32.mrf.mxu0
        %v1411 = vadd.f32 0.0, %v1410
        %v1412 = vpop.f32.mrf.mxu0
        %v1413 = vadd.f32 0.0, %v1412
        %1414 = vmatprep.mubr.f32.mxu0 0.0
        %v1415 = vand.u32 %v1175, 4294901760
        %v1416 = vsub.f32 %v1175, %v1415
        %v1417 = vand.u32 %v1416, 4294901760
        %v1418 = vsub.f32 %v1416, %v1417
        %v1419 = vand.u32 %v1418, 4294901760
        %1420 = vmatmul.mubr.f32.gmra.mxu0 %v1419
        %v1421 = vpop.f32.mrf.mxu0
        %v1422 = vadd.f32 0.0, %v1421
        %v1423 = vpop.f32.mrf.mxu0
        %v1424 = vadd.f32 0.0, %v1423
        %1425 = vmatprep.mubr.f32.mxu0 0.0
        %v1426 = vand.u32 %v1178, 4294901760
        %v1427 = vsub.f32 %v1178, %v1426
        %v1428 = vand.u32 %v1427, 4294901760
        %v1429 = vsub.f32 %v1427, %v1428
        %v1430 = vand.u32 %v1429, 4294901760
        %1431 = vmatmul.mubr.f32.gmra.mxu0 %v1430
        %v1432 = vpop.f32.mrf.mxu0
        %v1433 = vadd.f32 0.0, %v1432
        %v1434 = vpop.f32.mrf.mxu0
        %v1435 = vadd.f32 0.0, %v1434
        %1436 = vmatprep.mubr.f32.mxu0 0.0
        %v1437 = vand.u32 %v1181, 4294901760
        %v1438 = vsub.f32 %v1181, %v1437
        %v1439 = vand.u32 %v1438, 4294901760
        %v1440 = vsub.f32 %v1438, %v1439
        %v1441 = vand.u32 %v1440, 4294901760
        %1442 = vmatmul.mubr.f32.gmra.mxu0 %v1441
        %v1443 = vpop.f32.mrf.mxu0
        %v1444 = vadd.f32 0.0, %v1443
        %v1445 = vpop.f32.mrf.mxu0
        %v1446 = vadd.f32 0.0, %v1445
        %1447 = vmatprep.mubr.f32.mxu0 0.0
        %v1448 = vand.u32 %v1184, 4294901760
        %v1449 = vsub.f32 %v1184, %v1448
        %v1450 = vand.u32 %v1449, 4294901760
        %v1451 = vsub.f32 %v1449, %v1450
        %v1452 = vand.u32 %v1451, 4294901760
        %1453 = vmatmul.mubr.f32.gmra.mxu0 %v1452
        %v1454 = vpop.f32.mrf.mxu0
        %v1455 = vadd.f32 0.0, %v1454
        %v1456 = vpop.f32.mrf.mxu0
        %v1457 = vadd.f32 0.0, %v1456
        %1458 = vmatprep.mubr.f32.mxu0 0.0
        %v1459 = vand.u32 %v1187, 4294901760
        %v1460 = vsub.f32 %v1187, %v1459
        %v1461 = vand.u32 %v1460, 4294901760
        %v1462 = vsub.f32 %v1460, %v1461
        %v1463 = vand.u32 %v1462, 4294901760
        %1464 = vmatmul.mubr.f32.gmra.mxu0 %v1463
        %v1465 = vpop.f32.mrf.mxu0
        %v1466 = vadd.f32 0.0, %v1465
        %v1467 = vpop.f32.mrf.mxu0
        %v1468 = vadd.f32 0.0, %v1467
        %1469 = vmatprep.mubr.f32.mxu0 0.0
        %v1470 = vand.u32 %v1190, 4294901760
        %v1471 = vsub.f32 %v1190, %v1470
        %v1472 = vand.u32 %v1471, 4294901760
        %v1473 = vsub.f32 %v1471, %v1472
        %v1474 = vand.u32 %v1473, 4294901760
        %1475 = vmatmul.mubr.f32.gmra.mxu0 %v1474
        %v1476 = vpop.f32.mrf.mxu0
        %v1477 = vadd.f32 0.0, %v1476
        %v1478 = vpop.f32.mrf.mxu0
        %v1479 = vadd.f32 0.0, %v1478
        %1480 = vmatprep.mubr.f32.mxu0 0.0
        %v1481 = vand.u32 %v1193, 4294901760
        %v1482 = vsub.f32 %v1193, %v1481
        %v1483 = vand.u32 %v1482, 4294901760
        %v1484 = vsub.f32 %v1482, %v1483
        %v1485 = vand.u32 %v1484, 4294901760
        %1486 = vmatmul.mubr.f32.gmra.mxu0 %v1485
        %v1487 = vpop.f32.mrf.mxu0
        %v1488 = vadd.f32 0.0, %v1487
        %v1489 = vpop.f32.mrf.mxu0
        %v1490 = vadd.f32 0.0, %v1489
        %1491 = vmatprep.mubr.f32.mxu0 0.0
        %v1492 = vand.u32 %v1196, 4294901760
        %v1493 = vsub.f32 %v1196, %v1492
        %v1494 = vand.u32 %v1493, 4294901760
        %v1495 = vsub.f32 %v1493, %v1494
        %v1496 = vand.u32 %v1495, 4294901760
        %1497 = vmatmul.mubr.f32.gmra.mxu0 %v1496
        %v1498 = vpop.f32.mrf.mxu0
        %v1499 = vadd.f32 0.0, %v1498
        %v1500 = vpop.f32.mrf.mxu0
        %v1501 = vadd.f32 0.0, %v1500
        %1502 = vmatprep.mubr.f32.mxu0 0.0
        %v1503 = vand.u32 %v1199, 4294901760
        %v1504 = vsub.f32 %v1199, %v1503
        %v1505 = vand.u32 %v1504, 4294901760
        %v1506 = vsub.f32 %v1504, %v1505
        %v1507 = vand.u32 %v1506, 4294901760
        %1508 = vmatmul.mubr.f32.gmra.mxu0 %v1507
        %v1509 = vpop.f32.mrf.mxu0
        %v1510 = vadd.f32 0.0, %v1509
        %v1511 = vpop.f32.mrf.mxu0
        %v1512 = vadd.f32 0.0, %v1511
        %1513 = vmatprep.mubr.f32.mxu0 0.0
        %v1514 = vand.u32 %v1202, 4294901760
        %v1515 = vsub.f32 %v1202, %v1514
        %v1516 = vand.u32 %v1515, 4294901760
        %v1517 = vsub.f32 %v1515, %v1516
        %v1518 = vand.u32 %v1517, 4294901760
        %1519 = vmatmul.mubr.f32.gmra.mxu0 %v1518
        %v1520 = vpop.f32.mrf.mxu0
        %v1521 = vadd.f32 0.0, %v1520
        %v1522 = vpop.f32.mrf.mxu0
        %v1523 = vadd.f32 0.0, %v1522
        %1524 = vmatprep.mubr.f32.mxu0 0.0
        %v1525 = vand.u32 %v1205, 4294901760
        %v1526 = vsub.f32 %v1205, %v1525
        %v1527 = vand.u32 %v1526, 4294901760
        %v1528 = vsub.f32 %v1526, %v1527
        %v1529 = vand.u32 %v1528, 4294901760
        %1530 = vmatmul.mubr.f32.gmra.mxu0 %v1529
        %v1531 = vpop.f32.mrf.mxu0
        %v1532 = vadd.f32 0.0, %v1531
        %v1533 = vpop.f32.mrf.mxu0
        %v1534 = vadd.f32 0.0, %v1533
        %1535 = vmatprep.mubr.f32.mxu0 0.0
        %v1536 = vand.u32 %v1208, 4294901760
        %v1537 = vsub.f32 %v1208, %v1536
        %v1538 = vand.u32 %v1537, 4294901760
        %v1539 = vsub.f32 %v1537, %v1538
        %v1540 = vand.u32 %v1539, 4294901760
        %1541 = vmatmul.mubr.f32.gmra.mxu0 %v1540
        %v1542 = vpop.f32.mrf.mxu0
        %v1543 = vadd.f32 0.0, %v1542
        %v1544 = vpop.f32.mrf.mxu0
        %v1545 = vadd.f32 0.0, %v1544
        %1546 = vmatprep.mubr.f32.mxu0 0.0
        %v1547 = vand.u32 %v1211, 4294901760
        %v1548 = vsub.f32 %v1211, %v1547
        %v1549 = vand.u32 %v1548, 4294901760
        %v1550 = vsub.f32 %v1548, %v1549
        %v1551 = vand.u32 %v1550, 4294901760
        %1552 = vmatmul.mubr.f32.gmra.mxu0 %v1551
        %v1553 = vpop.f32.mrf.mxu0
        %v1554 = vadd.f32 0.0, %v1553
        %v1555 = vpop.f32.mrf.mxu0
        %v1556 = vadd.f32 0.0, %v1555
        %1557 = vmatprep.mubr.f32.mxu0 0.0
        %v1558 = vand.u32 %v1214, 4294901760
        %v1559 = vsub.f32 %v1214, %v1558
        %v1560 = vand.u32 %v1559, 4294901760
        %v1561 = vsub.f32 %v1559, %v1560
        %v1562 = vand.u32 %v1561, 4294901760
        %1563 = vmatmul.mubr.f32.gmra.mxu0 %v1562
        %v1564 = vpop.f32.mrf.mxu0
        %v1565 = vadd.f32 0.0, %v1564
        %v1566 = vpop.f32.mrf.mxu0
        %v1567 = vadd.f32 0.0, %v1566
        %1568 = vmatprep.mubr.f32.mxu0 0.0
        %v1569 = vand.u32 %v1217, 4294901760
        %v1570 = vsub.f32 %v1217, %v1569
        %v1571 = vand.u32 %v1570, 4294901760
        %v1572 = vsub.f32 %v1570, %v1571
        %v1573 = vand.u32 %v1572, 4294901760
        %1574 = vmatmul.mubr.f32.gmra.mxu0 %v1573
        %v1575 = vpop.f32.mrf.mxu0
        %v1576 = vadd.f32 0.0, %v1575
        %v1577 = vpop.f32.mrf.mxu0
        %v1578 = vadd.f32 0.0, %v1577
        %1579 = vmatprep.mubr.f32.mxu0 0.0
        %v1580 = vand.u32 %v1220, 4294901760
        %v1581 = vsub.f32 %v1220, %v1580
        %v1582 = vand.u32 %v1581, 4294901760
        %v1583 = vsub.f32 %v1581, %v1582
        %v1584 = vand.u32 %v1583, 4294901760
        %1585 = vmatmul.mubr.f32.gmra.mxu0 %v1584
        %v1586 = vpop.f32.mrf.mxu0
        %v1587 = vadd.f32 0.0, %v1586
        %v1588 = vpop.f32.mrf.mxu0
        %v1589 = vadd.f32 0.0, %v1588
        %1590 = vmatprep.mubr.f32.mxu0 0.0
        %v1591 = vand.u32 %v1223, 4294901760
        %v1592 = vsub.f32 %v1223, %v1591
        %v1593 = vand.u32 %v1592, 4294901760
        %v1594 = vsub.f32 %v1592, %v1593
        %v1595 = vand.u32 %v1594, 4294901760
        %1596 = vmatmul.mubr.f32.gmra.mxu0 %v1595
        %v1597 = vpop.f32.mrf.mxu0
        %v1598 = vadd.f32 0.0, %v1597
        %v1599 = vpop.f32.mrf.mxu0
        %v1600 = vadd.f32 0.0, %v1599
        %1601 = vdwg.mxu0
        %1602 = vmatprep.subr.mxu0 0.0
        %1603 = vmatpush1.msra.mxu0 0.0
        %1604 = vmatprep.subr.mxu0 0.0
        %1605 = vmatpush1.msra.mxu0 0.0
        %1606 = vmatprep.subr.mxu0 0.0
        %1607 = vmatpush1.msra.mxu0 0.0
        %1608 = vmatprep.subr.mxu0 0.0
        %1609 = vmatpush1.msra.mxu0 0.0
        %1610 = vmatprep.subr.mxu0 0.0
        %1611 = vmatpush1.msra.mxu0 0.0
        %1612 = vmatprep.subr.mxu0 0.0
        %1613 = vmatpush1.msra.mxu0 0.0
        %1614 = vmatprep.subr.mxu0 0.0
        %1615 = vmatpush1.msra.mxu0 0.0
        %1616 = vmatprep.subr.mxu0 0.0
        %1617 = vmatpush1.msra.mxu0 0.0
        %1618 = vmatprep.subr.mxu0 0.0
        %1619 = vmatpush1.msra.mxu0 0.0
        %1620 = vmatprep.subr.mxu0 0.0
        %1621 = vmatpush1.msra.mxu0 0.0
        %1622 = vmatprep.subr.mxu0 0.0
        %1623 = vmatpush1.msra.mxu0 0.0
        %1624 = vmatprep.subr.mxu0 0.0
        %1625 = vmatpush1.msra.mxu0 0.0
        %1626 = vmatprep.subr.mxu0 0.0
        %1627 = vmatpush1.msra.mxu0 0.0
        %1628 = vmatprep.subr.mxu0 0.0
        %1629 = vmatpush1.msra.mxu0 0.0
        %v1630 = vand.u32 %v1140, 4294901760
        %v1631 = vsub.f32 %v1140, %v1630
        %v1632 = vand.u32 %v1631, 4294901760
        %v1633 = vsub.f32 %v1631, %v1632
        %v1634 = vand.u32 %v1633, 4294901760
        %1635 = vmatprep.subr.mxu0 %v1634
        %v1636 = vand.u32 %v1139, 4294901760
        %v1637 = vsub.f32 %v1139, %v1636
        %v1638 = vand.u32 %v1637, 4294901760
        %v1639 = vsub.f32 %v1637, %v1638
        %v1640 = vand.u32 %v1639, 4294901760
        %1641 = vmatpush1.msra.mxu0 %v1640
        %v1642 = vand.u32 %v1138, 4294901760
        %v1643 = vsub.f32 %v1138, %v1642
        %v1644 = vand.u32 %v1643, 4294901760
        %v1645 = vsub.f32 %v1643, %v1644
        %v1646 = vand.u32 %v1645, 4294901760
        %1647 = vmatprep.subr.mxu0 %v1646
        %v1648 = vand.u32 %v1137, 4294901760
        %v1649 = vsub.f32 %v1137, %v1648
        %v1650 = vand.u32 %v1649, 4294901760
        %v1651 = vsub.f32 %v1649, %v1650
        %v1652 = vand.u32 %v1651, 4294901760
        %1653 = vmatpush1.msra.mxu0 %v1652
        %1654 = vmatprep.subr.mxu0 0.0
        %1655 = vmatpush2.msra.mxu0 0.0
        %1656 = vmatprep.subr.mxu0 0.0
        %1657 = vmatpush2.msra.mxu0 0.0
        %1658 = vmatprep.subr.mxu0 0.0
        %1659 = vmatpush2.msra.mxu0 0.0
        %1660 = vmatprep.subr.mxu0 0.0
        %1661 = vmatpush2.msra.mxu0 0.0
        %1662 = vmatprep.subr.mxu0 0.0
        %1663 = vmatpush2.msra.mxu0 0.0
        %1664 = vmatprep.subr.mxu0 0.0
        %1665 = vmatpush2.msra.mxu0 0.0
        %1666 = vmatprep.subr.mxu0 0.0
        %1667 = vmatpush2.msra.mxu0 0.0
        %1668 = vmatprep.subr.mxu0 0.0
        %1669 = vmatpush2.msra.mxu0 0.0
        %1670 = vmatprep.subr.mxu0 0.0
        %1671 = vmatpush2.msra.mxu0 0.0
        %1672 = vmatprep.subr.mxu0 0.0
        %1673 = vmatpush2.msra.mxu0 0.0
        %1674 = vmatprep.subr.mxu0 0.0
        %1675 = vmatpush2.msra.mxu0 0.0
        %1676 = vmatprep.subr.mxu0 0.0
        %1677 = vmatpush2.msra.mxu0 0.0
        %1678 = vmatprep.subr.mxu0 0.0
        %1679 = vmatpush2.msra.mxu0 0.0
        %1680 = vmatprep.subr.mxu0 0.0
        %1681 = vmatpush2.msra.mxu0 0.0
        %1682 = vmatprep.subr.mxu0 0.0
        %1683 = vmatpush2.msra.mxu0 0.0
        %1684 = vmatprep.subr.mxu0 0.0
        %1685 = vmatpush2.msra.mxu0 0.0
        %1686 = vmatprep.mubr.f32.mxu0 0.0
        %v1687 = vand.u32 %v1142, 4294901760
        %1688 = vmatmul.mubr.f32.gmra.mxu0 %v1687
        %v1689 = vpop.f32.mrf.mxu0
        %v1690 = vadd.f32 %v1301, %v1689
        %v1691 = vpop.f32.mrf.mxu0
        %v1692 = vadd.f32 %v1303, %v1691
        %1693 = vmatprep.mubr.f32.mxu0 0.0
        %v1694 = vand.u32 %v1145, 4294901760
        %1695 = vmatmul.mubr.f32.gmra.mxu0 %v1694
        %v1696 = vpop.f32.mrf.mxu0
        %v1697 = vadd.f32 %v1312, %v1696
        %v1698 = vpop.f32.mrf.mxu0
        %v1699 = vadd.f32 %v1314, %v1698
        %1700 = vmatprep.mubr.f32.mxu0 0.0
        %v1701 = vand.u32 %v1148, 4294901760
        %1702 = vmatmul.mubr.f32.gmra.mxu0 %v1701
        %v1703 = vpop.f32.mrf.mxu0
        %v1704 = vadd.f32 %v1323, %v1703
        %v1705 = vpop.f32.mrf.mxu0
        %v1706 = vadd.f32 %v1325, %v1705
        %1707 = vmatprep.mubr.f32.mxu0 0.0
        %v1708 = vand.u32 %v1151, 4294901760
        %1709 = vmatmul.mubr.f32.gmra.mxu0 %v1708
        %v1710 = vpop.f32.mrf.mxu0
        %v1711 = vadd.f32 %v1334, %v1710
        %v1712 = vpop.f32.mrf.mxu0
        %v1713 = vadd.f32 %v1336, %v1712
        %1714 = vmatprep.mubr.f32.mxu0 0.0
        %v1715 = vand.u32 %v1154, 4294901760
        %1716 = vmatmul.mubr.f32.gmra.mxu0 %v1715
        %v1717 = vpop.f32.mrf.mxu0
        %v1718 = vadd.f32 %v1345, %v1717
        %v1719 = vpop.f32.mrf.mxu0
        %v1720 = vadd.f32 %v1347, %v1719
        %1721 = vmatprep.mubr.f32.mxu0 0.0
        %v1722 = vand.u32 %v1157, 4294901760
        %1723 = vmatmul.mubr.f32.gmra.mxu0 %v1722
        %v1724 = vpop.f32.mrf.mxu0
        %v1725 = vadd.f32 %v1356, %v1724
        %v1726 = vpop.f32.mrf.mxu0
        %v1727 = vadd.f32 %v1358, %v1726
        %1728 = vmatprep.mubr.f32.mxu0 0.0
        %v1729 = vand.u32 %v1160, 4294901760
        %1730 = vmatmul.mubr.f32.gmra.mxu0 %v1729
        %v1731 = vpop.f32.mrf.mxu0
        %v1732 = vadd.f32 %v1367, %v1731
        %v1733 = vpop.f32.mrf.mxu0
        %v1734 = vadd.f32 %v1369, %v1733
        %1735 = vmatprep.mubr.f32.mxu0 0.0
        %v1736 = vand.u32 %v1163, 4294901760
        %1737 = vmatmul.mubr.f32.gmra.mxu0 %v1736
        %v1738 = vpop.f32.mrf.mxu0
        %v1739 = vadd.f32 %v1378, %v1738
        %v1740 = vpop.f32.mrf.mxu0
        %v1741 = vadd.f32 %v1380, %v1740
        %1742 = vmatprep.mubr.f32.mxu0 0.0
        %v1743 = vand.u32 %v1166, 4294901760
        %1744 = vmatmul.mubr.f32.gmra.mxu0 %v1743
        %v1745 = vpop.f32.mrf.mxu0
        %v1746 = vadd.f32 %v1389, %v1745
        %v1747 = vpop.f32.mrf.mxu0
        %v1748 = vadd.f32 %v1391, %v1747
        %1749 = vmatprep.mubr.f32.mxu0 0.0
        %v1750 = vand.u32 %v1169, 4294901760
        %1751 = vmatmul.mubr.f32.gmra.mxu0 %v1750
        %v1752 = vpop.f32.mrf.mxu0
        %v1753 = vadd.f32 %v1400, %v1752
        %v1754 = vpop.f32.mrf.mxu0
        %v1755 = vadd.f32 %v1402, %v1754
        %1756 = vmatprep.mubr.f32.mxu0 0.0
        %v1757 = vand.u32 %v1172, 4294901760
        %1758 = vmatmul.mubr.f32.gmra.mxu0 %v1757
        %v1759 = vpop.f32.mrf.mxu0
        %v1760 = vadd.f32 %v1411, %v1759
        %v1761 = vpop.f32.mrf.mxu0
        %v1762 = vadd.f32 %v1413, %v1761
        %1763 = vmatprep.mubr.f32.mxu0 0.0
        %v1764 = vand.u32 %v1175, 4294901760
        %1765 = vmatmul.mubr.f32.gmra.mxu0 %v1764
        %v1766 = vpop.f32.mrf.mxu0
        %v1767 = vadd.f32 %v1422, %v1766
        %v1768 = vpop.f32.mrf.mxu0
        %v1769 = vadd.f32 %v1424, %v1768
        %1770 = vmatprep.mubr.f32.mxu0 0.0
        %v1771 = vand.u32 %v1178, 4294901760
        %1772 = vmatmul.mubr.f32.gmra.mxu0 %v1771
        %v1773 = vpop.f32.mrf.mxu0
        %v1774 = vadd.f32 %v1433, %v1773
        %v1775 = vpop.f32.mrf.mxu0
        %v1776 = vadd.f32 %v1435, %v1775
        %1777 = vmatprep.mubr.f32.mxu0 0.0
        %v1778 = vand.u32 %v1181, 4294901760
        %1779 = vmatmul.mubr.f32.gmra.mxu0 %v1778
        %v1780 = vpop.f32.mrf.mxu0
        %v1781 = vadd.f32 %v1444, %v1780
        %v1782 = vpop.f32.mrf.mxu0
        %v1783 = vadd.f32 %v1446, %v1782
        %1784 = vmatprep.mubr.f32.mxu0 0.0
        %v1785 = vand.u32 %v1184, 4294901760
        %1786 = vmatmul.mubr.f32.gmra.mxu0 %v1785
        %v1787 = vpop.f32.mrf.mxu0
        %v1788 = vadd.f32 %v1455, %v1787
        %v1789 = vpop.f32.mrf.mxu0
        %v1790 = vadd.f32 %v1457, %v1789
        %1791 = vmatprep.mubr.f32.mxu0 0.0
        %v1792 = vand.u32 %v1187, 4294901760
        %1793 = vmatmul.mubr.f32.gmra.mxu0 %v1792
        %v1794 = vpop.f32.mrf.mxu0
        %v1795 = vadd.f32 %v1466, %v1794
        %v1796 = vpop.f32.mrf.mxu0
        %v1797 = vadd.f32 %v1468, %v1796
        %1798 = vmatprep.mubr.f32.mxu0 0.0
        %v1799 = vand.u32 %v1190, 4294901760
        %1800 = vmatmul.mubr.f32.gmra.mxu0 %v1799
        %v1801 = vpop.f32.mrf.mxu0
        %v1802 = vadd.f32 %v1477, %v1801
        %v1803 = vpop.f32.mrf.mxu0
        %v1804 = vadd.f32 %v1479, %v1803
        %1805 = vmatprep.mubr.f32.mxu0 0.0
        %v1806 = vand.u32 %v1193, 4294901760
        %1807 = vmatmul.mubr.f32.gmra.mxu0 %v1806
        %v1808 = vpop.f32.mrf.mxu0
        %v1809 = vadd.f32 %v1488, %v1808
        %v1810 = vpop.f32.mrf.mxu0
        %v1811 = vadd.f32 %v1490, %v1810
        %1812 = vmatprep.mubr.f32.mxu0 0.0
        %v1813 = vand.u32 %v1196, 4294901760
        %1814 = vmatmul.mubr.f32.gmra.mxu0 %v1813
        %v1815 = vpop.f32.mrf.mxu0
        %v1816 = vadd.f32 %v1499, %v1815
        %v1817 = vpop.f32.mrf.mxu0
        %v1818 = vadd.f32 %v1501, %v1817
        %1819 = vmatprep.mubr.f32.mxu0 0.0
        %v1820 = vand.u32 %v1199, 4294901760
        %1821 = vmatmul.mubr.f32.gmra.mxu0 %v1820
        %v1822 = vpop.f32.mrf.mxu0
        %v1823 = vadd.f32 %v1510, %v1822
        %v1824 = vpop.f32.mrf.mxu0
        %v1825 = vadd.f32 %v1512, %v1824
        %1826 = vmatprep.mubr.f32.mxu0 0.0
        %v1827 = vand.u32 %v1202, 4294901760
        %1828 = vmatmul.mubr.f32.gmra.mxu0 %v1827
        %v1829 = vpop.f32.mrf.mxu0
        %v1830 = vadd.f32 %v1521, %v1829
        %v1831 = vpop.f32.mrf.mxu0
        %v1832 = vadd.f32 %v1523, %v1831
        %1833 = vmatprep.mubr.f32.mxu0 0.0
        %v1834 = vand.u32 %v1205, 4294901760
        %1835 = vmatmul.mubr.f32.gmra.mxu0 %v1834
        %v1836 = vpop.f32.mrf.mxu0
        %v1837 = vadd.f32 %v1532, %v1836
        %v1838 = vpop.f32.mrf.mxu0
        %v1839 = vadd.f32 %v1534, %v1838
        %1840 = vmatprep.mubr.f32.mxu0 0.0
        %v1841 = vand.u32 %v1208, 4294901760
        %1842 = vmatmul.mubr.f32.gmra.mxu0 %v1841
        %v1843 = vpop.f32.mrf.mxu0
        %v1844 = vadd.f32 %v1543, %v1843
        %v1845 = vpop.f32.mrf.mxu0
        %v1846 = vadd.f32 %v1545, %v1845
        %1847 = vmatprep.mubr.f32.mxu0 0.0
        %v1848 = vand.u32 %v1211, 4294901760
        %1849 = vmatmul.mubr.f32.gmra.mxu0 %v1848
        %v1850 = vpop.f32.mrf.mxu0
        %v1851 = vadd.f32 %v1554, %v1850
        %v1852 = vpop.f32.mrf.mxu0
        %v1853 = vadd.f32 %v1556, %v1852
        %1854 = vmatprep.mubr.f32.mxu0 0.0
        %v1855 = vand.u32 %v1214, 4294901760
        %1856 = vmatmul.mubr.f32.gmra.mxu0 %v1855
        %v1857 = vpop.f32.mrf.mxu0
        %v1858 = vadd.f32 %v1565, %v1857
        %v1859 = vpop.f32.mrf.mxu0
        %v1860 = vadd.f32 %v1567, %v1859
        %1861 = vmatprep.mubr.f32.mxu0 0.0
        %v1862 = vand.u32 %v1217, 4294901760
        %1863 = vmatmul.mubr.f32.gmra.mxu0 %v1862
        %v1864 = vpop.f32.mrf.mxu0
        %v1865 = vadd.f32 %v1576, %v1864
        %v1866 = vpop.f32.mrf.mxu0
        %v1867 = vadd.f32 %v1578, %v1866
        %1868 = vmatprep.mubr.f32.mxu0 0.0
        %v1869 = vand.u32 %v1220, 4294901760
        %1870 = vmatmul.mubr.f32.gmra.mxu0 %v1869
        %v1871 = vpop.f32.mrf.mxu0
        %v1872 = vadd.f32 %v1587, %v1871
        %v1873 = vpop.f32.mrf.mxu0
        %v1874 = vadd.f32 %v1589, %v1873
        %1875 = vmatprep.mubr.f32.mxu0 0.0
        %v1876 = vand.u32 %v1223, 4294901760
        %1877 = vmatmul.mubr.f32.gmra.mxu0 %v1876
        %v1878 = vpop.f32.mrf.mxu0
        %v1879 = vadd.f32 %v1598, %v1878
        %v1880 = vpop.f32.mrf.mxu0
        %v1881 = vadd.f32 %v1600, %v1880
        %1882 = vdwg.mxu0
        %1883 = vmatprep.subr.mxu0 0.0
        %1884 = vmatpush1.msra.mxu0 0.0
        %1885 = vmatprep.subr.mxu0 0.0
        %1886 = vmatpush1.msra.mxu0 0.0
        %1887 = vmatprep.subr.mxu0 0.0
        %1888 = vmatpush1.msra.mxu0 0.0
        %1889 = vmatprep.subr.mxu0 0.0
        %1890 = vmatpush1.msra.mxu0 0.0
        %1891 = vmatprep.subr.mxu0 0.0
        %1892 = vmatpush1.msra.mxu0 0.0
        %1893 = vmatprep.subr.mxu0 0.0
        %1894 = vmatpush1.msra.mxu0 0.0
        %1895 = vmatprep.subr.mxu0 0.0
        %1896 = vmatpush1.msra.mxu0 0.0
        %1897 = vmatprep.subr.mxu0 0.0
        %1898 = vmatpush1.msra.mxu0 0.0
        %1899 = vmatprep.subr.mxu0 0.0
        %1900 = vmatpush1.msra.mxu0 0.0
        %1901 = vmatprep.subr.mxu0 0.0
        %1902 = vmatpush1.msra.mxu0 0.0
        %1903 = vmatprep.subr.mxu0 0.0
        %1904 = vmatpush1.msra.mxu0 0.0
        %1905 = vmatprep.subr.mxu0 0.0
        %1906 = vmatpush1.msra.mxu0 0.0
        %1907 = vmatprep.subr.mxu0 0.0
        %1908 = vmatpush1.msra.mxu0 0.0
        %1909 = vmatprep.subr.mxu0 0.0
        %1910 = vmatpush1.msra.mxu0 0.0
        %v1911 = vand.u32 %v1140, 4294901760
        %v1912 = vsub.f32 %v1140, %v1911
        %1913 = vmatprep.subr.mxu0 %v1912
        %v1914 = vand.u32 %v1139, 4294901760
        %v1915 = vsub.f32 %v1139, %v1914
        %1916 = vmatpush1.msra.mxu0 %v1915
        %v1917 = vand.u32 %v1138, 4294901760
        %v1918 = vsub.f32 %v1138, %v1917
        %1919 = vmatprep.subr.mxu0 %v1918
        %v1920 = vand.u32 %v1137, 4294901760
        %v1921 = vsub.f32 %v1137, %v1920
        %1922 = vmatpush1.msra.mxu0 %v1921
        %1923 = vmatprep.subr.mxu0 0.0
        %1924 = vmatpush2.msra.mxu0 0.0
        %1925 = vmatprep.subr.mxu0 0.0
        %1926 = vmatpush2.msra.mxu0 0.0
        %1927 = vmatprep.subr.mxu0 0.0
        %1928 = vmatpush2.msra.mxu0 0.0
        %1929 = vmatprep.subr.mxu0 0.0
        %1930 = vmatpush2.msra.mxu0 0.0
        %1931 = vmatprep.subr.mxu0 0.0
        %1932 = vmatpush2.msra.mxu0 0.0
        %1933 = vmatprep.subr.mxu0 0.0
        %1934 = vmatpush2.msra.mxu0 0.0
        %1935 = vmatprep.subr.mxu0 0.0
        %1936 = vmatpush2.msra.mxu0 0.0
        %1937 = vmatprep.subr.mxu0 0.0
        %1938 = vmatpush2.msra.mxu0 0.0
        %1939 = vmatprep.subr.mxu0 0.0
        %1940 = vmatpush2.msra.mxu0 0.0
        %1941 = vmatprep.subr.mxu0 0.0
        %1942 = vmatpush2.msra.mxu0 0.0
        %1943 = vmatprep.subr.mxu0 0.0
        %1944 = vmatpush2.msra.mxu0 0.0
        %1945 = vmatprep.subr.mxu0 0.0
        %1946 = vmatpush2.msra.mxu0 0.0
        %1947 = vmatprep.subr.mxu0 0.0
        %1948 = vmatpush2.msra.mxu0 0.0
        %1949 = vmatprep.subr.mxu0 0.0
        %1950 = vmatpush2.msra.mxu0 0.0
        %1951 = vmatprep.subr.mxu0 0.0
        %1952 = vmatpush2.msra.mxu0 0.0
        %1953 = vmatprep.subr.mxu0 0.0
        %1954 = vmatpush2.msra.mxu0 0.0
        %1955 = vmatprep.mubr.f32.mxu0 0.0
        %v1956 = vand.u32 %v1142, 4294901760
        %v1957 = vsub.f32 %v1142, %v1956
        %1958 = vmatmul.mubr.f32.gmra.mxu0 %v1957
        %v1959 = vpop.f32.mrf.mxu0
        %v1960 = vadd.f32 %v1690, %v1959
        %v1961 = vpop.f32.mrf.mxu0
        %v1962 = vadd.f32 %v1692, %v1961
        %1963 = vmatprep.mubr.f32.mxu0 0.0
        %v1964 = vand.u32 %v1145, 4294901760
        %v1965 = vsub.f32 %v1145, %v1964
        %1966 = vmatmul.mubr.f32.gmra.mxu0 %v1965
        %v1967 = vpop.f32.mrf.mxu0
        %v1968 = vadd.f32 %v1697, %v1967
        %v1969 = vpop.f32.mrf.mxu0
        %v1970 = vadd.f32 %v1699, %v1969
        %1971 = vmatprep.mubr.f32.mxu0 0.0
        %v1972 = vand.u32 %v1148, 4294901760
        %v1973 = vsub.f32 %v1148, %v1972
        %1974 = vmatmul.mubr.f32.gmra.mxu0 %v1973
        %v1975 = vpop.f32.mrf.mxu0
        %v1976 = vadd.f32 %v1704, %v1975
        %v1977 = vpop.f32.mrf.mxu0
        %v1978 = vadd.f32 %v1706, %v1977
        %1979 = vmatprep.mubr.f32.mxu0 0.0
        %v1980 = vand.u32 %v1151, 4294901760
        %v1981 = vsub.f32 %v1151, %v1980
        %1982 = vmatmul.mubr.f32.gmra.mxu0 %v1981
        %v1983 = vpop.f32.mrf.mxu0
        %v1984 = vadd.f32 %v1711, %v1983
        %v1985 = vpop.f32.mrf.mxu0
        %v1986 = vadd.f32 %v1713, %v1985
        %1987 = vmatprep.mubr.f32.mxu0 0.0
        %v1988 = vand.u32 %v1154, 4294901760
        %v1989 = vsub.f32 %v1154, %v1988
        %1990 = vmatmul.mubr.f32.gmra.mxu0 %v1989
        %v1991 = vpop.f32.mrf.mxu0
        %v1992 = vadd.f32 %v1718, %v1991
        %v1993 = vpop.f32.mrf.mxu0
        %v1994 = vadd.f32 %v1720, %v1993
        %1995 = vmatprep.mubr.f32.mxu0 0.0
        %v1996 = vand.u32 %v1157, 4294901760
        %v1997 = vsub.f32 %v1157, %v1996
        %1998 = vmatmul.mubr.f32.gmra.mxu0 %v1997
        %v1999 = vpop.f32.mrf.mxu0
        %v2000 = vadd.f32 %v1725, %v1999
        %v2001 = vpop.f32.mrf.mxu0
        %v2002 = vadd.f32 %v1727, %v2001
        %2003 = vmatprep.mubr.f32.mxu0 0.0
        %v2004 = vand.u32 %v1160, 4294901760
        %v2005 = vsub.f32 %v1160, %v2004
        %2006 = vmatmul.mubr.f32.gmra.mxu0 %v2005
        %v2007 = vpop.f32.mrf.mxu0
        %v2008 = vadd.f32 %v1732, %v2007
        %v2009 = vpop.f32.mrf.mxu0
        %v2010 = vadd.f32 %v1734, %v2009
        %2011 = vmatprep.mubr.f32.mxu0 0.0
        %v2012 = vand.u32 %v1163, 4294901760
        %v2013 = vsub.f32 %v1163, %v2012
        %2014 = vmatmul.mubr.f32.gmra.mxu0 %v2013
        %v2015 = vpop.f32.mrf.mxu0
        %v2016 = vadd.f32 %v1739, %v2015
        %v2017 = vpop.f32.mrf.mxu0
        %v2018 = vadd.f32 %v1741, %v2017
        %2019 = vmatprep.mubr.f32.mxu0 0.0
        %v2020 = vand.u32 %v1166, 4294901760
        %v2021 = vsub.f32 %v1166, %v2020
        %2022 = vmatmul.mubr.f32.gmra.mxu0 %v2021
        %v2023 = vpop.f32.mrf.mxu0
        %v2024 = vadd.f32 %v1746, %v2023
        %v2025 = vpop.f32.mrf.mxu0
        %v2026 = vadd.f32 %v1748, %v2025
        %2027 = vmatprep.mubr.f32.mxu0 0.0
        %v2028 = vand.u32 %v1169, 4294901760
        %v2029 = vsub.f32 %v1169, %v2028
        %2030 = vmatmul.mubr.f32.gmra.mxu0 %v2029
        %v2031 = vpop.f32.mrf.mxu0
        %v2032 = vadd.f32 %v1753, %v2031
        %v2033 = vpop.f32.mrf.mxu0
        %v2034 = vadd.f32 %v1755, %v2033
        %2035 = vmatprep.mubr.f32.mxu0 0.0
        %v2036 = vand.u32 %v1172, 4294901760
        %v2037 = vsub.f32 %v1172, %v2036
        %2038 = vmatmul.mubr.f32.gmra.mxu0 %v2037
        %v2039 = vpop.f32.mrf.mxu0
        %v2040 = vadd.f32 %v1760, %v2039
        %v2041 = vpop.f32.mrf.mxu0
        %v2042 = vadd.f32 %v1762, %v2041
        %2043 = vmatprep.mubr.f32.mxu0 0.0
        %v2044 = vand.u32 %v1175, 4294901760
        %v2045 = vsub.f32 %v1175, %v2044
        %2046 = vmatmul.mubr.f32.gmra.mxu0 %v2045
        %v2047 = vpop.f32.mrf.mxu0
        %v2048 = vadd.f32 %v1767, %v2047
        %v2049 = vpop.f32.mrf.mxu0
        %v2050 = vadd.f32 %v1769, %v2049
        %2051 = vmatprep.mubr.f32.mxu0 0.0
        %v2052 = vand.u32 %v1178, 4294901760
        %v2053 = vsub.f32 %v1178, %v2052
        %2054 = vmatmul.mubr.f32.gmra.mxu0 %v2053
        %v2055 = vpop.f32.mrf.mxu0
        %v2056 = vadd.f32 %v1774, %v2055
        %v2057 = vpop.f32.mrf.mxu0
        %v2058 = vadd.f32 %v1776, %v2057
        %2059 = vmatprep.mubr.f32.mxu0 0.0
        %v2060 = vand.u32 %v1181, 4294901760
        %v2061 = vsub.f32 %v1181, %v2060
        %2062 = vmatmul.mubr.f32.gmra.mxu0 %v2061
        %v2063 = vpop.f32.mrf.mxu0
        %v2064 = vadd.f32 %v1781, %v2063
        %v2065 = vpop.f32.mrf.mxu0
        %v2066 = vadd.f32 %v1783, %v2065
        %2067 = vmatprep.mubr.f32.mxu0 0.0
        %v2068 = vand.u32 %v1184, 4294901760
        %v2069 = vsub.f32 %v1184, %v2068
        %2070 = vmatmul.mubr.f32.gmra.mxu0 %v2069
        %v2071 = vpop.f32.mrf.mxu0
        %v2072 = vadd.f32 %v1788, %v2071
        %v2073 = vpop.f32.mrf.mxu0
        %v2074 = vadd.f32 %v1790, %v2073
        %2075 = vmatprep.mubr.f32.mxu0 0.0
        %v2076 = vand.u32 %v1187, 4294901760
        %v2077 = vsub.f32 %v1187, %v2076
        %2078 = vmatmul.mubr.f32.gmra.mxu0 %v2077
        %v2079 = vpop.f32.mrf.mxu0
        %v2080 = vadd.f32 %v1795, %v2079
        %v2081 = vpop.f32.mrf.mxu0
        %v2082 = vadd.f32 %v1797, %v2081
        %2083 = vmatprep.mubr.f32.mxu0 0.0
        %v2084 = vand.u32 %v1190, 4294901760
        %v2085 = vsub.f32 %v1190, %v2084
        %2086 = vmatmul.mubr.f32.gmra.mxu0 %v2085
        %v2087 = vpop.f32.mrf.mxu0
        %v2088 = vadd.f32 %v1802, %v2087
        %v2089 = vpop.f32.mrf.mxu0
        %v2090 = vadd.f32 %v1804, %v2089
        %2091 = vmatprep.mubr.f32.mxu0 0.0
        %v2092 = vand.u32 %v1193, 4294901760
        %v2093 = vsub.f32 %v1193, %v2092
        %2094 = vmatmul.mubr.f32.gmra.mxu0 %v2093
        %v2095 = vpop.f32.mrf.mxu0
        %v2096 = vadd.f32 %v1809, %v2095
        %v2097 = vpop.f32.mrf.mxu0
        %v2098 = vadd.f32 %v1811, %v2097
        %2099 = vmatprep.mubr.f32.mxu0 0.0
        %v2100 = vand.u32 %v1196, 4294901760
        %v2101 = vsub.f32 %v1196, %v2100
        %2102 = vmatmul.mubr.f32.gmra.mxu0 %v2101
        %v2103 = vpop.f32.mrf.mxu0
        %v2104 = vadd.f32 %v1816, %v2103
        %v2105 = vpop.f32.mrf.mxu0
        %v2106 = vadd.f32 %v1818, %v2105
        %2107 = vmatprep.mubr.f32.mxu0 0.0
        %v2108 = vand.u32 %v1199, 4294901760
        %v2109 = vsub.f32 %v1199, %v2108
        %2110 = vmatmul.mubr.f32.gmra.mxu0 %v2109
        %v2111 = vpop.f32.mrf.mxu0
        %v2112 = vadd.f32 %v1823, %v2111
        %v2113 = vpop.f32.mrf.mxu0
        %v2114 = vadd.f32 %v1825, %v2113
        %2115 = vmatprep.mubr.f32.mxu0 0.0
        %v2116 = vand.u32 %v1202, 4294901760
        %v2117 = vsub.f32 %v1202, %v2116
        %2118 = vmatmul.mubr.f32.gmra.mxu0 %v2117
        %v2119 = vpop.f32.mrf.mxu0
        %v2120 = vadd.f32 %v1830, %v2119
        %v2121 = vpop.f32.mrf.mxu0
        %v2122 = vadd.f32 %v1832, %v2121
        %2123 = vmatprep.mubr.f32.mxu0 0.0
        %v2124 = vand.u32 %v1205, 4294901760
        %v2125 = vsub.f32 %v1205, %v2124
        %2126 = vmatmul.mubr.f32.gmra.mxu0 %v2125
        %v2127 = vpop.f32.mrf.mxu0
        %v2128 = vadd.f32 %v1837, %v2127
        %v2129 = vpop.f32.mrf.mxu0
        %v2130 = vadd.f32 %v1839, %v2129
        %2131 = vmatprep.mubr.f32.mxu0 0.0
        %v2132 = vand.u32 %v1208, 4294901760
        %v2133 = vsub.f32 %v1208, %v2132
        %2134 = vmatmul.mubr.f32.gmra.mxu0 %v2133
        %v2135 = vpop.f32.mrf.mxu0
        %v2136 = vadd.f32 %v1844, %v2135
        %v2137 = vpop.f32.mrf.mxu0
        %v2138 = vadd.f32 %v1846, %v2137
        %2139 = vmatprep.mubr.f32.mxu0 0.0
        %v2140 = vand.u32 %v1211, 4294901760
        %v2141 = vsub.f32 %v1211, %v2140
        %2142 = vmatmul.mubr.f32.gmra.mxu0 %v2141
        %v2143 = vpop.f32.mrf.mxu0
        %v2144 = vadd.f32 %v1851, %v2143
        %v2145 = vpop.f32.mrf.mxu0
        %v2146 = vadd.f32 %v1853, %v2145
        %2147 = vmatprep.mubr.f32.mxu0 0.0
        %v2148 = vand.u32 %v1214, 4294901760
        %v2149 = vsub.f32 %v1214, %v2148
        %2150 = vmatmul.mubr.f32.gmra.mxu0 %v2149
        %v2151 = vpop.f32.mrf.mxu0
        %v2152 = vadd.f32 %v1858, %v2151
        %v2153 = vpop.f32.mrf.mxu0
        %v2154 = vadd.f32 %v1860, %v2153
        %2155 = vmatprep.mubr.f32.mxu0 0.0
        %v2156 = vand.u32 %v1217, 4294901760
        %v2157 = vsub.f32 %v1217, %v2156
        %2158 = vmatmul.mubr.f32.gmra.mxu0 %v2157
        %v2159 = vpop.f32.mrf.mxu0
        %v2160 = vadd.f32 %v1865, %v2159
        %v2161 = vpop.f32.mrf.mxu0
        %v2162 = vadd.f32 %v1867, %v2161
        %2163 = vmatprep.mubr.f32.mxu0 0.0
        %v2164 = vand.u32 %v1220, 4294901760
        %v2165 = vsub.f32 %v1220, %v2164
        %2166 = vmatmul.mubr.f32.gmra.mxu0 %v2165
        %v2167 = vpop.f32.mrf.mxu0
        %v2168 = vadd.f32 %v1872, %v2167
        %v2169 = vpop.f32.mrf.mxu0
        %v2170 = vadd.f32 %v1874, %v2169
        %2171 = vmatprep.mubr.f32.mxu0 0.0
        %v2172 = vand.u32 %v1223, 4294901760
        %v2173 = vsub.f32 %v1223, %v2172
        %2174 = vmatmul.mubr.f32.gmra.mxu0 %v2173
        %v2175 = vpop.f32.mrf.mxu0
        %v2176 = vadd.f32 %v1879, %v2175
        %v2177 = vpop.f32.mrf.mxu0
        %v2178 = vadd.f32 %v1881, %v2177
        %2179 = vdwg.mxu0
        %2180 = vmatprep.subr.mxu0 0.0
        %2181 = vmatpush1.msra.mxu0 0.0
        %2182 = vmatprep.subr.mxu0 0.0
        %2183 = vmatpush1.msra.mxu0 0.0
        %2184 = vmatprep.subr.mxu0 0.0
        %2185 = vmatpush1.msra.mxu0 0.0
        %2186 = vmatprep.subr.mxu0 0.0
        %2187 = vmatpush1.msra.mxu0 0.0
        %2188 = vmatprep.subr.mxu0 0.0
        %2189 = vmatpush1.msra.mxu0 0.0
        %2190 = vmatprep.subr.mxu0 0.0
        %2191 = vmatpush1.msra.mxu0 0.0
        %2192 = vmatprep.subr.mxu0 0.0
        %2193 = vmatpush1.msra.mxu0 0.0
        %2194 = vmatprep.subr.mxu0 0.0
        %2195 = vmatpush1.msra.mxu0 0.0
        %2196 = vmatprep.subr.mxu0 0.0
        %2197 = vmatpush1.msra.mxu0 0.0
        %2198 = vmatprep.subr.mxu0 0.0
        %2199 = vmatpush1.msra.mxu0 0.0
        %2200 = vmatprep.subr.mxu0 0.0
        %2201 = vmatpush1.msra.mxu0 0.0
        %2202 = vmatprep.subr.mxu0 0.0
        %2203 = vmatpush1.msra.mxu0 0.0
        %2204 = vmatprep.subr.mxu0 0.0
        %2205 = vmatpush1.msra.mxu0 0.0
        %2206 = vmatprep.subr.mxu0 0.0
        %2207 = vmatpush1.msra.mxu0 0.0
        %v2208 = vand.u32 %v1140, 4294901760
        %2209 = vmatprep.subr.mxu0 %v2208
        %v2210 = vand.u32 %v1139, 4294901760
        %2211 = vmatpush1.msra.mxu0 %v2210
        %v2212 = vand.u32 %v1138, 4294901760
        %2213 = vmatprep.subr.mxu0 %v2212
        %v2214 = vand.u32 %v1137, 4294901760
        %2215 = vmatpush1.msra.mxu0 %v2214
        %2216 = vmatprep.subr.mxu0 0.0
        %2217 = vmatpush2.msra.mxu0 0.0
        %2218 = vmatprep.subr.mxu0 0.0
        %2219 = vmatpush2.msra.mxu0 0.0
        %2220 = vmatprep.subr.mxu0 0.0
        %2221 = vmatpush2.msra.mxu0 0.0
        %2222 = vmatprep.subr.mxu0 0.0
        %2223 = vmatpush2.msra.mxu0 0.0
        %2224 = vmatprep.subr.mxu0 0.0
        %2225 = vmatpush2.msra.mxu0 0.0
        %2226 = vmatprep.subr.mxu0 0.0
        %2227 = vmatpush2.msra.mxu0 0.0
        %2228 = vmatprep.subr.mxu0 0.0
        %2229 = vmatpush2.msra.mxu0 0.0
        %2230 = vmatprep.subr.mxu0 0.0
        %2231 = vmatpush2.msra.mxu0 0.0
        %2232 = vmatprep.subr.mxu0 0.0
        %2233 = vmatpush2.msra.mxu0 0.0
        %2234 = vmatprep.subr.mxu0 0.0
        %2235 = vmatpush2.msra.mxu0 0.0
        %2236 = vmatprep.subr.mxu0 0.0
        %2237 = vmatpush2.msra.mxu0 0.0
        %2238 = vmatprep.subr.mxu0 0.0
        %2239 = vmatpush2.msra.mxu0 0.0
        %2240 = vmatprep.subr.mxu0 0.0
        %2241 = vmatpush2.msra.mxu0 0.0
        %2242 = vmatprep.subr.mxu0 0.0
        %2243 = vmatpush2.msra.mxu0 0.0
        %2244 = vmatprep.subr.mxu0 0.0
        %2245 = vmatpush2.msra.mxu0 0.0
        %2246 = vmatprep.subr.mxu0 0.0
        %2247 = vmatpush2.msra.mxu0 0.0
        %2248 = vmatprep.mubr.f32.mxu0 0.0
        %v2249 = vand.u32 %v1142, 4294901760
        %v2250 = vsub.f32 %v1142, %v2249
        %v2251 = vand.u32 %v2250, 4294901760
        %2252 = vmatmul.mubr.f32.gmra.mxu0 %v2251
        %v2253 = vpop.f32.mrf.mxu0
        %v2254 = vadd.f32 %v1960, %v2253
        %v2255 = vpop.f32.mrf.mxu0
        %v2256 = vadd.f32 %v1962, %v2255
        %2257 = vmatprep.mubr.f32.mxu0 0.0
        %v2258 = vand.u32 %v1145, 4294901760
        %v2259 = vsub.f32 %v1145, %v2258
        %v2260 = vand.u32 %v2259, 4294901760
        %2261 = vmatmul.mubr.f32.gmra.mxu0 %v2260
        %v2262 = vpop.f32.mrf.mxu0
        %v2263 = vadd.f32 %v1968, %v2262
        %v2264 = vpop.f32.mrf.mxu0
        %v2265 = vadd.f32 %v1970, %v2264
        %2266 = vmatprep.mubr.f32.mxu0 0.0
        %v2267 = vand.u32 %v1148, 4294901760
        %v2268 = vsub.f32 %v1148, %v2267
        %v2269 = vand.u32 %v2268, 4294901760
        %2270 = vmatmul.mubr.f32.gmra.mxu0 %v2269
        %v2271 = vpop.f32.mrf.mxu0
        %v2272 = vadd.f32 %v1976, %v2271
        %v2273 = vpop.f32.mrf.mxu0
        %v2274 = vadd.f32 %v1978, %v2273
        %2275 = vmatprep.mubr.f32.mxu0 0.0
        %v2276 = vand.u32 %v1151, 4294901760
        %v2277 = vsub.f32 %v1151, %v2276
        %v2278 = vand.u32 %v2277, 4294901760
        %2279 = vmatmul.mubr.f32.gmra.mxu0 %v2278
        %v2280 = vpop.f32.mrf.mxu0
        %v2281 = vadd.f32 %v1984, %v2280
        %v2282 = vpop.f32.mrf.mxu0
        %v2283 = vadd.f32 %v1986, %v2282
        %2284 = vmatprep.mubr.f32.mxu0 0.0
        %v2285 = vand.u32 %v1154, 4294901760
        %v2286 = vsub.f32 %v1154, %v2285
        %v2287 = vand.u32 %v2286, 4294901760
        %2288 = vmatmul.mubr.f32.gmra.mxu0 %v2287
        %v2289 = vpop.f32.mrf.mxu0
        %v2290 = vadd.f32 %v1992, %v2289
        %v2291 = vpop.f32.mrf.mxu0
        %v2292 = vadd.f32 %v1994, %v2291
        %2293 = vmatprep.mubr.f32.mxu0 0.0
        %v2294 = vand.u32 %v1157, 4294901760
        %v2295 = vsub.f32 %v1157, %v2294
        %v2296 = vand.u32 %v2295, 4294901760
        %2297 = vmatmul.mubr.f32.gmra.mxu0 %v2296
        %v2298 = vpop.f32.mrf.mxu0
        %v2299 = vadd.f32 %v2000, %v2298
        %v2300 = vpop.f32.mrf.mxu0
        %v2301 = vadd.f32 %v2002, %v2300
        %2302 = vmatprep.mubr.f32.mxu0 0.0
        %v2303 = vand.u32 %v1160, 4294901760
        %v2304 = vsub.f32 %v1160, %v2303
        %v2305 = vand.u32 %v2304, 4294901760
        %2306 = vmatmul.mubr.f32.gmra.mxu0 %v2305
        %v2307 = vpop.f32.mrf.mxu0
        %v2308 = vadd.f32 %v2008, %v2307
        %v2309 = vpop.f32.mrf.mxu0
        %v2310 = vadd.f32 %v2010, %v2309
        %2311 = vmatprep.mubr.f32.mxu0 0.0
        %v2312 = vand.u32 %v1163, 4294901760
        %v2313 = vsub.f32 %v1163, %v2312
        %v2314 = vand.u32 %v2313, 4294901760
        %2315 = vmatmul.mubr.f32.gmra.mxu0 %v2314
        %v2316 = vpop.f32.mrf.mxu0
        %v2317 = vadd.f32 %v2016, %v2316
        %v2318 = vpop.f32.mrf.mxu0
        %v2319 = vadd.f32 %v2018, %v2318
        %2320 = vmatprep.mubr.f32.mxu0 0.0
        %v2321 = vand.u32 %v1166, 4294901760
        %v2322 = vsub.f32 %v1166, %v2321
        %v2323 = vand.u32 %v2322, 4294901760
        %2324 = vmatmul.mubr.f32.gmra.mxu0 %v2323
        %v2325 = vpop.f32.mrf.mxu0
        %v2326 = vadd.f32 %v2024, %v2325
        %v2327 = vpop.f32.mrf.mxu0
        %v2328 = vadd.f32 %v2026, %v2327
        %2329 = vmatprep.mubr.f32.mxu0 0.0
        %v2330 = vand.u32 %v1169, 4294901760
        %v2331 = vsub.f32 %v1169, %v2330
        %v2332 = vand.u32 %v2331, 4294901760
        %2333 = vmatmul.mubr.f32.gmra.mxu0 %v2332
        %v2334 = vpop.f32.mrf.mxu0
        %v2335 = vadd.f32 %v2032, %v2334
        %v2336 = vpop.f32.mrf.mxu0
        %v2337 = vadd.f32 %v2034, %v2336
        %2338 = vmatprep.mubr.f32.mxu0 0.0
        %v2339 = vand.u32 %v1172, 4294901760
        %v2340 = vsub.f32 %v1172, %v2339
        %v2341 = vand.u32 %v2340, 4294901760
        %2342 = vmatmul.mubr.f32.gmra.mxu0 %v2341
        %v2343 = vpop.f32.mrf.mxu0
        %v2344 = vadd.f32 %v2040, %v2343
        %v2345 = vpop.f32.mrf.mxu0
        %v2346 = vadd.f32 %v2042, %v2345
        %2347 = vmatprep.mubr.f32.mxu0 0.0
        %v2348 = vand.u32 %v1175, 4294901760
        %v2349 = vsub.f32 %v1175, %v2348
        %v2350 = vand.u32 %v2349, 4294901760
        %2351 = vmatmul.mubr.f32.gmra.mxu0 %v2350
        %v2352 = vpop.f32.mrf.mxu0
        %v2353 = vadd.f32 %v2048, %v2352
        %v2354 = vpop.f32.mrf.mxu0
        %v2355 = vadd.f32 %v2050, %v2354
        %2356 = vmatprep.mubr.f32.mxu0 0.0
        %v2357 = vand.u32 %v1178, 4294901760
        %v2358 = vsub.f32 %v1178, %v2357
        %v2359 = vand.u32 %v2358, 4294901760
        %2360 = vmatmul.mubr.f32.gmra.mxu0 %v2359
        %v2361 = vpop.f32.mrf.mxu0
        %v2362 = vadd.f32 %v2056, %v2361
        %v2363 = vpop.f32.mrf.mxu0
        %v2364 = vadd.f32 %v2058, %v2363
        %2365 = vmatprep.mubr.f32.mxu0 0.0
        %v2366 = vand.u32 %v1181, 4294901760
        %v2367 = vsub.f32 %v1181, %v2366
        %v2368 = vand.u32 %v2367, 4294901760
        %2369 = vmatmul.mubr.f32.gmra.mxu0 %v2368
        %v2370 = vpop.f32.mrf.mxu0
        %v2371 = vadd.f32 %v2064, %v2370
        %v2372 = vpop.f32.mrf.mxu0
        %v2373 = vadd.f32 %v2066, %v2372
        %2374 = vmatprep.mubr.f32.mxu0 0.0
        %v2375 = vand.u32 %v1184, 4294901760
        %v2376 = vsub.f32 %v1184, %v2375
        %v2377 = vand.u32 %v2376, 4294901760
        %2378 = vmatmul.mubr.f32.gmra.mxu0 %v2377
        %v2379 = vpop.f32.mrf.mxu0
        %v2380 = vadd.f32 %v2072, %v2379
        %v2381 = vpop.f32.mrf.mxu0
        %v2382 = vadd.f32 %v2074, %v2381
        %2383 = vmatprep.mubr.f32.mxu0 0.0
        %v2384 = vand.u32 %v1187, 4294901760
        %v2385 = vsub.f32 %v1187, %v2384
        %v2386 = vand.u32 %v2385, 4294901760
        %2387 = vmatmul.mubr.f32.gmra.mxu0 %v2386
        %v2388 = vpop.f32.mrf.mxu0
        %v2389 = vadd.f32 %v2080, %v2388
        %v2390 = vpop.f32.mrf.mxu0
        %v2391 = vadd.f32 %v2082, %v2390
        %2392 = vmatprep.mubr.f32.mxu0 0.0
        %v2393 = vand.u32 %v1190, 4294901760
        %v2394 = vsub.f32 %v1190, %v2393
        %v2395 = vand.u32 %v2394, 4294901760
        %2396 = vmatmul.mubr.f32.gmra.mxu0 %v2395
        %v2397 = vpop.f32.mrf.mxu0
        %v2398 = vadd.f32 %v2088, %v2397
        %v2399 = vpop.f32.mrf.mxu0
        %v2400 = vadd.f32 %v2090, %v2399
        %2401 = vmatprep.mubr.f32.mxu0 0.0
        %v2402 = vand.u32 %v1193, 4294901760
        %v2403 = vsub.f32 %v1193, %v2402
        %v2404 = vand.u32 %v2403, 4294901760
        %2405 = vmatmul.mubr.f32.gmra.mxu0 %v2404
        %v2406 = vpop.f32.mrf.mxu0
        %v2407 = vadd.f32 %v2096, %v2406
        %v2408 = vpop.f32.mrf.mxu0
        %v2409 = vadd.f32 %v2098, %v2408
        %2410 = vmatprep.mubr.f32.mxu0 0.0
        %v2411 = vand.u32 %v1196, 4294901760
        %v2412 = vsub.f32 %v1196, %v2411
        %v2413 = vand.u32 %v2412, 4294901760
        %2414 = vmatmul.mubr.f32.gmra.mxu0 %v2413
        %v2415 = vpop.f32.mrf.mxu0
        %v2416 = vadd.f32 %v2104, %v2415
        %v2417 = vpop.f32.mrf.mxu0
        %v2418 = vadd.f32 %v2106, %v2417
        %2419 = vmatprep.mubr.f32.mxu0 0.0
        %v2420 = vand.u32 %v1199, 4294901760
        %v2421 = vsub.f32 %v1199, %v2420
        %v2422 = vand.u32 %v2421, 4294901760
        %2423 = vmatmul.mubr.f32.gmra.mxu0 %v2422
        %v2424 = vpop.f32.mrf.mxu0
        %v2425 = vadd.f32 %v2112, %v2424
        %v2426 = vpop.f32.mrf.mxu0
        %v2427 = vadd.f32 %v2114, %v2426
        %2428 = vmatprep.mubr.f32.mxu0 0.0
        %v2429 = vand.u32 %v1202, 4294901760
        %v2430 = vsub.f32 %v1202, %v2429
        %v2431 = vand.u32 %v2430, 4294901760
        %2432 = vmatmul.mubr.f32.gmra.mxu0 %v2431
        %v2433 = vpop.f32.mrf.mxu0
        %v2434 = vadd.f32 %v2120, %v2433
        %v2435 = vpop.f32.mrf.mxu0
        %v2436 = vadd.f32 %v2122, %v2435
        %2437 = vmatprep.mubr.f32.mxu0 0.0
        %v2438 = vand.u32 %v1205, 4294901760
        %v2439 = vsub.f32 %v1205, %v2438
        %v2440 = vand.u32 %v2439, 4294901760
        %2441 = vmatmul.mubr.f32.gmra.mxu0 %v2440
        %v2442 = vpop.f32.mrf.mxu0
        %v2443 = vadd.f32 %v2128, %v2442
        %v2444 = vpop.f32.mrf.mxu0
        %v2445 = vadd.f32 %v2130, %v2444
        %2446 = vmatprep.mubr.f32.mxu0 0.0
        %v2447 = vand.u32 %v1208, 4294901760
        %v2448 = vsub.f32 %v1208, %v2447
        %v2449 = vand.u32 %v2448, 4294901760
        %2450 = vmatmul.mubr.f32.gmra.mxu0 %v2449
        %v2451 = vpop.f32.mrf.mxu0
        %v2452 = vadd.f32 %v2136, %v2451
        %v2453 = vpop.f32.mrf.mxu0
        %v2454 = vadd.f32 %v2138, %v2453
        %2455 = vmatprep.mubr.f32.mxu0 0.0
        %v2456 = vand.u32 %v1211, 4294901760
        %v2457 = vsub.f32 %v1211, %v2456
        %v2458 = vand.u32 %v2457, 4294901760
        %2459 = vmatmul.mubr.f32.gmra.mxu0 %v2458
        %v2460 = vpop.f32.mrf.mxu0
        %v2461 = vadd.f32 %v2144, %v2460
        %v2462 = vpop.f32.mrf.mxu0
        %v2463 = vadd.f32 %v2146, %v2462
        %2464 = vmatprep.mubr.f32.mxu0 0.0
        %v2465 = vand.u32 %v1214, 4294901760
        %v2466 = vsub.f32 %v1214, %v2465
        %v2467 = vand.u32 %v2466, 4294901760
        %2468 = vmatmul.mubr.f32.gmra.mxu0 %v2467
        %v2469 = vpop.f32.mrf.mxu0
        %v2470 = vadd.f32 %v2152, %v2469
        %v2471 = vpop.f32.mrf.mxu0
        %v2472 = vadd.f32 %v2154, %v2471
        %2473 = vmatprep.mubr.f32.mxu0 0.0
        %v2474 = vand.u32 %v1217, 4294901760
        %v2475 = vsub.f32 %v1217, %v2474
        %v2476 = vand.u32 %v2475, 4294901760
        %2477 = vmatmul.mubr.f32.gmra.mxu0 %v2476
        %v2478 = vpop.f32.mrf.mxu0
        %v2479 = vadd.f32 %v2160, %v2478
        %v2480 = vpop.f32.mrf.mxu0
        %v2481 = vadd.f32 %v2162, %v2480
        %2482 = vmatprep.mubr.f32.mxu0 0.0
        %v2483 = vand.u32 %v1220, 4294901760
        %v2484 = vsub.f32 %v1220, %v2483
        %v2485 = vand.u32 %v2484, 4294901760
        %2486 = vmatmul.mubr.f32.gmra.mxu0 %v2485
        %v2487 = vpop.f32.mrf.mxu0
        %v2488 = vadd.f32 %v2168, %v2487
        %v2489 = vpop.f32.mrf.mxu0
        %v2490 = vadd.f32 %v2170, %v2489
        %2491 = vmatprep.mubr.f32.mxu0 0.0
        %v2492 = vand.u32 %v1223, 4294901760
        %v2493 = vsub.f32 %v1223, %v2492
        %v2494 = vand.u32 %v2493, 4294901760
        %2495 = vmatmul.mubr.f32.gmra.mxu0 %v2494
        %v2496 = vpop.f32.mrf.mxu0
        %v2497 = vadd.f32 %v2176, %v2496
        %v2498 = vpop.f32.mrf.mxu0
        %v2499 = vadd.f32 %v2178, %v2498
        %2500 = vdwg.mxu0
        %2501 = vmatprep.subr.mxu0 0.0
        %2502 = vmatpush1.msra.mxu0 0.0
        %2503 = vmatprep.subr.mxu0 0.0
        %2504 = vmatpush1.msra.mxu0 0.0
        %2505 = vmatprep.subr.mxu0 0.0
        %2506 = vmatpush1.msra.mxu0 0.0
        %2507 = vmatprep.subr.mxu0 0.0
        %2508 = vmatpush1.msra.mxu0 0.0
        %2509 = vmatprep.subr.mxu0 0.0
        %2510 = vmatpush1.msra.mxu0 0.0
        %2511 = vmatprep.subr.mxu0 0.0
        %2512 = vmatpush1.msra.mxu0 0.0
        %2513 = vmatprep.subr.mxu0 0.0
        %2514 = vmatpush1.msra.mxu0 0.0
        %2515 = vmatprep.subr.mxu0 0.0
        %2516 = vmatpush1.msra.mxu0 0.0
        %2517 = vmatprep.subr.mxu0 0.0
        %2518 = vmatpush1.msra.mxu0 0.0
        %2519 = vmatprep.subr.mxu0 0.0
        %2520 = vmatpush1.msra.mxu0 0.0
        %2521 = vmatprep.subr.mxu0 0.0
        %2522 = vmatpush1.msra.mxu0 0.0
        %2523 = vmatprep.subr.mxu0 0.0
        %2524 = vmatpush1.msra.mxu0 0.0
        %2525 = vmatprep.subr.mxu0 0.0
        %2526 = vmatpush1.msra.mxu0 0.0
        %2527 = vmatprep.subr.mxu0 0.0
        %2528 = vmatpush1.msra.mxu0 0.0
        %v2529 = vand.u32 %v1140, 4294901760
        %v2530 = vsub.f32 %v1140, %v2529
        %v2531 = vand.u32 %v2530, 4294901760
        %2532 = vmatprep.subr.mxu0 %v2531
        %v2533 = vand.u32 %v1139, 4294901760
        %v2534 = vsub.f32 %v1139, %v2533
        %v2535 = vand.u32 %v2534, 4294901760
        %2536 = vmatpush1.msra.mxu0 %v2535
        %v2537 = vand.u32 %v1138, 4294901760
        %v2538 = vsub.f32 %v1138, %v2537
        %v2539 = vand.u32 %v2538, 4294901760
        %2540 = vmatprep.subr.mxu0 %v2539
        %v2541 = vand.u32 %v1137, 4294901760
        %v2542 = vsub.f32 %v1137, %v2541
        %v2543 = vand.u32 %v2542, 4294901760
        %2544 = vmatpush1.msra.mxu0 %v2543
        %2545 = vmatprep.subr.mxu0 0.0
        %2546 = vmatpush2.msra.mxu0 0.0
        %2547 = vmatprep.subr.mxu0 0.0
        %2548 = vmatpush2.msra.mxu0 0.0
        %2549 = vmatprep.subr.mxu0 0.0
        %2550 = vmatpush2.msra.mxu0 0.0
        %2551 = vmatprep.subr.mxu0 0.0
        %2552 = vmatpush2.msra.mxu0 0.0
        %2553 = vmatprep.subr.mxu0 0.0
        %2554 = vmatpush2.msra.mxu0 0.0
        %2555 = vmatprep.subr.mxu0 0.0
        %2556 = vmatpush2.msra.mxu0 0.0
        %2557 = vmatprep.subr.mxu0 0.0
        %2558 = vmatpush2.msra.mxu0 0.0
        %2559 = vmatprep.subr.mxu0 0.0
        %2560 = vmatpush2.msra.mxu0 0.0
        %2561 = vmatprep.subr.mxu0 0.0
        %2562 = vmatpush2.msra.mxu0 0.0
        %2563 = vmatprep.subr.mxu0 0.0
        %2564 = vmatpush2.msra.mxu0 0.0
        %2565 = vmatprep.subr.mxu0 0.0
        %2566 = vmatpush2.msra.mxu0 0.0
        %2567 = vmatprep.subr.mxu0 0.0
        %2568 = vmatpush2.msra.mxu0 0.0
        %2569 = vmatprep.subr.mxu0 0.0
        %2570 = vmatpush2.msra.mxu0 0.0
        %2571 = vmatprep.subr.mxu0 0.0
        %2572 = vmatpush2.msra.mxu0 0.0
        %2573 = vmatprep.subr.mxu0 0.0
        %2574 = vmatpush2.msra.mxu0 0.0
        %2575 = vmatprep.subr.mxu0 0.0
        %2576 = vmatpush2.msra.mxu0 0.0
        %2577 = vmatprep.mubr.f32.mxu0 0.0
        %v2578 = vand.u32 %v1142, 4294901760
        %2579 = vmatmul.mubr.f32.gmra.mxu0 %v2578
        %v2580 = vpop.f32.mrf.mxu0
        %v2581 = vadd.f32 %v2254, %v2580
        %v2582 = vpop.f32.mrf.mxu0
        %v2583 = vadd.f32 %v2256, %v2582
        %2584 = vmatprep.mubr.f32.mxu0 0.0
        %v2585 = vand.u32 %v1145, 4294901760
        %2586 = vmatmul.mubr.f32.gmra.mxu0 %v2585
        %v2587 = vpop.f32.mrf.mxu0
        %v2588 = vadd.f32 %v2263, %v2587
        %v2589 = vpop.f32.mrf.mxu0
        %v2590 = vadd.f32 %v2265, %v2589
        %2591 = vmatprep.mubr.f32.mxu0 0.0
        %v2592 = vand.u32 %v1148, 4294901760
        %2593 = vmatmul.mubr.f32.gmra.mxu0 %v2592
        %v2594 = vpop.f32.mrf.mxu0
        %v2595 = vadd.f32 %v2272, %v2594
        %v2596 = vpop.f32.mrf.mxu0
        %v2597 = vadd.f32 %v2274, %v2596
        %2598 = vmatprep.mubr.f32.mxu0 0.0
        %v2599 = vand.u32 %v1151, 4294901760
        %2600 = vmatmul.mubr.f32.gmra.mxu0 %v2599
        %v2601 = vpop.f32.mrf.mxu0
        %v2602 = vadd.f32 %v2281, %v2601
        %v2603 = vpop.f32.mrf.mxu0
        %v2604 = vadd.f32 %v2283, %v2603
        %2605 = vmatprep.mubr.f32.mxu0 0.0
        %v2606 = vand.u32 %v1154, 4294901760
        %2607 = vmatmul.mubr.f32.gmra.mxu0 %v2606
        %v2608 = vpop.f32.mrf.mxu0
        %v2609 = vadd.f32 %v2290, %v2608
        %v2610 = vpop.f32.mrf.mxu0
        %v2611 = vadd.f32 %v2292, %v2610
        %2612 = vmatprep.mubr.f32.mxu0 0.0
        %v2613 = vand.u32 %v1157, 4294901760
        %2614 = vmatmul.mubr.f32.gmra.mxu0 %v2613
        %v2615 = vpop.f32.mrf.mxu0
        %v2616 = vadd.f32 %v2299, %v2615
        %v2617 = vpop.f32.mrf.mxu0
        %v2618 = vadd.f32 %v2301, %v2617
        %2619 = vmatprep.mubr.f32.mxu0 0.0
        %v2620 = vand.u32 %v1160, 4294901760
        %2621 = vmatmul.mubr.f32.gmra.mxu0 %v2620
        %v2622 = vpop.f32.mrf.mxu0
        %v2623 = vadd.f32 %v2308, %v2622
        %v2624 = vpop.f32.mrf.mxu0
        %v2625 = vadd.f32 %v2310, %v2624
        %2626 = vmatprep.mubr.f32.mxu0 0.0
        %v2627 = vand.u32 %v1163, 4294901760
        %2628 = vmatmul.mubr.f32.gmra.mxu0 %v2627
        %v2629 = vpop.f32.mrf.mxu0
        %v2630 = vadd.f32 %v2317, %v2629
        %v2631 = vpop.f32.mrf.mxu0
        %v2632 = vadd.f32 %v2319, %v2631
        %2633 = vmatprep.mubr.f32.mxu0 0.0
        %v2634 = vand.u32 %v1166, 4294901760
        %2635 = vmatmul.mubr.f32.gmra.mxu0 %v2634
        %v2636 = vpop.f32.mrf.mxu0
        %v2637 = vadd.f32 %v2326, %v2636
        %v2638 = vpop.f32.mrf.mxu0
        %v2639 = vadd.f32 %v2328, %v2638
        %2640 = vmatprep.mubr.f32.mxu0 0.0
        %v2641 = vand.u32 %v1169, 4294901760
        %2642 = vmatmul.mubr.f32.gmra.mxu0 %v2641
        %v2643 = vpop.f32.mrf.mxu0
        %v2644 = vadd.f32 %v2335, %v2643
        %v2645 = vpop.f32.mrf.mxu0
        %v2646 = vadd.f32 %v2337, %v2645
        %2647 = vmatprep.mubr.f32.mxu0 0.0
        %v2648 = vand.u32 %v1172, 4294901760
        %2649 = vmatmul.mubr.f32.gmra.mxu0 %v2648
        %v2650 = vpop.f32.mrf.mxu0
        %v2651 = vadd.f32 %v2344, %v2650
        %v2652 = vpop.f32.mrf.mxu0
        %v2653 = vadd.f32 %v2346, %v2652
        %2654 = vmatprep.mubr.f32.mxu0 0.0
        %v2655 = vand.u32 %v1175, 4294901760
        %2656 = vmatmul.mubr.f32.gmra.mxu0 %v2655
        %v2657 = vpop.f32.mrf.mxu0
        %v2658 = vadd.f32 %v2353, %v2657
        %v2659 = vpop.f32.mrf.mxu0
        %v2660 = vadd.f32 %v2355, %v2659
        %2661 = vmatprep.mubr.f32.mxu0 0.0
        %v2662 = vand.u32 %v1178, 4294901760
        %2663 = vmatmul.mubr.f32.gmra.mxu0 %v2662
        %v2664 = vpop.f32.mrf.mxu0
        %v2665 = vadd.f32 %v2362, %v2664
        %v2666 = vpop.f32.mrf.mxu0
        %v2667 = vadd.f32 %v2364, %v2666
        %2668 = vmatprep.mubr.f32.mxu0 0.0
        %v2669 = vand.u32 %v1181, 4294901760
        %2670 = vmatmul.mubr.f32.gmra.mxu0 %v2669
        %v2671 = vpop.f32.mrf.mxu0
        %v2672 = vadd.f32 %v2371, %v2671
        %v2673 = vpop.f32.mrf.mxu0
        %v2674 = vadd.f32 %v2373, %v2673
        %2675 = vmatprep.mubr.f32.mxu0 0.0
        %v2676 = vand.u32 %v1184, 4294901760
        %2677 = vmatmul.mubr.f32.gmra.mxu0 %v2676
        %v2678 = vpop.f32.mrf.mxu0
        %v2679 = vadd.f32 %v2380, %v2678
        %v2680 = vpop.f32.mrf.mxu0
        %v2681 = vadd.f32 %v2382, %v2680
        %2682 = vmatprep.mubr.f32.mxu0 0.0
        %v2683 = vand.u32 %v1187, 4294901760
        %2684 = vmatmul.mubr.f32.gmra.mxu0 %v2683
        %v2685 = vpop.f32.mrf.mxu0
        %v2686 = vadd.f32 %v2389, %v2685
        %v2687 = vpop.f32.mrf.mxu0
        %v2688 = vadd.f32 %v2391, %v2687
        %2689 = vmatprep.mubr.f32.mxu0 0.0
        %v2690 = vand.u32 %v1190, 4294901760
        %2691 = vmatmul.mubr.f32.gmra.mxu0 %v2690
        %v2692 = vpop.f32.mrf.mxu0
        %v2693 = vadd.f32 %v2398, %v2692
        %v2694 = vpop.f32.mrf.mxu0
        %v2695 = vadd.f32 %v2400, %v2694
        %2696 = vmatprep.mubr.f32.mxu0 0.0
        %v2697 = vand.u32 %v1193, 4294901760
        %2698 = vmatmul.mubr.f32.gmra.mxu0 %v2697
        %v2699 = vpop.f32.mrf.mxu0
        %v2700 = vadd.f32 %v2407, %v2699
        %v2701 = vpop.f32.mrf.mxu0
        %v2702 = vadd.f32 %v2409, %v2701
        %2703 = vmatprep.mubr.f32.mxu0 0.0
        %v2704 = vand.u32 %v1196, 4294901760
        %2705 = vmatmul.mubr.f32.gmra.mxu0 %v2704
        %v2706 = vpop.f32.mrf.mxu0
        %v2707 = vadd.f32 %v2416, %v2706
        %v2708 = vpop.f32.mrf.mxu0
        %v2709 = vadd.f32 %v2418, %v2708
        %2710 = vmatprep.mubr.f32.mxu0 0.0
        %v2711 = vand.u32 %v1199, 4294901760
        %2712 = vmatmul.mubr.f32.gmra.mxu0 %v2711
        %v2713 = vpop.f32.mrf.mxu0
        %v2714 = vadd.f32 %v2425, %v2713
        %v2715 = vpop.f32.mrf.mxu0
        %v2716 = vadd.f32 %v2427, %v2715
        %2717 = vmatprep.mubr.f32.mxu0 0.0
        %v2718 = vand.u32 %v1202, 4294901760
        %2719 = vmatmul.mubr.f32.gmra.mxu0 %v2718
        %v2720 = vpop.f32.mrf.mxu0
        %v2721 = vadd.f32 %v2434, %v2720
        %v2722 = vpop.f32.mrf.mxu0
        %v2723 = vadd.f32 %v2436, %v2722
        %2724 = vmatprep.mubr.f32.mxu0 0.0
        %v2725 = vand.u32 %v1205, 4294901760
        %2726 = vmatmul.mubr.f32.gmra.mxu0 %v2725
        %v2727 = vpop.f32.mrf.mxu0
        %v2728 = vadd.f32 %v2443, %v2727
        %v2729 = vpop.f32.mrf.mxu0
        %v2730 = vadd.f32 %v2445, %v2729
        %2731 = vmatprep.mubr.f32.mxu0 0.0
        %v2732 = vand.u32 %v1208, 4294901760
        %2733 = vmatmul.mubr.f32.gmra.mxu0 %v2732
        %v2734 = vpop.f32.mrf.mxu0
        %v2735 = vadd.f32 %v2452, %v2734
        %v2736 = vpop.f32.mrf.mxu0
        %v2737 = vadd.f32 %v2454, %v2736
        %2738 = vmatprep.mubr.f32.mxu0 0.0
        %v2739 = vand.u32 %v1211, 4294901760
        %2740 = vmatmul.mubr.f32.gmra.mxu0 %v2739
        %v2741 = vpop.f32.mrf.mxu0
        %v2742 = vadd.f32 %v2461, %v2741
        %v2743 = vpop.f32.mrf.mxu0
        %v2744 = vadd.f32 %v2463, %v2743
        %2745 = vmatprep.mubr.f32.mxu0 0.0
        %v2746 = vand.u32 %v1214, 4294901760
        %2747 = vmatmul.mubr.f32.gmra.mxu0 %v2746
        %v2748 = vpop.f32.mrf.mxu0
        %v2749 = vadd.f32 %v2470, %v2748
        %v2750 = vpop.f32.mrf.mxu0
        %v2751 = vadd.f32 %v2472, %v2750
        %2752 = vmatprep.mubr.f32.mxu0 0.0
        %v2753 = vand.u32 %v1217, 4294901760
        %2754 = vmatmul.mubr.f32.gmra.mxu0 %v2753
        %v2755 = vpop.f32.mrf.mxu0
        %v2756 = vadd.f32 %v2479, %v2755
        %v2757 = vpop.f32.mrf.mxu0
        %v2758 = vadd.f32 %v2481, %v2757
        %2759 = vmatprep.mubr.f32.mxu0 0.0
        %v2760 = vand.u32 %v1220, 4294901760
        %2761 = vmatmul.mubr.f32.gmra.mxu0 %v2760
        %v2762 = vpop.f32.mrf.mxu0
        %v2763 = vadd.f32 %v2488, %v2762
        %v2764 = vpop.f32.mrf.mxu0
        %v2765 = vadd.f32 %v2490, %v2764
        %2766 = vmatprep.mubr.f32.mxu0 0.0
        %v2767 = vand.u32 %v1223, 4294901760
        %2768 = vmatmul.mubr.f32.gmra.mxu0 %v2767
        %v2769 = vpop.f32.mrf.mxu0
        %v2770 = vadd.f32 %v2497, %v2769
        %v2771 = vpop.f32.mrf.mxu0
        %v2772 = vadd.f32 %v2499, %v2771
        %2773 = vdwg.mxu0
        %2774 = vmatprep.subr.mxu0 0.0
        %2775 = vmatpush1.msra.mxu0 0.0
        %2776 = vmatprep.subr.mxu0 0.0
        %2777 = vmatpush1.msra.mxu0 0.0
        %2778 = vmatprep.subr.mxu0 0.0
        %2779 = vmatpush1.msra.mxu0 0.0
        %2780 = vmatprep.subr.mxu0 0.0
        %2781 = vmatpush1.msra.mxu0 0.0
        %2782 = vmatprep.subr.mxu0 0.0
        %2783 = vmatpush1.msra.mxu0 0.0
        %2784 = vmatprep.subr.mxu0 0.0
        %2785 = vmatpush1.msra.mxu0 0.0
        %2786 = vmatprep.subr.mxu0 0.0
        %2787 = vmatpush1.msra.mxu0 0.0
        %2788 = vmatprep.subr.mxu0 0.0
        %2789 = vmatpush1.msra.mxu0 0.0
        %2790 = vmatprep.subr.mxu0 0.0
        %2791 = vmatpush1.msra.mxu0 0.0
        %2792 = vmatprep.subr.mxu0 0.0
        %2793 = vmatpush1.msra.mxu0 0.0
        %2794 = vmatprep.subr.mxu0 0.0
        %2795 = vmatpush1.msra.mxu0 0.0
        %2796 = vmatprep.subr.mxu0 0.0
        %2797 = vmatpush1.msra.mxu0 0.0
        %2798 = vmatprep.subr.mxu0 0.0
        %2799 = vmatpush1.msra.mxu0 0.0
        %2800 = vmatprep.subr.mxu0 0.0
        %2801 = vmatpush1.msra.mxu0 0.0
        %v2802 = vand.u32 %v1140, 4294901760
        %2803 = vmatprep.subr.mxu0 %v2802
        %v2804 = vand.u32 %v1139, 4294901760
        %2805 = vmatpush1.msra.mxu0 %v2804
        %v2806 = vand.u32 %v1138, 4294901760
        %2807 = vmatprep.subr.mxu0 %v2806
        %v2808 = vand.u32 %v1137, 4294901760
        %2809 = vmatpush1.msra.mxu0 %v2808
        %2810 = vmatprep.subr.mxu0 0.0
        %2811 = vmatpush2.msra.mxu0 0.0
        %2812 = vmatprep.subr.mxu0 0.0
        %2813 = vmatpush2.msra.mxu0 0.0
        %2814 = vmatprep.subr.mxu0 0.0
        %2815 = vmatpush2.msra.mxu0 0.0
        %2816 = vmatprep.subr.mxu0 0.0
        %2817 = vmatpush2.msra.mxu0 0.0
        %2818 = vmatprep.subr.mxu0 0.0
        %2819 = vmatpush2.msra.mxu0 0.0
        %2820 = vmatprep.subr.mxu0 0.0
        %2821 = vmatpush2.msra.mxu0 0.0
        %2822 = vmatprep.subr.mxu0 0.0
        %2823 = vmatpush2.msra.mxu0 0.0
        %2824 = vmatprep.subr.mxu0 0.0
        %2825 = vmatpush2.msra.mxu0 0.0
        %2826 = vmatprep.subr.mxu0 0.0
        %2827 = vmatpush2.msra.mxu0 0.0
        %2828 = vmatprep.subr.mxu0 0.0
        %2829 = vmatpush2.msra.mxu0 0.0
        %2830 = vmatprep.subr.mxu0 0.0
        %2831 = vmatpush2.msra.mxu0 0.0
        %2832 = vmatprep.subr.mxu0 0.0
        %2833 = vmatpush2.msra.mxu0 0.0
        %2834 = vmatprep.subr.mxu0 0.0
        %2835 = vmatpush2.msra.mxu0 0.0
        %2836 = vmatprep.subr.mxu0 0.0
        %2837 = vmatpush2.msra.mxu0 0.0
        %2838 = vmatprep.subr.mxu0 0.0
        %2839 = vmatpush2.msra.mxu0 0.0
        %2840 = vmatprep.subr.mxu0 0.0
        %2841 = vmatpush2.msra.mxu0 0.0
        %2842 = vmatprep.mubr.f32.mxu0 0.0
        %v2843 = vand.u32 %v1142, 4294901760
        %2844 = vmatmul.mubr.f32.gmra.mxu0 %v2843
        %v2845 = vpop.f32.mrf.mxu0
        %v2846 = vadd.f32 %v2581, %v2845
        %v2847 = vpop.f32.mrf.mxu0
        %v2848 = vadd.f32 %v2583, %v2847
        %2849 = vmatprep.mubr.f32.mxu0 0.0
        %v2850 = vand.u32 %v1145, 4294901760
        %2851 = vmatmul.mubr.f32.gmra.mxu0 %v2850
        %v2852 = vpop.f32.mrf.mxu0
        %v2853 = vadd.f32 %v2588, %v2852
        %v2854 = vpop.f32.mrf.mxu0
        %v2855 = vadd.f32 %v2590, %v2854
        %2856 = vmatprep.mubr.f32.mxu0 0.0
        %v2857 = vand.u32 %v1148, 4294901760
        %2858 = vmatmul.mubr.f32.gmra.mxu0 %v2857
        %v2859 = vpop.f32.mrf.mxu0
        %v2860 = vadd.f32 %v2595, %v2859
        %v2861 = vpop.f32.mrf.mxu0
        %v2862 = vadd.f32 %v2597, %v2861
        %2863 = vmatprep.mubr.f32.mxu0 0.0
        %v2864 = vand.u32 %v1151, 4294901760
        %2865 = vmatmul.mubr.f32.gmra.mxu0 %v2864
        %v2866 = vpop.f32.mrf.mxu0
        %v2867 = vadd.f32 %v2602, %v2866
        %v2868 = vpop.f32.mrf.mxu0
        %v2869 = vadd.f32 %v2604, %v2868
        %2870 = vmatprep.mubr.f32.mxu0 0.0
        %v2871 = vand.u32 %v1154, 4294901760
        %2872 = vmatmul.mubr.f32.gmra.mxu0 %v2871
        %v2873 = vpop.f32.mrf.mxu0
        %v2874 = vadd.f32 %v2609, %v2873
        %v2875 = vpop.f32.mrf.mxu0
        %v2876 = vadd.f32 %v2611, %v2875
        %2877 = vmatprep.mubr.f32.mxu0 0.0
        %v2878 = vand.u32 %v1157, 4294901760
        %2879 = vmatmul.mubr.f32.gmra.mxu0 %v2878
        %v2880 = vpop.f32.mrf.mxu0
        %v2881 = vadd.f32 %v2616, %v2880
        %v2882 = vpop.f32.mrf.mxu0
        %v2883 = vadd.f32 %v2618, %v2882
        %2884 = vmatprep.mubr.f32.mxu0 0.0
        %v2885 = vand.u32 %v1160, 4294901760
        %2886 = vmatmul.mubr.f32.gmra.mxu0 %v2885
        %v2887 = vpop.f32.mrf.mxu0
        %v2888 = vadd.f32 %v2623, %v2887
        %v2889 = vpop.f32.mrf.mxu0
        %v2890 = vadd.f32 %v2625, %v2889
        %2891 = vmatprep.mubr.f32.mxu0 0.0
        %v2892 = vand.u32 %v1163, 4294901760
        %2893 = vmatmul.mubr.f32.gmra.mxu0 %v2892
        %v2894 = vpop.f32.mrf.mxu0
        %v2895 = vadd.f32 %v2630, %v2894
        %v2896 = vpop.f32.mrf.mxu0
        %v2897 = vadd.f32 %v2632, %v2896
        %2898 = vmatprep.mubr.f32.mxu0 0.0
        %v2899 = vand.u32 %v1166, 4294901760
        %2900 = vmatmul.mubr.f32.gmra.mxu0 %v2899
        %v2901 = vpop.f32.mrf.mxu0
        %v2902 = vadd.f32 %v2637, %v2901
        %v2903 = vpop.f32.mrf.mxu0
        %v2904 = vadd.f32 %v2639, %v2903
        %2905 = vmatprep.mubr.f32.mxu0 0.0
        %v2906 = vand.u32 %v1169, 4294901760
        %2907 = vmatmul.mubr.f32.gmra.mxu0 %v2906
        %v2908 = vpop.f32.mrf.mxu0
        %v2909 = vadd.f32 %v2644, %v2908
        %v2910 = vpop.f32.mrf.mxu0
        %v2911 = vadd.f32 %v2646, %v2910
        %2912 = vmatprep.mubr.f32.mxu0 0.0
        %v2913 = vand.u32 %v1172, 4294901760
        %2914 = vmatmul.mubr.f32.gmra.mxu0 %v2913
        %v2915 = vpop.f32.mrf.mxu0
        %v2916 = vadd.f32 %v2651, %v2915
        %v2917 = vpop.f32.mrf.mxu0
        %v2918 = vadd.f32 %v2653, %v2917
        %2919 = vmatprep.mubr.f32.mxu0 0.0
        %v2920 = vand.u32 %v1175, 4294901760
        %2921 = vmatmul.mubr.f32.gmra.mxu0 %v2920
        %v2922 = vpop.f32.mrf.mxu0
        %v2923 = vadd.f32 %v2658, %v2922
        %v2924 = vpop.f32.mrf.mxu0
        %v2925 = vadd.f32 %v2660, %v2924
        %2926 = vmatprep.mubr.f32.mxu0 0.0
        %v2927 = vand.u32 %v1178, 4294901760
        %2928 = vmatmul.mubr.f32.gmra.mxu0 %v2927
        %v2929 = vpop.f32.mrf.mxu0
        %v2930 = vadd.f32 %v2665, %v2929
        %v2931 = vpop.f32.mrf.mxu0
        %v2932 = vadd.f32 %v2667, %v2931
        %2933 = vmatprep.mubr.f32.mxu0 0.0
        %v2934 = vand.u32 %v1181, 4294901760
        %2935 = vmatmul.mubr.f32.gmra.mxu0 %v2934
        %v2936 = vpop.f32.mrf.mxu0
        %v2937 = vadd.f32 %v2672, %v2936
        %v2938 = vpop.f32.mrf.mxu0
        %v2939 = vadd.f32 %v2674, %v2938
        %2940 = vmatprep.mubr.f32.mxu0 0.0
        %v2941 = vand.u32 %v1184, 4294901760
        %2942 = vmatmul.mubr.f32.gmra.mxu0 %v2941
        %v2943 = vpop.f32.mrf.mxu0
        %v2944 = vadd.f32 %v2679, %v2943
        %v2945 = vpop.f32.mrf.mxu0
        %v2946 = vadd.f32 %v2681, %v2945
        %2947 = vmatprep.mubr.f32.mxu0 0.0
        %v2948 = vand.u32 %v1187, 4294901760
        %2949 = vmatmul.mubr.f32.gmra.mxu0 %v2948
        %v2950 = vpop.f32.mrf.mxu0
        %v2951 = vadd.f32 %v2686, %v2950
        %v2952 = vpop.f32.mrf.mxu0
        %v2953 = vadd.f32 %v2688, %v2952
        %2954 = vmatprep.mubr.f32.mxu0 0.0
        %v2955 = vand.u32 %v1190, 4294901760
        %2956 = vmatmul.mubr.f32.gmra.mxu0 %v2955
        %v2957 = vpop.f32.mrf.mxu0
        %v2958 = vadd.f32 %v2693, %v2957
        %v2959 = vpop.f32.mrf.mxu0
        %v2960 = vadd.f32 %v2695, %v2959
        %2961 = vmatprep.mubr.f32.mxu0 0.0
        %v2962 = vand.u32 %v1193, 4294901760
        %2963 = vmatmul.mubr.f32.gmra.mxu0 %v2962
        %v2964 = vpop.f32.mrf.mxu0
        %v2965 = vadd.f32 %v2700, %v2964
        %v2966 = vpop.f32.mrf.mxu0
        %v2967 = vadd.f32 %v2702, %v2966
        %2968 = vmatprep.mubr.f32.mxu0 0.0
        %v2969 = vand.u32 %v1196, 4294901760
        %2970 = vmatmul.mubr.f32.gmra.mxu0 %v2969
        %v2971 = vpop.f32.mrf.mxu0
        %v2972 = vadd.f32 %v2707, %v2971
        %v2973 = vpop.f32.mrf.mxu0
        %v2974 = vadd.f32 %v2709, %v2973
        %2975 = vmatprep.mubr.f32.mxu0 0.0
        %v2976 = vand.u32 %v1199, 4294901760
        %2977 = vmatmul.mubr.f32.gmra.mxu0 %v2976
        %v2978 = vpop.f32.mrf.mxu0
        %v2979 = vadd.f32 %v2714, %v2978
        %v2980 = vpop.f32.mrf.mxu0
        %v2981 = vadd.f32 %v2716, %v2980
        %2982 = vmatprep.mubr.f32.mxu0 0.0
        %v2983 = vand.u32 %v1202, 4294901760
        %2984 = vmatmul.mubr.f32.gmra.mxu0 %v2983
        %v2985 = vpop.f32.mrf.mxu0
        %v2986 = vadd.f32 %v2721, %v2985
        %v2987 = vpop.f32.mrf.mxu0
        %v2988 = vadd.f32 %v2723, %v2987
        %2989 = vmatprep.mubr.f32.mxu0 0.0
        %v2990 = vand.u32 %v1205, 4294901760
        %2991 = vmatmul.mubr.f32.gmra.mxu0 %v2990
        %v2992 = vpop.f32.mrf.mxu0
        %v2993 = vadd.f32 %v2728, %v2992
        %v2994 = vpop.f32.mrf.mxu0
        %v2995 = vadd.f32 %v2730, %v2994
        %2996 = vmatprep.mubr.f32.mxu0 0.0
        %v2997 = vand.u32 %v1208, 4294901760
        %2998 = vmatmul.mubr.f32.gmra.mxu0 %v2997
        %v2999 = vpop.f32.mrf.mxu0
        %v3000 = vadd.f32 %v2735, %v2999
        %v3001 = vpop.f32.mrf.mxu0
        %v3002 = vadd.f32 %v2737, %v3001
        %3003 = vmatprep.mubr.f32.mxu0 0.0
        %v3004 = vand.u32 %v1211, 4294901760
        %3005 = vmatmul.mubr.f32.gmra.mxu0 %v3004
        %v3006 = vpop.f32.mrf.mxu0
        %v3007 = vadd.f32 %v2742, %v3006
        %v3008 = vpop.f32.mrf.mxu0
        %v3009 = vadd.f32 %v2744, %v3008
        %3010 = vmatprep.mubr.f32.mxu0 0.0
        %v3011 = vand.u32 %v1214, 4294901760
        %3012 = vmatmul.mubr.f32.gmra.mxu0 %v3011
        %v3013 = vpop.f32.mrf.mxu0
        %v3014 = vadd.f32 %v2749, %v3013
        %v3015 = vpop.f32.mrf.mxu0
        %v3016 = vadd.f32 %v2751, %v3015
        %3017 = vmatprep.mubr.f32.mxu0 0.0
        %v3018 = vand.u32 %v1217, 4294901760
        %3019 = vmatmul.mubr.f32.gmra.mxu0 %v3018
        %v3020 = vpop.f32.mrf.mxu0
        %v3021 = vadd.f32 %v2756, %v3020
        %v3022 = vpop.f32.mrf.mxu0
        %v3023 = vadd.f32 %v2758, %v3022
        %3024 = vmatprep.mubr.f32.mxu0 0.0
        %v3025 = vand.u32 %v1220, 4294901760
        %3026 = vmatmul.mubr.f32.gmra.mxu0 %v3025
        %v3027 = vpop.f32.mrf.mxu0
        %v3028 = vadd.f32 %v2763, %v3027
        %v3029 = vpop.f32.mrf.mxu0
        %v3030 = vadd.f32 %v2765, %v3029
        %3031 = vmatprep.mubr.f32.mxu0 0.0
        %v3032 = vand.u32 %v1223, 4294901760
        %3033 = vmatmul.mubr.f32.gmra.mxu0 %v3032
        %v3034 = vpop.f32.mrf.mxu0
        %v3035 = vadd.f32 %v2770, %v3034
        %v3036 = vpop.f32.mrf.mxu0
        %v3037 = vadd.f32 %v2772, %v3036
        %3038 = vdwg.mxu0
        %3039 = vst [vmem:[%s215] sm:$0xff] %v2846
        %3040 = vst.msk [vmem:[%s215 + $0x8] sm:$0xff] %vm1090, %v2848
        %3041 = vst [vmem:[%s215 + $0x10] sm:$0xff] %v2853
        %3042 = vst.msk [vmem:[%s215 + $0x18] sm:$0xff] %vm1090, %v2855
        %3043 = vst [vmem:[%s215 + $0x20] sm:$0xff] %v2860
        %3044 = vst.msk [vmem:[%s215 + $0x28] sm:$0xff] %vm1090, %v2862
        %3045 = vst [vmem:[%s215 + $0x30] sm:$0xff] %v2867
        %3046 = vst.msk [vmem:[%s215 + $0x38] sm:$0xff] %vm1090, %v2869
        %3047 = vst [vmem:[%s215 + $0x40] sm:$0xff] %v2874
        %3048 = vst.msk [vmem:[%s215 + $0x48] sm:$0xff] %vm1090, %v2876
        %3049 = vst [vmem:[%s215 + $0x50] sm:$0xff] %v2881
        %3050 = vst.msk [vmem:[%s215 + $0x58] sm:$0xff] %vm1090, %v2883
        %3051 = vst [vmem:[%s215 + $0x60] sm:$0xff] %v2888
        %3052 = vst.msk [vmem:[%s215 + $0x68] sm:$0xff] %vm1090, %v2890
        %3053 = vst [vmem:[%s215 + $0x70] sm:$0xff] %v2895
        %3054 = vst.msk [vmem:[%s215 + $0x78] sm:$0xff] %vm1090, %v2897
        %3055 = vst [vmem:[%s215 + $0x80] sm:$0xff] %v2902
        %3056 = vst.msk [vmem:[%s215 + $0x88] sm:$0xff] %vm1090, %v2904
        %3057 = vst [vmem:[%s215 + $0x90] sm:$0xff] %v2909
        %3058 = vst.msk [vmem:[%s215 + $0x98] sm:$0xff] %vm1090, %v2911
        %3059 = vst [vmem:[%s215 + $0xa0] sm:$0xff] %v2916
        %3060 = vst.msk [vmem:[%s215 + $0xa8] sm:$0xff] %vm1090, %v2918
        %3061 = vst [vmem:[%s215 + $0xb0] sm:$0xff] %v2923
        %3062 = vst.msk [vmem:[%s215 + $0xb8] sm:$0xff] %vm1090, %v2925
        %3063 = vst [vmem:[%s215 + $0xc0] sm:$0xff] %v2930
        %3064 = vst.msk [vmem:[%s215 + $0xc8] sm:$0xff] %vm1090, %v2932
        %3065 = vst [vmem:[%s215 + $0xd0] sm:$0xff] %v2937
        %3066 = vst.msk [vmem:[%s215 + $0xd8] sm:$0xff] %vm1090, %v2939
        %3067 = vst [vmem:[%s215 + $0xe0] sm:$0xff] %v2944
        %3068 = vst.msk [vmem:[%s215 + $0xe8] sm:$0xff] %vm1090, %v2946
        %3069 = vst [vmem:[%s215 + $0xf0] sm:$0xff] %v2951
        %3070 = vst.msk [vmem:[%s215 + $0xf8] sm:$0xff] %vm1090, %v2953
        %3071 = vst [vmem:[%s215 + $0x100] sm:$0xff] %v2958
        %3072 = vst.msk [vmem:[%s215 + $0x108] sm:$0xff] %vm1090, %v2960
        %3073 = vst [vmem:[%s215 + $0x110] sm:$0xff] %v2965
        %3074 = vst.msk [vmem:[%s215 + $0x118] sm:$0xff] %vm1090, %v2967
        %3075 = vst [vmem:[%s215 + $0x120] sm:$0xff] %v2972
        %3076 = vst.msk [vmem:[%s215 + $0x128] sm:$0xff] %vm1090, %v2974
        %3077 = vst [vmem:[%s215 + $0x130] sm:$0xff] %v2979
        %3078 = vst.msk [vmem:[%s215 + $0x138] sm:$0xff] %vm1090, %v2981
        %3079 = vst [vmem:[%s215 + $0x140] sm:$0xff] %v2986
        %3080 = vst.msk [vmem:[%s215 + $0x148] sm:$0xff] %vm1090, %v2988
        %3081 = vst [vmem:[%s215 + $0x150] sm:$0xff] %v2993
        %3082 = vst.msk [vmem:[%s215 + $0x158] sm:$0xff] %vm1090, %v2995
        %3083 = vst [vmem:[%s215 + $0x160] sm:$0xff] %v3000
        %3084 = vst.msk [vmem:[%s215 + $0x168] sm:$0xff] %vm1090, %v3002
        %3085 = vst [vmem:[%s215 + $0x170] sm:$0xff] %v3007
        %3086 = vst.msk [vmem:[%s215 + $0x178] sm:$0xff] %vm1090, %v3009
        %3087 = vst [vmem:[%s215 + $0x180] sm:$0xff] %v3014
        %3088 = vst.msk [vmem:[%s215 + $0x188] sm:$0xff] %vm1090, %v3016
        %3089 = vst [vmem:[%s215 + $0x190] sm:$0xff] %v3021
        %3090 = vst.msk [vmem:[%s215 + $0x198] sm:$0xff] %vm1090, %v3023
        %3091 = vst [vmem:[%s215 + $0x1a0] sm:$0xff] %v3028
        %3092 = vst.msk [vmem:[%s215 + $0x1a8] sm:$0xff] %vm1090, %v3030
        %3093 = vst [vmem:[%s215 + $0x1b0] sm:$0xff] %v3035
        %3094 = vst.msk [vmem:[%s215 + $0x1b8] sm:$0xff] %vm1090, %v3037
        %s3095 = smul.u32 2, 2
        %s3096 = smul.addr %s3095, 8
        %s3097 = scalar_lea.vmem [#allocation2], %s3096
        %v3098 = vld [vmem:[%s3097] sm:$0xff]
        %v3099 = vld [vmem:[%s3097 + $0x8] sm:$0xff]
        %v3100 = vld [vmem:[%s3097 + $0x10] sm:$0xff]
        %v3101 = vld [vmem:[%s3097 + $0x18] sm:$0xff]
        %3102 = vmatprep.subr.mxu0 0.0
        %3103 = vmatpush1.msra.mxu0 0.0
        %3104 = vmatprep.subr.mxu0 0.0
        %3105 = vmatpush1.msra.mxu0 0.0
        %3106 = vmatprep.subr.mxu0 0.0
        %3107 = vmatpush1.msra.mxu0 0.0
        %3108 = vmatprep.subr.mxu0 0.0
        %3109 = vmatpush1.msra.mxu0 0.0
        %3110 = vmatprep.subr.mxu0 0.0
        %3111 = vmatpush1.msra.mxu0 0.0
        %3112 = vmatprep.subr.mxu0 0.0
        %3113 = vmatpush1.msra.mxu0 0.0
        %3114 = vmatprep.subr.mxu0 0.0
        %3115 = vmatpush1.msra.mxu0 0.0
        %3116 = vmatprep.subr.mxu0 0.0
        %3117 = vmatpush1.msra.mxu0 0.0
        %3118 = vmatprep.subr.mxu0 0.0
        %3119 = vmatpush1.msra.mxu0 0.0
        %3120 = vmatprep.subr.mxu0 0.0
        %3121 = vmatpush1.msra.mxu0 0.0
        %3122 = vmatprep.subr.mxu0 0.0
        %3123 = vmatpush1.msra.mxu0 0.0
        %3124 = vmatprep.subr.mxu0 0.0
        %3125 = vmatpush1.msra.mxu0 0.0
        %3126 = vmatprep.subr.mxu0 0.0
        %3127 = vmatpush1.msra.mxu0 0.0
        %3128 = vmatprep.subr.mxu0 0.0
        %3129 = vmatpush1.msra.mxu0 0.0
        %v3130 = vand.u32 %v3101, 4294901760
        %3131 = vmatprep.subr.mxu0 %v3130
        %v3132 = vand.u32 %v3100, 4294901760
        %3133 = vmatpush1.msra.mxu0 %v3132
        %v3134 = vand.u32 %v3099, 4294901760
        %3135 = vmatprep.subr.mxu0 %v3134
        %v3136 = vand.u32 %v3098, 4294901760
        %3137 = vmatpush1.msra.mxu0 %v3136
        %3138 = vmatprep.subr.mxu0 0.0
        %3139 = vmatpush2.msra.mxu0 0.0
        %3140 = vmatprep.subr.mxu0 0.0
        %3141 = vmatpush2.msra.mxu0 0.0
        %3142 = vmatprep.subr.mxu0 0.0
        %3143 = vmatpush2.msra.mxu0 0.0
        %3144 = vmatprep.subr.mxu0 0.0
        %3145 = vmatpush2.msra.mxu0 0.0
        %3146 = vmatprep.subr.mxu0 0.0
        %3147 = vmatpush2.msra.mxu0 0.0
        %3148 = vmatprep.subr.mxu0 0.0
        %3149 = vmatpush2.msra.mxu0 0.0
        %3150 = vmatprep.subr.mxu0 0.0
        %3151 = vmatpush2.msra.mxu0 0.0
        %3152 = vmatprep.subr.mxu0 0.0
        %3153 = vmatpush2.msra.mxu0 0.0
        %3154 = vmatprep.subr.mxu0 0.0
        %3155 = vmatpush2.msra.mxu0 0.0
        %3156 = vmatprep.subr.mxu0 0.0
        %3157 = vmatpush2.msra.mxu0 0.0
        %3158 = vmatprep.subr.mxu0 0.0
        %3159 = vmatpush2.msra.mxu0 0.0
        %3160 = vmatprep.subr.mxu0 0.0
        %3161 = vmatpush2.msra.mxu0 0.0
        %3162 = vmatprep.subr.mxu0 0.0
        %3163 = vmatpush2.msra.mxu0 0.0
        %3164 = vmatprep.subr.mxu0 0.0
        %3165 = vmatpush2.msra.mxu0 0.0
        %3166 = vmatprep.subr.mxu0 0.0
        %3167 = vmatpush2.msra.mxu0 0.0
        %3168 = vmatprep.subr.mxu0 0.0
        %3169 = vmatpush2.msra.mxu0 0.0
        %3170 = vmatprep.mubr.f32.mxu0 0.0
        %v3171 = vand.u32 %v1142, 4294901760
        %v3172 = vsub.f32 %v1142, %v3171
        %v3173 = vand.u32 %v3172, 4294901760
        %v3174 = vsub.f32 %v3172, %v3173
        %v3175 = vand.u32 %v3174, 4294901760
        %3176 = vmatmul.mubr.f32.gmra.mxu0 %v3175
        %v3177 = vpop.f32.mrf.mxu0
        %v3178 = vadd.f32 0.0, %v3177
        %v3179 = vpop.f32.mrf.mxu0
        %v3180 = vadd.f32 0.0, %v3179
        %3181 = vmatprep.mubr.f32.mxu0 0.0
        %v3182 = vand.u32 %v1145, 4294901760
        %v3183 = vsub.f32 %v1145, %v3182
        %v3184 = vand.u32 %v3183, 4294901760
        %v3185 = vsub.f32 %v3183, %v3184
        %v3186 = vand.u32 %v3185, 4294901760
        %3187 = vmatmul.mubr.f32.gmra.mxu0 %v3186
        %v3188 = vpop.f32.mrf.mxu0
        %v3189 = vadd.f32 0.0, %v3188
        %v3190 = vpop.f32.mrf.mxu0
        %v3191 = vadd.f32 0.0, %v3190
        %3192 = vmatprep.mubr.f32.mxu0 0.0
        %v3193 = vand.u32 %v1148, 4294901760
        %v3194 = vsub.f32 %v1148, %v3193
        %v3195 = vand.u32 %v3194, 4294901760
        %v3196 = vsub.f32 %v3194, %v3195
        %v3197 = vand.u32 %v3196, 4294901760
        %3198 = vmatmul.mubr.f32.gmra.mxu0 %v3197
        %v3199 = vpop.f32.mrf.mxu0
        %v3200 = vadd.f32 0.0, %v3199
        %v3201 = vpop.f32.mrf.mxu0
        %v3202 = vadd.f32 0.0, %v3201
        %3203 = vmatprep.mubr.f32.mxu0 0.0
        %v3204 = vand.u32 %v1151, 4294901760
        %v3205 = vsub.f32 %v1151, %v3204
        %v3206 = vand.u32 %v3205, 4294901760
        %v3207 = vsub.f32 %v3205, %v3206
        %v3208 = vand.u32 %v3207, 4294901760
        %3209 = vmatmul.mubr.f32.gmra.mxu0 %v3208
        %v3210 = vpop.f32.mrf.mxu0
        %v3211 = vadd.f32 0.0, %v3210
        %v3212 = vpop.f32.mrf.mxu0
        %v3213 = vadd.f32 0.0, %v3212
        %3214 = vmatprep.mubr.f32.mxu0 0.0
        %v3215 = vand.u32 %v1154, 4294901760
        %v3216 = vsub.f32 %v1154, %v3215
        %v3217 = vand.u32 %v3216, 4294901760
        %v3218 = vsub.f32 %v3216, %v3217
        %v3219 = vand.u32 %v3218, 4294901760
        %3220 = vmatmul.mubr.f32.gmra.mxu0 %v3219
        %v3221 = vpop.f32.mrf.mxu0
        %v3222 = vadd.f32 0.0, %v3221
        %v3223 = vpop.f32.mrf.mxu0
        %v3224 = vadd.f32 0.0, %v3223
        %3225 = vmatprep.mubr.f32.mxu0 0.0
        %v3226 = vand.u32 %v1157, 4294901760
        %v3227 = vsub.f32 %v1157, %v3226
        %v3228 = vand.u32 %v3227, 4294901760
        %v3229 = vsub.f32 %v3227, %v3228
        %v3230 = vand.u32 %v3229, 4294901760
        %3231 = vmatmul.mubr.f32.gmra.mxu0 %v3230
        %v3232 = vpop.f32.mrf.mxu0
        %v3233 = vadd.f32 0.0, %v3232
        %v3234 = vpop.f32.mrf.mxu0
        %v3235 = vadd.f32 0.0, %v3234
        %3236 = vmatprep.mubr.f32.mxu0 0.0
        %v3237 = vand.u32 %v1160, 4294901760
        %v3238 = vsub.f32 %v1160, %v3237
        %v3239 = vand.u32 %v3238, 4294901760
        %v3240 = vsub.f32 %v3238, %v3239
        %v3241 = vand.u32 %v3240, 4294901760
        %3242 = vmatmul.mubr.f32.gmra.mxu0 %v3241
        %v3243 = vpop.f32.mrf.mxu0
        %v3244 = vadd.f32 0.0, %v3243
        %v3245 = vpop.f32.mrf.mxu0
        %v3246 = vadd.f32 0.0, %v3245
        %3247 = vmatprep.mubr.f32.mxu0 0.0
        %v3248 = vand.u32 %v1163, 4294901760
        %v3249 = vsub.f32 %v1163, %v3248
        %v3250 = vand.u32 %v3249, 4294901760
        %v3251 = vsub.f32 %v3249, %v3250
        %v3252 = vand.u32 %v3251, 4294901760
        %3253 = vmatmul.mubr.f32.gmra.mxu0 %v3252
        %v3254 = vpop.f32.mrf.mxu0
        %v3255 = vadd.f32 0.0, %v3254
        %v3256 = vpop.f32.mrf.mxu0
        %v3257 = vadd.f32 0.0, %v3256
        %3258 = vmatprep.mubr.f32.mxu0 0.0
        %v3259 = vand.u32 %v1166, 4294901760
        %v3260 = vsub.f32 %v1166, %v3259
        %v3261 = vand.u32 %v3260, 4294901760
        %v3262 = vsub.f32 %v3260, %v3261
        %v3263 = vand.u32 %v3262, 4294901760
        %3264 = vmatmul.mubr.f32.gmra.mxu0 %v3263
        %v3265 = vpop.f32.mrf.mxu0
        %v3266 = vadd.f32 0.0, %v3265
        %v3267 = vpop.f32.mrf.mxu0
        %v3268 = vadd.f32 0.0, %v3267
        %3269 = vmatprep.mubr.f32.mxu0 0.0
        %v3270 = vand.u32 %v1169, 4294901760
        %v3271 = vsub.f32 %v1169, %v3270
        %v3272 = vand.u32 %v3271, 4294901760
        %v3273 = vsub.f32 %v3271, %v3272
        %v3274 = vand.u32 %v3273, 4294901760
        %3275 = vmatmul.mubr.f32.gmra.mxu0 %v3274
        %v3276 = vpop.f32.mrf.mxu0
        %v3277 = vadd.f32 0.0, %v3276
        %v3278 = vpop.f32.mrf.mxu0
        %v3279 = vadd.f32 0.0, %v3278
        %3280 = vmatprep.mubr.f32.mxu0 0.0
        %v3281 = vand.u32 %v1172, 4294901760
        %v3282 = vsub.f32 %v1172, %v3281
        %v3283 = vand.u32 %v3282, 4294901760
        %v3284 = vsub.f32 %v3282, %v3283
        %v3285 = vand.u32 %v3284, 4294901760
        %3286 = vmatmul.mubr.f32.gmra.mxu0 %v3285
        %v3287 = vpop.f32.mrf.mxu0
        %v3288 = vadd.f32 0.0, %v3287
        %v3289 = vpop.f32.mrf.mxu0
        %v3290 = vadd.f32 0.0, %v3289
        %3291 = vmatprep.mubr.f32.mxu0 0.0
        %v3292 = vand.u32 %v1175, 4294901760
        %v3293 = vsub.f32 %v1175, %v3292
        %v3294 = vand.u32 %v3293, 4294901760
        %v3295 = vsub.f32 %v3293, %v3294
        %v3296 = vand.u32 %v3295, 4294901760
        %3297 = vmatmul.mubr.f32.gmra.mxu0 %v3296
        %v3298 = vpop.f32.mrf.mxu0
        %v3299 = vadd.f32 0.0, %v3298
        %v3300 = vpop.f32.mrf.mxu0
        %v3301 = vadd.f32 0.0, %v3300
        %3302 = vmatprep.mubr.f32.mxu0 0.0
        %v3303 = vand.u32 %v1178, 4294901760
        %v3304 = vsub.f32 %v1178, %v3303
        %v3305 = vand.u32 %v3304, 4294901760
        %v3306 = vsub.f32 %v3304, %v3305
        %v3307 = vand.u32 %v3306, 4294901760
        %3308 = vmatmul.mubr.f32.gmra.mxu0 %v3307
        %v3309 = vpop.f32.mrf.mxu0
        %v3310 = vadd.f32 0.0, %v3309
        %v3311 = vpop.f32.mrf.mxu0
        %v3312 = vadd.f32 0.0, %v3311
        %3313 = vmatprep.mubr.f32.mxu0 0.0
        %v3314 = vand.u32 %v1181, 4294901760
        %v3315 = vsub.f32 %v1181, %v3314
        %v3316 = vand.u32 %v3315, 4294901760
        %v3317 = vsub.f32 %v3315, %v3316
        %v3318 = vand.u32 %v3317, 4294901760
        %3319 = vmatmul.mubr.f32.gmra.mxu0 %v3318
        %v3320 = vpop.f32.mrf.mxu0
        %v3321 = vadd.f32 0.0, %v3320
        %v3322 = vpop.f32.mrf.mxu0
        %v3323 = vadd.f32 0.0, %v3322
        %3324 = vmatprep.mubr.f32.mxu0 0.0
        %v3325 = vand.u32 %v1184, 4294901760
        %v3326 = vsub.f32 %v1184, %v3325
        %v3327 = vand.u32 %v3326, 4294901760
        %v3328 = vsub.f32 %v3326, %v3327
        %v3329 = vand.u32 %v3328, 4294901760
        %3330 = vmatmul.mubr.f32.gmra.mxu0 %v3329
        %v3331 = vpop.f32.mrf.mxu0
        %v3332 = vadd.f32 0.0, %v3331
        %v3333 = vpop.f32.mrf.mxu0
        %v3334 = vadd.f32 0.0, %v3333
        %3335 = vmatprep.mubr.f32.mxu0 0.0
        %v3336 = vand.u32 %v1187, 4294901760
        %v3337 = vsub.f32 %v1187, %v3336
        %v3338 = vand.u32 %v3337, 4294901760
        %v3339 = vsub.f32 %v3337, %v3338
        %v3340 = vand.u32 %v3339, 4294901760
        %3341 = vmatmul.mubr.f32.gmra.mxu0 %v3340
        %v3342 = vpop.f32.mrf.mxu0
        %v3343 = vadd.f32 0.0, %v3342
        %v3344 = vpop.f32.mrf.mxu0
        %v3345 = vadd.f32 0.0, %v3344
        %3346 = vmatprep.mubr.f32.mxu0 0.0
        %v3347 = vand.u32 %v1190, 4294901760
        %v3348 = vsub.f32 %v1190, %v3347
        %v3349 = vand.u32 %v3348, 4294901760
        %v3350 = vsub.f32 %v3348, %v3349
        %v3351 = vand.u32 %v3350, 4294901760
        %3352 = vmatmul.mubr.f32.gmra.mxu0 %v3351
        %v3353 = vpop.f32.mrf.mxu0
        %v3354 = vadd.f32 0.0, %v3353
        %v3355 = vpop.f32.mrf.mxu0
        %v3356 = vadd.f32 0.0, %v3355
        %3357 = vmatprep.mubr.f32.mxu0 0.0
        %v3358 = vand.u32 %v1193, 4294901760
        %v3359 = vsub.f32 %v1193, %v3358
        %v3360 = vand.u32 %v3359, 4294901760
        %v3361 = vsub.f32 %v3359, %v3360
        %v3362 = vand.u32 %v3361, 4294901760
        %3363 = vmatmul.mubr.f32.gmra.mxu0 %v3362
        %v3364 = vpop.f32.mrf.mxu0
        %v3365 = vadd.f32 0.0, %v3364
        %v3366 = vpop.f32.mrf.mxu0
        %v3367 = vadd.f32 0.0, %v3366
        %3368 = vmatprep.mubr.f32.mxu0 0.0
        %v3369 = vand.u32 %v1196, 4294901760
        %v3370 = vsub.f32 %v1196, %v3369
        %v3371 = vand.u32 %v3370, 4294901760
        %v3372 = vsub.f32 %v3370, %v3371
        %v3373 = vand.u32 %v3372, 4294901760
        %3374 = vmatmul.mubr.f32.gmra.mxu0 %v3373
        %v3375 = vpop.f32.mrf.mxu0
        %v3376 = vadd.f32 0.0, %v3375
        %v3377 = vpop.f32.mrf.mxu0
        %v3378 = vadd.f32 0.0, %v3377
        %3379 = vmatprep.mubr.f32.mxu0 0.0
        %v3380 = vand.u32 %v1199, 4294901760
        %v3381 = vsub.f32 %v1199, %v3380
        %v3382 = vand.u32 %v3381, 4294901760
        %v3383 = vsub.f32 %v3381, %v3382
        %v3384 = vand.u32 %v3383, 4294901760
        %3385 = vmatmul.mubr.f32.gmra.mxu0 %v3384
        %v3386 = vpop.f32.mrf.mxu0
        %v3387 = vadd.f32 0.0, %v3386
        %v3388 = vpop.f32.mrf.mxu0
        %v3389 = vadd.f32 0.0, %v3388
        %3390 = vmatprep.mubr.f32.mxu0 0.0
        %v3391 = vand.u32 %v1202, 4294901760
        %v3392 = vsub.f32 %v1202, %v3391
        %v3393 = vand.u32 %v3392, 4294901760
        %v3394 = vsub.f32 %v3392, %v3393
        %v3395 = vand.u32 %v3394, 4294901760
        %3396 = vmatmul.mubr.f32.gmra.mxu0 %v3395
        %v3397 = vpop.f32.mrf.mxu0
        %v3398 = vadd.f32 0.0, %v3397
        %v3399 = vpop.f32.mrf.mxu0
        %v3400 = vadd.f32 0.0, %v3399
        %3401 = vmatprep.mubr.f32.mxu0 0.0
        %v3402 = vand.u32 %v1205, 4294901760
        %v3403 = vsub.f32 %v1205, %v3402
        %v3404 = vand.u32 %v3403, 4294901760
        %v3405 = vsub.f32 %v3403, %v3404
        %v3406 = vand.u32 %v3405, 4294901760
        %3407 = vmatmul.mubr.f32.gmra.mxu0 %v3406
        %v3408 = vpop.f32.mrf.mxu0
        %v3409 = vadd.f32 0.0, %v3408
        %v3410 = vpop.f32.mrf.mxu0
        %v3411 = vadd.f32 0.0, %v3410
        %3412 = vmatprep.mubr.f32.mxu0 0.0
        %v3413 = vand.u32 %v1208, 4294901760
        %v3414 = vsub.f32 %v1208, %v3413
        %v3415 = vand.u32 %v3414, 4294901760
        %v3416 = vsub.f32 %v3414, %v3415
        %v3417 = vand.u32 %v3416, 4294901760
        %3418 = vmatmul.mubr.f32.gmra.mxu0 %v3417
        %v3419 = vpop.f32.mrf.mxu0
        %v3420 = vadd.f32 0.0, %v3419
        %v3421 = vpop.f32.mrf.mxu0
        %v3422 = vadd.f32 0.0, %v3421
        %3423 = vmatprep.mubr.f32.mxu0 0.0
        %v3424 = vand.u32 %v1211, 4294901760
        %v3425 = vsub.f32 %v1211, %v3424
        %v3426 = vand.u32 %v3425, 4294901760
        %v3427 = vsub.f32 %v3425, %v3426
        %v3428 = vand.u32 %v3427, 4294901760
        %3429 = vmatmul.mubr.f32.gmra.mxu0 %v3428
        %v3430 = vpop.f32.mrf.mxu0
        %v3431 = vadd.f32 0.0, %v3430
        %v3432 = vpop.f32.mrf.mxu0
        %v3433 = vadd.f32 0.0, %v3432
        %3434 = vmatprep.mubr.f32.mxu0 0.0
        %v3435 = vand.u32 %v1214, 4294901760
        %v3436 = vsub.f32 %v1214, %v3435
        %v3437 = vand.u32 %v3436, 4294901760
        %v3438 = vsub.f32 %v3436, %v3437
        %v3439 = vand.u32 %v3438, 4294901760
        %3440 = vmatmul.mubr.f32.gmra.mxu0 %v3439
        %v3441 = vpop.f32.mrf.mxu0
        %v3442 = vadd.f32 0.0, %v3441
        %v3443 = vpop.f32.mrf.mxu0
        %v3444 = vadd.f32 0.0, %v3443
        %3445 = vmatprep.mubr.f32.mxu0 0.0
        %v3446 = vand.u32 %v1217, 4294901760
        %v3447 = vsub.f32 %v1217, %v3446
        %v3448 = vand.u32 %v3447, 4294901760
        %v3449 = vsub.f32 %v3447, %v3448
        %v3450 = vand.u32 %v3449, 4294901760
        %3451 = vmatmul.mubr.f32.gmra.mxu0 %v3450
        %v3452 = vpop.f32.mrf.mxu0
        %v3453 = vadd.f32 0.0, %v3452
        %v3454 = vpop.f32.mrf.mxu0
        %v3455 = vadd.f32 0.0, %v3454
        %3456 = vmatprep.mubr.f32.mxu0 0.0
        %v3457 = vand.u32 %v1220, 4294901760
        %v3458 = vsub.f32 %v1220, %v3457
        %v3459 = vand.u32 %v3458, 4294901760
        %v3460 = vsub.f32 %v3458, %v3459
        %v3461 = vand.u32 %v3460, 4294901760
        %3462 = vmatmul.mubr.f32.gmra.mxu0 %v3461
        %v3463 = vpop.f32.mrf.mxu0
        %v3464 = vadd.f32 0.0, %v3463
        %v3465 = vpop.f32.mrf.mxu0
        %v3466 = vadd.f32 0.0, %v3465
        %3467 = vmatprep.mubr.f32.mxu0 0.0
        %v3468 = vand.u32 %v1223, 4294901760
        %v3469 = vsub.f32 %v1223, %v3468
        %v3470 = vand.u32 %v3469, 4294901760
        %v3471 = vsub.f32 %v3469, %v3470
        %v3472 = vand.u32 %v3471, 4294901760
        %3473 = vmatmul.mubr.f32.gmra.mxu0 %v3472
        %v3474 = vpop.f32.mrf.mxu0
        %v3475 = vadd.f32 0.0, %v3474
        %v3476 = vpop.f32.mrf.mxu0
        %v3477 = vadd.f32 0.0, %v3476
        %3478 = vdwg.mxu0
        %3479 = vmatprep.subr.mxu0 0.0
        %3480 = vmatpush1.msra.mxu0 0.0
        %3481 = vmatprep.subr.mxu0 0.0
        %3482 = vmatpush1.msra.mxu0 0.0
        %3483 = vmatprep.subr.mxu0 0.0
        %3484 = vmatpush1.msra.mxu0 0.0
        %3485 = vmatprep.subr.mxu0 0.0
        %3486 = vmatpush1.msra.mxu0 0.0
        %3487 = vmatprep.subr.mxu0 0.0
        %3488 = vmatpush1.msra.mxu0 0.0
        %3489 = vmatprep.subr.mxu0 0.0
        %3490 = vmatpush1.msra.mxu0 0.0
        %3491 = vmatprep.subr.mxu0 0.0
        %3492 = vmatpush1.msra.mxu0 0.0
        %3493 = vmatprep.subr.mxu0 0.0
        %3494 = vmatpush1.msra.mxu0 0.0
        %3495 = vmatprep.subr.mxu0 0.0
        %3496 = vmatpush1.msra.mxu0 0.0
        %3497 = vmatprep.subr.mxu0 0.0
        %3498 = vmatpush1.msra.mxu0 0.0
        %3499 = vmatprep.subr.mxu0 0.0
        %3500 = vmatpush1.msra.mxu0 0.0
        %3501 = vmatprep.subr.mxu0 0.0
        %3502 = vmatpush1.msra.mxu0 0.0
        %3503 = vmatprep.subr.mxu0 0.0
        %3504 = vmatpush1.msra.mxu0 0.0
        %3505 = vmatprep.subr.mxu0 0.0
        %3506 = vmatpush1.msra.mxu0 0.0
        %v3507 = vand.u32 %v3101, 4294901760
        %v3508 = vsub.f32 %v3101, %v3507
        %v3509 = vand.u32 %v3508, 4294901760
        %v3510 = vsub.f32 %v3508, %v3509
        %v3511 = vand.u32 %v3510, 4294901760
        %3512 = vmatprep.subr.mxu0 %v3511
        %v3513 = vand.u32 %v3100, 4294901760
        %v3514 = vsub.f32 %v3100, %v3513
        %v3515 = vand.u32 %v3514, 4294901760
        %v3516 = vsub.f32 %v3514, %v3515
        %v3517 = vand.u32 %v3516, 4294901760
        %3518 = vmatpush1.msra.mxu0 %v3517
        %v3519 = vand.u32 %v3099, 4294901760
        %v3520 = vsub.f32 %v3099, %v3519
        %v3521 = vand.u32 %v3520, 4294901760
        %v3522 = vsub.f32 %v3520, %v3521
        %v3523 = vand.u32 %v3522, 4294901760
        %3524 = vmatprep.subr.mxu0 %v3523
        %v3525 = vand.u32 %v3098, 4294901760
        %v3526 = vsub.f32 %v3098, %v3525
        %v3527 = vand.u32 %v3526, 4294901760
        %v3528 = vsub.f32 %v3526, %v3527
        %v3529 = vand.u32 %v3528, 4294901760
        %3530 = vmatpush1.msra.mxu0 %v3529
        %3531 = vmatprep.subr.mxu0 0.0
        %3532 = vmatpush2.msra.mxu0 0.0
        %3533 = vmatprep.subr.mxu0 0.0
        %3534 = vmatpush2.msra.mxu0 0.0
        %3535 = vmatprep.subr.mxu0 0.0
        %3536 = vmatpush2.msra.mxu0 0.0
        %3537 = vmatprep.subr.mxu0 0.0
        %3538 = vmatpush2.msra.mxu0 0.0
        %3539 = vmatprep.subr.mxu0 0.0
        %3540 = vmatpush2.msra.mxu0 0.0
        %3541 = vmatprep.subr.mxu0 0.0
        %3542 = vmatpush2.msra.mxu0 0.0
        %3543 = vmatprep.subr.mxu0 0.0
        %3544 = vmatpush2.msra.mxu0 0.0
        %3545 = vmatprep.subr.mxu0 0.0
        %3546 = vmatpush2.msra.mxu0 0.0
        %3547 = vmatprep.subr.mxu0 0.0
        %3548 = vmatpush2.msra.mxu0 0.0
        %3549 = vmatprep.subr.mxu0 0.0
        %3550 = vmatpush2.msra.mxu0 0.0
        %3551 = vmatprep.subr.mxu0 0.0
        %3552 = vmatpush2.msra.mxu0 0.0
        %3553 = vmatprep.subr.mxu0 0.0
        %3554 = vmatpush2.msra.mxu0 0.0
        %3555 = vmatprep.subr.mxu0 0.0
        %3556 = vmatpush2.msra.mxu0 0.0
        %3557 = vmatprep.subr.mxu0 0.0
        %3558 = vmatpush2.msra.mxu0 0.0
        %3559 = vmatprep.subr.mxu0 0.0
        %3560 = vmatpush2.msra.mxu0 0.0
        %3561 = vmatprep.subr.mxu0 0.0
        %3562 = vmatpush2.msra.mxu0 0.0
        %3563 = vmatprep.mubr.f32.mxu0 0.0
        %v3564 = vand.u32 %v1142, 4294901760
        %3565 = vmatmul.mubr.f32.gmra.mxu0 %v3564
        %v3566 = vpop.f32.mrf.mxu0
        %v3567 = vadd.f32 %v3178, %v3566
        %v3568 = vpop.f32.mrf.mxu0
        %v3569 = vadd.f32 %v3180, %v3568
        %3570 = vmatprep.mubr.f32.mxu0 0.0
        %v3571 = vand.u32 %v1145, 4294901760
        %3572 = vmatmul.mubr.f32.gmra.mxu0 %v3571
        %v3573 = vpop.f32.mrf.mxu0
        %v3574 = vadd.f32 %v3189, %v3573
        %v3575 = vpop.f32.mrf.mxu0
        %v3576 = vadd.f32 %v3191, %v3575
        %3577 = vmatprep.mubr.f32.mxu0 0.0
        %v3578 = vand.u32 %v1148, 4294901760
        %3579 = vmatmul.mubr.f32.gmra.mxu0 %v3578
        %v3580 = vpop.f32.mrf.mxu0
        %v3581 = vadd.f32 %v3200, %v3580
        %v3582 = vpop.f32.mrf.mxu0
        %v3583 = vadd.f32 %v3202, %v3582
        %3584 = vmatprep.mubr.f32.mxu0 0.0
        %v3585 = vand.u32 %v1151, 4294901760
        %3586 = vmatmul.mubr.f32.gmra.mxu0 %v3585
        %v3587 = vpop.f32.mrf.mxu0
        %v3588 = vadd.f32 %v3211, %v3587
        %v3589 = vpop.f32.mrf.mxu0
        %v3590 = vadd.f32 %v3213, %v3589
        %3591 = vmatprep.mubr.f32.mxu0 0.0
        %v3592 = vand.u32 %v1154, 4294901760
        %3593 = vmatmul.mubr.f32.gmra.mxu0 %v3592
        %v3594 = vpop.f32.mrf.mxu0
        %v3595 = vadd.f32 %v3222, %v3594
        %v3596 = vpop.f32.mrf.mxu0
        %v3597 = vadd.f32 %v3224, %v3596
        %3598 = vmatprep.mubr.f32.mxu0 0.0
        %v3599 = vand.u32 %v1157, 4294901760
        %3600 = vmatmul.mubr.f32.gmra.mxu0 %v3599
        %v3601 = vpop.f32.mrf.mxu0
        %v3602 = vadd.f32 %v3233, %v3601
        %v3603 = vpop.f32.mrf.mxu0
        %v3604 = vadd.f32 %v3235, %v3603
        %3605 = vmatprep.mubr.f32.mxu0 0.0
        %v3606 = vand.u32 %v1160, 4294901760
        %3607 = vmatmul.mubr.f32.gmra.mxu0 %v3606
        %v3608 = vpop.f32.mrf.mxu0
        %v3609 = vadd.f32 %v3244, %v3608
        %v3610 = vpop.f32.mrf.mxu0
        %v3611 = vadd.f32 %v3246, %v3610
        %3612 = vmatprep.mubr.f32.mxu0 0.0
        %v3613 = vand.u32 %v1163, 4294901760
        %3614 = vmatmul.mubr.f32.gmra.mxu0 %v3613
        %v3615 = vpop.f32.mrf.mxu0
        %v3616 = vadd.f32 %v3255, %v3615
        %v3617 = vpop.f32.mrf.mxu0
        %v3618 = vadd.f32 %v3257, %v3617
        %3619 = vmatprep.mubr.f32.mxu0 0.0
        %v3620 = vand.u32 %v1166, 4294901760
        %3621 = vmatmul.mubr.f32.gmra.mxu0 %v3620
        %v3622 = vpop.f32.mrf.mxu0
        %v3623 = vadd.f32 %v3266, %v3622
        %v3624 = vpop.f32.mrf.mxu0
        %v3625 = vadd.f32 %v3268, %v3624
        %3626 = vmatprep.mubr.f32.mxu0 0.0
        %v3627 = vand.u32 %v1169, 4294901760
        %3628 = vmatmul.mubr.f32.gmra.mxu0 %v3627
        %v3629 = vpop.f32.mrf.mxu0
        %v3630 = vadd.f32 %v3277, %v3629
        %v3631 = vpop.f32.mrf.mxu0
        %v3632 = vadd.f32 %v3279, %v3631
        %3633 = vmatprep.mubr.f32.mxu0 0.0
        %v3634 = vand.u32 %v1172, 4294901760
        %3635 = vmatmul.mubr.f32.gmra.mxu0 %v3634
        %v3636 = vpop.f32.mrf.mxu0
        %v3637 = vadd.f32 %v3288, %v3636
        %v3638 = vpop.f32.mrf.mxu0
        %v3639 = vadd.f32 %v3290, %v3638
        %3640 = vmatprep.mubr.f32.mxu0 0.0
        %v3641 = vand.u32 %v1175, 4294901760
        %3642 = vmatmul.mubr.f32.gmra.mxu0 %v3641
        %v3643 = vpop.f32.mrf.mxu0
        %v3644 = vadd.f32 %v3299, %v3643
        %v3645 = vpop.f32.mrf.mxu0
        %v3646 = vadd.f32 %v3301, %v3645
        %3647 = vmatprep.mubr.f32.mxu0 0.0
        %v3648 = vand.u32 %v1178, 4294901760
        %3649 = vmatmul.mubr.f32.gmra.mxu0 %v3648
        %v3650 = vpop.f32.mrf.mxu0
        %v3651 = vadd.f32 %v3310, %v3650
        %v3652 = vpop.f32.mrf.mxu0
        %v3653 = vadd.f32 %v3312, %v3652
        %3654 = vmatprep.mubr.f32.mxu0 0.0
        %v3655 = vand.u32 %v1181, 4294901760
        %3656 = vmatmul.mubr.f32.gmra.mxu0 %v3655
        %v3657 = vpop.f32.mrf.mxu0
        %v3658 = vadd.f32 %v3321, %v3657
        %v3659 = vpop.f32.mrf.mxu0
        %v3660 = vadd.f32 %v3323, %v3659
        %3661 = vmatprep.mubr.f32.mxu0 0.0
        %v3662 = vand.u32 %v1184, 4294901760
        %3663 = vmatmul.mubr.f32.gmra.mxu0 %v3662
        %v3664 = vpop.f32.mrf.mxu0
        %v3665 = vadd.f32 %v3332, %v3664
        %v3666 = vpop.f32.mrf.mxu0
        %v3667 = vadd.f32 %v3334, %v3666
        %3668 = vmatprep.mubr.f32.mxu0 0.0
        %v3669 = vand.u32 %v1187, 4294901760
        %3670 = vmatmul.mubr.f32.gmra.mxu0 %v3669
        %v3671 = vpop.f32.mrf.mxu0
        %v3672 = vadd.f32 %v3343, %v3671
        %v3673 = vpop.f32.mrf.mxu0
        %v3674 = vadd.f32 %v3345, %v3673
        %3675 = vmatprep.mubr.f32.mxu0 0.0
        %v3676 = vand.u32 %v1190, 4294901760
        %3677 = vmatmul.mubr.f32.gmra.mxu0 %v3676
        %v3678 = vpop.f32.mrf.mxu0
        %v3679 = vadd.f32 %v3354, %v3678
        %v3680 = vpop.f32.mrf.mxu0
        %v3681 = vadd.f32 %v3356, %v3680
        %3682 = vmatprep.mubr.f32.mxu0 0.0
        %v3683 = vand.u32 %v1193, 4294901760
        %3684 = vmatmul.mubr.f32.gmra.mxu0 %v3683
        %v3685 = vpop.f32.mrf.mxu0
        %v3686 = vadd.f32 %v3365, %v3685
        %v3687 = vpop.f32.mrf.mxu0
        %v3688 = vadd.f32 %v3367, %v3687
        %3689 = vmatprep.mubr.f32.mxu0 0.0
        %v3690 = vand.u32 %v1196, 4294901760
        %3691 = vmatmul.mubr.f32.gmra.mxu0 %v3690
        %v3692 = vpop.f32.mrf.mxu0
        %v3693 = vadd.f32 %v3376, %v3692
        %v3694 = vpop.f32.mrf.mxu0
        %v3695 = vadd.f32 %v3378, %v3694
        %3696 = vmatprep.mubr.f32.mxu0 0.0
        %v3697 = vand.u32 %v1199, 4294901760
        %3698 = vmatmul.mubr.f32.gmra.mxu0 %v3697
        %v3699 = vpop.f32.mrf.mxu0
        %v3700 = vadd.f32 %v3387, %v3699
        %v3701 = vpop.f32.mrf.mxu0
        %v3702 = vadd.f32 %v3389, %v3701
        %3703 = vmatprep.mubr.f32.mxu0 0.0
        %v3704 = vand.u32 %v1202, 4294901760
        %3705 = vmatmul.mubr.f32.gmra.mxu0 %v3704
        %v3706 = vpop.f32.mrf.mxu0
        %v3707 = vadd.f32 %v3398, %v3706
        %v3708 = vpop.f32.mrf.mxu0
        %v3709 = vadd.f32 %v3400, %v3708
        %3710 = vmatprep.mubr.f32.mxu0 0.0
        %v3711 = vand.u32 %v1205, 4294901760
        %3712 = vmatmul.mubr.f32.gmra.mxu0 %v3711
        %v3713 = vpop.f32.mrf.mxu0
        %v3714 = vadd.f32 %v3409, %v3713
        %v3715 = vpop.f32.mrf.mxu0
        %v3716 = vadd.f32 %v3411, %v3715
        %3717 = vmatprep.mubr.f32.mxu0 0.0
        %v3718 = vand.u32 %v1208, 4294901760
        %3719 = vmatmul.mubr.f32.gmra.mxu0 %v3718
        %v3720 = vpop.f32.mrf.mxu0
        %v3721 = vadd.f32 %v3420, %v3720
        %v3722 = vpop.f32.mrf.mxu0
        %v3723 = vadd.f32 %v3422, %v3722
        %3724 = vmatprep.mubr.f32.mxu0 0.0
        %v3725 = vand.u32 %v1211, 4294901760
        %3726 = vmatmul.mubr.f32.gmra.mxu0 %v3725
        %v3727 = vpop.f32.mrf.mxu0
        %v3728 = vadd.f32 %v3431, %v3727
        %v3729 = vpop.f32.mrf.mxu0
        %v3730 = vadd.f32 %v3433, %v3729
        %3731 = vmatprep.mubr.f32.mxu0 0.0
        %v3732 = vand.u32 %v1214, 4294901760
        %3733 = vmatmul.mubr.f32.gmra.mxu0 %v3732
        %v3734 = vpop.f32.mrf.mxu0
        %v3735 = vadd.f32 %v3442, %v3734
        %v3736 = vpop.f32.mrf.mxu0
        %v3737 = vadd.f32 %v3444, %v3736
        %3738 = vmatprep.mubr.f32.mxu0 0.0
        %v3739 = vand.u32 %v1217, 4294901760
        %3740 = vmatmul.mubr.f32.gmra.mxu0 %v3739
        %v3741 = vpop.f32.mrf.mxu0
        %v3742 = vadd.f32 %v3453, %v3741
        %v3743 = vpop.f32.mrf.mxu0
        %v3744 = vadd.f32 %v3455, %v3743
        %3745 = vmatprep.mubr.f32.mxu0 0.0
        %v3746 = vand.u32 %v1220, 4294901760
        %3747 = vmatmul.mubr.f32.gmra.mxu0 %v3746
        %v3748 = vpop.f32.mrf.mxu0
        %v3749 = vadd.f32 %v3464, %v3748
        %v3750 = vpop.f32.mrf.mxu0
        %v3751 = vadd.f32 %v3466, %v3750
        %3752 = vmatprep.mubr.f32.mxu0 0.0
        %v3753 = vand.u32 %v1223, 4294901760
        %3754 = vmatmul.mubr.f32.gmra.mxu0 %v3753
        %v3755 = vpop.f32.mrf.mxu0
        %v3756 = vadd.f32 %v3475, %v3755
        %v3757 = vpop.f32.mrf.mxu0
        %v3758 = vadd.f32 %v3477, %v3757
        %3759 = vdwg.mxu0
        %3760 = vmatprep.subr.mxu0 0.0
        %3761 = vmatpush1.msra.mxu0 0.0
        %3762 = vmatprep.subr.mxu0 0.0
        %3763 = vmatpush1.msra.mxu0 0.0
        %3764 = vmatprep.subr.mxu0 0.0
        %3765 = vmatpush1.msra.mxu0 0.0
        %3766 = vmatprep.subr.mxu0 0.0
        %3767 = vmatpush1.msra.mxu0 0.0
        %3768 = vmatprep.subr.mxu0 0.0
        %3769 = vmatpush1.msra.mxu0 0.0
        %3770 = vmatprep.subr.mxu0 0.0
        %3771 = vmatpush1.msra.mxu0 0.0
        %3772 = vmatprep.subr.mxu0 0.0
        %3773 = vmatpush1.msra.mxu0 0.0
        %3774 = vmatprep.subr.mxu0 0.0
        %3775 = vmatpush1.msra.mxu0 0.0
        %3776 = vmatprep.subr.mxu0 0.0
        %3777 = vmatpush1.msra.mxu0 0.0
        %3778 = vmatprep.subr.mxu0 0.0
        %3779 = vmatpush1.msra.mxu0 0.0
        %3780 = vmatprep.subr.mxu0 0.0
        %3781 = vmatpush1.msra.mxu0 0.0
        %3782 = vmatprep.subr.mxu0 0.0
        %3783 = vmatpush1.msra.mxu0 0.0
        %3784 = vmatprep.subr.mxu0 0.0
        %3785 = vmatpush1.msra.mxu0 0.0
        %3786 = vmatprep.subr.mxu0 0.0
        %3787 = vmatpush1.msra.mxu0 0.0
        %v3788 = vand.u32 %v3101, 4294901760
        %v3789 = vsub.f32 %v3101, %v3788
        %3790 = vmatprep.subr.mxu0 %v3789
        %v3791 = vand.u32 %v3100, 4294901760
        %v3792 = vsub.f32 %v3100, %v3791
        %3793 = vmatpush1.msra.mxu0 %v3792
        %v3794 = vand.u32 %v3099, 4294901760
        %v3795 = vsub.f32 %v3099, %v3794
        %3796 = vmatprep.subr.mxu0 %v3795
        %v3797 = vand.u32 %v3098, 4294901760
        %v3798 = vsub.f32 %v3098, %v3797
        %3799 = vmatpush1.msra.mxu0 %v3798
        %3800 = vmatprep.subr.mxu0 0.0
        %3801 = vmatpush2.msra.mxu0 0.0
        %3802 = vmatprep.subr.mxu0 0.0
        %3803 = vmatpush2.msra.mxu0 0.0
        %3804 = vmatprep.subr.mxu0 0.0
        %3805 = vmatpush2.msra.mxu0 0.0
        %3806 = vmatprep.subr.mxu0 0.0
        %3807 = vmatpush2.msra.mxu0 0.0
        %3808 = vmatprep.subr.mxu0 0.0
        %3809 = vmatpush2.msra.mxu0 0.0
        %3810 = vmatprep.subr.mxu0 0.0
        %3811 = vmatpush2.msra.mxu0 0.0
        %3812 = vmatprep.subr.mxu0 0.0
        %3813 = vmatpush2.msra.mxu0 0.0
        %3814 = vmatprep.subr.mxu0 0.0
        %3815 = vmatpush2.msra.mxu0 0.0
        %3816 = vmatprep.subr.mxu0 0.0
        %3817 = vmatpush2.msra.mxu0 0.0
        %3818 = vmatprep.subr.mxu0 0.0
        %3819 = vmatpush2.msra.mxu0 0.0
        %3820 = vmatprep.subr.mxu0 0.0
        %3821 = vmatpush2.msra.mxu0 0.0
        %3822 = vmatprep.subr.mxu0 0.0
        %3823 = vmatpush2.msra.mxu0 0.0
        %3824 = vmatprep.subr.mxu0 0.0
        %3825 = vmatpush2.msra.mxu0 0.0
        %3826 = vmatprep.subr.mxu0 0.0
        %3827 = vmatpush2.msra.mxu0 0.0
        %3828 = vmatprep.subr.mxu0 0.0
        %3829 = vmatpush2.msra.mxu0 0.0
        %3830 = vmatprep.subr.mxu0 0.0
        %3831 = vmatpush2.msra.mxu0 0.0
        %3832 = vmatprep.mubr.f32.mxu0 0.0
        %v3833 = vand.u32 %v1142, 4294901760
        %v3834 = vsub.f32 %v1142, %v3833
        %3835 = vmatmul.mubr.f32.gmra.mxu0 %v3834
        %v3836 = vpop.f32.mrf.mxu0
        %v3837 = vadd.f32 %v3567, %v3836
        %v3838 = vpop.f32.mrf.mxu0
        %v3839 = vadd.f32 %v3569, %v3838
        %3840 = vmatprep.mubr.f32.mxu0 0.0
        %v3841 = vand.u32 %v1145, 4294901760
        %v3842 = vsub.f32 %v1145, %v3841
        %3843 = vmatmul.mubr.f32.gmra.mxu0 %v3842
        %v3844 = vpop.f32.mrf.mxu0
        %v3845 = vadd.f32 %v3574, %v3844
        %v3846 = vpop.f32.mrf.mxu0
        %v3847 = vadd.f32 %v3576, %v3846
        %3848 = vmatprep.mubr.f32.mxu0 0.0
        %v3849 = vand.u32 %v1148, 4294901760
        %v3850 = vsub.f32 %v1148, %v3849
        %3851 = vmatmul.mubr.f32.gmra.mxu0 %v3850
        %v3852 = vpop.f32.mrf.mxu0
        %v3853 = vadd.f32 %v3581, %v3852
        %v3854 = vpop.f32.mrf.mxu0
        %v3855 = vadd.f32 %v3583, %v3854
        %3856 = vmatprep.mubr.f32.mxu0 0.0
        %v3857 = vand.u32 %v1151, 4294901760
        %v3858 = vsub.f32 %v1151, %v3857
        %3859 = vmatmul.mubr.f32.gmra.mxu0 %v3858
        %v3860 = vpop.f32.mrf.mxu0
        %v3861 = vadd.f32 %v3588, %v3860
        %v3862 = vpop.f32.mrf.mxu0
        %v3863 = vadd.f32 %v3590, %v3862
        %3864 = vmatprep.mubr.f32.mxu0 0.0
        %v3865 = vand.u32 %v1154, 4294901760
        %v3866 = vsub.f32 %v1154, %v3865
        %3867 = vmatmul.mubr.f32.gmra.mxu0 %v3866
        %v3868 = vpop.f32.mrf.mxu0
        %v3869 = vadd.f32 %v3595, %v3868
        %v3870 = vpop.f32.mrf.mxu0
        %v3871 = vadd.f32 %v3597, %v3870
        %3872 = vmatprep.mubr.f32.mxu0 0.0
        %v3873 = vand.u32 %v1157, 4294901760
        %v3874 = vsub.f32 %v1157, %v3873
        %3875 = vmatmul.mubr.f32.gmra.mxu0 %v3874
        %v3876 = vpop.f32.mrf.mxu0
        %v3877 = vadd.f32 %v3602, %v3876
        %v3878 = vpop.f32.mrf.mxu0
        %v3879 = vadd.f32 %v3604, %v3878
        %3880 = vmatprep.mubr.f32.mxu0 0.0
        %v3881 = vand.u32 %v1160, 4294901760
        %v3882 = vsub.f32 %v1160, %v3881
        %3883 = vmatmul.mubr.f32.gmra.mxu0 %v3882
        %v3884 = vpop.f32.mrf.mxu0
        %v3885 = vadd.f32 %v3609, %v3884
        %v3886 = vpop.f32.mrf.mxu0
        %v3887 = vadd.f32 %v3611, %v3886
        %3888 = vmatprep.mubr.f32.mxu0 0.0
        %v3889 = vand.u32 %v1163, 4294901760
        %v3890 = vsub.f32 %v1163, %v3889
        %3891 = vmatmul.mubr.f32.gmra.mxu0 %v3890
        %v3892 = vpop.f32.mrf.mxu0
        %v3893 = vadd.f32 %v3616, %v3892
        %v3894 = vpop.f32.mrf.mxu0
        %v3895 = vadd.f32 %v3618, %v3894
        %3896 = vmatprep.mubr.f32.mxu0 0.0
        %v3897 = vand.u32 %v1166, 4294901760
        %v3898 = vsub.f32 %v1166, %v3897
        %3899 = vmatmul.mubr.f32.gmra.mxu0 %v3898
        %v3900 = vpop.f32.mrf.mxu0
        %v3901 = vadd.f32 %v3623, %v3900
        %v3902 = vpop.f32.mrf.mxu0
        %v3903 = vadd.f32 %v3625, %v3902
        %3904 = vmatprep.mubr.f32.mxu0 0.0
        %v3905 = vand.u32 %v1169, 4294901760
        %v3906 = vsub.f32 %v1169, %v3905
        %3907 = vmatmul.mubr.f32.gmra.mxu0 %v3906
        %v3908 = vpop.f32.mrf.mxu0
        %v3909 = vadd.f32 %v3630, %v3908
        %v3910 = vpop.f32.mrf.mxu0
        %v3911 = vadd.f32 %v3632, %v3910
        %3912 = vmatprep.mubr.f32.mxu0 0.0
        %v3913 = vand.u32 %v1172, 4294901760
        %v3914 = vsub.f32 %v1172, %v3913
        %3915 = vmatmul.mubr.f32.gmra.mxu0 %v3914
        %v3916 = vpop.f32.mrf.mxu0
        %v3917 = vadd.f32 %v3637, %v3916
        %v3918 = vpop.f32.mrf.mxu0
        %v3919 = vadd.f32 %v3639, %v3918
        %3920 = vmatprep.mubr.f32.mxu0 0.0
        %v3921 = vand.u32 %v1175, 4294901760
        %v3922 = vsub.f32 %v1175, %v3921
        %3923 = vmatmul.mubr.f32.gmra.mxu0 %v3922
        %v3924 = vpop.f32.mrf.mxu0
        %v3925 = vadd.f32 %v3644, %v3924
        %v3926 = vpop.f32.mrf.mxu0
        %v3927 = vadd.f32 %v3646, %v3926
        %3928 = vmatprep.mubr.f32.mxu0 0.0
        %v3929 = vand.u32 %v1178, 4294901760
        %v3930 = vsub.f32 %v1178, %v3929
        %3931 = vmatmul.mubr.f32.gmra.mxu0 %v3930
        %v3932 = vpop.f32.mrf.mxu0
        %v3933 = vadd.f32 %v3651, %v3932
        %v3934 = vpop.f32.mrf.mxu0
        %v3935 = vadd.f32 %v3653, %v3934
        %3936 = vmatprep.mubr.f32.mxu0 0.0
        %v3937 = vand.u32 %v1181, 4294901760
        %v3938 = vsub.f32 %v1181, %v3937
        %3939 = vmatmul.mubr.f32.gmra.mxu0 %v3938
        %v3940 = vpop.f32.mrf.mxu0
        %v3941 = vadd.f32 %v3658, %v3940
        %v3942 = vpop.f32.mrf.mxu0
        %v3943 = vadd.f32 %v3660, %v3942
        %3944 = vmatprep.mubr.f32.mxu0 0.0
        %v3945 = vand.u32 %v1184, 4294901760
        %v3946 = vsub.f32 %v1184, %v3945
        %3947 = vmatmul.mubr.f32.gmra.mxu0 %v3946
        %v3948 = vpop.f32.mrf.mxu0
        %v3949 = vadd.f32 %v3665, %v3948
        %v3950 = vpop.f32.mrf.mxu0
        %v3951 = vadd.f32 %v3667, %v3950
        %3952 = vmatprep.mubr.f32.mxu0 0.0
        %v3953 = vand.u32 %v1187, 4294901760
        %v3954 = vsub.f32 %v1187, %v3953
        %3955 = vmatmul.mubr.f32.gmra.mxu0 %v3954
        %v3956 = vpop.f32.mrf.mxu0
        %v3957 = vadd.f32 %v3672, %v3956
        %v3958 = vpop.f32.mrf.mxu0
        %v3959 = vadd.f32 %v3674, %v3958
        %3960 = vmatprep.mubr.f32.mxu0 0.0
        %v3961 = vand.u32 %v1190, 4294901760
        %v3962 = vsub.f32 %v1190, %v3961
        %3963 = vmatmul.mubr.f32.gmra.mxu0 %v3962
        %v3964 = vpop.f32.mrf.mxu0
        %v3965 = vadd.f32 %v3679, %v3964
        %v3966 = vpop.f32.mrf.mxu0
        %v3967 = vadd.f32 %v3681, %v3966
        %3968 = vmatprep.mubr.f32.mxu0 0.0
        %v3969 = vand.u32 %v1193, 4294901760
        %v3970 = vsub.f32 %v1193, %v3969
        %3971 = vmatmul.mubr.f32.gmra.mxu0 %v3970
        %v3972 = vpop.f32.mrf.mxu0
        %v3973 = vadd.f32 %v3686, %v3972
        %v3974 = vpop.f32.mrf.mxu0
        %v3975 = vadd.f32 %v3688, %v3974
        %3976 = vmatprep.mubr.f32.mxu0 0.0
        %v3977 = vand.u32 %v1196, 4294901760
        %v3978 = vsub.f32 %v1196, %v3977
        %3979 = vmatmul.mubr.f32.gmra.mxu0 %v3978
        %v3980 = vpop.f32.mrf.mxu0
        %v3981 = vadd.f32 %v3693, %v3980
        %v3982 = vpop.f32.mrf.mxu0
        %v3983 = vadd.f32 %v3695, %v3982
        %3984 = vmatprep.mubr.f32.mxu0 0.0
        %v3985 = vand.u32 %v1199, 4294901760
        %v3986 = vsub.f32 %v1199, %v3985
        %3987 = vmatmul.mubr.f32.gmra.mxu0 %v3986
        %v3988 = vpop.f32.mrf.mxu0
        %v3989 = vadd.f32 %v3700, %v3988
        %v3990 = vpop.f32.mrf.mxu0
        %v3991 = vadd.f32 %v3702, %v3990
        %3992 = vmatprep.mubr.f32.mxu0 0.0
        %v3993 = vand.u32 %v1202, 4294901760
        %v3994 = vsub.f32 %v1202, %v3993
        %3995 = vmatmul.mubr.f32.gmra.mxu0 %v3994
        %v3996 = vpop.f32.mrf.mxu0
        %v3997 = vadd.f32 %v3707, %v3996
        %v3998 = vpop.f32.mrf.mxu0
        %v3999 = vadd.f32 %v3709, %v3998
        %4000 = vmatprep.mubr.f32.mxu0 0.0
        %v4001 = vand.u32 %v1205, 4294901760
        %v4002 = vsub.f32 %v1205, %v4001
        %4003 = vmatmul.mubr.f32.gmra.mxu0 %v4002
        %v4004 = vpop.f32.mrf.mxu0
        %v4005 = vadd.f32 %v3714, %v4004
        %v4006 = vpop.f32.mrf.mxu0
        %v4007 = vadd.f32 %v3716, %v4006
        %4008 = vmatprep.mubr.f32.mxu0 0.0
        %v4009 = vand.u32 %v1208, 4294901760
        %v4010 = vsub.f32 %v1208, %v4009
        %4011 = vmatmul.mubr.f32.gmra.mxu0 %v4010
        %v4012 = vpop.f32.mrf.mxu0
        %v4013 = vadd.f32 %v3721, %v4012
        %v4014 = vpop.f32.mrf.mxu0
        %v4015 = vadd.f32 %v3723, %v4014
        %4016 = vmatprep.mubr.f32.mxu0 0.0
        %v4017 = vand.u32 %v1211, 4294901760
        %v4018 = vsub.f32 %v1211, %v4017
        %4019 = vmatmul.mubr.f32.gmra.mxu0 %v4018
        %v4020 = vpop.f32.mrf.mxu0
        %v4021 = vadd.f32 %v3728, %v4020
        %v4022 = vpop.f32.mrf.mxu0
        %v4023 = vadd.f32 %v3730, %v4022
        %4024 = vmatprep.mubr.f32.mxu0 0.0
        %v4025 = vand.u32 %v1214, 4294901760
        %v4026 = vsub.f32 %v1214, %v4025
        %4027 = vmatmul.mubr.f32.gmra.mxu0 %v4026
        %v4028 = vpop.f32.mrf.mxu0
        %v4029 = vadd.f32 %v3735, %v4028
        %v4030 = vpop.f32.mrf.mxu0
        %v4031 = vadd.f32 %v3737, %v4030
        %4032 = vmatprep.mubr.f32.mxu0 0.0
        %v4033 = vand.u32 %v1217, 4294901760
        %v4034 = vsub.f32 %v1217, %v4033
        %4035 = vmatmul.mubr.f32.gmra.mxu0 %v4034
        %v4036 = vpop.f32.mrf.mxu0
        %v4037 = vadd.f32 %v3742, %v4036
        %v4038 = vpop.f32.mrf.mxu0
        %v4039 = vadd.f32 %v3744, %v4038
        %4040 = vmatprep.mubr.f32.mxu0 0.0
        %v4041 = vand.u32 %v1220, 4294901760
        %v4042 = vsub.f32 %v1220, %v4041
        %4043 = vmatmul.mubr.f32.gmra.mxu0 %v4042
        %v4044 = vpop.f32.mrf.mxu0
        %v4045 = vadd.f32 %v3749, %v4044
        %v4046 = vpop.f32.mrf.mxu0
        %v4047 = vadd.f32 %v3751, %v4046
        %4048 = vmatprep.mubr.f32.mxu0 0.0
        %v4049 = vand.u32 %v1223, 4294901760
        %v4050 = vsub.f32 %v1223, %v4049
        %4051 = vmatmul.mubr.f32.gmra.mxu0 %v4050
        %v4052 = vpop.f32.mrf.mxu0
        %v4053 = vadd.f32 %v3756, %v4052
        %v4054 = vpop.f32.mrf.mxu0
        %v4055 = vadd.f32 %v3758, %v4054
        %4056 = vdwg.mxu0
        %4057 = vmatprep.subr.mxu0 0.0
        %4058 = vmatpush1.msra.mxu0 0.0
        %4059 = vmatprep.subr.mxu0 0.0
        %4060 = vmatpush1.msra.mxu0 0.0
        %4061 = vmatprep.subr.mxu0 0.0
        %4062 = vmatpush1.msra.mxu0 0.0
        %4063 = vmatprep.subr.mxu0 0.0
        %4064 = vmatpush1.msra.mxu0 0.0
        %4065 = vmatprep.subr.mxu0 0.0
        %4066 = vmatpush1.msra.mxu0 0.0
        %4067 = vmatprep.subr.mxu0 0.0
        %4068 = vmatpush1.msra.mxu0 0.0
        %4069 = vmatprep.subr.mxu0 0.0
        %4070 = vmatpush1.msra.mxu0 0.0
        %4071 = vmatprep.subr.mxu0 0.0
        %4072 = vmatpush1.msra.mxu0 0.0
        %4073 = vmatprep.subr.mxu0 0.0
        %4074 = vmatpush1.msra.mxu0 0.0
        %4075 = vmatprep.subr.mxu0 0.0
        %4076 = vmatpush1.msra.mxu0 0.0
        %4077 = vmatprep.subr.mxu0 0.0
        %4078 = vmatpush1.msra.mxu0 0.0
        %4079 = vmatprep.subr.mxu0 0.0
        %4080 = vmatpush1.msra.mxu0 0.0
        %4081 = vmatprep.subr.mxu0 0.0
        %4082 = vmatpush1.msra.mxu0 0.0
        %4083 = vmatprep.subr.mxu0 0.0
        %4084 = vmatpush1.msra.mxu0 0.0
        %v4085 = vand.u32 %v3101, 4294901760
        %4086 = vmatprep.subr.mxu0 %v4085
        %v4087 = vand.u32 %v3100, 4294901760
        %4088 = vmatpush1.msra.mxu0 %v4087
        %v4089 = vand.u32 %v3099, 4294901760
        %4090 = vmatprep.subr.mxu0 %v4089
        %v4091 = vand.u32 %v3098, 4294901760
        %4092 = vmatpush1.msra.mxu0 %v4091
        %4093 = vmatprep.subr.mxu0 0.0
        %4094 = vmatpush2.msra.mxu0 0.0
        %4095 = vmatprep.subr.mxu0 0.0
        %4096 = vmatpush2.msra.mxu0 0.0
        %4097 = vmatprep.subr.mxu0 0.0
        %4098 = vmatpush2.msra.mxu0 0.0
        %4099 = vmatprep.subr.mxu0 0.0
        %4100 = vmatpush2.msra.mxu0 0.0
        %4101 = vmatprep.subr.mxu0 0.0
        %4102 = vmatpush2.msra.mxu0 0.0
        %4103 = vmatprep.subr.mxu0 0.0
        %4104 = vmatpush2.msra.mxu0 0.0
        %4105 = vmatprep.subr.mxu0 0.0
        %4106 = vmatpush2.msra.mxu0 0.0
        %4107 = vmatprep.subr.mxu0 0.0
        %4108 = vmatpush2.msra.mxu0 0.0
        %4109 = vmatprep.subr.mxu0 0.0
        %4110 = vmatpush2.msra.mxu0 0.0
        %4111 = vmatprep.subr.mxu0 0.0
        %4112 = vmatpush2.msra.mxu0 0.0
        %4113 = vmatprep.subr.mxu0 0.0
        %4114 = vmatpush2.msra.mxu0 0.0
        %4115 = vmatprep.subr.mxu0 0.0
        %4116 = vmatpush2.msra.mxu0 0.0
        %4117 = vmatprep.subr.mxu0 0.0
        %4118 = vmatpush2.msra.mxu0 0.0
        %4119 = vmatprep.subr.mxu0 0.0
        %4120 = vmatpush2.msra.mxu0 0.0
        %4121 = vmatprep.subr.mxu0 0.0
        %4122 = vmatpush2.msra.mxu0 0.0
        %4123 = vmatprep.subr.mxu0 0.0
        %4124 = vmatpush2.msra.mxu0 0.0
        %4125 = vmatprep.mubr.f32.mxu0 0.0
        %v4126 = vand.u32 %v1142, 4294901760
        %v4127 = vsub.f32 %v1142, %v4126
        %v4128 = vand.u32 %v4127, 4294901760
        %4129 = vmatmul.mubr.f32.gmra.mxu0 %v4128
        %v4130 = vpop.f32.mrf.mxu0
        %v4131 = vadd.f32 %v3837, %v4130
        %v4132 = vpop.f32.mrf.mxu0
        %v4133 = vadd.f32 %v3839, %v4132
        %4134 = vmatprep.mubr.f32.mxu0 0.0
        %v4135 = vand.u32 %v1145, 4294901760
        %v4136 = vsub.f32 %v1145, %v4135
        %v4137 = vand.u32 %v4136, 4294901760
        %4138 = vmatmul.mubr.f32.gmra.mxu0 %v4137
        %v4139 = vpop.f32.mrf.mxu0
        %v4140 = vadd.f32 %v3845, %v4139
        %v4141 = vpop.f32.mrf.mxu0
        %v4142 = vadd.f32 %v3847, %v4141
        %4143 = vmatprep.mubr.f32.mxu0 0.0
        %v4144 = vand.u32 %v1148, 4294901760
        %v4145 = vsub.f32 %v1148, %v4144
        %v4146 = vand.u32 %v4145, 4294901760
        %4147 = vmatmul.mubr.f32.gmra.mxu0 %v4146
        %v4148 = vpop.f32.mrf.mxu0
        %v4149 = vadd.f32 %v3853, %v4148
        %v4150 = vpop.f32.mrf.mxu0
        %v4151 = vadd.f32 %v3855, %v4150
        %4152 = vmatprep.mubr.f32.mxu0 0.0
        %v4153 = vand.u32 %v1151, 4294901760
        %v4154 = vsub.f32 %v1151, %v4153
        %v4155 = vand.u32 %v4154, 4294901760
        %4156 = vmatmul.mubr.f32.gmra.mxu0 %v4155
        %v4157 = vpop.f32.mrf.mxu0
        %v4158 = vadd.f32 %v3861, %v4157
        %v4159 = vpop.f32.mrf.mxu0
        %v4160 = vadd.f32 %v3863, %v4159
        %4161 = vmatprep.mubr.f32.mxu0 0.0
        %v4162 = vand.u32 %v1154, 4294901760
        %v4163 = vsub.f32 %v1154, %v4162
        %v4164 = vand.u32 %v4163, 4294901760
        %4165 = vmatmul.mubr.f32.gmra.mxu0 %v4164
        %v4166 = vpop.f32.mrf.mxu0
        %v4167 = vadd.f32 %v3869, %v4166
        %v4168 = vpop.f32.mrf.mxu0
        %v4169 = vadd.f32 %v3871, %v4168
        %4170 = vmatprep.mubr.f32.mxu0 0.0
        %v4171 = vand.u32 %v1157, 4294901760
        %v4172 = vsub.f32 %v1157, %v4171
        %v4173 = vand.u32 %v4172, 4294901760
        %4174 = vmatmul.mubr.f32.gmra.mxu0 %v4173
        %v4175 = vpop.f32.mrf.mxu0
        %v4176 = vadd.f32 %v3877, %v4175
        %v4177 = vpop.f32.mrf.mxu0
        %v4178 = vadd.f32 %v3879, %v4177
        %4179 = vmatprep.mubr.f32.mxu0 0.0
        %v4180 = vand.u32 %v1160, 4294901760
        %v4181 = vsub.f32 %v1160, %v4180
        %v4182 = vand.u32 %v4181, 4294901760
        %4183 = vmatmul.mubr.f32.gmra.mxu0 %v4182
        %v4184 = vpop.f32.mrf.mxu0
        %v4185 = vadd.f32 %v3885, %v4184
        %v4186 = vpop.f32.mrf.mxu0
        %v4187 = vadd.f32 %v3887, %v4186
        %4188 = vmatprep.mubr.f32.mxu0 0.0
        %v4189 = vand.u32 %v1163, 4294901760
        %v4190 = vsub.f32 %v1163, %v4189
        %v4191 = vand.u32 %v4190, 4294901760
        %4192 = vmatmul.mubr.f32.gmra.mxu0 %v4191
        %v4193 = vpop.f32.mrf.mxu0
        %v4194 = vadd.f32 %v3893, %v4193
        %v4195 = vpop.f32.mrf.mxu0
        %v4196 = vadd.f32 %v3895, %v4195
        %4197 = vmatprep.mubr.f32.mxu0 0.0
        %v4198 = vand.u32 %v1166, 4294901760
        %v4199 = vsub.f32 %v1166, %v4198
        %v4200 = vand.u32 %v4199, 4294901760
        %4201 = vmatmul.mubr.f32.gmra.mxu0 %v4200
        %v4202 = vpop.f32.mrf.mxu0
        %v4203 = vadd.f32 %v3901, %v4202
        %v4204 = vpop.f32.mrf.mxu0
        %v4205 = vadd.f32 %v3903, %v4204
        %4206 = vmatprep.mubr.f32.mxu0 0.0
        %v4207 = vand.u32 %v1169, 4294901760
        %v4208 = vsub.f32 %v1169, %v4207
        %v4209 = vand.u32 %v4208, 4294901760
        %4210 = vmatmul.mubr.f32.gmra.mxu0 %v4209
        %v4211 = vpop.f32.mrf.mxu0
        %v4212 = vadd.f32 %v3909, %v4211
        %v4213 = vpop.f32.mrf.mxu0
        %v4214 = vadd.f32 %v3911, %v4213
        %4215 = vmatprep.mubr.f32.mxu0 0.0
        %v4216 = vand.u32 %v1172, 4294901760
        %v4217 = vsub.f32 %v1172, %v4216
        %v4218 = vand.u32 %v4217, 4294901760
        %4219 = vmatmul.mubr.f32.gmra.mxu0 %v4218
        %v4220 = vpop.f32.mrf.mxu0
        %v4221 = vadd.f32 %v3917, %v4220
        %v4222 = vpop.f32.mrf.mxu0
        %v4223 = vadd.f32 %v3919, %v4222
        %4224 = vmatprep.mubr.f32.mxu0 0.0
        %v4225 = vand.u32 %v1175, 4294901760
        %v4226 = vsub.f32 %v1175, %v4225
        %v4227 = vand.u32 %v4226, 4294901760
        %4228 = vmatmul.mubr.f32.gmra.mxu0 %v4227
        %v4229 = vpop.f32.mrf.mxu0
        %v4230 = vadd.f32 %v3925, %v4229
        %v4231 = vpop.f32.mrf.mxu0
        %v4232 = vadd.f32 %v3927, %v4231
        %4233 = vmatprep.mubr.f32.mxu0 0.0
        %v4234 = vand.u32 %v1178, 4294901760
        %v4235 = vsub.f32 %v1178, %v4234
        %v4236 = vand.u32 %v4235, 4294901760
        %4237 = vmatmul.mubr.f32.gmra.mxu0 %v4236
        %v4238 = vpop.f32.mrf.mxu0
        %v4239 = vadd.f32 %v3933, %v4238
        %v4240 = vpop.f32.mrf.mxu0
        %v4241 = vadd.f32 %v3935, %v4240
        %4242 = vmatprep.mubr.f32.mxu0 0.0
        %v4243 = vand.u32 %v1181, 4294901760
        %v4244 = vsub.f32 %v1181, %v4243
        %v4245 = vand.u32 %v4244, 4294901760
        %4246 = vmatmul.mubr.f32.gmra.mxu0 %v4245
        %v4247 = vpop.f32.mrf.mxu0
        %v4248 = vadd.f32 %v3941, %v4247
        %v4249 = vpop.f32.mrf.mxu0
        %v4250 = vadd.f32 %v3943, %v4249
        %4251 = vmatprep.mubr.f32.mxu0 0.0
        %v4252 = vand.u32 %v1184, 4294901760
        %v4253 = vsub.f32 %v1184, %v4252
        %v4254 = vand.u32 %v4253, 4294901760
        %4255 = vmatmul.mubr.f32.gmra.mxu0 %v4254
        %v4256 = vpop.f32.mrf.mxu0
        %v4257 = vadd.f32 %v3949, %v4256
        %v4258 = vpop.f32.mrf.mxu0
        %v4259 = vadd.f32 %v3951, %v4258
        %4260 = vmatprep.mubr.f32.mxu0 0.0
        %v4261 = vand.u32 %v1187, 4294901760
        %v4262 = vsub.f32 %v1187, %v4261
        %v4263 = vand.u32 %v4262, 4294901760
        %4264 = vmatmul.mubr.f32.gmra.mxu0 %v4263
        %v4265 = vpop.f32.mrf.mxu0
        %v4266 = vadd.f32 %v3957, %v4265
        %v4267 = vpop.f32.mrf.mxu0
        %v4268 = vadd.f32 %v3959, %v4267
        %4269 = vmatprep.mubr.f32.mxu0 0.0
        %v4270 = vand.u32 %v1190, 4294901760
        %v4271 = vsub.f32 %v1190, %v4270
        %v4272 = vand.u32 %v4271, 4294901760
        %4273 = vmatmul.mubr.f32.gmra.mxu0 %v4272
        %v4274 = vpop.f32.mrf.mxu0
        %v4275 = vadd.f32 %v3965, %v4274
        %v4276 = vpop.f32.mrf.mxu0
        %v4277 = vadd.f32 %v3967, %v4276
        %4278 = vmatprep.mubr.f32.mxu0 0.0
        %v4279 = vand.u32 %v1193, 4294901760
        %v4280 = vsub.f32 %v1193, %v4279
        %v4281 = vand.u32 %v4280, 4294901760
        %4282 = vmatmul.mubr.f32.gmra.mxu0 %v4281
        %v4283 = vpop.f32.mrf.mxu0
        %v4284 = vadd.f32 %v3973, %v4283
        %v4285 = vpop.f32.mrf.mxu0
        %v4286 = vadd.f32 %v3975, %v4285
        %4287 = vmatprep.mubr.f32.mxu0 0.0
        %v4288 = vand.u32 %v1196, 4294901760
        %v4289 = vsub.f32 %v1196, %v4288
        %v4290 = vand.u32 %v4289, 4294901760
        %4291 = vmatmul.mubr.f32.gmra.mxu0 %v4290
        %v4292 = vpop.f32.mrf.mxu0
        %v4293 = vadd.f32 %v3981, %v4292
        %v4294 = vpop.f32.mrf.mxu0
        %v4295 = vadd.f32 %v3983, %v4294
        %4296 = vmatprep.mubr.f32.mxu0 0.0
        %v4297 = vand.u32 %v1199, 4294901760
        %v4298 = vsub.f32 %v1199, %v4297
        %v4299 = vand.u32 %v4298, 4294901760
        %4300 = vmatmul.mubr.f32.gmra.mxu0 %v4299
        %v4301 = vpop.f32.mrf.mxu0
        %v4302 = vadd.f32 %v3989, %v4301
        %v4303 = vpop.f32.mrf.mxu0
        %v4304 = vadd.f32 %v3991, %v4303
        %4305 = vmatprep.mubr.f32.mxu0 0.0
        %v4306 = vand.u32 %v1202, 4294901760
        %v4307 = vsub.f32 %v1202, %v4306
        %v4308 = vand.u32 %v4307, 4294901760
        %4309 = vmatmul.mubr.f32.gmra.mxu0 %v4308
        %v4310 = vpop.f32.mrf.mxu0
        %v4311 = vadd.f32 %v3997, %v4310
        %v4312 = vpop.f32.mrf.mxu0
        %v4313 = vadd.f32 %v3999, %v4312
        %4314 = vmatprep.mubr.f32.mxu0 0.0
        %v4315 = vand.u32 %v1205, 4294901760
        %v4316 = vsub.f32 %v1205, %v4315
        %v4317 = vand.u32 %v4316, 4294901760
        %4318 = vmatmul.mubr.f32.gmra.mxu0 %v4317
        %v4319 = vpop.f32.mrf.mxu0
        %v4320 = vadd.f32 %v4005, %v4319
        %v4321 = vpop.f32.mrf.mxu0
        %v4322 = vadd.f32 %v4007, %v4321
        %4323 = vmatprep.mubr.f32.mxu0 0.0
        %v4324 = vand.u32 %v1208, 4294901760
        %v4325 = vsub.f32 %v1208, %v4324
        %v4326 = vand.u32 %v4325, 4294901760
        %4327 = vmatmul.mubr.f32.gmra.mxu0 %v4326
        %v4328 = vpop.f32.mrf.mxu0
        %v4329 = vadd.f32 %v4013, %v4328
        %v4330 = vpop.f32.mrf.mxu0
        %v4331 = vadd.f32 %v4015, %v4330
        %4332 = vmatprep.mubr.f32.mxu0 0.0
        %v4333 = vand.u32 %v1211, 4294901760
        %v4334 = vsub.f32 %v1211, %v4333
        %v4335 = vand.u32 %v4334, 4294901760
        %4336 = vmatmul.mubr.f32.gmra.mxu0 %v4335
        %v4337 = vpop.f32.mrf.mxu0
        %v4338 = vadd.f32 %v4021, %v4337
        %v4339 = vpop.f32.mrf.mxu0
        %v4340 = vadd.f32 %v4023, %v4339
        %4341 = vmatprep.mubr.f32.mxu0 0.0
        %v4342 = vand.u32 %v1214, 4294901760
        %v4343 = vsub.f32 %v1214, %v4342
        %v4344 = vand.u32 %v4343, 4294901760
        %4345 = vmatmul.mubr.f32.gmra.mxu0 %v4344
        %v4346 = vpop.f32.mrf.mxu0
        %v4347 = vadd.f32 %v4029, %v4346
        %v4348 = vpop.f32.mrf.mxu0
        %v4349 = vadd.f32 %v4031, %v4348
        %4350 = vmatprep.mubr.f32.mxu0 0.0
        %v4351 = vand.u32 %v1217, 4294901760
        %v4352 = vsub.f32 %v1217, %v4351
        %v4353 = vand.u32 %v4352, 4294901760
        %4354 = vmatmul.mubr.f32.gmra.mxu0 %v4353
        %v4355 = vpop.f32.mrf.mxu0
        %v4356 = vadd.f32 %v4037, %v4355
        %v4357 = vpop.f32.mrf.mxu0
        %v4358 = vadd.f32 %v4039, %v4357
        %4359 = vmatprep.mubr.f32.mxu0 0.0
        %v4360 = vand.u32 %v1220, 4294901760
        %v4361 = vsub.f32 %v1220, %v4360
        %v4362 = vand.u32 %v4361, 4294901760
        %4363 = vmatmul.mubr.f32.gmra.mxu0 %v4362
        %v4364 = vpop.f32.mrf.mxu0
        %v4365 = vadd.f32 %v4045, %v4364
        %v4366 = vpop.f32.mrf.mxu0
        %v4367 = vadd.f32 %v4047, %v4366
        %4368 = vmatprep.mubr.f32.mxu0 0.0
        %v4369 = vand.u32 %v1223, 4294901760
        %v4370 = vsub.f32 %v1223, %v4369
        %v4371 = vand.u32 %v4370, 4294901760
        %4372 = vmatmul.mubr.f32.gmra.mxu0 %v4371
        %v4373 = vpop.f32.mrf.mxu0
        %v4374 = vadd.f32 %v4053, %v4373
        %v4375 = vpop.f32.mrf.mxu0
        %v4376 = vadd.f32 %v4055, %v4375
        %4377 = vdwg.mxu0
        %4378 = vmatprep.subr.mxu0 0.0
        %4379 = vmatpush1.msra.mxu0 0.0
        %4380 = vmatprep.subr.mxu0 0.0
        %4381 = vmatpush1.msra.mxu0 0.0
        %4382 = vmatprep.subr.mxu0 0.0
        %4383 = vmatpush1.msra.mxu0 0.0
        %4384 = vmatprep.subr.mxu0 0.0
        %4385 = vmatpush1.msra.mxu0 0.0
        %4386 = vmatprep.subr.mxu0 0.0
        %4387 = vmatpush1.msra.mxu0 0.0
        %4388 = vmatprep.subr.mxu0 0.0
        %4389 = vmatpush1.msra.mxu0 0.0
        %4390 = vmatprep.subr.mxu0 0.0
        %4391 = vmatpush1.msra.mxu0 0.0
        %4392 = vmatprep.subr.mxu0 0.0
        %4393 = vmatpush1.msra.mxu0 0.0
        %4394 = vmatprep.subr.mxu0 0.0
        %4395 = vmatpush1.msra.mxu0 0.0
        %4396 = vmatprep.subr.mxu0 0.0
        %4397 = vmatpush1.msra.mxu0 0.0
        %4398 = vmatprep.subr.mxu0 0.0
        %4399 = vmatpush1.msra.mxu0 0.0
        %4400 = vmatprep.subr.mxu0 0.0
        %4401 = vmatpush1.msra.mxu0 0.0
        %4402 = vmatprep.subr.mxu0 0.0
        %4403 = vmatpush1.msra.mxu0 0.0
        %4404 = vmatprep.subr.mxu0 0.0
        %4405 = vmatpush1.msra.mxu0 0.0
        %v4406 = vand.u32 %v3101, 4294901760
        %v4407 = vsub.f32 %v3101, %v4406
        %v4408 = vand.u32 %v4407, 4294901760
        %4409 = vmatprep.subr.mxu0 %v4408
        %v4410 = vand.u32 %v3100, 4294901760
        %v4411 = vsub.f32 %v3100, %v4410
        %v4412 = vand.u32 %v4411, 4294901760
        %4413 = vmatpush1.msra.mxu0 %v4412
        %v4414 = vand.u32 %v3099, 4294901760
        %v4415 = vsub.f32 %v3099, %v4414
        %v4416 = vand.u32 %v4415, 4294901760
        %4417 = vmatprep.subr.mxu0 %v4416
        %v4418 = vand.u32 %v3098, 4294901760
        %v4419 = vsub.f32 %v3098, %v4418
        %v4420 = vand.u32 %v4419, 4294901760
        %4421 = vmatpush1.msra.mxu0 %v4420
        %4422 = vmatprep.subr.mxu0 0.0
        %4423 = vmatpush2.msra.mxu0 0.0
        %4424 = vmatprep.subr.mxu0 0.0
        %4425 = vmatpush2.msra.mxu0 0.0
        %4426 = vmatprep.subr.mxu0 0.0
        %4427 = vmatpush2.msra.mxu0 0.0
        %4428 = vmatprep.subr.mxu0 0.0
        %4429 = vmatpush2.msra.mxu0 0.0
        %4430 = vmatprep.subr.mxu0 0.0
        %4431 = vmatpush2.msra.mxu0 0.0
        %4432 = vmatprep.subr.mxu0 0.0
        %4433 = vmatpush2.msra.mxu0 0.0
        %4434 = vmatprep.subr.mxu0 0.0
        %4435 = vmatpush2.msra.mxu0 0.0
        %4436 = vmatprep.subr.mxu0 0.0
        %4437 = vmatpush2.msra.mxu0 0.0
        %4438 = vmatprep.subr.mxu0 0.0
        %4439 = vmatpush2.msra.mxu0 0.0
        %4440 = vmatprep.subr.mxu0 0.0
        %4441 = vmatpush2.msra.mxu0 0.0
        %4442 = vmatprep.subr.mxu0 0.0
        %4443 = vmatpush2.msra.mxu0 0.0
        %4444 = vmatprep.subr.mxu0 0.0
        %4445 = vmatpush2.msra.mxu0 0.0
        %4446 = vmatprep.subr.mxu0 0.0
        %4447 = vmatpush2.msra.mxu0 0.0
        %4448 = vmatprep.subr.mxu0 0.0
        %4449 = vmatpush2.msra.mxu0 0.0
        %4450 = vmatprep.subr.mxu0 0.0
        %4451 = vmatpush2.msra.mxu0 0.0
        %4452 = vmatprep.subr.mxu0 0.0
        %4453 = vmatpush2.msra.mxu0 0.0
        %4454 = vmatprep.mubr.f32.mxu0 0.0
        %v4455 = vand.u32 %v1142, 4294901760
        %4456 = vmatmul.mubr.f32.gmra.mxu0 %v4455
        %v4457 = vpop.f32.mrf.mxu0
        %v4458 = vadd.f32 %v4131, %v4457
        %v4459 = vpop.f32.mrf.mxu0
        %v4460 = vadd.f32 %v4133, %v4459
        %4461 = vmatprep.mubr.f32.mxu0 0.0
        %v4462 = vand.u32 %v1145, 4294901760
        %4463 = vmatmul.mubr.f32.gmra.mxu0 %v4462
        %v4464 = vpop.f32.mrf.mxu0
        %v4465 = vadd.f32 %v4140, %v4464
        %v4466 = vpop.f32.mrf.mxu0
        %v4467 = vadd.f32 %v4142, %v4466
        %4468 = vmatprep.mubr.f32.mxu0 0.0
        %v4469 = vand.u32 %v1148, 4294901760
        %4470 = vmatmul.mubr.f32.gmra.mxu0 %v4469
        %v4471 = vpop.f32.mrf.mxu0
        %v4472 = vadd.f32 %v4149, %v4471
        %v4473 = vpop.f32.mrf.mxu0
        %v4474 = vadd.f32 %v4151, %v4473
        %4475 = vmatprep.mubr.f32.mxu0 0.0
        %v4476 = vand.u32 %v1151, 4294901760
        %4477 = vmatmul.mubr.f32.gmra.mxu0 %v4476
        %v4478 = vpop.f32.mrf.mxu0
        %v4479 = vadd.f32 %v4158, %v4478
        %v4480 = vpop.f32.mrf.mxu0
        %v4481 = vadd.f32 %v4160, %v4480
        %4482 = vmatprep.mubr.f32.mxu0 0.0
        %v4483 = vand.u32 %v1154, 4294901760
        %4484 = vmatmul.mubr.f32.gmra.mxu0 %v4483
        %v4485 = vpop.f32.mrf.mxu0
        %v4486 = vadd.f32 %v4167, %v4485
        %v4487 = vpop.f32.mrf.mxu0
        %v4488 = vadd.f32 %v4169, %v4487
        %4489 = vmatprep.mubr.f32.mxu0 0.0
        %v4490 = vand.u32 %v1157, 4294901760
        %4491 = vmatmul.mubr.f32.gmra.mxu0 %v4490
        %v4492 = vpop.f32.mrf.mxu0
        %v4493 = vadd.f32 %v4176, %v4492
        %v4494 = vpop.f32.mrf.mxu0
        %v4495 = vadd.f32 %v4178, %v4494
        %4496 = vmatprep.mubr.f32.mxu0 0.0
        %v4497 = vand.u32 %v1160, 4294901760
        %4498 = vmatmul.mubr.f32.gmra.mxu0 %v4497
        %v4499 = vpop.f32.mrf.mxu0
        %v4500 = vadd.f32 %v4185, %v4499
        %v4501 = vpop.f32.mrf.mxu0
        %v4502 = vadd.f32 %v4187, %v4501
        %4503 = vmatprep.mubr.f32.mxu0 0.0
        %v4504 = vand.u32 %v1163, 4294901760
        %4505 = vmatmul.mubr.f32.gmra.mxu0 %v4504
        %v4506 = vpop.f32.mrf.mxu0
        %v4507 = vadd.f32 %v4194, %v4506
        %v4508 = vpop.f32.mrf.mxu0
        %v4509 = vadd.f32 %v4196, %v4508
        %4510 = vmatprep.mubr.f32.mxu0 0.0
        %v4511 = vand.u32 %v1166, 4294901760
        %4512 = vmatmul.mubr.f32.gmra.mxu0 %v4511
        %v4513 = vpop.f32.mrf.mxu0
        %v4514 = vadd.f32 %v4203, %v4513
        %v4515 = vpop.f32.mrf.mxu0
        %v4516 = vadd.f32 %v4205, %v4515
        %4517 = vmatprep.mubr.f32.mxu0 0.0
        %v4518 = vand.u32 %v1169, 4294901760
        %4519 = vmatmul.mubr.f32.gmra.mxu0 %v4518
        %v4520 = vpop.f32.mrf.mxu0
        %v4521 = vadd.f32 %v4212, %v4520
        %v4522 = vpop.f32.mrf.mxu0
        %v4523 = vadd.f32 %v4214, %v4522
        %4524 = vmatprep.mubr.f32.mxu0 0.0
        %v4525 = vand.u32 %v1172, 4294901760
        %4526 = vmatmul.mubr.f32.gmra.mxu0 %v4525
        %v4527 = vpop.f32.mrf.mxu0
        %v4528 = vadd.f32 %v4221, %v4527
        %v4529 = vpop.f32.mrf.mxu0
        %v4530 = vadd.f32 %v4223, %v4529
        %4531 = vmatprep.mubr.f32.mxu0 0.0
        %v4532 = vand.u32 %v1175, 4294901760
        %4533 = vmatmul.mubr.f32.gmra.mxu0 %v4532
        %v4534 = vpop.f32.mrf.mxu0
        %v4535 = vadd.f32 %v4230, %v4534
        %v4536 = vpop.f32.mrf.mxu0
        %v4537 = vadd.f32 %v4232, %v4536
        %4538 = vmatprep.mubr.f32.mxu0 0.0
        %v4539 = vand.u32 %v1178, 4294901760
        %4540 = vmatmul.mubr.f32.gmra.mxu0 %v4539
        %v4541 = vpop.f32.mrf.mxu0
        %v4542 = vadd.f32 %v4239, %v4541
        %v4543 = vpop.f32.mrf.mxu0
        %v4544 = vadd.f32 %v4241, %v4543
        %4545 = vmatprep.mubr.f32.mxu0 0.0
        %v4546 = vand.u32 %v1181, 4294901760
        %4547 = vmatmul.mubr.f32.gmra.mxu0 %v4546
        %v4548 = vpop.f32.mrf.mxu0
        %v4549 = vadd.f32 %v4248, %v4548
        %v4550 = vpop.f32.mrf.mxu0
        %v4551 = vadd.f32 %v4250, %v4550
        %4552 = vmatprep.mubr.f32.mxu0 0.0
        %v4553 = vand.u32 %v1184, 4294901760
        %4554 = vmatmul.mubr.f32.gmra.mxu0 %v4553
        %v4555 = vpop.f32.mrf.mxu0
        %v4556 = vadd.f32 %v4257, %v4555
        %v4557 = vpop.f32.mrf.mxu0
        %v4558 = vadd.f32 %v4259, %v4557
        %4559 = vmatprep.mubr.f32.mxu0 0.0
        %v4560 = vand.u32 %v1187, 4294901760
        %4561 = vmatmul.mubr.f32.gmra.mxu0 %v4560
        %v4562 = vpop.f32.mrf.mxu0
        %v4563 = vadd.f32 %v4266, %v4562
        %v4564 = vpop.f32.mrf.mxu0
        %v4565 = vadd.f32 %v4268, %v4564
        %4566 = vmatprep.mubr.f32.mxu0 0.0
        %v4567 = vand.u32 %v1190, 4294901760
        %4568 = vmatmul.mubr.f32.gmra.mxu0 %v4567
        %v4569 = vpop.f32.mrf.mxu0
        %v4570 = vadd.f32 %v4275, %v4569
        %v4571 = vpop.f32.mrf.mxu0
        %v4572 = vadd.f32 %v4277, %v4571
        %4573 = vmatprep.mubr.f32.mxu0 0.0
        %v4574 = vand.u32 %v1193, 4294901760
        %4575 = vmatmul.mubr.f32.gmra.mxu0 %v4574
        %v4576 = vpop.f32.mrf.mxu0
        %v4577 = vadd.f32 %v4284, %v4576
        %v4578 = vpop.f32.mrf.mxu0
        %v4579 = vadd.f32 %v4286, %v4578
        %4580 = vmatprep.mubr.f32.mxu0 0.0
        %v4581 = vand.u32 %v1196, 4294901760
        %4582 = vmatmul.mubr.f32.gmra.mxu0 %v4581
        %v4583 = vpop.f32.mrf.mxu0
        %v4584 = vadd.f32 %v4293, %v4583
        %v4585 = vpop.f32.mrf.mxu0
        %v4586 = vadd.f32 %v4295, %v4585
        %4587 = vmatprep.mubr.f32.mxu0 0.0
        %v4588 = vand.u32 %v1199, 4294901760
        %4589 = vmatmul.mubr.f32.gmra.mxu0 %v4588
        %v4590 = vpop.f32.mrf.mxu0
        %v4591 = vadd.f32 %v4302, %v4590
        %v4592 = vpop.f32.mrf.mxu0
        %v4593 = vadd.f32 %v4304, %v4592
        %4594 = vmatprep.mubr.f32.mxu0 0.0
        %v4595 = vand.u32 %v1202, 4294901760
        %4596 = vmatmul.mubr.f32.gmra.mxu0 %v4595
        %v4597 = vpop.f32.mrf.mxu0
        %v4598 = vadd.f32 %v4311, %v4597
        %v4599 = vpop.f32.mrf.mxu0
        %v4600 = vadd.f32 %v4313, %v4599
        %4601 = vmatprep.mubr.f32.mxu0 0.0
        %v4602 = vand.u32 %v1205, 4294901760
        %4603 = vmatmul.mubr.f32.gmra.mxu0 %v4602
        %v4604 = vpop.f32.mrf.mxu0
        %v4605 = vadd.f32 %v4320, %v4604
        %v4606 = vpop.f32.mrf.mxu0
        %v4607 = vadd.f32 %v4322, %v4606
        %4608 = vmatprep.mubr.f32.mxu0 0.0
        %v4609 = vand.u32 %v1208, 4294901760
        %4610 = vmatmul.mubr.f32.gmra.mxu0 %v4609
        %v4611 = vpop.f32.mrf.mxu0
        %v4612 = vadd.f32 %v4329, %v4611
        %v4613 = vpop.f32.mrf.mxu0
        %v4614 = vadd.f32 %v4331, %v4613
        %4615 = vmatprep.mubr.f32.mxu0 0.0
        %v4616 = vand.u32 %v1211, 4294901760
        %4617 = vmatmul.mubr.f32.gmra.mxu0 %v4616
        %v4618 = vpop.f32.mrf.mxu0
        %v4619 = vadd.f32 %v4338, %v4618
        %v4620 = vpop.f32.mrf.mxu0
        %v4621 = vadd.f32 %v4340, %v4620
        %4622 = vmatprep.mubr.f32.mxu0 0.0
        %v4623 = vand.u32 %v1214, 4294901760
        %4624 = vmatmul.mubr.f32.gmra.mxu0 %v4623
        %v4625 = vpop.f32.mrf.mxu0
        %v4626 = vadd.f32 %v4347, %v4625
        %v4627 = vpop.f32.mrf.mxu0
        %v4628 = vadd.f32 %v4349, %v4627
        %4629 = vmatprep.mubr.f32.mxu0 0.0
        %v4630 = vand.u32 %v1217, 4294901760
        %4631 = vmatmul.mubr.f32.gmra.mxu0 %v4630
        %v4632 = vpop.f32.mrf.mxu0
        %v4633 = vadd.f32 %v4356, %v4632
        %v4634 = vpop.f32.mrf.mxu0
        %v4635 = vadd.f32 %v4358, %v4634
        %4636 = vmatprep.mubr.f32.mxu0 0.0
        %v4637 = vand.u32 %v1220, 4294901760
        %4638 = vmatmul.mubr.f32.gmra.mxu0 %v4637
        %v4639 = vpop.f32.mrf.mxu0
        %v4640 = vadd.f32 %v4365, %v4639
        %v4641 = vpop.f32.mrf.mxu0
        %v4642 = vadd.f32 %v4367, %v4641
        %4643 = vmatprep.mubr.f32.mxu0 0.0
        %v4644 = vand.u32 %v1223, 4294901760
        %4645 = vmatmul.mubr.f32.gmra.mxu0 %v4644
        %v4646 = vpop.f32.mrf.mxu0
        %v4647 = vadd.f32 %v4374, %v4646
        %v4648 = vpop.f32.mrf.mxu0
        %v4649 = vadd.f32 %v4376, %v4648
        %4650 = vdwg.mxu0
        %4651 = vmatprep.subr.mxu0 0.0
        %4652 = vmatpush1.msra.mxu0 0.0
        %4653 = vmatprep.subr.mxu0 0.0
        %4654 = vmatpush1.msra.mxu0 0.0
        %4655 = vmatprep.subr.mxu0 0.0
        %4656 = vmatpush1.msra.mxu0 0.0
        %4657 = vmatprep.subr.mxu0 0.0
        %4658 = vmatpush1.msra.mxu0 0.0
        %4659 = vmatprep.subr.mxu0 0.0
        %4660 = vmatpush1.msra.mxu0 0.0
        %4661 = vmatprep.subr.mxu0 0.0
        %4662 = vmatpush1.msra.mxu0 0.0
        %4663 = vmatprep.subr.mxu0 0.0
        %4664 = vmatpush1.msra.mxu0 0.0
        %4665 = vmatprep.subr.mxu0 0.0
        %4666 = vmatpush1.msra.mxu0 0.0
        %4667 = vmatprep.subr.mxu0 0.0
        %4668 = vmatpush1.msra.mxu0 0.0
        %4669 = vmatprep.subr.mxu0 0.0
        %4670 = vmatpush1.msra.mxu0 0.0
        %4671 = vmatprep.subr.mxu0 0.0
        %4672 = vmatpush1.msra.mxu0 0.0
        %4673 = vmatprep.subr.mxu0 0.0
        %4674 = vmatpush1.msra.mxu0 0.0
        %4675 = vmatprep.subr.mxu0 0.0
        %4676 = vmatpush1.msra.mxu0 0.0
        %4677 = vmatprep.subr.mxu0 0.0
        %4678 = vmatpush1.msra.mxu0 0.0
        %v4679 = vand.u32 %v3101, 4294901760
        %4680 = vmatprep.subr.mxu0 %v4679
        %v4681 = vand.u32 %v3100, 4294901760
        %4682 = vmatpush1.msra.mxu0 %v4681
        %v4683 = vand.u32 %v3099, 4294901760
        %4684 = vmatprep.subr.mxu0 %v4683
        %v4685 = vand.u32 %v3098, 4294901760
        %4686 = vmatpush1.msra.mxu0 %v4685
        %4687 = vmatprep.subr.mxu0 0.0
        %4688 = vmatpush2.msra.mxu0 0.0
        %4689 = vmatprep.subr.mxu0 0.0
        %4690 = vmatpush2.msra.mxu0 0.0
        %4691 = vmatprep.subr.mxu0 0.0
        %4692 = vmatpush2.msra.mxu0 0.0
        %4693 = vmatprep.subr.mxu0 0.0
        %4694 = vmatpush2.msra.mxu0 0.0
        %4695 = vmatprep.subr.mxu0 0.0
        %4696 = vmatpush2.msra.mxu0 0.0
        %4697 = vmatprep.subr.mxu0 0.0
        %4698 = vmatpush2.msra.mxu0 0.0
        %4699 = vmatprep.subr.mxu0 0.0
        %4700 = vmatpush2.msra.mxu0 0.0
        %4701 = vmatprep.subr.mxu0 0.0
        %4702 = vmatpush2.msra.mxu0 0.0
        %4703 = vmatprep.subr.mxu0 0.0
        %4704 = vmatpush2.msra.mxu0 0.0
        %4705 = vmatprep.subr.mxu0 0.0
        %4706 = vmatpush2.msra.mxu0 0.0
        %4707 = vmatprep.subr.mxu0 0.0
        %4708 = vmatpush2.msra.mxu0 0.0
        %4709 = vmatprep.subr.mxu0 0.0
        %4710 = vmatpush2.msra.mxu0 0.0
        %4711 = vmatprep.subr.mxu0 0.0
        %4712 = vmatpush2.msra.mxu0 0.0
        %4713 = vmatprep.subr.mxu0 0.0
        %4714 = vmatpush2.msra.mxu0 0.0
        %4715 = vmatprep.subr.mxu0 0.0
        %4716 = vmatpush2.msra.mxu0 0.0
        %4717 = vmatprep.subr.mxu0 0.0
        %4718 = vmatpush2.msra.mxu0 0.0
        %4719 = vmatprep.mubr.f32.mxu0 0.0
        %v4720 = vand.u32 %v1142, 4294901760
        %4721 = vmatmul.mubr.f32.gmra.mxu0 %v4720
        %v4722 = vpop.f32.mrf.mxu0
        %v4723 = vadd.f32 %v4458, %v4722
        %v4724 = vpop.f32.mrf.mxu0
        %v4725 = vadd.f32 %v4460, %v4724
        %4726 = vmatprep.mubr.f32.mxu0 0.0
        %v4727 = vand.u32 %v1145, 4294901760
        %4728 = vmatmul.mubr.f32.gmra.mxu0 %v4727
        %v4729 = vpop.f32.mrf.mxu0
        %v4730 = vadd.f32 %v4465, %v4729
        %v4731 = vpop.f32.mrf.mxu0
        %v4732 = vadd.f32 %v4467, %v4731
        %4733 = vmatprep.mubr.f32.mxu0 0.0
        %v4734 = vand.u32 %v1148, 4294901760
        %4735 = vmatmul.mubr.f32.gmra.mxu0 %v4734
        %v4736 = vpop.f32.mrf.mxu0
        %v4737 = vadd.f32 %v4472, %v4736
        %v4738 = vpop.f32.mrf.mxu0
        %v4739 = vadd.f32 %v4474, %v4738
        %4740 = vmatprep.mubr.f32.mxu0 0.0
        %v4741 = vand.u32 %v1151, 4294901760
        %4742 = vmatmul.mubr.f32.gmra.mxu0 %v4741
        %v4743 = vpop.f32.mrf.mxu0
        %v4744 = vadd.f32 %v4479, %v4743
        %v4745 = vpop.f32.mrf.mxu0
        %v4746 = vadd.f32 %v4481, %v4745
        %4747 = vmatprep.mubr.f32.mxu0 0.0
        %v4748 = vand.u32 %v1154, 4294901760
        %4749 = vmatmul.mubr.f32.gmra.mxu0 %v4748
        %v4750 = vpop.f32.mrf.mxu0
        %v4751 = vadd.f32 %v4486, %v4750
        %v4752 = vpop.f32.mrf.mxu0
        %v4753 = vadd.f32 %v4488, %v4752
        %4754 = vmatprep.mubr.f32.mxu0 0.0
        %v4755 = vand.u32 %v1157, 4294901760
        %4756 = vmatmul.mubr.f32.gmra.mxu0 %v4755
        %v4757 = vpop.f32.mrf.mxu0
        %v4758 = vadd.f32 %v4493, %v4757
        %v4759 = vpop.f32.mrf.mxu0
        %v4760 = vadd.f32 %v4495, %v4759
        %4761 = vmatprep.mubr.f32.mxu0 0.0
        %v4762 = vand.u32 %v1160, 4294901760
        %4763 = vmatmul.mubr.f32.gmra.mxu0 %v4762
        %v4764 = vpop.f32.mrf.mxu0
        %v4765 = vadd.f32 %v4500, %v4764
        %v4766 = vpop.f32.mrf.mxu0
        %v4767 = vadd.f32 %v4502, %v4766
        %4768 = vmatprep.mubr.f32.mxu0 0.0
        %v4769 = vand.u32 %v1163, 4294901760
        %4770 = vmatmul.mubr.f32.gmra.mxu0 %v4769
        %v4771 = vpop.f32.mrf.mxu0
        %v4772 = vadd.f32 %v4507, %v4771
        %v4773 = vpop.f32.mrf.mxu0
        %v4774 = vadd.f32 %v4509, %v4773
        %4775 = vmatprep.mubr.f32.mxu0 0.0
        %v4776 = vand.u32 %v1166, 4294901760
        %4777 = vmatmul.mubr.f32.gmra.mxu0 %v4776
        %v4778 = vpop.f32.mrf.mxu0
        %v4779 = vadd.f32 %v4514, %v4778
        %v4780 = vpop.f32.mrf.mxu0
        %v4781 = vadd.f32 %v4516, %v4780
        %4782 = vmatprep.mubr.f32.mxu0 0.0
        %v4783 = vand.u32 %v1169, 4294901760
        %4784 = vmatmul.mubr.f32.gmra.mxu0 %v4783
        %v4785 = vpop.f32.mrf.mxu0
        %v4786 = vadd.f32 %v4521, %v4785
        %v4787 = vpop.f32.mrf.mxu0
        %v4788 = vadd.f32 %v4523, %v4787
        %4789 = vmatprep.mubr.f32.mxu0 0.0
        %v4790 = vand.u32 %v1172, 4294901760
        %4791 = vmatmul.mubr.f32.gmra.mxu0 %v4790
        %v4792 = vpop.f32.mrf.mxu0
        %v4793 = vadd.f32 %v4528, %v4792
        %v4794 = vpop.f32.mrf.mxu0
        %v4795 = vadd.f32 %v4530, %v4794
        %4796 = vmatprep.mubr.f32.mxu0 0.0
        %v4797 = vand.u32 %v1175, 4294901760
        %4798 = vmatmul.mubr.f32.gmra.mxu0 %v4797
        %v4799 = vpop.f32.mrf.mxu0
        %v4800 = vadd.f32 %v4535, %v4799
        %v4801 = vpop.f32.mrf.mxu0
        %v4802 = vadd.f32 %v4537, %v4801
        %4803 = vmatprep.mubr.f32.mxu0 0.0
        %v4804 = vand.u32 %v1178, 4294901760
        %4805 = vmatmul.mubr.f32.gmra.mxu0 %v4804
        %v4806 = vpop.f32.mrf.mxu0
        %v4807 = vadd.f32 %v4542, %v4806
        %v4808 = vpop.f32.mrf.mxu0
        %v4809 = vadd.f32 %v4544, %v4808
        %4810 = vmatprep.mubr.f32.mxu0 0.0
        %v4811 = vand.u32 %v1181, 4294901760
        %4812 = vmatmul.mubr.f32.gmra.mxu0 %v4811
        %v4813 = vpop.f32.mrf.mxu0
        %v4814 = vadd.f32 %v4549, %v4813
        %v4815 = vpop.f32.mrf.mxu0
        %v4816 = vadd.f32 %v4551, %v4815
        %4817 = vmatprep.mubr.f32.mxu0 0.0
        %v4818 = vand.u32 %v1184, 4294901760
        %4819 = vmatmul.mubr.f32.gmra.mxu0 %v4818
        %v4820 = vpop.f32.mrf.mxu0
        %v4821 = vadd.f32 %v4556, %v4820
        %v4822 = vpop.f32.mrf.mxu0
        %v4823 = vadd.f32 %v4558, %v4822
        %4824 = vmatprep.mubr.f32.mxu0 0.0
        %v4825 = vand.u32 %v1187, 4294901760
        %4826 = vmatmul.mubr.f32.gmra.mxu0 %v4825
        %v4827 = vpop.f32.mrf.mxu0
        %v4828 = vadd.f32 %v4563, %v4827
        %v4829 = vpop.f32.mrf.mxu0
        %v4830 = vadd.f32 %v4565, %v4829
        %4831 = vmatprep.mubr.f32.mxu0 0.0
        %v4832 = vand.u32 %v1190, 4294901760
        %4833 = vmatmul.mubr.f32.gmra.mxu0 %v4832
        %v4834 = vpop.f32.mrf.mxu0
        %v4835 = vadd.f32 %v4570, %v4834
        %v4836 = vpop.f32.mrf.mxu0
        %v4837 = vadd.f32 %v4572, %v4836
        %4838 = vmatprep.mubr.f32.mxu0 0.0
        %v4839 = vand.u32 %v1193, 4294901760
        %4840 = vmatmul.mubr.f32.gmra.mxu0 %v4839
        %v4841 = vpop.f32.mrf.mxu0
        %v4842 = vadd.f32 %v4577, %v4841
        %v4843 = vpop.f32.mrf.mxu0
        %v4844 = vadd.f32 %v4579, %v4843
        %4845 = vmatprep.mubr.f32.mxu0 0.0
        %v4846 = vand.u32 %v1196, 4294901760
        %4847 = vmatmul.mubr.f32.gmra.mxu0 %v4846
        %v4848 = vpop.f32.mrf.mxu0
        %v4849 = vadd.f32 %v4584, %v4848
        %v4850 = vpop.f32.mrf.mxu0
        %v4851 = vadd.f32 %v4586, %v4850
        %4852 = vmatprep.mubr.f32.mxu0 0.0
        %v4853 = vand.u32 %v1199, 4294901760
        %4854 = vmatmul.mubr.f32.gmra.mxu0 %v4853
        %v4855 = vpop.f32.mrf.mxu0
        %v4856 = vadd.f32 %v4591, %v4855
        %v4857 = vpop.f32.mrf.mxu0
        %v4858 = vadd.f32 %v4593, %v4857
        %4859 = vmatprep.mubr.f32.mxu0 0.0
        %v4860 = vand.u32 %v1202, 4294901760
        %4861 = vmatmul.mubr.f32.gmra.mxu0 %v4860
        %v4862 = vpop.f32.mrf.mxu0
        %v4863 = vadd.f32 %v4598, %v4862
        %v4864 = vpop.f32.mrf.mxu0
        %v4865 = vadd.f32 %v4600, %v4864
        %4866 = vmatprep.mubr.f32.mxu0 0.0
        %v4867 = vand.u32 %v1205, 4294901760
        %4868 = vmatmul.mubr.f32.gmra.mxu0 %v4867
        %v4869 = vpop.f32.mrf.mxu0
        %v4870 = vadd.f32 %v4605, %v4869
        %v4871 = vpop.f32.mrf.mxu0
        %v4872 = vadd.f32 %v4607, %v4871
        %4873 = vmatprep.mubr.f32.mxu0 0.0
        %v4874 = vand.u32 %v1208, 4294901760
        %4875 = vmatmul.mubr.f32.gmra.mxu0 %v4874
        %v4876 = vpop.f32.mrf.mxu0
        %v4877 = vadd.f32 %v4612, %v4876
        %v4878 = vpop.f32.mrf.mxu0
        %v4879 = vadd.f32 %v4614, %v4878
        %4880 = vmatprep.mubr.f32.mxu0 0.0
        %v4881 = vand.u32 %v1211, 4294901760
        %4882 = vmatmul.mubr.f32.gmra.mxu0 %v4881
        %v4883 = vpop.f32.mrf.mxu0
        %v4884 = vadd.f32 %v4619, %v4883
        %v4885 = vpop.f32.mrf.mxu0
        %v4886 = vadd.f32 %v4621, %v4885
        %4887 = vmatprep.mubr.f32.mxu0 0.0
        %v4888 = vand.u32 %v1214, 4294901760
        %4889 = vmatmul.mubr.f32.gmra.mxu0 %v4888
        %v4890 = vpop.f32.mrf.mxu0
        %v4891 = vadd.f32 %v4626, %v4890
        %v4892 = vpop.f32.mrf.mxu0
        %v4893 = vadd.f32 %v4628, %v4892
        %4894 = vmatprep.mubr.f32.mxu0 0.0
        %v4895 = vand.u32 %v1217, 4294901760
        %4896 = vmatmul.mubr.f32.gmra.mxu0 %v4895
        %v4897 = vpop.f32.mrf.mxu0
        %v4898 = vadd.f32 %v4633, %v4897
        %v4899 = vpop.f32.mrf.mxu0
        %v4900 = vadd.f32 %v4635, %v4899
        %4901 = vmatprep.mubr.f32.mxu0 0.0
        %v4902 = vand.u32 %v1220, 4294901760
        %4903 = vmatmul.mubr.f32.gmra.mxu0 %v4902
        %v4904 = vpop.f32.mrf.mxu0
        %v4905 = vadd.f32 %v4640, %v4904
        %v4906 = vpop.f32.mrf.mxu0
        %v4907 = vadd.f32 %v4642, %v4906
        %4908 = vmatprep.mubr.f32.mxu0 0.0
        %v4909 = vand.u32 %v1223, 4294901760
        %4910 = vmatmul.mubr.f32.gmra.mxu0 %v4909
        %v4911 = vpop.f32.mrf.mxu0
        %v4912 = vadd.f32 %v4647, %v4911
        %v4913 = vpop.f32.mrf.mxu0
        %v4914 = vadd.f32 %v4649, %v4913
        %4915 = vdwg.mxu0
        %s4916 = scalar_lea.vmem %s215, 448 [#allocation9]
        %4917 = vst [vmem:[%s4916] sm:$0xff] %v4723
        %4918 = vst.msk [vmem:[%s4916 + $0x8] sm:$0xff] %vm1090, %v4725
        %4919 = vst [vmem:[%s4916 + $0x10] sm:$0xff] %v4730
        %4920 = vst.msk [vmem:[%s4916 + $0x18] sm:$0xff] %vm1090, %v4732
        %4921 = vst [vmem:[%s4916 + $0x20] sm:$0xff] %v4737
        %4922 = vst.msk [vmem:[%s4916 + $0x28] sm:$0xff] %vm1090, %v4739
        %4923 = vst [vmem:[%s4916 + $0x30] sm:$0xff] %v4744
        %4924 = vst.msk [vmem:[%s4916 + $0x38] sm:$0xff] %vm1090, %v4746
        %4925 = vst [vmem:[%s4916 + $0x40] sm:$0xff] %v4751
        %4926 = vst.msk [vmem:[%s4916 + $0x48] sm:$0xff] %vm1090, %v4753
        %4927 = vst [vmem:[%s4916 + $0x50] sm:$0xff] %v4758
        %4928 = vst.msk [vmem:[%s4916 + $0x58] sm:$0xff] %vm1090, %v4760
        %4929 = vst [vmem:[%s4916 + $0x60] sm:$0xff] %v4765
        %4930 = vst.msk [vmem:[%s4916 + $0x68] sm:$0xff] %vm1090, %v4767
        %4931 = vst [vmem:[%s4916 + $0x70] sm:$0xff] %v4772
        %4932 = vst.msk [vmem:[%s4916 + $0x78] sm:$0xff] %vm1090, %v4774
        %4933 = vst [vmem:[%s4916 + $0x80] sm:$0xff] %v4779
        %4934 = vst.msk [vmem:[%s4916 + $0x88] sm:$0xff] %vm1090, %v4781
        %4935 = vst [vmem:[%s4916 + $0x90] sm:$0xff] %v4786
        %4936 = vst.msk [vmem:[%s4916 + $0x98] sm:$0xff] %vm1090, %v4788
        %4937 = vst [vmem:[%s4916 + $0xa0] sm:$0xff] %v4793
        %4938 = vst.msk [vmem:[%s4916 + $0xa8] sm:$0xff] %vm1090, %v4795
        %4939 = vst [vmem:[%s4916 + $0xb0] sm:$0xff] %v4800
        %4940 = vst.msk [vmem:[%s4916 + $0xb8] sm:$0xff] %vm1090, %v4802
        %4941 = vst [vmem:[%s4916 + $0xc0] sm:$0xff] %v4807
        %4942 = vst.msk [vmem:[%s4916 + $0xc8] sm:$0xff] %vm1090, %v4809
        %4943 = vst [vmem:[%s4916 + $0xd0] sm:$0xff] %v4814
        %4944 = vst.msk [vmem:[%s4916 + $0xd8] sm:$0xff] %vm1090, %v4816
        %4945 = vst [vmem:[%s4916 + $0xe0] sm:$0xff] %v4821
        %4946 = vst.msk [vmem:[%s4916 + $0xe8] sm:$0xff] %vm1090, %v4823
        %4947 = vst [vmem:[%s4916 + $0xf0] sm:$0xff] %v4828
        %4948 = vst.msk [vmem:[%s4916 + $0xf8] sm:$0xff] %vm1090, %v4830
        %4949 = vst [vmem:[%s4916 + $0x100] sm:$0xff] %v4835
        %4950 = vst.msk [vmem:[%s4916 + $0x108] sm:$0xff] %vm1090, %v4837
        %4951 = vst [vmem:[%s4916 + $0x110] sm:$0xff] %v4842
        %4952 = vst.msk [vmem:[%s4916 + $0x118] sm:$0xff] %vm1090, %v4844
        %4953 = vst [vmem:[%s4916 + $0x120] sm:$0xff] %v4849
        %4954 = vst.msk [vmem:[%s4916 + $0x128] sm:$0xff] %vm1090, %v4851
        %4955 = vst [vmem:[%s4916 + $0x130] sm:$0xff] %v4856
        %4956 = vst.msk [vmem:[%s4916 + $0x138] sm:$0xff] %vm1090, %v4858
        %4957 = vst [vmem:[%s4916 + $0x140] sm:$0xff] %v4863
        %4958 = vst.msk [vmem:[%s4916 + $0x148] sm:$0xff] %vm1090, %v4865
        %4959 = vst [vmem:[%s4916 + $0x150] sm:$0xff] %v4870
        %4960 = vst.msk [vmem:[%s4916 + $0x158] sm:$0xff] %vm1090, %v4872
        %4961 = vst [vmem:[%s4916 + $0x160] sm:$0xff] %v4877
        %4962 = vst.msk [vmem:[%s4916 + $0x168] sm:$0xff] %vm1090, %v4879
        %4963 = vst [vmem:[%s4916 + $0x170] sm:$0xff] %v4884
        %4964 = vst.msk [vmem:[%s4916 + $0x178] sm:$0xff] %vm1090, %v4886
        %4965 = vst [vmem:[%s4916 + $0x180] sm:$0xff] %v4891
        %4966 = vst.msk [vmem:[%s4916 + $0x188] sm:$0xff] %vm1090, %v4893
        %4967 = vst [vmem:[%s4916 + $0x190] sm:$0xff] %v4898
        %4968 = vst.msk [vmem:[%s4916 + $0x198] sm:$0xff] %vm1090, %v4900
        %4969 = vst [vmem:[%s4916 + $0x1a0] sm:$0xff] %v4905
        %4970 = vst.msk [vmem:[%s4916 + $0x1a8] sm:$0xff] %vm1090, %v4907
        %4971 = vst [vmem:[%s4916 + $0x1b0] sm:$0xff] %v4912
        %4972 = vst.msk [vmem:[%s4916 + $0x1b8] sm:$0xff] %vm1090, %v4914
        %s4973 = smul.u32 4, 2
        %s4974 = smul.addr %s4973, 8
        %s4975 = scalar_lea.vmem [#allocation2], %s4974
        %v4976 = vld [vmem:[%s4975] sm:$0xff]
        %v4977 = vld [vmem:[%s4975 + $0x8] sm:$0xff]
        %v4978 = vld [vmem:[%s4975 + $0x10] sm:$0xff]
        %v4979 = vld [vmem:[%s4975 + $0x18] sm:$0xff]
        %4980 = vmatprep.subr.mxu0 0.0
        %4981 = vmatpush1.msra.mxu0 0.0
        %4982 = vmatprep.subr.mxu0 0.0
        %4983 = vmatpush1.msra.mxu0 0.0
        %4984 = vmatprep.subr.mxu0 0.0
        %4985 = vmatpush1.msra.mxu0 0.0
        %4986 = vmatprep.subr.mxu0 0.0
        %4987 = vmatpush1.msra.mxu0 0.0
        %4988 = vmatprep.subr.mxu0 0.0
        %4989 = vmatpush1.msra.mxu0 0.0
        %4990 = vmatprep.subr.mxu0 0.0
        %4991 = vmatpush1.msra.mxu0 0.0
        %4992 = vmatprep.subr.mxu0 0.0
        %4993 = vmatpush1.msra.mxu0 0.0
        %4994 = vmatprep.subr.mxu0 0.0
        %4995 = vmatpush1.msra.mxu0 0.0
        %4996 = vmatprep.subr.mxu0 0.0
        %4997 = vmatpush1.msra.mxu0 0.0
        %4998 = vmatprep.subr.mxu0 0.0
        %4999 = vmatpush1.msra.mxu0 0.0
        %5000 = vmatprep.subr.mxu0 0.0
        %5001 = vmatpush1.msra.mxu0 0.0
        %5002 = vmatprep.subr.mxu0 0.0
        %5003 = vmatpush1.msra.mxu0 0.0
        %5004 = vmatprep.subr.mxu0 0.0
        %5005 = vmatpush1.msra.mxu0 0.0
        %5006 = vmatprep.subr.mxu0 0.0
        %5007 = vmatpush1.msra.mxu0 0.0
        %v5008 = vand.u32 %v4979, 4294901760
        %5009 = vmatprep.subr.mxu0 %v5008
        %v5010 = vand.u32 %v4978, 4294901760
        %5011 = vmatpush1.msra.mxu0 %v5010
        %v5012 = vand.u32 %v4977, 4294901760
        %5013 = vmatprep.subr.mxu0 %v5012
        %v5014 = vand.u32 %v4976, 4294901760
        %5015 = vmatpush1.msra.mxu0 %v5014
        %5016 = vmatprep.subr.mxu0 0.0
        %5017 = vmatpush2.msra.mxu0 0.0
        %5018 = vmatprep.subr.mxu0 0.0
        %5019 = vmatpush2.msra.mxu0 0.0
        %5020 = vmatprep.subr.mxu0 0.0
        %5021 = vmatpush2.msra.mxu0 0.0
        %5022 = vmatprep.subr.mxu0 0.0
        %5023 = vmatpush2.msra.mxu0 0.0
        %5024 = vmatprep.subr.mxu0 0.0
        %5025 = vmatpush2.msra.mxu0 0.0
        %5026 = vmatprep.subr.mxu0 0.0
        %5027 = vmatpush2.msra.mxu0 0.0
        %5028 = vmatprep.subr.mxu0 0.0
        %5029 = vmatpush2.msra.mxu0 0.0
        %5030 = vmatprep.subr.mxu0 0.0
        %5031 = vmatpush2.msra.mxu0 0.0
        %5032 = vmatprep.subr.mxu0 0.0
        %5033 = vmatpush2.msra.mxu0 0.0
        %5034 = vmatprep.subr.mxu0 0.0
        %5035 = vmatpush2.msra.mxu0 0.0
        %5036 = vmatprep.subr.mxu0 0.0
        %5037 = vmatpush2.msra.mxu0 0.0
        %5038 = vmatprep.subr.mxu0 0.0
        %5039 = vmatpush2.msra.mxu0 0.0
        %5040 = vmatprep.subr.mxu0 0.0
        %5041 = vmatpush2.msra.mxu0 0.0
        %5042 = vmatprep.subr.mxu0 0.0
        %5043 = vmatpush2.msra.mxu0 0.0
        %5044 = vmatprep.subr.mxu0 0.0
        %5045 = vmatpush2.msra.mxu0 0.0
        %5046 = vmatprep.subr.mxu0 0.0
        %5047 = vmatpush2.msra.mxu0 0.0
        %5048 = vmatprep.mubr.f32.mxu0 0.0
        %v5049 = vand.u32 %v1142, 4294901760
        %v5050 = vsub.f32 %v1142, %v5049
        %v5051 = vand.u32 %v5050, 4294901760
        %v5052 = vsub.f32 %v5050, %v5051
        %v5053 = vand.u32 %v5052, 4294901760
        %5054 = vmatmul.mubr.f32.gmra.mxu0 %v5053
        %v5055 = vpop.f32.mrf.mxu0
        %v5056 = vadd.f32 0.0, %v5055
        %v5057 = vpop.f32.mrf.mxu0
        %v5058 = vadd.f32 0.0, %v5057
        %5059 = vmatprep.mubr.f32.mxu0 0.0
        %v5060 = vand.u32 %v1145, 4294901760
        %v5061 = vsub.f32 %v1145, %v5060
        %v5062 = vand.u32 %v5061, 4294901760
        %v5063 = vsub.f32 %v5061, %v5062
        %v5064 = vand.u32 %v5063, 4294901760
        %5065 = vmatmul.mubr.f32.gmra.mxu0 %v5064
        %v5066 = vpop.f32.mrf.mxu0
        %v5067 = vadd.f32 0.0, %v5066
        %v5068 = vpop.f32.mrf.mxu0
        %v5069 = vadd.f32 0.0, %v5068
        %5070 = vmatprep.mubr.f32.mxu0 0.0
        %v5071 = vand.u32 %v1148, 4294901760
        %v5072 = vsub.f32 %v1148, %v5071
        %v5073 = vand.u32 %v5072, 4294901760
        %v5074 = vsub.f32 %v5072, %v5073
        %v5075 = vand.u32 %v5074, 4294901760
        %5076 = vmatmul.mubr.f32.gmra.mxu0 %v5075
        %v5077 = vpop.f32.mrf.mxu0
        %v5078 = vadd.f32 0.0, %v5077
        %v5079 = vpop.f32.mrf.mxu0
        %v5080 = vadd.f32 0.0, %v5079
        %5081 = vmatprep.mubr.f32.mxu0 0.0
        %v5082 = vand.u32 %v1151, 4294901760
        %v5083 = vsub.f32 %v1151, %v5082
        %v5084 = vand.u32 %v5083, 4294901760
        %v5085 = vsub.f32 %v5083, %v5084
        %v5086 = vand.u32 %v5085, 4294901760
        %5087 = vmatmul.mubr.f32.gmra.mxu0 %v5086
        %v5088 = vpop.f32.mrf.mxu0
        %v5089 = vadd.f32 0.0, %v5088
        %v5090 = vpop.f32.mrf.mxu0
        %v5091 = vadd.f32 0.0, %v5090
        %5092 = vmatprep.mubr.f32.mxu0 0.0
        %v5093 = vand.u32 %v1154, 4294901760
        %v5094 = vsub.f32 %v1154, %v5093
        %v5095 = vand.u32 %v5094, 4294901760
        %v5096 = vsub.f32 %v5094, %v5095
        %v5097 = vand.u32 %v5096, 4294901760
        %5098 = vmatmul.mubr.f32.gmra.mxu0 %v5097
        %v5099 = vpop.f32.mrf.mxu0
        %v5100 = vadd.f32 0.0, %v5099
        %v5101 = vpop.f32.mrf.mxu0
        %v5102 = vadd.f32 0.0, %v5101
        %5103 = vmatprep.mubr.f32.mxu0 0.0
        %v5104 = vand.u32 %v1157, 4294901760
        %v5105 = vsub.f32 %v1157, %v5104
        %v5106 = vand.u32 %v5105, 4294901760
        %v5107 = vsub.f32 %v5105, %v5106
        %v5108 = vand.u32 %v5107, 4294901760
        %5109 = vmatmul.mubr.f32.gmra.mxu0 %v5108
        %v5110 = vpop.f32.mrf.mxu0
        %v5111 = vadd.f32 0.0, %v5110
        %v5112 = vpop.f32.mrf.mxu0
        %v5113 = vadd.f32 0.0, %v5112
        %5114 = vmatprep.mubr.f32.mxu0 0.0
        %v5115 = vand.u32 %v1160, 4294901760
        %v5116 = vsub.f32 %v1160, %v5115
        %v5117 = vand.u32 %v5116, 4294901760
        %v5118 = vsub.f32 %v5116, %v5117
        %v5119 = vand.u32 %v5118, 4294901760
        %5120 = vmatmul.mubr.f32.gmra.mxu0 %v5119
        %v5121 = vpop.f32.mrf.mxu0
        %v5122 = vadd.f32 0.0, %v5121
        %v5123 = vpop.f32.mrf.mxu0
        %v5124 = vadd.f32 0.0, %v5123
        %5125 = vmatprep.mubr.f32.mxu0 0.0
        %v5126 = vand.u32 %v1163, 4294901760
        %v5127 = vsub.f32 %v1163, %v5126
        %v5128 = vand.u32 %v5127, 4294901760
        %v5129 = vsub.f32 %v5127, %v5128
        %v5130 = vand.u32 %v5129, 4294901760
        %5131 = vmatmul.mubr.f32.gmra.mxu0 %v5130
        %v5132 = vpop.f32.mrf.mxu0
        %v5133 = vadd.f32 0.0, %v5132
        %v5134 = vpop.f32.mrf.mxu0
        %v5135 = vadd.f32 0.0, %v5134
        %5136 = vmatprep.mubr.f32.mxu0 0.0
        %v5137 = vand.u32 %v1166, 4294901760
        %v5138 = vsub.f32 %v1166, %v5137
        %v5139 = vand.u32 %v5138, 4294901760
        %v5140 = vsub.f32 %v5138, %v5139
        %v5141 = vand.u32 %v5140, 4294901760
        %5142 = vmatmul.mubr.f32.gmra.mxu0 %v5141
        %v5143 = vpop.f32.mrf.mxu0
        %v5144 = vadd.f32 0.0, %v5143
        %v5145 = vpop.f32.mrf.mxu0
        %v5146 = vadd.f32 0.0, %v5145
        %5147 = vmatprep.mubr.f32.mxu0 0.0
        %v5148 = vand.u32 %v1169, 4294901760
        %v5149 = vsub.f32 %v1169, %v5148
        %v5150 = vand.u32 %v5149, 4294901760
        %v5151 = vsub.f32 %v5149, %v5150
        %v5152 = vand.u32 %v5151, 4294901760
        %5153 = vmatmul.mubr.f32.gmra.mxu0 %v5152
        %v5154 = vpop.f32.mrf.mxu0
        %v5155 = vadd.f32 0.0, %v5154
        %v5156 = vpop.f32.mrf.mxu0
        %v5157 = vadd.f32 0.0, %v5156
        %5158 = vmatprep.mubr.f32.mxu0 0.0
        %v5159 = vand.u32 %v1172, 4294901760
        %v5160 = vsub.f32 %v1172, %v5159
        %v5161 = vand.u32 %v5160, 4294901760
        %v5162 = vsub.f32 %v5160, %v5161
        %v5163 = vand.u32 %v5162, 4294901760
        %5164 = vmatmul.mubr.f32.gmra.mxu0 %v5163
        %v5165 = vpop.f32.mrf.mxu0
        %v5166 = vadd.f32 0.0, %v5165
        %v5167 = vpop.f32.mrf.mxu0
        %v5168 = vadd.f32 0.0, %v5167
        %5169 = vmatprep.mubr.f32.mxu0 0.0
        %v5170 = vand.u32 %v1175, 4294901760
        %v5171 = vsub.f32 %v1175, %v5170
        %v5172 = vand.u32 %v5171, 4294901760
        %v5173 = vsub.f32 %v5171, %v5172
        %v5174 = vand.u32 %v5173, 4294901760
        %5175 = vmatmul.mubr.f32.gmra.mxu0 %v5174
        %v5176 = vpop.f32.mrf.mxu0
        %v5177 = vadd.f32 0.0, %v5176
        %v5178 = vpop.f32.mrf.mxu0
        %v5179 = vadd.f32 0.0, %v5178
        %5180 = vmatprep.mubr.f32.mxu0 0.0
        %v5181 = vand.u32 %v1178, 4294901760
        %v5182 = vsub.f32 %v1178, %v5181
        %v5183 = vand.u32 %v5182, 4294901760
        %v5184 = vsub.f32 %v5182, %v5183
        %v5185 = vand.u32 %v5184, 4294901760
        %5186 = vmatmul.mubr.f32.gmra.mxu0 %v5185
        %v5187 = vpop.f32.mrf.mxu0
        %v5188 = vadd.f32 0.0, %v5187
        %v5189 = vpop.f32.mrf.mxu0
        %v5190 = vadd.f32 0.0, %v5189
        %5191 = vmatprep.mubr.f32.mxu0 0.0
        %v5192 = vand.u32 %v1181, 4294901760
        %v5193 = vsub.f32 %v1181, %v5192
        %v5194 = vand.u32 %v5193, 4294901760
        %v5195 = vsub.f32 %v5193, %v5194
        %v5196 = vand.u32 %v5195, 4294901760
        %5197 = vmatmul.mubr.f32.gmra.mxu0 %v5196
        %v5198 = vpop.f32.mrf.mxu0
        %v5199 = vadd.f32 0.0, %v5198
        %v5200 = vpop.f32.mrf.mxu0
        %v5201 = vadd.f32 0.0, %v5200
        %5202 = vmatprep.mubr.f32.mxu0 0.0
        %v5203 = vand.u32 %v1184, 4294901760
        %v5204 = vsub.f32 %v1184, %v5203
        %v5205 = vand.u32 %v5204, 4294901760
        %v5206 = vsub.f32 %v5204, %v5205
        %v5207 = vand.u32 %v5206, 4294901760
        %5208 = vmatmul.mubr.f32.gmra.mxu0 %v5207
        %v5209 = vpop.f32.mrf.mxu0
        %v5210 = vadd.f32 0.0, %v5209
        %v5211 = vpop.f32.mrf.mxu0
        %v5212 = vadd.f32 0.0, %v5211
        %5213 = vmatprep.mubr.f32.mxu0 0.0
        %v5214 = vand.u32 %v1187, 4294901760
        %v5215 = vsub.f32 %v1187, %v5214
        %v5216 = vand.u32 %v5215, 4294901760
        %v5217 = vsub.f32 %v5215, %v5216
        %v5218 = vand.u32 %v5217, 4294901760
        %5219 = vmatmul.mubr.f32.gmra.mxu0 %v5218
        %v5220 = vpop.f32.mrf.mxu0
        %v5221 = vadd.f32 0.0, %v5220
        %v5222 = vpop.f32.mrf.mxu0
        %v5223 = vadd.f32 0.0, %v5222
        %5224 = vmatprep.mubr.f32.mxu0 0.0
        %v5225 = vand.u32 %v1190, 4294901760
        %v5226 = vsub.f32 %v1190, %v5225
        %v5227 = vand.u32 %v5226, 4294901760
        %v5228 = vsub.f32 %v5226, %v5227
        %v5229 = vand.u32 %v5228, 4294901760
        %5230 = vmatmul.mubr.f32.gmra.mxu0 %v5229
        %v5231 = vpop.f32.mrf.mxu0
        %v5232 = vadd.f32 0.0, %v5231
        %v5233 = vpop.f32.mrf.mxu0
        %v5234 = vadd.f32 0.0, %v5233
        %5235 = vmatprep.mubr.f32.mxu0 0.0
        %v5236 = vand.u32 %v1193, 4294901760
        %v5237 = vsub.f32 %v1193, %v5236
        %v5238 = vand.u32 %v5237, 4294901760
        %v5239 = vsub.f32 %v5237, %v5238
        %v5240 = vand.u32 %v5239, 4294901760
        %5241 = vmatmul.mubr.f32.gmra.mxu0 %v5240
        %v5242 = vpop.f32.mrf.mxu0
        %v5243 = vadd.f32 0.0, %v5242
        %v5244 = vpop.f32.mrf.mxu0
        %v5245 = vadd.f32 0.0, %v5244
        %5246 = vmatprep.mubr.f32.mxu0 0.0
        %v5247 = vand.u32 %v1196, 4294901760
        %v5248 = vsub.f32 %v1196, %v5247
        %v5249 = vand.u32 %v5248, 4294901760
        %v5250 = vsub.f32 %v5248, %v5249
        %v5251 = vand.u32 %v5250, 4294901760
        %5252 = vmatmul.mubr.f32.gmra.mxu0 %v5251
        %v5253 = vpop.f32.mrf.mxu0
        %v5254 = vadd.f32 0.0, %v5253
        %v5255 = vpop.f32.mrf.mxu0
        %v5256 = vadd.f32 0.0, %v5255
        %5257 = vmatprep.mubr.f32.mxu0 0.0
        %v5258 = vand.u32 %v1199, 4294901760
        %v5259 = vsub.f32 %v1199, %v5258
        %v5260 = vand.u32 %v5259, 4294901760
        %v5261 = vsub.f32 %v5259, %v5260
        %v5262 = vand.u32 %v5261, 4294901760
        %5263 = vmatmul.mubr.f32.gmra.mxu0 %v5262
        %v5264 = vpop.f32.mrf.mxu0
        %v5265 = vadd.f32 0.0, %v5264
        %v5266 = vpop.f32.mrf.mxu0
        %v5267 = vadd.f32 0.0, %v5266
        %5268 = vmatprep.mubr.f32.mxu0 0.0
        %v5269 = vand.u32 %v1202, 4294901760
        %v5270 = vsub.f32 %v1202, %v5269
        %v5271 = vand.u32 %v5270, 4294901760
        %v5272 = vsub.f32 %v5270, %v5271
        %v5273 = vand.u32 %v5272, 4294901760
        %5274 = vmatmul.mubr.f32.gmra.mxu0 %v5273
        %v5275 = vpop.f32.mrf.mxu0
        %v5276 = vadd.f32 0.0, %v5275
        %v5277 = vpop.f32.mrf.mxu0
        %v5278 = vadd.f32 0.0, %v5277
        %5279 = vmatprep.mubr.f32.mxu0 0.0
        %v5280 = vand.u32 %v1205, 4294901760
        %v5281 = vsub.f32 %v1205, %v5280
        %v5282 = vand.u32 %v5281, 4294901760
        %v5283 = vsub.f32 %v5281, %v5282
        %v5284 = vand.u32 %v5283, 4294901760
        %5285 = vmatmul.mubr.f32.gmra.mxu0 %v5284
        %v5286 = vpop.f32.mrf.mxu0
        %v5287 = vadd.f32 0.0, %v5286
        %v5288 = vpop.f32.mrf.mxu0
        %v5289 = vadd.f32 0.0, %v5288
        %5290 = vmatprep.mubr.f32.mxu0 0.0
        %v5291 = vand.u32 %v1208, 4294901760
        %v5292 = vsub.f32 %v1208, %v5291
        %v5293 = vand.u32 %v5292, 4294901760
        %v5294 = vsub.f32 %v5292, %v5293
        %v5295 = vand.u32 %v5294, 4294901760
        %5296 = vmatmul.mubr.f32.gmra.mxu0 %v5295
        %v5297 = vpop.f32.mrf.mxu0
        %v5298 = vadd.f32 0.0, %v5297
        %v5299 = vpop.f32.mrf.mxu0
        %v5300 = vadd.f32 0.0, %v5299
        %5301 = vmatprep.mubr.f32.mxu0 0.0
        %v5302 = vand.u32 %v1211, 4294901760
        %v5303 = vsub.f32 %v1211, %v5302
        %v5304 = vand.u32 %v5303, 4294901760
        %v5305 = vsub.f32 %v5303, %v5304
        %v5306 = vand.u32 %v5305, 4294901760
        %5307 = vmatmul.mubr.f32.gmra.mxu0 %v5306
        %v5308 = vpop.f32.mrf.mxu0
        %v5309 = vadd.f32 0.0, %v5308
        %v5310 = vpop.f32.mrf.mxu0
        %v5311 = vadd.f32 0.0, %v5310
        %5312 = vmatprep.mubr.f32.mxu0 0.0
        %v5313 = vand.u32 %v1214, 4294901760
        %v5314 = vsub.f32 %v1214, %v5313
        %v5315 = vand.u32 %v5314, 4294901760
        %v5316 = vsub.f32 %v5314, %v5315
        %v5317 = vand.u32 %v5316, 4294901760
        %5318 = vmatmul.mubr.f32.gmra.mxu0 %v5317
        %v5319 = vpop.f32.mrf.mxu0
        %v5320 = vadd.f32 0.0, %v5319
        %v5321 = vpop.f32.mrf.mxu0
        %v5322 = vadd.f32 0.0, %v5321
        %5323 = vmatprep.mubr.f32.mxu0 0.0
        %v5324 = vand.u32 %v1217, 4294901760
        %v5325 = vsub.f32 %v1217, %v5324
        %v5326 = vand.u32 %v5325, 4294901760
        %v5327 = vsub.f32 %v5325, %v5326
        %v5328 = vand.u32 %v5327, 4294901760
        %5329 = vmatmul.mubr.f32.gmra.mxu0 %v5328
        %v5330 = vpop.f32.mrf.mxu0
        %v5331 = vadd.f32 0.0, %v5330
        %v5332 = vpop.f32.mrf.mxu0
        %v5333 = vadd.f32 0.0, %v5332
        %5334 = vmatprep.mubr.f32.mxu0 0.0
        %v5335 = vand.u32 %v1220, 4294901760
        %v5336 = vsub.f32 %v1220, %v5335
        %v5337 = vand.u32 %v5336, 4294901760
        %v5338 = vsub.f32 %v5336, %v5337
        %v5339 = vand.u32 %v5338, 4294901760
        %5340 = vmatmul.mubr.f32.gmra.mxu0 %v5339
        %v5341 = vpop.f32.mrf.mxu0
        %v5342 = vadd.f32 0.0, %v5341
        %v5343 = vpop.f32.mrf.mxu0
        %v5344 = vadd.f32 0.0, %v5343
        %5345 = vmatprep.mubr.f32.mxu0 0.0
        %v5346 = vand.u32 %v1223, 4294901760
        %v5347 = vsub.f32 %v1223, %v5346
        %v5348 = vand.u32 %v5347, 4294901760
        %v5349 = vsub.f32 %v5347, %v5348
        %v5350 = vand.u32 %v5349, 4294901760
        %5351 = vmatmul.mubr.f32.gmra.mxu0 %v5350
        %v5352 = vpop.f32.mrf.mxu0
        %v5353 = vadd.f32 0.0, %v5352
        %v5354 = vpop.f32.mrf.mxu0
        %v5355 = vadd.f32 0.0, %v5354
        %5356 = vdwg.mxu0
        %5357 = vmatprep.subr.mxu0 0.0
        %5358 = vmatpush1.msra.mxu0 0.0
        %5359 = vmatprep.subr.mxu0 0.0
        %5360 = vmatpush1.msra.mxu0 0.0
        %5361 = vmatprep.subr.mxu0 0.0
        %5362 = vmatpush1.msra.mxu0 0.0
        %5363 = vmatprep.subr.mxu0 0.0
        %5364 = vmatpush1.msra.mxu0 0.0
        %5365 = vmatprep.subr.mxu0 0.0
        %5366 = vmatpush1.msra.mxu0 0.0
        %5367 = vmatprep.subr.mxu0 0.0
        %5368 = vmatpush1.msra.mxu0 0.0
        %5369 = vmatprep.subr.mxu0 0.0
        %5370 = vmatpush1.msra.mxu0 0.0
        %5371 = vmatprep.subr.mxu0 0.0
        %5372 = vmatpush1.msra.mxu0 0.0
        %5373 = vmatprep.subr.mxu0 0.0
        %5374 = vmatpush1.msra.mxu0 0.0
        %5375 = vmatprep.subr.mxu0 0.0
        %5376 = vmatpush1.msra.mxu0 0.0
        %5377 = vmatprep.subr.mxu0 0.0
        %5378 = vmatpush1.msra.mxu0 0.0
        %5379 = vmatprep.subr.mxu0 0.0
        %5380 = vmatpush1.msra.mxu0 0.0
        %5381 = vmatprep.subr.mxu0 0.0
        %5382 = vmatpush1.msra.mxu0 0.0
        %5383 = vmatprep.subr.mxu0 0.0
        %5384 = vmatpush1.msra.mxu0 0.0
        %v5385 = vand.u32 %v4979, 4294901760
        %v5386 = vsub.f32 %v4979, %v5385
        %v5387 = vand.u32 %v5386, 4294901760
        %v5388 = vsub.f32 %v5386, %v5387
        %v5389 = vand.u32 %v5388, 4294901760
        %5390 = vmatprep.subr.mxu0 %v5389
        %v5391 = vand.u32 %v4978, 4294901760
        %v5392 = vsub.f32 %v4978, %v5391
        %v5393 = vand.u32 %v5392, 4294901760
        %v5394 = vsub.f32 %v5392, %v5393
        %v5395 = vand.u32 %v5394, 4294901760
        %5396 = vmatpush1.msra.mxu0 %v5395
        %v5397 = vand.u32 %v4977, 4294901760
        %v5398 = vsub.f32 %v4977, %v5397
        %v5399 = vand.u32 %v5398, 4294901760
        %v5400 = vsub.f32 %v5398, %v5399
        %v5401 = vand.u32 %v5400, 4294901760
        %5402 = vmatprep.subr.mxu0 %v5401
        %v5403 = vand.u32 %v4976, 4294901760
        %v5404 = vsub.f32 %v4976, %v5403
        %v5405 = vand.u32 %v5404, 4294901760
        %v5406 = vsub.f32 %v5404, %v5405
        %v5407 = vand.u32 %v5406, 4294901760
        %5408 = vmatpush1.msra.mxu0 %v5407
        %5409 = vmatprep.subr.mxu0 0.0
        %5410 = vmatpush2.msra.mxu0 0.0
        %5411 = vmatprep.subr.mxu0 0.0
        %5412 = vmatpush2.msra.mxu0 0.0
        %5413 = vmatprep.subr.mxu0 0.0
        %5414 = vmatpush2.msra.mxu0 0.0
        %5415 = vmatprep.subr.mxu0 0.0
        %5416 = vmatpush2.msra.mxu0 0.0
        %5417 = vmatprep.subr.mxu0 0.0
        %5418 = vmatpush2.msra.mxu0 0.0
        %5419 = vmatprep.subr.mxu0 0.0
        %5420 = vmatpush2.msra.mxu0 0.0
        %5421 = vmatprep.subr.mxu0 0.0
        %5422 = vmatpush2.msra.mxu0 0.0
        %5423 = vmatprep.subr.mxu0 0.0
        %5424 = vmatpush2.msra.mxu0 0.0
        %5425 = vmatprep.subr.mxu0 0.0
        %5426 = vmatpush2.msra.mxu0 0.0
        %5427 = vmatprep.subr.mxu0 0.0
        %5428 = vmatpush2.msra.mxu0 0.0
        %5429 = vmatprep.subr.mxu0 0.0
        %5430 = vmatpush2.msra.mxu0 0.0
        %5431 = vmatprep.subr.mxu0 0.0
        %5432 = vmatpush2.msra.mxu0 0.0
        %5433 = vmatprep.subr.mxu0 0.0
        %5434 = vmatpush2.msra.mxu0 0.0
        %5435 = vmatprep.subr.mxu0 0.0
        %5436 = vmatpush2.msra.mxu0 0.0
        %5437 = vmatprep.subr.mxu0 0.0
        %5438 = vmatpush2.msra.mxu0 0.0
        %5439 = vmatprep.subr.mxu0 0.0
        %5440 = vmatpush2.msra.mxu0 0.0
        %5441 = vmatprep.mubr.f32.mxu0 0.0
        %v5442 = vand.u32 %v1142, 4294901760
        %5443 = vmatmul.mubr.f32.gmra.mxu0 %v5442
        %v5444 = vpop.f32.mrf.mxu0
        %v5445 = vadd.f32 %v5056, %v5444
        %v5446 = vpop.f32.mrf.mxu0
        %v5447 = vadd.f32 %v5058, %v5446
        %5448 = vmatprep.mubr.f32.mxu0 0.0
        %v5449 = vand.u32 %v1145, 4294901760
        %5450 = vmatmul.mubr.f32.gmra.mxu0 %v5449
        %v5451 = vpop.f32.mrf.mxu0
        %v5452 = vadd.f32 %v5067, %v5451
        %v5453 = vpop.f32.mrf.mxu0
        %v5454 = vadd.f32 %v5069, %v5453
        %5455 = vmatprep.mubr.f32.mxu0 0.0
        %v5456 = vand.u32 %v1148, 4294901760
        %5457 = vmatmul.mubr.f32.gmra.mxu0 %v5456
        %v5458 = vpop.f32.mrf.mxu0
        %v5459 = vadd.f32 %v5078, %v5458
        %v5460 = vpop.f32.mrf.mxu0
        %v5461 = vadd.f32 %v5080, %v5460
        %5462 = vmatprep.mubr.f32.mxu0 0.0
        %v5463 = vand.u32 %v1151, 4294901760
        %5464 = vmatmul.mubr.f32.gmra.mxu0 %v5463
        %v5465 = vpop.f32.mrf.mxu0
        %v5466 = vadd.f32 %v5089, %v5465
        %v5467 = vpop.f32.mrf.mxu0
        %v5468 = vadd.f32 %v5091, %v5467
        %5469 = vmatprep.mubr.f32.mxu0 0.0
        %v5470 = vand.u32 %v1154, 4294901760
        %5471 = vmatmul.mubr.f32.gmra.mxu0 %v5470
        %v5472 = vpop.f32.mrf.mxu0
        %v5473 = vadd.f32 %v5100, %v5472
        %v5474 = vpop.f32.mrf.mxu0
        %v5475 = vadd.f32 %v5102, %v5474
        %5476 = vmatprep.mubr.f32.mxu0 0.0
        %v5477 = vand.u32 %v1157, 4294901760
        %5478 = vmatmul.mubr.f32.gmra.mxu0 %v5477
        %v5479 = vpop.f32.mrf.mxu0
        %v5480 = vadd.f32 %v5111, %v5479
        %v5481 = vpop.f32.mrf.mxu0
        %v5482 = vadd.f32 %v5113, %v5481
        %5483 = vmatprep.mubr.f32.mxu0 0.0
        %v5484 = vand.u32 %v1160, 4294901760
        %5485 = vmatmul.mubr.f32.gmra.mxu0 %v5484
        %v5486 = vpop.f32.mrf.mxu0
        %v5487 = vadd.f32 %v5122, %v5486
        %v5488 = vpop.f32.mrf.mxu0
        %v5489 = vadd.f32 %v5124, %v5488
        %5490 = vmatprep.mubr.f32.mxu0 0.0
        %v5491 = vand.u32 %v1163, 4294901760
        %5492 = vmatmul.mubr.f32.gmra.mxu0 %v5491
        %v5493 = vpop.f32.mrf.mxu0
        %v5494 = vadd.f32 %v5133, %v5493
        %v5495 = vpop.f32.mrf.mxu0
        %v5496 = vadd.f32 %v5135, %v5495
        %5497 = vmatprep.mubr.f32.mxu0 0.0
        %v5498 = vand.u32 %v1166, 4294901760
        %5499 = vmatmul.mubr.f32.gmra.mxu0 %v5498
        %v5500 = vpop.f32.mrf.mxu0
        %v5501 = vadd.f32 %v5144, %v5500
        %v5502 = vpop.f32.mrf.mxu0
        %v5503 = vadd.f32 %v5146, %v5502
        %5504 = vmatprep.mubr.f32.mxu0 0.0
        %v5505 = vand.u32 %v1169, 4294901760
        %5506 = vmatmul.mubr.f32.gmra.mxu0 %v5505
        %v5507 = vpop.f32.mrf.mxu0
        %v5508 = vadd.f32 %v5155, %v5507
        %v5509 = vpop.f32.mrf.mxu0
        %v5510 = vadd.f32 %v5157, %v5509
        %5511 = vmatprep.mubr.f32.mxu0 0.0
        %v5512 = vand.u32 %v1172, 4294901760
        %5513 = vmatmul.mubr.f32.gmra.mxu0 %v5512
        %v5514 = vpop.f32.mrf.mxu0
        %v5515 = vadd.f32 %v5166, %v5514
        %v5516 = vpop.f32.mrf.mxu0
        %v5517 = vadd.f32 %v5168, %v5516
        %5518 = vmatprep.mubr.f32.mxu0 0.0
        %v5519 = vand.u32 %v1175, 4294901760
        %5520 = vmatmul.mubr.f32.gmra.mxu0 %v5519
        %v5521 = vpop.f32.mrf.mxu0
        %v5522 = vadd.f32 %v5177, %v5521
        %v5523 = vpop.f32.mrf.mxu0
        %v5524 = vadd.f32 %v5179, %v5523
        %5525 = vmatprep.mubr.f32.mxu0 0.0
        %v5526 = vand.u32 %v1178, 4294901760
        %5527 = vmatmul.mubr.f32.gmra.mxu0 %v5526
        %v5528 = vpop.f32.mrf.mxu0
        %v5529 = vadd.f32 %v5188, %v5528
        %v5530 = vpop.f32.mrf.mxu0
        %v5531 = vadd.f32 %v5190, %v5530
        %5532 = vmatprep.mubr.f32.mxu0 0.0
        %v5533 = vand.u32 %v1181, 4294901760
        %5534 = vmatmul.mubr.f32.gmra.mxu0 %v5533
        %v5535 = vpop.f32.mrf.mxu0
        %v5536 = vadd.f32 %v5199, %v5535
        %v5537 = vpop.f32.mrf.mxu0
        %v5538 = vadd.f32 %v5201, %v5537
        %5539 = vmatprep.mubr.f32.mxu0 0.0
        %v5540 = vand.u32 %v1184, 4294901760
        %5541 = vmatmul.mubr.f32.gmra.mxu0 %v5540
        %v5542 = vpop.f32.mrf.mxu0
        %v5543 = vadd.f32 %v5210, %v5542
        %v5544 = vpop.f32.mrf.mxu0
        %v5545 = vadd.f32 %v5212, %v5544
        %5546 = vmatprep.mubr.f32.mxu0 0.0
        %v5547 = vand.u32 %v1187, 4294901760
        %5548 = vmatmul.mubr.f32.gmra.mxu0 %v5547
        %v5549 = vpop.f32.mrf.mxu0
        %v5550 = vadd.f32 %v5221, %v5549
        %v5551 = vpop.f32.mrf.mxu0
        %v5552 = vadd.f32 %v5223, %v5551
        %5553 = vmatprep.mubr.f32.mxu0 0.0
        %v5554 = vand.u32 %v1190, 4294901760
        %5555 = vmatmul.mubr.f32.gmra.mxu0 %v5554
        %v5556 = vpop.f32.mrf.mxu0
        %v5557 = vadd.f32 %v5232, %v5556
        %v5558 = vpop.f32.mrf.mxu0
        %v5559 = vadd.f32 %v5234, %v5558
        %5560 = vmatprep.mubr.f32.mxu0 0.0
        %v5561 = vand.u32 %v1193, 4294901760
        %5562 = vmatmul.mubr.f32.gmra.mxu0 %v5561
        %v5563 = vpop.f32.mrf.mxu0
        %v5564 = vadd.f32 %v5243, %v5563
        %v5565 = vpop.f32.mrf.mxu0
        %v5566 = vadd.f32 %v5245, %v5565
        %5567 = vmatprep.mubr.f32.mxu0 0.0
        %v5568 = vand.u32 %v1196, 4294901760
        %5569 = vmatmul.mubr.f32.gmra.mxu0 %v5568
        %v5570 = vpop.f32.mrf.mxu0
        %v5571 = vadd.f32 %v5254, %v5570
        %v5572 = vpop.f32.mrf.mxu0
        %v5573 = vadd.f32 %v5256, %v5572
        %5574 = vmatprep.mubr.f32.mxu0 0.0
        %v5575 = vand.u32 %v1199, 4294901760
        %5576 = vmatmul.mubr.f32.gmra.mxu0 %v5575
        %v5577 = vpop.f32.mrf.mxu0
        %v5578 = vadd.f32 %v5265, %v5577
        %v5579 = vpop.f32.mrf.mxu0
        %v5580 = vadd.f32 %v5267, %v5579
        %5581 = vmatprep.mubr.f32.mxu0 0.0
        %v5582 = vand.u32 %v1202, 4294901760
        %5583 = vmatmul.mubr.f32.gmra.mxu0 %v5582
        %v5584 = vpop.f32.mrf.mxu0
        %v5585 = vadd.f32 %v5276, %v5584
        %v5586 = vpop.f32.mrf.mxu0
        %v5587 = vadd.f32 %v5278, %v5586
        %5588 = vmatprep.mubr.f32.mxu0 0.0
        %v5589 = vand.u32 %v1205, 4294901760
        %5590 = vmatmul.mubr.f32.gmra.mxu0 %v5589
        %v5591 = vpop.f32.mrf.mxu0
        %v5592 = vadd.f32 %v5287, %v5591
        %v5593 = vpop.f32.mrf.mxu0
        %v5594 = vadd.f32 %v5289, %v5593
        %5595 = vmatprep.mubr.f32.mxu0 0.0
        %v5596 = vand.u32 %v1208, 4294901760
        %5597 = vmatmul.mubr.f32.gmra.mxu0 %v5596
        %v5598 = vpop.f32.mrf.mxu0
        %v5599 = vadd.f32 %v5298, %v5598
        %v5600 = vpop.f32.mrf.mxu0
        %v5601 = vadd.f32 %v5300, %v5600
        %5602 = vmatprep.mubr.f32.mxu0 0.0
        %v5603 = vand.u32 %v1211, 4294901760
        %5604 = vmatmul.mubr.f32.gmra.mxu0 %v5603
        %v5605 = vpop.f32.mrf.mxu0
        %v5606 = vadd.f32 %v5309, %v5605
        %v5607 = vpop.f32.mrf.mxu0
        %v5608 = vadd.f32 %v5311, %v5607
        %5609 = vmatprep.mubr.f32.mxu0 0.0
        %v5610 = vand.u32 %v1214, 4294901760
        %5611 = vmatmul.mubr.f32.gmra.mxu0 %v5610
        %v5612 = vpop.f32.mrf.mxu0
        %v5613 = vadd.f32 %v5320, %v5612
        %v5614 = vpop.f32.mrf.mxu0
        %v5615 = vadd.f32 %v5322, %v5614
        %5616 = vmatprep.mubr.f32.mxu0 0.0
        %v5617 = vand.u32 %v1217, 4294901760
        %5618 = vmatmul.mubr.f32.gmra.mxu0 %v5617
        %v5619 = vpop.f32.mrf.mxu0
        %v5620 = vadd.f32 %v5331, %v5619
        %v5621 = vpop.f32.mrf.mxu0
        %v5622 = vadd.f32 %v5333, %v5621
        %5623 = vmatprep.mubr.f32.mxu0 0.0
        %v5624 = vand.u32 %v1220, 4294901760
        %5625 = vmatmul.mubr.f32.gmra.mxu0 %v5624
        %v5626 = vpop.f32.mrf.mxu0
        %v5627 = vadd.f32 %v5342, %v5626
        %v5628 = vpop.f32.mrf.mxu0
        %v5629 = vadd.f32 %v5344, %v5628
        %5630 = vmatprep.mubr.f32.mxu0 0.0
        %v5631 = vand.u32 %v1223, 4294901760
        %5632 = vmatmul.mubr.f32.gmra.mxu0 %v5631
        %v5633 = vpop.f32.mrf.mxu0
        %v5634 = vadd.f32 %v5353, %v5633
        %v5635 = vpop.f32.mrf.mxu0
        %v5636 = vadd.f32 %v5355, %v5635
        %5637 = vdwg.mxu0
        %5638 = vmatprep.subr.mxu0 0.0
        %5639 = vmatpush1.msra.mxu0 0.0
        %5640 = vmatprep.subr.mxu0 0.0
        %5641 = vmatpush1.msra.mxu0 0.0
        %5642 = vmatprep.subr.mxu0 0.0
        %5643 = vmatpush1.msra.mxu0 0.0
        %5644 = vmatprep.subr.mxu0 0.0
        %5645 = vmatpush1.msra.mxu0 0.0
        %5646 = vmatprep.subr.mxu0 0.0
        %5647 = vmatpush1.msra.mxu0 0.0
        %5648 = vmatprep.subr.mxu0 0.0
        %5649 = vmatpush1.msra.mxu0 0.0
        %5650 = vmatprep.subr.mxu0 0.0
        %5651 = vmatpush1.msra.mxu0 0.0
        %5652 = vmatprep.subr.mxu0 0.0
        %5653 = vmatpush1.msra.mxu0 0.0
        %5654 = vmatprep.subr.mxu0 0.0
        %5655 = vmatpush1.msra.mxu0 0.0
        %5656 = vmatprep.subr.mxu0 0.0
        %5657 = vmatpush1.msra.mxu0 0.0
        %5658 = vmatprep.subr.mxu0 0.0
        %5659 = vmatpush1.msra.mxu0 0.0
        %5660 = vmatprep.subr.mxu0 0.0
        %5661 = vmatpush1.msra.mxu0 0.0
        %5662 = vmatprep.subr.mxu0 0.0
        %5663 = vmatpush1.msra.mxu0 0.0
        %5664 = vmatprep.subr.mxu0 0.0
        %5665 = vmatpush1.msra.mxu0 0.0
        %v5666 = vand.u32 %v4979, 4294901760
        %v5667 = vsub.f32 %v4979, %v5666
        %5668 = vmatprep.subr.mxu0 %v5667
        %v5669 = vand.u32 %v4978, 4294901760
        %v5670 = vsub.f32 %v4978, %v5669
        %5671 = vmatpush1.msra.mxu0 %v5670
        %v5672 = vand.u32 %v4977, 4294901760
        %v5673 = vsub.f32 %v4977, %v5672
        %5674 = vmatprep.subr.mxu0 %v5673
        %v5675 = vand.u32 %v4976, 4294901760
        %v5676 = vsub.f32 %v4976, %v5675
        %5677 = vmatpush1.msra.mxu0 %v5676
        %5678 = vmatprep.subr.mxu0 0.0
        %5679 = vmatpush2.msra.mxu0 0.0
        %5680 = vmatprep.subr.mxu0 0.0
        %5681 = vmatpush2.msra.mxu0 0.0
        %5682 = vmatprep.subr.mxu0 0.0
        %5683 = vmatpush2.msra.mxu0 0.0
        %5684 = vmatprep.subr.mxu0 0.0
        %5685 = vmatpush2.msra.mxu0 0.0
        %5686 = vmatprep.subr.mxu0 0.0
        %5687 = vmatpush2.msra.mxu0 0.0
        %5688 = vmatprep.subr.mxu0 0.0
        %5689 = vmatpush2.msra.mxu0 0.0
        %5690 = vmatprep.subr.mxu0 0.0
        %5691 = vmatpush2.msra.mxu0 0.0
        %5692 = vmatprep.subr.mxu0 0.0
        %5693 = vmatpush2.msra.mxu0 0.0
        %5694 = vmatprep.subr.mxu0 0.0
        %5695 = vmatpush2.msra.mxu0 0.0
        %5696 = vmatprep.subr.mxu0 0.0
        %5697 = vmatpush2.msra.mxu0 0.0
        %5698 = vmatprep.subr.mxu0 0.0
        %5699 = vmatpush2.msra.mxu0 0.0
        %5700 = vmatprep.subr.mxu0 0.0
        %5701 = vmatpush2.msra.mxu0 0.0
        %5702 = vmatprep.subr.mxu0 0.0
        %5703 = vmatpush2.msra.mxu0 0.0
        %5704 = vmatprep.subr.mxu0 0.0
        %5705 = vmatpush2.msra.mxu0 0.0
        %5706 = vmatprep.subr.mxu0 0.0
        %5707 = vmatpush2.msra.mxu0 0.0
        %5708 = vmatprep.subr.mxu0 0.0
        %5709 = vmatpush2.msra.mxu0 0.0
        %5710 = vmatprep.mubr.f32.mxu0 0.0
        %v5711 = vand.u32 %v1142, 4294901760
        %v5712 = vsub.f32 %v1142, %v5711
        %5713 = vmatmul.mubr.f32.gmra.mxu0 %v5712
        %v5714 = vpop.f32.mrf.mxu0
        %v5715 = vadd.f32 %v5445, %v5714
        %v5716 = vpop.f32.mrf.mxu0
        %v5717 = vadd.f32 %v5447, %v5716
        %5718 = vmatprep.mubr.f32.mxu0 0.0
        %v5719 = vand.u32 %v1145, 4294901760
        %v5720 = vsub.f32 %v1145, %v5719
        %5721 = vmatmul.mubr.f32.gmra.mxu0 %v5720
        %v5722 = vpop.f32.mrf.mxu0
        %v5723 = vadd.f32 %v5452, %v5722
        %v5724 = vpop.f32.mrf.mxu0
        %v5725 = vadd.f32 %v5454, %v5724
        %5726 = vmatprep.mubr.f32.mxu0 0.0
        %v5727 = vand.u32 %v1148, 4294901760
        %v5728 = vsub.f32 %v1148, %v5727
        %5729 = vmatmul.mubr.f32.gmra.mxu0 %v5728
        %v5730 = vpop.f32.mrf.mxu0
        %v5731 = vadd.f32 %v5459, %v5730
        %v5732 = vpop.f32.mrf.mxu0
        %v5733 = vadd.f32 %v5461, %v5732
        %5734 = vmatprep.mubr.f32.mxu0 0.0
        %v5735 = vand.u32 %v1151, 4294901760
        %v5736 = vsub.f32 %v1151, %v5735
        %5737 = vmatmul.mubr.f32.gmra.mxu0 %v5736
        %v5738 = vpop.f32.mrf.mxu0
        %v5739 = vadd.f32 %v5466, %v5738
        %v5740 = vpop.f32.mrf.mxu0
        %v5741 = vadd.f32 %v5468, %v5740
        %5742 = vmatprep.mubr.f32.mxu0 0.0
        %v5743 = vand.u32 %v1154, 4294901760
        %v5744 = vsub.f32 %v1154, %v5743
        %5745 = vmatmul.mubr.f32.gmra.mxu0 %v5744
        %v5746 = vpop.f32.mrf.mxu0
        %v5747 = vadd.f32 %v5473, %v5746
        %v5748 = vpop.f32.mrf.mxu0
        %v5749 = vadd.f32 %v5475, %v5748
        %5750 = vmatprep.mubr.f32.mxu0 0.0
        %v5751 = vand.u32 %v1157, 4294901760
        %v5752 = vsub.f32 %v1157, %v5751
        %5753 = vmatmul.mubr.f32.gmra.mxu0 %v5752
        %v5754 = vpop.f32.mrf.mxu0
        %v5755 = vadd.f32 %v5480, %v5754
        %v5756 = vpop.f32.mrf.mxu0
        %v5757 = vadd.f32 %v5482, %v5756
        %5758 = vmatprep.mubr.f32.mxu0 0.0
        %v5759 = vand.u32 %v1160, 4294901760
        %v5760 = vsub.f32 %v1160, %v5759
        %5761 = vmatmul.mubr.f32.gmra.mxu0 %v5760
        %v5762 = vpop.f32.mrf.mxu0
        %v5763 = vadd.f32 %v5487, %v5762
        %v5764 = vpop.f32.mrf.mxu0
        %v5765 = vadd.f32 %v5489, %v5764
        %5766 = vmatprep.mubr.f32.mxu0 0.0
        %v5767 = vand.u32 %v1163, 4294901760
        %v5768 = vsub.f32 %v1163, %v5767
        %5769 = vmatmul.mubr.f32.gmra.mxu0 %v5768
        %v5770 = vpop.f32.mrf.mxu0
        %v5771 = vadd.f32 %v5494, %v5770
        %v5772 = vpop.f32.mrf.mxu0
        %v5773 = vadd.f32 %v5496, %v5772
        %5774 = vmatprep.mubr.f32.mxu0 0.0
        %v5775 = vand.u32 %v1166, 4294901760
        %v5776 = vsub.f32 %v1166, %v5775
        %5777 = vmatmul.mubr.f32.gmra.mxu0 %v5776
        %v5778 = vpop.f32.mrf.mxu0
        %v5779 = vadd.f32 %v5501, %v5778
        %v5780 = vpop.f32.mrf.mxu0
        %v5781 = vadd.f32 %v5503, %v5780
        %5782 = vmatprep.mubr.f32.mxu0 0.0
        %v5783 = vand.u32 %v1169, 4294901760
        %v5784 = vsub.f32 %v1169, %v5783
        %5785 = vmatmul.mubr.f32.gmra.mxu0 %v5784
        %v5786 = vpop.f32.mrf.mxu0
        %v5787 = vadd.f32 %v5508, %v5786
        %v5788 = vpop.f32.mrf.mxu0
        %v5789 = vadd.f32 %v5510, %v5788
        %5790 = vmatprep.mubr.f32.mxu0 0.0
        %v5791 = vand.u32 %v1172, 4294901760
        %v5792 = vsub.f32 %v1172, %v5791
        %5793 = vmatmul.mubr.f32.gmra.mxu0 %v5792
        %v5794 = vpop.f32.mrf.mxu0
        %v5795 = vadd.f32 %v5515, %v5794
        %v5796 = vpop.f32.mrf.mxu0
        %v5797 = vadd.f32 %v5517, %v5796
        %5798 = vmatprep.mubr.f32.mxu0 0.0
        %v5799 = vand.u32 %v1175, 4294901760
        %v5800 = vsub.f32 %v1175, %v5799
        %5801 = vmatmul.mubr.f32.gmra.mxu0 %v5800
        %v5802 = vpop.f32.mrf.mxu0
        %v5803 = vadd.f32 %v5522, %v5802
        %v5804 = vpop.f32.mrf.mxu0
        %v5805 = vadd.f32 %v5524, %v5804
        %5806 = vmatprep.mubr.f32.mxu0 0.0
        %v5807 = vand.u32 %v1178, 4294901760
        %v5808 = vsub.f32 %v1178, %v5807
        %5809 = vmatmul.mubr.f32.gmra.mxu0 %v5808
        %v5810 = vpop.f32.mrf.mxu0
        %v5811 = vadd.f32 %v5529, %v5810
        %v5812 = vpop.f32.mrf.mxu0
        %v5813 = vadd.f32 %v5531, %v5812
        %5814 = vmatprep.mubr.f32.mxu0 0.0
        %v5815 = vand.u32 %v1181, 4294901760
        %v5816 = vsub.f32 %v1181, %v5815
        %5817 = vmatmul.mubr.f32.gmra.mxu0 %v5816
        %v5818 = vpop.f32.mrf.mxu0
        %v5819 = vadd.f32 %v5536, %v5818
        %v5820 = vpop.f32.mrf.mxu0
        %v5821 = vadd.f32 %v5538, %v5820
        %5822 = vmatprep.mubr.f32.mxu0 0.0
        %v5823 = vand.u32 %v1184, 4294901760
        %v5824 = vsub.f32 %v1184, %v5823
        %5825 = vmatmul.mubr.f32.gmra.mxu0 %v5824
        %v5826 = vpop.f32.mrf.mxu0
        %v5827 = vadd.f32 %v5543, %v5826
        %v5828 = vpop.f32.mrf.mxu0
        %v5829 = vadd.f32 %v5545, %v5828
        %5830 = vmatprep.mubr.f32.mxu0 0.0
        %v5831 = vand.u32 %v1187, 4294901760
        %v5832 = vsub.f32 %v1187, %v5831
        %5833 = vmatmul.mubr.f32.gmra.mxu0 %v5832
        %v5834 = vpop.f32.mrf.mxu0
        %v5835 = vadd.f32 %v5550, %v5834
        %v5836 = vpop.f32.mrf.mxu0
        %v5837 = vadd.f32 %v5552, %v5836
        %5838 = vmatprep.mubr.f32.mxu0 0.0
        %v5839 = vand.u32 %v1190, 4294901760
        %v5840 = vsub.f32 %v1190, %v5839
        %5841 = vmatmul.mubr.f32.gmra.mxu0 %v5840
        %v5842 = vpop.f32.mrf.mxu0
        %v5843 = vadd.f32 %v5557, %v5842
        %v5844 = vpop.f32.mrf.mxu0
        %v5845 = vadd.f32 %v5559, %v5844
        %5846 = vmatprep.mubr.f32.mxu0 0.0
        %v5847 = vand.u32 %v1193, 4294901760
        %v5848 = vsub.f32 %v1193, %v5847
        %5849 = vmatmul.mubr.f32.gmra.mxu0 %v5848
        %v5850 = vpop.f32.mrf.mxu0
        %v5851 = vadd.f32 %v5564, %v5850
        %v5852 = vpop.f32.mrf.mxu0
        %v5853 = vadd.f32 %v5566, %v5852
        %5854 = vmatprep.mubr.f32.mxu0 0.0
        %v5855 = vand.u32 %v1196, 4294901760
        %v5856 = vsub.f32 %v1196, %v5855
        %5857 = vmatmul.mubr.f32.gmra.mxu0 %v5856
        %v5858 = vpop.f32.mrf.mxu0
        %v5859 = vadd.f32 %v5571, %v5858
        %v5860 = vpop.f32.mrf.mxu0
        %v5861 = vadd.f32 %v5573, %v5860
        %5862 = vmatprep.mubr.f32.mxu0 0.0
        %v5863 = vand.u32 %v1199, 4294901760
        %v5864 = vsub.f32 %v1199, %v5863
        %5865 = vmatmul.mubr.f32.gmra.mxu0 %v5864
        %v5866 = vpop.f32.mrf.mxu0
        %v5867 = vadd.f32 %v5578, %v5866
        %v5868 = vpop.f32.mrf.mxu0
        %v5869 = vadd.f32 %v5580, %v5868
        %5870 = vmatprep.mubr.f32.mxu0 0.0
        %v5871 = vand.u32 %v1202, 4294901760
        %v5872 = vsub.f32 %v1202, %v5871
        %5873 = vmatmul.mubr.f32.gmra.mxu0 %v5872
        %v5874 = vpop.f32.mrf.mxu0
        %v5875 = vadd.f32 %v5585, %v5874
        %v5876 = vpop.f32.mrf.mxu0
        %v5877 = vadd.f32 %v5587, %v5876
        %5878 = vmatprep.mubr.f32.mxu0 0.0
        %v5879 = vand.u32 %v1205, 4294901760
        %v5880 = vsub.f32 %v1205, %v5879
        %5881 = vmatmul.mubr.f32.gmra.mxu0 %v5880
        %v5882 = vpop.f32.mrf.mxu0
        %v5883 = vadd.f32 %v5592, %v5882
        %v5884 = vpop.f32.mrf.mxu0
        %v5885 = vadd.f32 %v5594, %v5884
        %5886 = vmatprep.mubr.f32.mxu0 0.0
        %v5887 = vand.u32 %v1208, 4294901760
        %v5888 = vsub.f32 %v1208, %v5887
        %5889 = vmatmul.mubr.f32.gmra.mxu0 %v5888
        %v5890 = vpop.f32.mrf.mxu0
        %v5891 = vadd.f32 %v5599, %v5890
        %v5892 = vpop.f32.mrf.mxu0
        %v5893 = vadd.f32 %v5601, %v5892
        %5894 = vmatprep.mubr.f32.mxu0 0.0
        %v5895 = vand.u32 %v1211, 4294901760
        %v5896 = vsub.f32 %v1211, %v5895
        %5897 = vmatmul.mubr.f32.gmra.mxu0 %v5896
        %v5898 = vpop.f32.mrf.mxu0
        %v5899 = vadd.f32 %v5606, %v5898
        %v5900 = vpop.f32.mrf.mxu0
        %v5901 = vadd.f32 %v5608, %v5900
        %5902 = vmatprep.mubr.f32.mxu0 0.0
        %v5903 = vand.u32 %v1214, 4294901760
        %v5904 = vsub.f32 %v1214, %v5903
        %5905 = vmatmul.mubr.f32.gmra.mxu0 %v5904
        %v5906 = vpop.f32.mrf.mxu0
        %v5907 = vadd.f32 %v5613, %v5906
        %v5908 = vpop.f32.mrf.mxu0
        %v5909 = vadd.f32 %v5615, %v5908
        %5910 = vmatprep.mubr.f32.mxu0 0.0
        %v5911 = vand.u32 %v1217, 4294901760
        %v5912 = vsub.f32 %v1217, %v5911
        %5913 = vmatmul.mubr.f32.gmra.mxu0 %v5912
        %v5914 = vpop.f32.mrf.mxu0
        %v5915 = vadd.f32 %v5620, %v5914
        %v5916 = vpop.f32.mrf.mxu0
        %v5917 = vadd.f32 %v5622, %v5916
        %5918 = vmatprep.mubr.f32.mxu0 0.0
        %v5919 = vand.u32 %v1220, 4294901760
        %v5920 = vsub.f32 %v1220, %v5919
        %5921 = vmatmul.mubr.f32.gmra.mxu0 %v5920
        %v5922 = vpop.f32.mrf.mxu0
        %v5923 = vadd.f32 %v5627, %v5922
        %v5924 = vpop.f32.mrf.mxu0
        %v5925 = vadd.f32 %v5629, %v5924
        %5926 = vmatprep.mubr.f32.mxu0 0.0
        %v5927 = vand.u32 %v1223, 4294901760
        %v5928 = vsub.f32 %v1223, %v5927
        %5929 = vmatmul.mubr.f32.gmra.mxu0 %v5928
        %v5930 = vpop.f32.mrf.mxu0
        %v5931 = vadd.f32 %v5634, %v5930
        %v5932 = vpop.f32.mrf.mxu0
        %v5933 = vadd.f32 %v5636, %v5932
        %5934 = vdwg.mxu0
        %5935 = vmatprep.subr.mxu0 0.0
        %5936 = vmatpush1.msra.mxu0 0.0
        %5937 = vmatprep.subr.mxu0 0.0
        %5938 = vmatpush1.msra.mxu0 0.0
        %5939 = vmatprep.subr.mxu0 0.0
        %5940 = vmatpush1.msra.mxu0 0.0
        %5941 = vmatprep.subr.mxu0 0.0
        %5942 = vmatpush1.msra.mxu0 0.0
        %5943 = vmatprep.subr.mxu0 0.0
        %5944 = vmatpush1.msra.mxu0 0.0
        %5945 = vmatprep.subr.mxu0 0.0
        %5946 = vmatpush1.msra.mxu0 0.0
        %5947 = vmatprep.subr.mxu0 0.0
        %5948 = vmatpush1.msra.mxu0 0.0
        %5949 = vmatprep.subr.mxu0 0.0
        %5950 = vmatpush1.msra.mxu0 0.0
        %5951 = vmatprep.subr.mxu0 0.0
        %5952 = vmatpush1.msra.mxu0 0.0
        %5953 = vmatprep.subr.mxu0 0.0
        %5954 = vmatpush1.msra.mxu0 0.0
        %5955 = vmatprep.subr.mxu0 0.0
        %5956 = vmatpush1.msra.mxu0 0.0
        %5957 = vmatprep.subr.mxu0 0.0
        %5958 = vmatpush1.msra.mxu0 0.0
        %5959 = vmatprep.subr.mxu0 0.0
        %5960 = vmatpush1.msra.mxu0 0.0
        %5961 = vmatprep.subr.mxu0 0.0
        %5962 = vmatpush1.msra.mxu0 0.0
        %v5963 = vand.u32 %v4979, 4294901760
        %5964 = vmatprep.subr.mxu0 %v5963
        %v5965 = vand.u32 %v4978, 4294901760
        %5966 = vmatpush1.msra.mxu0 %v5965
        %v5967 = vand.u32 %v4977, 4294901760
        %5968 = vmatprep.subr.mxu0 %v5967
        %v5969 = vand.u32 %v4976, 4294901760
        %5970 = vmatpush1.msra.mxu0 %v5969
        %5971 = vmatprep.subr.mxu0 0.0
        %5972 = vmatpush2.msra.mxu0 0.0
        %5973 = vmatprep.subr.mxu0 0.0
        %5974 = vmatpush2.msra.mxu0 0.0
        %5975 = vmatprep.subr.mxu0 0.0
        %5976 = vmatpush2.msra.mxu0 0.0
        %5977 = vmatprep.subr.mxu0 0.0
        %5978 = vmatpush2.msra.mxu0 0.0
        %5979 = vmatprep.subr.mxu0 0.0
        %5980 = vmatpush2.msra.mxu0 0.0
        %5981 = vmatprep.subr.mxu0 0.0
        %5982 = vmatpush2.msra.mxu0 0.0
        %5983 = vmatprep.subr.mxu0 0.0
        %5984 = vmatpush2.msra.mxu0 0.0
        %5985 = vmatprep.subr.mxu0 0.0
        %5986 = vmatpush2.msra.mxu0 0.0
        %5987 = vmatprep.subr.mxu0 0.0
        %5988 = vmatpush2.msra.mxu0 0.0
        %5989 = vmatprep.subr.mxu0 0.0
        %5990 = vmatpush2.msra.mxu0 0.0
        %5991 = vmatprep.subr.mxu0 0.0
        %5992 = vmatpush2.msra.mxu0 0.0
        %5993 = vmatprep.subr.mxu0 0.0
        %5994 = vmatpush2.msra.mxu0 0.0
        %5995 = vmatprep.subr.mxu0 0.0
        %5996 = vmatpush2.msra.mxu0 0.0
        %5997 = vmatprep.subr.mxu0 0.0
        %5998 = vmatpush2.msra.mxu0 0.0
        %5999 = vmatprep.subr.mxu0 0.0
        %6000 = vmatpush2.msra.mxu0 0.0
        %6001 = vmatprep.subr.mxu0 0.0
        %6002 = vmatpush2.msra.mxu0 0.0
        %6003 = vmatprep.mubr.f32.mxu0 0.0
        %v6004 = vand.u32 %v1142, 4294901760
        %v6005 = vsub.f32 %v1142, %v6004
        %v6006 = vand.u32 %v6005, 4294901760
        %6007 = vmatmul.mubr.f32.gmra.mxu0 %v6006
        %v6008 = vpop.f32.mrf.mxu0
        %v6009 = vadd.f32 %v5715, %v6008
        %v6010 = vpop.f32.mrf.mxu0
        %v6011 = vadd.f32 %v5717, %v6010
        %6012 = vmatprep.mubr.f32.mxu0 0.0
        %v6013 = vand.u32 %v1145, 4294901760
        %v6014 = vsub.f32 %v1145, %v6013
        %v6015 = vand.u32 %v6014, 4294901760
        %6016 = vmatmul.mubr.f32.gmra.mxu0 %v6015
        %v6017 = vpop.f32.mrf.mxu0
        %v6018 = vadd.f32 %v5723, %v6017
        %v6019 = vpop.f32.mrf.mxu0
        %v6020 = vadd.f32 %v5725, %v6019
        %6021 = vmatprep.mubr.f32.mxu0 0.0
        %v6022 = vand.u32 %v1148, 4294901760
        %v6023 = vsub.f32 %v1148, %v6022
        %v6024 = vand.u32 %v6023, 4294901760
        %6025 = vmatmul.mubr.f32.gmra.mxu0 %v6024
        %v6026 = vpop.f32.mrf.mxu0
        %v6027 = vadd.f32 %v5731, %v6026
        %v6028 = vpop.f32.mrf.mxu0
        %v6029 = vadd.f32 %v5733, %v6028
        %6030 = vmatprep.mubr.f32.mxu0 0.0
        %v6031 = vand.u32 %v1151, 4294901760
        %v6032 = vsub.f32 %v1151, %v6031
        %v6033 = vand.u32 %v6032, 4294901760
        %6034 = vmatmul.mubr.f32.gmra.mxu0 %v6033
        %v6035 = vpop.f32.mrf.mxu0
        %v6036 = vadd.f32 %v5739, %v6035
        %v6037 = vpop.f32.mrf.mxu0
        %v6038 = vadd.f32 %v5741, %v6037
        %6039 = vmatprep.mubr.f32.mxu0 0.0
        %v6040 = vand.u32 %v1154, 4294901760
        %v6041 = vsub.f32 %v1154, %v6040
        %v6042 = vand.u32 %v6041, 4294901760
        %6043 = vmatmul.mubr.f32.gmra.mxu0 %v6042
        %v6044 = vpop.f32.mrf.mxu0
        %v6045 = vadd.f32 %v5747, %v6044
        %v6046 = vpop.f32.mrf.mxu0
        %v6047 = vadd.f32 %v5749, %v6046
        %6048 = vmatprep.mubr.f32.mxu0 0.0
        %v6049 = vand.u32 %v1157, 4294901760
        %v6050 = vsub.f32 %v1157, %v6049
        %v6051 = vand.u32 %v6050, 4294901760
        %6052 = vmatmul.mubr.f32.gmra.mxu0 %v6051
        %v6053 = vpop.f32.mrf.mxu0
        %v6054 = vadd.f32 %v5755, %v6053
        %v6055 = vpop.f32.mrf.mxu0
        %v6056 = vadd.f32 %v5757, %v6055
        %6057 = vmatprep.mubr.f32.mxu0 0.0
        %v6058 = vand.u32 %v1160, 4294901760
        %v6059 = vsub.f32 %v1160, %v6058
        %v6060 = vand.u32 %v6059, 4294901760
        %6061 = vmatmul.mubr.f32.gmra.mxu0 %v6060
        %v6062 = vpop.f32.mrf.mxu0
        %v6063 = vadd.f32 %v5763, %v6062
        %v6064 = vpop.f32.mrf.mxu0
        %v6065 = vadd.f32 %v5765, %v6064
        %6066 = vmatprep.mubr.f32.mxu0 0.0
        %v6067 = vand.u32 %v1163, 4294901760
        %v6068 = vsub.f32 %v1163, %v6067
        %v6069 = vand.u32 %v6068, 4294901760
        %6070 = vmatmul.mubr.f32.gmra.mxu0 %v6069
        %v6071 = vpop.f32.mrf.mxu0
        %v6072 = vadd.f32 %v5771, %v6071
        %v6073 = vpop.f32.mrf.mxu0
        %v6074 = vadd.f32 %v5773, %v6073
        %6075 = vmatprep.mubr.f32.mxu0 0.0
        %v6076 = vand.u32 %v1166, 4294901760
        %v6077 = vsub.f32 %v1166, %v6076
        %v6078 = vand.u32 %v6077, 4294901760
        %6079 = vmatmul.mubr.f32.gmra.mxu0 %v6078
        %v6080 = vpop.f32.mrf.mxu0
        %v6081 = vadd.f32 %v5779, %v6080
        %v6082 = vpop.f32.mrf.mxu0
        %v6083 = vadd.f32 %v5781, %v6082
        %6084 = vmatprep.mubr.f32.mxu0 0.0
        %v6085 = vand.u32 %v1169, 4294901760
        %v6086 = vsub.f32 %v1169, %v6085
        %v6087 = vand.u32 %v6086, 4294901760
        %6088 = vmatmul.mubr.f32.gmra.mxu0 %v6087
        %v6089 = vpop.f32.mrf.mxu0
        %v6090 = vadd.f32 %v5787, %v6089
        %v6091 = vpop.f32.mrf.mxu0
        %v6092 = vadd.f32 %v5789, %v6091
        %6093 = vmatprep.mubr.f32.mxu0 0.0
        %v6094 = vand.u32 %v1172, 4294901760
        %v6095 = vsub.f32 %v1172, %v6094
        %v6096 = vand.u32 %v6095, 4294901760
        %6097 = vmatmul.mubr.f32.gmra.mxu0 %v6096
        %v6098 = vpop.f32.mrf.mxu0
        %v6099 = vadd.f32 %v5795, %v6098
        %v6100 = vpop.f32.mrf.mxu0
        %v6101 = vadd.f32 %v5797, %v6100
        %6102 = vmatprep.mubr.f32.mxu0 0.0
        %v6103 = vand.u32 %v1175, 4294901760
        %v6104 = vsub.f32 %v1175, %v6103
        %v6105 = vand.u32 %v6104, 4294901760
        %6106 = vmatmul.mubr.f32.gmra.mxu0 %v6105
        %v6107 = vpop.f32.mrf.mxu0
        %v6108 = vadd.f32 %v5803, %v6107
        %v6109 = vpop.f32.mrf.mxu0
        %v6110 = vadd.f32 %v5805, %v6109
        %6111 = vmatprep.mubr.f32.mxu0 0.0
        %v6112 = vand.u32 %v1178, 4294901760
        %v6113 = vsub.f32 %v1178, %v6112
        %v6114 = vand.u32 %v6113, 4294901760
        %6115 = vmatmul.mubr.f32.gmra.mxu0 %v6114
        %v6116 = vpop.f32.mrf.mxu0
        %v6117 = vadd.f32 %v5811, %v6116
        %v6118 = vpop.f32.mrf.mxu0
        %v6119 = vadd.f32 %v5813, %v6118
        %6120 = vmatprep.mubr.f32.mxu0 0.0
        %v6121 = vand.u32 %v1181, 4294901760
        %v6122 = vsub.f32 %v1181, %v6121
        %v6123 = vand.u32 %v6122, 4294901760
        %6124 = vmatmul.mubr.f32.gmra.mxu0 %v6123
        %v6125 = vpop.f32.mrf.mxu0
        %v6126 = vadd.f32 %v5819, %v6125
        %v6127 = vpop.f32.mrf.mxu0
        %v6128 = vadd.f32 %v5821, %v6127
        %6129 = vmatprep.mubr.f32.mxu0 0.0
        %v6130 = vand.u32 %v1184, 4294901760
        %v6131 = vsub.f32 %v1184, %v6130
        %v6132 = vand.u32 %v6131, 4294901760
        %6133 = vmatmul.mubr.f32.gmra.mxu0 %v6132
        %v6134 = vpop.f32.mrf.mxu0
        %v6135 = vadd.f32 %v5827, %v6134
        %v6136 = vpop.f32.mrf.mxu0
        %v6137 = vadd.f32 %v5829, %v6136
        %6138 = vmatprep.mubr.f32.mxu0 0.0
        %v6139 = vand.u32 %v1187, 4294901760
        %v6140 = vsub.f32 %v1187, %v6139
        %v6141 = vand.u32 %v6140, 4294901760
        %6142 = vmatmul.mubr.f32.gmra.mxu0 %v6141
        %v6143 = vpop.f32.mrf.mxu0
        %v6144 = vadd.f32 %v5835, %v6143
        %v6145 = vpop.f32.mrf.mxu0
        %v6146 = vadd.f32 %v5837, %v6145
        %6147 = vmatprep.mubr.f32.mxu0 0.0
        %v6148 = vand.u32 %v1190, 4294901760
        %v6149 = vsub.f32 %v1190, %v6148
        %v6150 = vand.u32 %v6149, 4294901760
        %6151 = vmatmul.mubr.f32.gmra.mxu0 %v6150
        %v6152 = vpop.f32.mrf.mxu0
        %v6153 = vadd.f32 %v5843, %v6152
        %v6154 = vpop.f32.mrf.mxu0
        %v6155 = vadd.f32 %v5845, %v6154
        %6156 = vmatprep.mubr.f32.mxu0 0.0
        %v6157 = vand.u32 %v1193, 4294901760
        %v6158 = vsub.f32 %v1193, %v6157
        %v6159 = vand.u32 %v6158, 4294901760
        %6160 = vmatmul.mubr.f32.gmra.mxu0 %v6159
        %v6161 = vpop.f32.mrf.mxu0
        %v6162 = vadd.f32 %v5851, %v6161
        %v6163 = vpop.f32.mrf.mxu0
        %v6164 = vadd.f32 %v5853, %v6163
        %6165 = vmatprep.mubr.f32.mxu0 0.0
        %v6166 = vand.u32 %v1196, 4294901760
        %v6167 = vsub.f32 %v1196, %v6166
        %v6168 = vand.u32 %v6167, 4294901760
        %6169 = vmatmul.mubr.f32.gmra.mxu0 %v6168
        %v6170 = vpop.f32.mrf.mxu0
        %v6171 = vadd.f32 %v5859, %v6170
        %v6172 = vpop.f32.mrf.mxu0
        %v6173 = vadd.f32 %v5861, %v6172
        %6174 = vmatprep.mubr.f32.mxu0 0.0
        %v6175 = vand.u32 %v1199, 4294901760
        %v6176 = vsub.f32 %v1199, %v6175
        %v6177 = vand.u32 %v6176, 4294901760
        %6178 = vmatmul.mubr.f32.gmra.mxu0 %v6177
        %v6179 = vpop.f32.mrf.mxu0
        %v6180 = vadd.f32 %v5867, %v6179
        %v6181 = vpop.f32.mrf.mxu0
        %v6182 = vadd.f32 %v5869, %v6181
        %6183 = vmatprep.mubr.f32.mxu0 0.0
        %v6184 = vand.u32 %v1202, 4294901760
        %v6185 = vsub.f32 %v1202, %v6184
        %v6186 = vand.u32 %v6185, 4294901760
        %6187 = vmatmul.mubr.f32.gmra.mxu0 %v6186
        %v6188 = vpop.f32.mrf.mxu0
        %v6189 = vadd.f32 %v5875, %v6188
        %v6190 = vpop.f32.mrf.mxu0
        %v6191 = vadd.f32 %v5877, %v6190
        %6192 = vmatprep.mubr.f32.mxu0 0.0
        %v6193 = vand.u32 %v1205, 4294901760
        %v6194 = vsub.f32 %v1205, %v6193
        %v6195 = vand.u32 %v6194, 4294901760
        %6196 = vmatmul.mubr.f32.gmra.mxu0 %v6195
        %v6197 = vpop.f32.mrf.mxu0
        %v6198 = vadd.f32 %v5883, %v6197
        %v6199 = vpop.f32.mrf.mxu0
        %v6200 = vadd.f32 %v5885, %v6199
        %6201 = vmatprep.mubr.f32.mxu0 0.0
        %v6202 = vand.u32 %v1208, 4294901760
        %v6203 = vsub.f32 %v1208, %v6202
        %v6204 = vand.u32 %v6203, 4294901760
        %6205 = vmatmul.mubr.f32.gmra.mxu0 %v6204
        %v6206 = vpop.f32.mrf.mxu0
        %v6207 = vadd.f32 %v5891, %v6206
        %v6208 = vpop.f32.mrf.mxu0
        %v6209 = vadd.f32 %v5893, %v6208
        %6210 = vmatprep.mubr.f32.mxu0 0.0
        %v6211 = vand.u32 %v1211, 4294901760
        %v6212 = vsub.f32 %v1211, %v6211
        %v6213 = vand.u32 %v6212, 4294901760
        %6214 = vmatmul.mubr.f32.gmra.mxu0 %v6213
        %v6215 = vpop.f32.mrf.mxu0
        %v6216 = vadd.f32 %v5899, %v6215
        %v6217 = vpop.f32.mrf.mxu0
        %v6218 = vadd.f32 %v5901, %v6217
        %6219 = vmatprep.mubr.f32.mxu0 0.0
        %v6220 = vand.u32 %v1214, 4294901760
        %v6221 = vsub.f32 %v1214, %v6220
        %v6222 = vand.u32 %v6221, 4294901760
        %6223 = vmatmul.mubr.f32.gmra.mxu0 %v6222
        %v6224 = vpop.f32.mrf.mxu0
        %v6225 = vadd.f32 %v5907, %v6224
        %v6226 = vpop.f32.mrf.mxu0
        %v6227 = vadd.f32 %v5909, %v6226
        %6228 = vmatprep.mubr.f32.mxu0 0.0
        %v6229 = vand.u32 %v1217, 4294901760
        %v6230 = vsub.f32 %v1217, %v6229
        %v6231 = vand.u32 %v6230, 4294901760
        %6232 = vmatmul.mubr.f32.gmra.mxu0 %v6231
        %v6233 = vpop.f32.mrf.mxu0
        %v6234 = vadd.f32 %v5915, %v6233
        %v6235 = vpop.f32.mrf.mxu0
        %v6236 = vadd.f32 %v5917, %v6235
        %6237 = vmatprep.mubr.f32.mxu0 0.0
        %v6238 = vand.u32 %v1220, 4294901760
        %v6239 = vsub.f32 %v1220, %v6238
        %v6240 = vand.u32 %v6239, 4294901760
        %6241 = vmatmul.mubr.f32.gmra.mxu0 %v6240
        %v6242 = vpop.f32.mrf.mxu0
        %v6243 = vadd.f32 %v5923, %v6242
        %v6244 = vpop.f32.mrf.mxu0
        %v6245 = vadd.f32 %v5925, %v6244
        %6246 = vmatprep.mubr.f32.mxu0 0.0
        %v6247 = vand.u32 %v1223, 4294901760
        %v6248 = vsub.f32 %v1223, %v6247
        %v6249 = vand.u32 %v6248, 4294901760
        %6250 = vmatmul.mubr.f32.gmra.mxu0 %v6249
        %v6251 = vpop.f32.mrf.mxu0
        %v6252 = vadd.f32 %v5931, %v6251
        %v6253 = vpop.f32.mrf.mxu0
        %v6254 = vadd.f32 %v5933, %v6253
        %6255 = vdwg.mxu0
        %6256 = vmatprep.subr.mxu0 0.0
        %6257 = vmatpush1.msra.mxu0 0.0
        %6258 = vmatprep.subr.mxu0 0.0
        %6259 = vmatpush1.msra.mxu0 0.0
        %6260 = vmatprep.subr.mxu0 0.0
        %6261 = vmatpush1.msra.mxu0 0.0
        %6262 = vmatprep.subr.mxu0 0.0
        %6263 = vmatpush1.msra.mxu0 0.0
        %6264 = vmatprep.subr.mxu0 0.0
        %6265 = vmatpush1.msra.mxu0 0.0
        %6266 = vmatprep.subr.mxu0 0.0
        %6267 = vmatpush1.msra.mxu0 0.0
        %6268 = vmatprep.subr.mxu0 0.0
        %6269 = vmatpush1.msra.mxu0 0.0
        %6270 = vmatprep.subr.mxu0 0.0
        %6271 = vmatpush1.msra.mxu0 0.0
        %6272 = vmatprep.subr.mxu0 0.0
        %6273 = vmatpush1.msra.mxu0 0.0
        %6274 = vmatprep.subr.mxu0 0.0
        %6275 = vmatpush1.msra.mxu0 0.0
        %6276 = vmatprep.subr.mxu0 0.0
        %6277 = vmatpush1.msra.mxu0 0.0
        %6278 = vmatprep.subr.mxu0 0.0
        %6279 = vmatpush1.msra.mxu0 0.0
        %6280 = vmatprep.subr.mxu0 0.0
        %6281 = vmatpush1.msra.mxu0 0.0
        %6282 = vmatprep.subr.mxu0 0.0
        %6283 = vmatpush1.msra.mxu0 0.0
        %v6284 = vand.u32 %v4979, 4294901760
        %v6285 = vsub.f32 %v4979, %v6284
        %v6286 = vand.u32 %v6285, 4294901760
        %6287 = vmatprep.subr.mxu0 %v6286
        %v6288 = vand.u32 %v4978, 4294901760
        %v6289 = vsub.f32 %v4978, %v6288
        %v6290 = vand.u32 %v6289, 4294901760
        %6291 = vmatpush1.msra.mxu0 %v6290
        %v6292 = vand.u32 %v4977, 4294901760
        %v6293 = vsub.f32 %v4977, %v6292
        %v6294 = vand.u32 %v6293, 4294901760
        %6295 = vmatprep.subr.mxu0 %v6294
        %v6296 = vand.u32 %v4976, 4294901760
        %v6297 = vsub.f32 %v4976, %v6296
        %v6298 = vand.u32 %v6297, 4294901760
        %6299 = vmatpush1.msra.mxu0 %v6298
        %6300 = vmatprep.subr.mxu0 0.0
        %6301 = vmatpush2.msra.mxu0 0.0
        %6302 = vmatprep.subr.mxu0 0.0
        %6303 = vmatpush2.msra.mxu0 0.0
        %6304 = vmatprep.subr.mxu0 0.0
        %6305 = vmatpush2.msra.mxu0 0.0
        %6306 = vmatprep.subr.mxu0 0.0
        %6307 = vmatpush2.msra.mxu0 0.0
        %6308 = vmatprep.subr.mxu0 0.0
        %6309 = vmatpush2.msra.mxu0 0.0
        %6310 = vmatprep.subr.mxu0 0.0
        %6311 = vmatpush2.msra.mxu0 0.0
        %6312 = vmatprep.subr.mxu0 0.0
        %6313 = vmatpush2.msra.mxu0 0.0
        %6314 = vmatprep.subr.mxu0 0.0
        %6315 = vmatpush2.msra.mxu0 0.0
        %6316 = vmatprep.subr.mxu0 0.0
        %6317 = vmatpush2.msra.mxu0 0.0
        %6318 = vmatprep.subr.mxu0 0.0
        %6319 = vmatpush2.msra.mxu0 0.0
        %6320 = vmatprep.subr.mxu0 0.0
        %6321 = vmatpush2.msra.mxu0 0.0
        %6322 = vmatprep.subr.mxu0 0.0
        %6323 = vmatpush2.msra.mxu0 0.0
        %6324 = vmatprep.subr.mxu0 0.0
        %6325 = vmatpush2.msra.mxu0 0.0
        %6326 = vmatprep.subr.mxu0 0.0
        %6327 = vmatpush2.msra.mxu0 0.0
        %6328 = vmatprep.subr.mxu0 0.0
        %6329 = vmatpush2.msra.mxu0 0.0
        %6330 = vmatprep.subr.mxu0 0.0
        %6331 = vmatpush2.msra.mxu0 0.0
        %6332 = vmatprep.mubr.f32.mxu0 0.0
        %v6333 = vand.u32 %v1142, 4294901760
        %6334 = vmatmul.mubr.f32.gmra.mxu0 %v6333
        %v6335 = vpop.f32.mrf.mxu0
        %v6336 = vadd.f32 %v6009, %v6335
        %v6337 = vpop.f32.mrf.mxu0
        %v6338 = vadd.f32 %v6011, %v6337
        %6339 = vmatprep.mubr.f32.mxu0 0.0
        %v6340 = vand.u32 %v1145, 4294901760
        %6341 = vmatmul.mubr.f32.gmra.mxu0 %v6340
        %v6342 = vpop.f32.mrf.mxu0
        %v6343 = vadd.f32 %v6018, %v6342
        %v6344 = vpop.f32.mrf.mxu0
        %v6345 = vadd.f32 %v6020, %v6344
        %6346 = vmatprep.mubr.f32.mxu0 0.0
        %v6347 = vand.u32 %v1148, 4294901760
        %6348 = vmatmul.mubr.f32.gmra.mxu0 %v6347
        %v6349 = vpop.f32.mrf.mxu0
        %v6350 = vadd.f32 %v6027, %v6349
        %v6351 = vpop.f32.mrf.mxu0
        %v6352 = vadd.f32 %v6029, %v6351
        %6353 = vmatprep.mubr.f32.mxu0 0.0
        %v6354 = vand.u32 %v1151, 4294901760
        %6355 = vmatmul.mubr.f32.gmra.mxu0 %v6354
        %v6356 = vpop.f32.mrf.mxu0
        %v6357 = vadd.f32 %v6036, %v6356
        %v6358 = vpop.f32.mrf.mxu0
        %v6359 = vadd.f32 %v6038, %v6358
        %6360 = vmatprep.mubr.f32.mxu0 0.0
        %v6361 = vand.u32 %v1154, 4294901760
        %6362 = vmatmul.mubr.f32.gmra.mxu0 %v6361
        %v6363 = vpop.f32.mrf.mxu0
        %v6364 = vadd.f32 %v6045, %v6363
        %v6365 = vpop.f32.mrf.mxu0
        %v6366 = vadd.f32 %v6047, %v6365
        %6367 = vmatprep.mubr.f32.mxu0 0.0
        %v6368 = vand.u32 %v1157, 4294901760
        %6369 = vmatmul.mubr.f32.gmra.mxu0 %v6368
        %v6370 = vpop.f32.mrf.mxu0
        %v6371 = vadd.f32 %v6054, %v6370
        %v6372 = vpop.f32.mrf.mxu0
        %v6373 = vadd.f32 %v6056, %v6372
        %6374 = vmatprep.mubr.f32.mxu0 0.0
        %v6375 = vand.u32 %v1160, 4294901760
        %6376 = vmatmul.mubr.f32.gmra.mxu0 %v6375
        %v6377 = vpop.f32.mrf.mxu0
        %v6378 = vadd.f32 %v6063, %v6377
        %v6379 = vpop.f32.mrf.mxu0
        %v6380 = vadd.f32 %v6065, %v6379
        %6381 = vmatprep.mubr.f32.mxu0 0.0
        %v6382 = vand.u32 %v1163, 4294901760
        %6383 = vmatmul.mubr.f32.gmra.mxu0 %v6382
        %v6384 = vpop.f32.mrf.mxu0
        %v6385 = vadd.f32 %v6072, %v6384
        %v6386 = vpop.f32.mrf.mxu0
        %v6387 = vadd.f32 %v6074, %v6386
        %6388 = vmatprep.mubr.f32.mxu0 0.0
        %v6389 = vand.u32 %v1166, 4294901760
        %6390 = vmatmul.mubr.f32.gmra.mxu0 %v6389
        %v6391 = vpop.f32.mrf.mxu0
        %v6392 = vadd.f32 %v6081, %v6391
        %v6393 = vpop.f32.mrf.mxu0
        %v6394 = vadd.f32 %v6083, %v6393
        %6395 = vmatprep.mubr.f32.mxu0 0.0
        %v6396 = vand.u32 %v1169, 4294901760
        %6397 = vmatmul.mubr.f32.gmra.mxu0 %v6396
        %v6398 = vpop.f32.mrf.mxu0
        %v6399 = vadd.f32 %v6090, %v6398
        %v6400 = vpop.f32.mrf.mxu0
        %v6401 = vadd.f32 %v6092, %v6400
        %6402 = vmatprep.mubr.f32.mxu0 0.0
        %v6403 = vand.u32 %v1172, 4294901760
        %6404 = vmatmul.mubr.f32.gmra.mxu0 %v6403
        %v6405 = vpop.f32.mrf.mxu0
        %v6406 = vadd.f32 %v6099, %v6405
        %v6407 = vpop.f32.mrf.mxu0
        %v6408 = vadd.f32 %v6101, %v6407
        %6409 = vmatprep.mubr.f32.mxu0 0.0
        %v6410 = vand.u32 %v1175, 4294901760
        %6411 = vmatmul.mubr.f32.gmra.mxu0 %v6410
        %v6412 = vpop.f32.mrf.mxu0
        %v6413 = vadd.f32 %v6108, %v6412
        %v6414 = vpop.f32.mrf.mxu0
        %v6415 = vadd.f32 %v6110, %v6414
        %6416 = vmatprep.mubr.f32.mxu0 0.0
        %v6417 = vand.u32 %v1178, 4294901760
        %6418 = vmatmul.mubr.f32.gmra.mxu0 %v6417
        %v6419 = vpop.f32.mrf.mxu0
        %v6420 = vadd.f32 %v6117, %v6419
        %v6421 = vpop.f32.mrf.mxu0
        %v6422 = vadd.f32 %v6119, %v6421
        %6423 = vmatprep.mubr.f32.mxu0 0.0
        %v6424 = vand.u32 %v1181, 4294901760
        %6425 = vmatmul.mubr.f32.gmra.mxu0 %v6424
        %v6426 = vpop.f32.mrf.mxu0
        %v6427 = vadd.f32 %v6126, %v6426
        %v6428 = vpop.f32.mrf.mxu0
        %v6429 = vadd.f32 %v6128, %v6428
        %6430 = vmatprep.mubr.f32.mxu0 0.0
        %v6431 = vand.u32 %v1184, 4294901760
        %6432 = vmatmul.mubr.f32.gmra.mxu0 %v6431
        %v6433 = vpop.f32.mrf.mxu0
        %v6434 = vadd.f32 %v6135, %v6433
        %v6435 = vpop.f32.mrf.mxu0
        %v6436 = vadd.f32 %v6137, %v6435
        %6437 = vmatprep.mubr.f32.mxu0 0.0
        %v6438 = vand.u32 %v1187, 4294901760
        %6439 = vmatmul.mubr.f32.gmra.mxu0 %v6438
        %v6440 = vpop.f32.mrf.mxu0
        %v6441 = vadd.f32 %v6144, %v6440
        %v6442 = vpop.f32.mrf.mxu0
        %v6443 = vadd.f32 %v6146, %v6442
        %6444 = vmatprep.mubr.f32.mxu0 0.0
        %v6445 = vand.u32 %v1190, 4294901760
        %6446 = vmatmul.mubr.f32.gmra.mxu0 %v6445
        %v6447 = vpop.f32.mrf.mxu0
        %v6448 = vadd.f32 %v6153, %v6447
        %v6449 = vpop.f32.mrf.mxu0
        %v6450 = vadd.f32 %v6155, %v6449
        %6451 = vmatprep.mubr.f32.mxu0 0.0
        %v6452 = vand.u32 %v1193, 4294901760
        %6453 = vmatmul.mubr.f32.gmra.mxu0 %v6452
        %v6454 = vpop.f32.mrf.mxu0
        %v6455 = vadd.f32 %v6162, %v6454
        %v6456 = vpop.f32.mrf.mxu0
        %v6457 = vadd.f32 %v6164, %v6456
        %6458 = vmatprep.mubr.f32.mxu0 0.0
        %v6459 = vand.u32 %v1196, 4294901760
        %6460 = vmatmul.mubr.f32.gmra.mxu0 %v6459
        %v6461 = vpop.f32.mrf.mxu0
        %v6462 = vadd.f32 %v6171, %v6461
        %v6463 = vpop.f32.mrf.mxu0
        %v6464 = vadd.f32 %v6173, %v6463
        %6465 = vmatprep.mubr.f32.mxu0 0.0
        %v6466 = vand.u32 %v1199, 4294901760
        %6467 = vmatmul.mubr.f32.gmra.mxu0 %v6466
        %v6468 = vpop.f32.mrf.mxu0
        %v6469 = vadd.f32 %v6180, %v6468
        %v6470 = vpop.f32.mrf.mxu0
        %v6471 = vadd.f32 %v6182, %v6470
        %6472 = vmatprep.mubr.f32.mxu0 0.0
        %v6473 = vand.u32 %v1202, 4294901760
        %6474 = vmatmul.mubr.f32.gmra.mxu0 %v6473
        %v6475 = vpop.f32.mrf.mxu0
        %v6476 = vadd.f32 %v6189, %v6475
        %v6477 = vpop.f32.mrf.mxu0
        %v6478 = vadd.f32 %v6191, %v6477
        %6479 = vmatprep.mubr.f32.mxu0 0.0
        %v6480 = vand.u32 %v1205, 4294901760
        %6481 = vmatmul.mubr.f32.gmra.mxu0 %v6480
        %v6482 = vpop.f32.mrf.mxu0
        %v6483 = vadd.f32 %v6198, %v6482
        %v6484 = vpop.f32.mrf.mxu0
        %v6485 = vadd.f32 %v6200, %v6484
        %6486 = vmatprep.mubr.f32.mxu0 0.0
        %v6487 = vand.u32 %v1208, 4294901760
        %6488 = vmatmul.mubr.f32.gmra.mxu0 %v6487
        %v6489 = vpop.f32.mrf.mxu0
        %v6490 = vadd.f32 %v6207, %v6489
        %v6491 = vpop.f32.mrf.mxu0
        %v6492 = vadd.f32 %v6209, %v6491
        %6493 = vmatprep.mubr.f32.mxu0 0.0
        %v6494 = vand.u32 %v1211, 4294901760
        %6495 = vmatmul.mubr.f32.gmra.mxu0 %v6494
        %v6496 = vpop.f32.mrf.mxu0
        %v6497 = vadd.f32 %v6216, %v6496
        %v6498 = vpop.f32.mrf.mxu0
        %v6499 = vadd.f32 %v6218, %v6498
        %6500 = vmatprep.mubr.f32.mxu0 0.0
        %v6501 = vand.u32 %v1214, 4294901760
        %6502 = vmatmul.mubr.f32.gmra.mxu0 %v6501
        %v6503 = vpop.f32.mrf.mxu0
        %v6504 = vadd.f32 %v6225, %v6503
        %v6505 = vpop.f32.mrf.mxu0
        %v6506 = vadd.f32 %v6227, %v6505
        %6507 = vmatprep.mubr.f32.mxu0 0.0
        %v6508 = vand.u32 %v1217, 4294901760
        %6509 = vmatmul.mubr.f32.gmra.mxu0 %v6508
        %v6510 = vpop.f32.mrf.mxu0
        %v6511 = vadd.f32 %v6234, %v6510
        %v6512 = vpop.f32.mrf.mxu0
        %v6513 = vadd.f32 %v6236, %v6512
        %6514 = vmatprep.mubr.f32.mxu0 0.0
        %v6515 = vand.u32 %v1220, 4294901760
        %6516 = vmatmul.mubr.f32.gmra.mxu0 %v6515
        %v6517 = vpop.f32.mrf.mxu0
        %v6518 = vadd.f32 %v6243, %v6517
        %v6519 = vpop.f32.mrf.mxu0
        %v6520 = vadd.f32 %v6245, %v6519
        %6521 = vmatprep.mubr.f32.mxu0 0.0
        %v6522 = vand.u32 %v1223, 4294901760
        %6523 = vmatmul.mubr.f32.gmra.mxu0 %v6522
        %v6524 = vpop.f32.mrf.mxu0
        %v6525 = vadd.f32 %v6252, %v6524
        %v6526 = vpop.f32.mrf.mxu0
        %v6527 = vadd.f32 %v6254, %v6526
        %6528 = vdwg.mxu0
        %6529 = vmatprep.subr.mxu0 0.0
        %6530 = vmatpush1.msra.mxu0 0.0
        %6531 = vmatprep.subr.mxu0 0.0
        %6532 = vmatpush1.msra.mxu0 0.0
        %6533 = vmatprep.subr.mxu0 0.0
        %6534 = vmatpush1.msra.mxu0 0.0
        %6535 = vmatprep.subr.mxu0 0.0
        %6536 = vmatpush1.msra.mxu0 0.0
        %6537 = vmatprep.subr.mxu0 0.0
        %6538 = vmatpush1.msra.mxu0 0.0
        %6539 = vmatprep.subr.mxu0 0.0
        %6540 = vmatpush1.msra.mxu0 0.0
        %6541 = vmatprep.subr.mxu0 0.0
        %6542 = vmatpush1.msra.mxu0 0.0
        %6543 = vmatprep.subr.mxu0 0.0
        %6544 = vmatpush1.msra.mxu0 0.0
        %6545 = vmatprep.subr.mxu0 0.0
        %6546 = vmatpush1.msra.mxu0 0.0
        %6547 = vmatprep.subr.mxu0 0.0
        %6548 = vmatpush1.msra.mxu0 0.0
        %6549 = vmatprep.subr.mxu0 0.0
        %6550 = vmatpush1.msra.mxu0 0.0
        %6551 = vmatprep.subr.mxu0 0.0
        %6552 = vmatpush1.msra.mxu0 0.0
        %6553 = vmatprep.subr.mxu0 0.0
        %6554 = vmatpush1.msra.mxu0 0.0
        %6555 = vmatprep.subr.mxu0 0.0
        %6556 = vmatpush1.msra.mxu0 0.0
        %v6557 = vand.u32 %v4979, 4294901760
        %6558 = vmatprep.subr.mxu0 %v6557
        %v6559 = vand.u32 %v4978, 4294901760
        %6560 = vmatpush1.msra.mxu0 %v6559
        %v6561 = vand.u32 %v4977, 4294901760
        %6562 = vmatprep.subr.mxu0 %v6561
        %v6563 = vand.u32 %v4976, 4294901760
        %6564 = vmatpush1.msra.mxu0 %v6563
        %6565 = vmatprep.subr.mxu0 0.0
        %6566 = vmatpush2.msra.mxu0 0.0
        %6567 = vmatprep.subr.mxu0 0.0
        %6568 = vmatpush2.msra.mxu0 0.0
        %6569 = vmatprep.subr.mxu0 0.0
        %6570 = vmatpush2.msra.mxu0 0.0
        %6571 = vmatprep.subr.mxu0 0.0
        %6572 = vmatpush2.msra.mxu0 0.0
        %6573 = vmatprep.subr.mxu0 0.0
        %6574 = vmatpush2.msra.mxu0 0.0
        %6575 = vmatprep.subr.mxu0 0.0
        %6576 = vmatpush2.msra.mxu0 0.0
        %6577 = vmatprep.subr.mxu0 0.0
        %6578 = vmatpush2.msra.mxu0 0.0
        %6579 = vmatprep.subr.mxu0 0.0
        %6580 = vmatpush2.msra.mxu0 0.0
        %6581 = vmatprep.subr.mxu0 0.0
        %6582 = vmatpush2.msra.mxu0 0.0
        %6583 = vmatprep.subr.mxu0 0.0
        %6584 = vmatpush2.msra.mxu0 0.0
        %6585 = vmatprep.subr.mxu0 0.0
        %6586 = vmatpush2.msra.mxu0 0.0
        %6587 = vmatprep.subr.mxu0 0.0
        %6588 = vmatpush2.msra.mxu0 0.0
        %6589 = vmatprep.subr.mxu0 0.0
        %6590 = vmatpush2.msra.mxu0 0.0
        %6591 = vmatprep.subr.mxu0 0.0
        %6592 = vmatpush2.msra.mxu0 0.0
        %6593 = vmatprep.subr.mxu0 0.0
        %6594 = vmatpush2.msra.mxu0 0.0
        %6595 = vmatprep.subr.mxu0 0.0
        %6596 = vmatpush2.msra.mxu0 0.0
        %6597 = vmatprep.mubr.f32.mxu0 0.0
        %v6598 = vand.u32 %v1142, 4294901760
        %6599 = vmatmul.mubr.f32.gmra.mxu0 %v6598
        %v6600 = vpop.f32.mrf.mxu0
        %v6601 = vadd.f32 %v6336, %v6600
        %v6602 = vpop.f32.mrf.mxu0
        %v6603 = vadd.f32 %v6338, %v6602
        %6604 = vmatprep.mubr.f32.mxu0 0.0
        %v6605 = vand.u32 %v1145, 4294901760
        %6606 = vmatmul.mubr.f32.gmra.mxu0 %v6605
        %v6607 = vpop.f32.mrf.mxu0
        %v6608 = vadd.f32 %v6343, %v6607
        %v6609 = vpop.f32.mrf.mxu0
        %v6610 = vadd.f32 %v6345, %v6609
        %6611 = vmatprep.mubr.f32.mxu0 0.0
        %v6612 = vand.u32 %v1148, 4294901760
        %6613 = vmatmul.mubr.f32.gmra.mxu0 %v6612
        %v6614 = vpop.f32.mrf.mxu0
        %v6615 = vadd.f32 %v6350, %v6614
        %v6616 = vpop.f32.mrf.mxu0
        %v6617 = vadd.f32 %v6352, %v6616
        %6618 = vmatprep.mubr.f32.mxu0 0.0
        %v6619 = vand.u32 %v1151, 4294901760
        %6620 = vmatmul.mubr.f32.gmra.mxu0 %v6619
        %v6621 = vpop.f32.mrf.mxu0
        %v6622 = vadd.f32 %v6357, %v6621
        %v6623 = vpop.f32.mrf.mxu0
        %v6624 = vadd.f32 %v6359, %v6623
        %6625 = vmatprep.mubr.f32.mxu0 0.0
        %v6626 = vand.u32 %v1154, 4294901760
        %6627 = vmatmul.mubr.f32.gmra.mxu0 %v6626
        %v6628 = vpop.f32.mrf.mxu0
        %v6629 = vadd.f32 %v6364, %v6628
        %v6630 = vpop.f32.mrf.mxu0
        %v6631 = vadd.f32 %v6366, %v6630
        %6632 = vmatprep.mubr.f32.mxu0 0.0
        %v6633 = vand.u32 %v1157, 4294901760
        %6634 = vmatmul.mubr.f32.gmra.mxu0 %v6633
        %v6635 = vpop.f32.mrf.mxu0
        %v6636 = vadd.f32 %v6371, %v6635
        %v6637 = vpop.f32.mrf.mxu0
        %v6638 = vadd.f32 %v6373, %v6637
        %6639 = vmatprep.mubr.f32.mxu0 0.0
        %v6640 = vand.u32 %v1160, 4294901760
        %6641 = vmatmul.mubr.f32.gmra.mxu0 %v6640
        %v6642 = vpop.f32.mrf.mxu0
        %v6643 = vadd.f32 %v6378, %v6642
        %v6644 = vpop.f32.mrf.mxu0
        %v6645 = vadd.f32 %v6380, %v6644
        %6646 = vmatprep.mubr.f32.mxu0 0.0
        %v6647 = vand.u32 %v1163, 4294901760
        %6648 = vmatmul.mubr.f32.gmra.mxu0 %v6647
        %v6649 = vpop.f32.mrf.mxu0
        %v6650 = vadd.f32 %v6385, %v6649
        %v6651 = vpop.f32.mrf.mxu0
        %v6652 = vadd.f32 %v6387, %v6651
        %6653 = vmatprep.mubr.f32.mxu0 0.0
        %v6654 = vand.u32 %v1166, 4294901760
        %6655 = vmatmul.mubr.f32.gmra.mxu0 %v6654
        %v6656 = vpop.f32.mrf.mxu0
        %v6657 = vadd.f32 %v6392, %v6656
        %v6658 = vpop.f32.mrf.mxu0
        %v6659 = vadd.f32 %v6394, %v6658
        %6660 = vmatprep.mubr.f32.mxu0 0.0
        %v6661 = vand.u32 %v1169, 4294901760
        %6662 = vmatmul.mubr.f32.gmra.mxu0 %v6661
        %v6663 = vpop.f32.mrf.mxu0
        %v6664 = vadd.f32 %v6399, %v6663
        %v6665 = vpop.f32.mrf.mxu0
        %v6666 = vadd.f32 %v6401, %v6665
        %6667 = vmatprep.mubr.f32.mxu0 0.0
        %v6668 = vand.u32 %v1172, 4294901760
        %6669 = vmatmul.mubr.f32.gmra.mxu0 %v6668
        %v6670 = vpop.f32.mrf.mxu0
        %v6671 = vadd.f32 %v6406, %v6670
        %v6672 = vpop.f32.mrf.mxu0
        %v6673 = vadd.f32 %v6408, %v6672
        %6674 = vmatprep.mubr.f32.mxu0 0.0
        %v6675 = vand.u32 %v1175, 4294901760
        %6676 = vmatmul.mubr.f32.gmra.mxu0 %v6675
        %v6677 = vpop.f32.mrf.mxu0
        %v6678 = vadd.f32 %v6413, %v6677
        %v6679 = vpop.f32.mrf.mxu0
        %v6680 = vadd.f32 %v6415, %v6679
        %6681 = vmatprep.mubr.f32.mxu0 0.0
        %v6682 = vand.u32 %v1178, 4294901760
        %6683 = vmatmul.mubr.f32.gmra.mxu0 %v6682
        %v6684 = vpop.f32.mrf.mxu0
        %v6685 = vadd.f32 %v6420, %v6684
        %v6686 = vpop.f32.mrf.mxu0
        %v6687 = vadd.f32 %v6422, %v6686
        %6688 = vmatprep.mubr.f32.mxu0 0.0
        %v6689 = vand.u32 %v1181, 4294901760
        %6690 = vmatmul.mubr.f32.gmra.mxu0 %v6689
        %v6691 = vpop.f32.mrf.mxu0
        %v6692 = vadd.f32 %v6427, %v6691
        %v6693 = vpop.f32.mrf.mxu0
        %v6694 = vadd.f32 %v6429, %v6693
        %6695 = vmatprep.mubr.f32.mxu0 0.0
        %v6696 = vand.u32 %v1184, 4294901760
        %6697 = vmatmul.mubr.f32.gmra.mxu0 %v6696
        %v6698 = vpop.f32.mrf.mxu0
        %v6699 = vadd.f32 %v6434, %v6698
        %v6700 = vpop.f32.mrf.mxu0
        %v6701 = vadd.f32 %v6436, %v6700
        %6702 = vmatprep.mubr.f32.mxu0 0.0
        %v6703 = vand.u32 %v1187, 4294901760
        %6704 = vmatmul.mubr.f32.gmra.mxu0 %v6703
        %v6705 = vpop.f32.mrf.mxu0
        %v6706 = vadd.f32 %v6441, %v6705
        %v6707 = vpop.f32.mrf.mxu0
        %v6708 = vadd.f32 %v6443, %v6707
        %6709 = vmatprep.mubr.f32.mxu0 0.0
        %v6710 = vand.u32 %v1190, 4294901760
        %6711 = vmatmul.mubr.f32.gmra.mxu0 %v6710
        %v6712 = vpop.f32.mrf.mxu0
        %v6713 = vadd.f32 %v6448, %v6712
        %v6714 = vpop.f32.mrf.mxu0
        %v6715 = vadd.f32 %v6450, %v6714
        %6716 = vmatprep.mubr.f32.mxu0 0.0
        %v6717 = vand.u32 %v1193, 4294901760
        %6718 = vmatmul.mubr.f32.gmra.mxu0 %v6717
        %v6719 = vpop.f32.mrf.mxu0
        %v6720 = vadd.f32 %v6455, %v6719
        %v6721 = vpop.f32.mrf.mxu0
        %v6722 = vadd.f32 %v6457, %v6721
        %6723 = vmatprep.mubr.f32.mxu0 0.0
        %v6724 = vand.u32 %v1196, 4294901760
        %6725 = vmatmul.mubr.f32.gmra.mxu0 %v6724
        %v6726 = vpop.f32.mrf.mxu0
        %v6727 = vadd.f32 %v6462, %v6726
        %v6728 = vpop.f32.mrf.mxu0
        %v6729 = vadd.f32 %v6464, %v6728
        %6730 = vmatprep.mubr.f32.mxu0 0.0
        %v6731 = vand.u32 %v1199, 4294901760
        %6732 = vmatmul.mubr.f32.gmra.mxu0 %v6731
        %v6733 = vpop.f32.mrf.mxu0
        %v6734 = vadd.f32 %v6469, %v6733
        %v6735 = vpop.f32.mrf.mxu0
        %v6736 = vadd.f32 %v6471, %v6735
        %6737 = vmatprep.mubr.f32.mxu0 0.0
        %v6738 = vand.u32 %v1202, 4294901760
        %6739 = vmatmul.mubr.f32.gmra.mxu0 %v6738
        %v6740 = vpop.f32.mrf.mxu0
        %v6741 = vadd.f32 %v6476, %v6740
        %v6742 = vpop.f32.mrf.mxu0
        %v6743 = vadd.f32 %v6478, %v6742
        %6744 = vmatprep.mubr.f32.mxu0 0.0
        %v6745 = vand.u32 %v1205, 4294901760
        %6746 = vmatmul.mubr.f32.gmra.mxu0 %v6745
        %v6747 = vpop.f32.mrf.mxu0
        %v6748 = vadd.f32 %v6483, %v6747
        %v6749 = vpop.f32.mrf.mxu0
        %v6750 = vadd.f32 %v6485, %v6749
        %6751 = vmatprep.mubr.f32.mxu0 0.0
        %v6752 = vand.u32 %v1208, 4294901760
        %6753 = vmatmul.mubr.f32.gmra.mxu0 %v6752
        %v6754 = vpop.f32.mrf.mxu0
        %v6755 = vadd.f32 %v6490, %v6754
        %v6756 = vpop.f32.mrf.mxu0
        %v6757 = vadd.f32 %v6492, %v6756
        %6758 = vmatprep.mubr.f32.mxu0 0.0
        %v6759 = vand.u32 %v1211, 4294901760
        %6760 = vmatmul.mubr.f32.gmra.mxu0 %v6759
        %v6761 = vpop.f32.mrf.mxu0
        %v6762 = vadd.f32 %v6497, %v6761
        %v6763 = vpop.f32.mrf.mxu0
        %v6764 = vadd.f32 %v6499, %v6763
        %6765 = vmatprep.mubr.f32.mxu0 0.0
        %v6766 = vand.u32 %v1214, 4294901760
        %6767 = vmatmul.mubr.f32.gmra.mxu0 %v6766
        %v6768 = vpop.f32.mrf.mxu0
        %v6769 = vadd.f32 %v6504, %v6768
        %v6770 = vpop.f32.mrf.mxu0
        %v6771 = vadd.f32 %v6506, %v6770
        %6772 = vmatprep.mubr.f32.mxu0 0.0
        %v6773 = vand.u32 %v1217, 4294901760
        %6774 = vmatmul.mubr.f32.gmra.mxu0 %v6773
        %v6775 = vpop.f32.mrf.mxu0
        %v6776 = vadd.f32 %v6511, %v6775
        %v6777 = vpop.f32.mrf.mxu0
        %v6778 = vadd.f32 %v6513, %v6777
        %6779 = vmatprep.mubr.f32.mxu0 0.0
        %v6780 = vand.u32 %v1220, 4294901760
        %6781 = vmatmul.mubr.f32.gmra.mxu0 %v6780
        %v6782 = vpop.f32.mrf.mxu0
        %v6783 = vadd.f32 %v6518, %v6782
        %v6784 = vpop.f32.mrf.mxu0
        %v6785 = vadd.f32 %v6520, %v6784
        %6786 = vmatprep.mubr.f32.mxu0 0.0
        %v6787 = vand.u32 %v1223, 4294901760
        %6788 = vmatmul.mubr.f32.gmra.mxu0 %v6787
        %v6789 = vpop.f32.mrf.mxu0
        %v6790 = vadd.f32 %v6525, %v6789
        %v6791 = vpop.f32.mrf.mxu0
        %v6792 = vadd.f32 %v6527, %v6791
        %6793 = vdwg.mxu0
        %s6794 = scalar_lea.vmem %s215, 896 [#allocation9]
        %6795 = vst [vmem:[%s6794] sm:$0xff] %v6601
        %6796 = vst.msk [vmem:[%s6794 + $0x8] sm:$0xff] %vm1090, %v6603
        %6797 = vst [vmem:[%s6794 + $0x10] sm:$0xff] %v6608
        %6798 = vst.msk [vmem:[%s6794 + $0x18] sm:$0xff] %vm1090, %v6610
        %6799 = vst [vmem:[%s6794 + $0x20] sm:$0xff] %v6615
        %6800 = vst.msk [vmem:[%s6794 + $0x28] sm:$0xff] %vm1090, %v6617
        %6801 = vst [vmem:[%s6794 + $0x30] sm:$0xff] %v6622
        %6802 = vst.msk [vmem:[%s6794 + $0x38] sm:$0xff] %vm1090, %v6624
        %6803 = vst [vmem:[%s6794 + $0x40] sm:$0xff] %v6629
        %6804 = vst.msk [vmem:[%s6794 + $0x48] sm:$0xff] %vm1090, %v6631
        %6805 = vst [vmem:[%s6794 + $0x50] sm:$0xff] %v6636
        %6806 = vst.msk [vmem:[%s6794 + $0x58] sm:$0xff] %vm1090, %v6638
        %6807 = vst [vmem:[%s6794 + $0x60] sm:$0xff] %v6643
        %6808 = vst.msk [vmem:[%s6794 + $0x68] sm:$0xff] %vm1090, %v6645
        %6809 = vst [vmem:[%s6794 + $0x70] sm:$0xff] %v6650
        %6810 = vst.msk [vmem:[%s6794 + $0x78] sm:$0xff] %vm1090, %v6652
        %6811 = vst [vmem:[%s6794 + $0x80] sm:$0xff] %v6657
        %6812 = vst.msk [vmem:[%s6794 + $0x88] sm:$0xff] %vm1090, %v6659
        %6813 = vst [vmem:[%s6794 + $0x90] sm:$0xff] %v6664
        %6814 = vst.msk [vmem:[%s6794 + $0x98] sm:$0xff] %vm1090, %v6666
        %6815 = vst [vmem:[%s6794 + $0xa0] sm:$0xff] %v6671
        %6816 = vst.msk [vmem:[%s6794 + $0xa8] sm:$0xff] %vm1090, %v6673
        %6817 = vst [vmem:[%s6794 + $0xb0] sm:$0xff] %v6678
        %6818 = vst.msk [vmem:[%s6794 + $0xb8] sm:$0xff] %vm1090, %v6680
        %6819 = vst [vmem:[%s6794 + $0xc0] sm:$0xff] %v6685
        %6820 = vst.msk [vmem:[%s6794 + $0xc8] sm:$0xff] %vm1090, %v6687
        %6821 = vst [vmem:[%s6794 + $0xd0] sm:$0xff] %v6692
        %6822 = vst.msk [vmem:[%s6794 + $0xd8] sm:$0xff] %vm1090, %v6694
        %6823 = vst [vmem:[%s6794 + $0xe0] sm:$0xff] %v6699
        %6824 = vst.msk [vmem:[%s6794 + $0xe8] sm:$0xff] %vm1090, %v6701
        %6825 = vst [vmem:[%s6794 + $0xf0] sm:$0xff] %v6706
        %6826 = vst.msk [vmem:[%s6794 + $0xf8] sm:$0xff] %vm1090, %v6708
        %6827 = vst [vmem:[%s6794 + $0x100] sm:$0xff] %v6713
        %6828 = vst.msk [vmem:[%s6794 + $0x108] sm:$0xff] %vm1090, %v6715
        %6829 = vst [vmem:[%s6794 + $0x110] sm:$0xff] %v6720
        %6830 = vst.msk [vmem:[%s6794 + $0x118] sm:$0xff] %vm1090, %v6722
        %6831 = vst [vmem:[%s6794 + $0x120] sm:$0xff] %v6727
        %6832 = vst.msk [vmem:[%s6794 + $0x128] sm:$0xff] %vm1090, %v6729
        %6833 = vst [vmem:[%s6794 + $0x130] sm:$0xff] %v6734
        %6834 = vst.msk [vmem:[%s6794 + $0x138] sm:$0xff] %vm1090, %v6736
        %6835 = vst [vmem:[%s6794 + $0x140] sm:$0xff] %v6741
        %6836 = vst.msk [vmem:[%s6794 + $0x148] sm:$0xff] %vm1090, %v6743
        %6837 = vst [vmem:[%s6794 + $0x150] sm:$0xff] %v6748
        %6838 = vst.msk [vmem:[%s6794 + $0x158] sm:$0xff] %vm1090, %v6750
        %6839 = vst [vmem:[%s6794 + $0x160] sm:$0xff] %v6755
        %6840 = vst.msk [vmem:[%s6794 + $0x168] sm:$0xff] %vm1090, %v6757
        %6841 = vst [vmem:[%s6794 + $0x170] sm:$0xff] %v6762
        %6842 = vst.msk [vmem:[%s6794 + $0x178] sm:$0xff] %vm1090, %v6764
        %6843 = vst [vmem:[%s6794 + $0x180] sm:$0xff] %v6769
        %6844 = vst.msk [vmem:[%s6794 + $0x188] sm:$0xff] %vm1090, %v6771
        %6845 = vst [vmem:[%s6794 + $0x190] sm:$0xff] %v6776
        %6846 = vst.msk [vmem:[%s6794 + $0x198] sm:$0xff] %vm1090, %v6778
        %6847 = vst [vmem:[%s6794 + $0x1a0] sm:$0xff] %v6783
        %6848 = vst.msk [vmem:[%s6794 + $0x1a8] sm:$0xff] %vm1090, %v6785
        %6849 = vst [vmem:[%s6794 + $0x1b0] sm:$0xff] %v6790
        %6850 = vst.msk [vmem:[%s6794 + $0x1b8] sm:$0xff] %vm1090, %v6792
        %s6851 = smul.u32 6, 2
        %s6852 = smul.addr %s6851, 8
        %s6853 = scalar_lea.vmem [#allocation2], %s6852
        %v6854 = vld [vmem:[%s6853] sm:$0xff]
        %v6855 = vld [vmem:[%s6853 + $0x8] sm:$0xff]
        %v6856 = vld [vmem:[%s6853 + $0x10] sm:$0xff]
        %v6857 = vld [vmem:[%s6853 + $0x18] sm:$0xff]
        %6858 = vmatprep.subr.mxu0 0.0
        %6859 = vmatpush1.msra.mxu0 0.0
        %6860 = vmatprep.subr.mxu0 0.0
        %6861 = vmatpush1.msra.mxu0 0.0
        %6862 = vmatprep.subr.mxu0 0.0
        %6863 = vmatpush1.msra.mxu0 0.0
        %6864 = vmatprep.subr.mxu0 0.0
        %6865 = vmatpush1.msra.mxu0 0.0
        %6866 = vmatprep.subr.mxu0 0.0
        %6867 = vmatpush1.msra.mxu0 0.0
        %6868 = vmatprep.subr.mxu0 0.0
        %6869 = vmatpush1.msra.mxu0 0.0
        %6870 = vmatprep.subr.mxu0 0.0
        %6871 = vmatpush1.msra.mxu0 0.0
        %6872 = vmatprep.subr.mxu0 0.0
        %6873 = vmatpush1.msra.mxu0 0.0
        %6874 = vmatprep.subr.mxu0 0.0
        %6875 = vmatpush1.msra.mxu0 0.0
        %6876 = vmatprep.subr.mxu0 0.0
        %6877 = vmatpush1.msra.mxu0 0.0
        %6878 = vmatprep.subr.mxu0 0.0
        %6879 = vmatpush1.msra.mxu0 0.0
        %6880 = vmatprep.subr.mxu0 0.0
        %6881 = vmatpush1.msra.mxu0 0.0
        %6882 = vmatprep.subr.mxu0 0.0
        %6883 = vmatpush1.msra.mxu0 0.0
        %6884 = vmatprep.subr.mxu0 0.0
        %6885 = vmatpush1.msra.mxu0 0.0
        %v6886 = vand.u32 %v6857, 4294901760
        %6887 = vmatprep.subr.mxu0 %v6886
        %v6888 = vand.u32 %v6856, 4294901760
        %6889 = vmatpush1.msra.mxu0 %v6888
        %v6890 = vand.u32 %v6855, 4294901760
        %6891 = vmatprep.subr.mxu0 %v6890
        %v6892 = vand.u32 %v6854, 4294901760
        %6893 = vmatpush1.msra.mxu0 %v6892
        %6894 = vmatprep.subr.mxu0 0.0
        %6895 = vmatpush2.msra.mxu0 0.0
        %6896 = vmatprep.subr.mxu0 0.0
        %6897 = vmatpush2.msra.mxu0 0.0
        %6898 = vmatprep.subr.mxu0 0.0
        %6899 = vmatpush2.msra.mxu0 0.0
        %6900 = vmatprep.subr.mxu0 0.0
        %6901 = vmatpush2.msra.mxu0 0.0
        %6902 = vmatprep.subr.mxu0 0.0
        %6903 = vmatpush2.msra.mxu0 0.0
        %6904 = vmatprep.subr.mxu0 0.0
        %6905 = vmatpush2.msra.mxu0 0.0
        %6906 = vmatprep.subr.mxu0 0.0
        %6907 = vmatpush2.msra.mxu0 0.0
        %6908 = vmatprep.subr.mxu0 0.0
        %6909 = vmatpush2.msra.mxu0 0.0
        %6910 = vmatprep.subr.mxu0 0.0
        %6911 = vmatpush2.msra.mxu0 0.0
        %6912 = vmatprep.subr.mxu0 0.0
        %6913 = vmatpush2.msra.mxu0 0.0
        %6914 = vmatprep.subr.mxu0 0.0
        %6915 = vmatpush2.msra.mxu0 0.0
        %6916 = vmatprep.subr.mxu0 0.0
        %6917 = vmatpush2.msra.mxu0 0.0
        %6918 = vmatprep.subr.mxu0 0.0
        %6919 = vmatpush2.msra.mxu0 0.0
        %6920 = vmatprep.subr.mxu0 0.0
        %6921 = vmatpush2.msra.mxu0 0.0
        %6922 = vmatprep.subr.mxu0 0.0
        %6923 = vmatpush2.msra.mxu0 0.0
        %6924 = vmatprep.subr.mxu0 0.0
        %6925 = vmatpush2.msra.mxu0 0.0
        %6926 = vmatprep.mubr.f32.mxu0 0.0
        %v6927 = vand.u32 %v1142, 4294901760
        %v6928 = vsub.f32 %v1142, %v6927
        %v6929 = vand.u32 %v6928, 4294901760
        %v6930 = vsub.f32 %v6928, %v6929
        %v6931 = vand.u32 %v6930, 4294901760
        %6932 = vmatmul.mubr.f32.gmra.mxu0 %v6931
        %v6933 = vpop.f32.mrf.mxu0
        %v6934 = vadd.f32 0.0, %v6933
        %v6935 = vpop.f32.mrf.mxu0
        %v6936 = vadd.f32 0.0, %v6935
        %6937 = vmatprep.mubr.f32.mxu0 0.0
        %v6938 = vand.u32 %v1145, 4294901760
        %v6939 = vsub.f32 %v1145, %v6938
        %v6940 = vand.u32 %v6939, 4294901760
        %v6941 = vsub.f32 %v6939, %v6940
        %v6942 = vand.u32 %v6941, 4294901760
        %6943 = vmatmul.mubr.f32.gmra.mxu0 %v6942
        %v6944 = vpop.f32.mrf.mxu0
        %v6945 = vadd.f32 0.0, %v6944
        %v6946 = vpop.f32.mrf.mxu0
        %v6947 = vadd.f32 0.0, %v6946
        %6948 = vmatprep.mubr.f32.mxu0 0.0
        %v6949 = vand.u32 %v1148, 4294901760
        %v6950 = vsub.f32 %v1148, %v6949
        %v6951 = vand.u32 %v6950, 4294901760
        %v6952 = vsub.f32 %v6950, %v6951
        %v6953 = vand.u32 %v6952, 4294901760
        %6954 = vmatmul.mubr.f32.gmra.mxu0 %v6953
        %v6955 = vpop.f32.mrf.mxu0
        %v6956 = vadd.f32 0.0, %v6955
        %v6957 = vpop.f32.mrf.mxu0
        %v6958 = vadd.f32 0.0, %v6957
        %6959 = vmatprep.mubr.f32.mxu0 0.0
        %v6960 = vand.u32 %v1151, 4294901760
        %v6961 = vsub.f32 %v1151, %v6960
        %v6962 = vand.u32 %v6961, 4294901760
        %v6963 = vsub.f32 %v6961, %v6962
        %v6964 = vand.u32 %v6963, 4294901760
        %6965 = vmatmul.mubr.f32.gmra.mxu0 %v6964
        %v6966 = vpop.f32.mrf.mxu0
        %v6967 = vadd.f32 0.0, %v6966
        %v6968 = vpop.f32.mrf.mxu0
        %v6969 = vadd.f32 0.0, %v6968
        %6970 = vmatprep.mubr.f32.mxu0 0.0
        %v6971 = vand.u32 %v1154, 4294901760
        %v6972 = vsub.f32 %v1154, %v6971
        %v6973 = vand.u32 %v6972, 4294901760
        %v6974 = vsub.f32 %v6972, %v6973
        %v6975 = vand.u32 %v6974, 4294901760
        %6976 = vmatmul.mubr.f32.gmra.mxu0 %v6975
        %v6977 = vpop.f32.mrf.mxu0
        %v6978 = vadd.f32 0.0, %v6977
        %v6979 = vpop.f32.mrf.mxu0
        %v6980 = vadd.f32 0.0, %v6979
        %6981 = vmatprep.mubr.f32.mxu0 0.0
        %v6982 = vand.u32 %v1157, 4294901760
        %v6983 = vsub.f32 %v1157, %v6982
        %v6984 = vand.u32 %v6983, 4294901760
        %v6985 = vsub.f32 %v6983, %v6984
        %v6986 = vand.u32 %v6985, 4294901760
        %6987 = vmatmul.mubr.f32.gmra.mxu0 %v6986
        %v6988 = vpop.f32.mrf.mxu0
        %v6989 = vadd.f32 0.0, %v6988
        %v6990 = vpop.f32.mrf.mxu0
        %v6991 = vadd.f32 0.0, %v6990
        %6992 = vmatprep.mubr.f32.mxu0 0.0
        %v6993 = vand.u32 %v1160, 4294901760
        %v6994 = vsub.f32 %v1160, %v6993
        %v6995 = vand.u32 %v6994, 4294901760
        %v6996 = vsub.f32 %v6994, %v6995
        %v6997 = vand.u32 %v6996, 4294901760
        %6998 = vmatmul.mubr.f32.gmra.mxu0 %v6997
        %v6999 = vpop.f32.mrf.mxu0
        %v7000 = vadd.f32 0.0, %v6999
        %v7001 = vpop.f32.mrf.mxu0
        %v7002 = vadd.f32 0.0, %v7001
        %7003 = vmatprep.mubr.f32.mxu0 0.0
        %v7004 = vand.u32 %v1163, 4294901760
        %v7005 = vsub.f32 %v1163, %v7004
        %v7006 = vand.u32 %v7005, 4294901760
        %v7007 = vsub.f32 %v7005, %v7006
        %v7008 = vand.u32 %v7007, 4294901760
        %7009 = vmatmul.mubr.f32.gmra.mxu0 %v7008
        %v7010 = vpop.f32.mrf.mxu0
        %v7011 = vadd.f32 0.0, %v7010
        %v7012 = vpop.f32.mrf.mxu0
        %v7013 = vadd.f32 0.0, %v7012
        %7014 = vmatprep.mubr.f32.mxu0 0.0
        %v7015 = vand.u32 %v1166, 4294901760
        %v7016 = vsub.f32 %v1166, %v7015
        %v7017 = vand.u32 %v7016, 4294901760
        %v7018 = vsub.f32 %v7016, %v7017
        %v7019 = vand.u32 %v7018, 4294901760
        %7020 = vmatmul.mubr.f32.gmra.mxu0 %v7019
        %v7021 = vpop.f32.mrf.mxu0
        %v7022 = vadd.f32 0.0, %v7021
        %v7023 = vpop.f32.mrf.mxu0
        %v7024 = vadd.f32 0.0, %v7023
        %7025 = vmatprep.mubr.f32.mxu0 0.0
        %v7026 = vand.u32 %v1169, 4294901760
        %v7027 = vsub.f32 %v1169, %v7026
        %v7028 = vand.u32 %v7027, 4294901760
        %v7029 = vsub.f32 %v7027, %v7028
        %v7030 = vand.u32 %v7029, 4294901760
        %7031 = vmatmul.mubr.f32.gmra.mxu0 %v7030
        %v7032 = vpop.f32.mrf.mxu0
        %v7033 = vadd.f32 0.0, %v7032
        %v7034 = vpop.f32.mrf.mxu0
        %v7035 = vadd.f32 0.0, %v7034
        %7036 = vmatprep.mubr.f32.mxu0 0.0
        %v7037 = vand.u32 %v1172, 4294901760
        %v7038 = vsub.f32 %v1172, %v7037
        %v7039 = vand.u32 %v7038, 4294901760
        %v7040 = vsub.f32 %v7038, %v7039
        %v7041 = vand.u32 %v7040, 4294901760
        %7042 = vmatmul.mubr.f32.gmra.mxu0 %v7041
        %v7043 = vpop.f32.mrf.mxu0
        %v7044 = vadd.f32 0.0, %v7043
        %v7045 = vpop.f32.mrf.mxu0
        %v7046 = vadd.f32 0.0, %v7045
        %7047 = vmatprep.mubr.f32.mxu0 0.0
        %v7048 = vand.u32 %v1175, 4294901760
        %v7049 = vsub.f32 %v1175, %v7048
        %v7050 = vand.u32 %v7049, 4294901760
        %v7051 = vsub.f32 %v7049, %v7050
        %v7052 = vand.u32 %v7051, 4294901760
        %7053 = vmatmul.mubr.f32.gmra.mxu0 %v7052
        %v7054 = vpop.f32.mrf.mxu0
        %v7055 = vadd.f32 0.0, %v7054
        %v7056 = vpop.f32.mrf.mxu0
        %v7057 = vadd.f32 0.0, %v7056
        %7058 = vmatprep.mubr.f32.mxu0 0.0
        %v7059 = vand.u32 %v1178, 4294901760
        %v7060 = vsub.f32 %v1178, %v7059
        %v7061 = vand.u32 %v7060, 4294901760
        %v7062 = vsub.f32 %v7060, %v7061
        %v7063 = vand.u32 %v7062, 4294901760
        %7064 = vmatmul.mubr.f32.gmra.mxu0 %v7063
        %v7065 = vpop.f32.mrf.mxu0
        %v7066 = vadd.f32 0.0, %v7065
        %v7067 = vpop.f32.mrf.mxu0
        %v7068 = vadd.f32 0.0, %v7067
        %7069 = vmatprep.mubr.f32.mxu0 0.0
        %v7070 = vand.u32 %v1181, 4294901760
        %v7071 = vsub.f32 %v1181, %v7070
        %v7072 = vand.u32 %v7071, 4294901760
        %v7073 = vsub.f32 %v7071, %v7072
        %v7074 = vand.u32 %v7073, 4294901760
        %7075 = vmatmul.mubr.f32.gmra.mxu0 %v7074
        %v7076 = vpop.f32.mrf.mxu0
        %v7077 = vadd.f32 0.0, %v7076
        %v7078 = vpop.f32.mrf.mxu0
        %v7079 = vadd.f32 0.0, %v7078
        %7080 = vmatprep.mubr.f32.mxu0 0.0
        %v7081 = vand.u32 %v1184, 4294901760
        %v7082 = vsub.f32 %v1184, %v7081
        %v7083 = vand.u32 %v7082, 4294901760
        %v7084 = vsub.f32 %v7082, %v7083
        %v7085 = vand.u32 %v7084, 4294901760
        %7086 = vmatmul.mubr.f32.gmra.mxu0 %v7085
        %v7087 = vpop.f32.mrf.mxu0
        %v7088 = vadd.f32 0.0, %v7087
        %v7089 = vpop.f32.mrf.mxu0
        %v7090 = vadd.f32 0.0, %v7089
        %7091 = vmatprep.mubr.f32.mxu0 0.0
        %v7092 = vand.u32 %v1187, 4294901760
        %v7093 = vsub.f32 %v1187, %v7092
        %v7094 = vand.u32 %v7093, 4294901760
        %v7095 = vsub.f32 %v7093, %v7094
        %v7096 = vand.u32 %v7095, 4294901760
        %7097 = vmatmul.mubr.f32.gmra.mxu0 %v7096
        %v7098 = vpop.f32.mrf.mxu0
        %v7099 = vadd.f32 0.0, %v7098
        %v7100 = vpop.f32.mrf.mxu0
        %v7101 = vadd.f32 0.0, %v7100
        %7102 = vmatprep.mubr.f32.mxu0 0.0
        %v7103 = vand.u32 %v1190, 4294901760
        %v7104 = vsub.f32 %v1190, %v7103
        %v7105 = vand.u32 %v7104, 4294901760
        %v7106 = vsub.f32 %v7104, %v7105
        %v7107 = vand.u32 %v7106, 4294901760
        %7108 = vmatmul.mubr.f32.gmra.mxu0 %v7107
        %v7109 = vpop.f32.mrf.mxu0
        %v7110 = vadd.f32 0.0, %v7109
        %v7111 = vpop.f32.mrf.mxu0
        %v7112 = vadd.f32 0.0, %v7111
        %7113 = vmatprep.mubr.f32.mxu0 0.0
        %v7114 = vand.u32 %v1193, 4294901760
        %v7115 = vsub.f32 %v1193, %v7114
        %v7116 = vand.u32 %v7115, 4294901760
        %v7117 = vsub.f32 %v7115, %v7116
        %v7118 = vand.u32 %v7117, 4294901760
        %7119 = vmatmul.mubr.f32.gmra.mxu0 %v7118
        %v7120 = vpop.f32.mrf.mxu0
        %v7121 = vadd.f32 0.0, %v7120
        %v7122 = vpop.f32.mrf.mxu0
        %v7123 = vadd.f32 0.0, %v7122
        %7124 = vmatprep.mubr.f32.mxu0 0.0
        %v7125 = vand.u32 %v1196, 4294901760
        %v7126 = vsub.f32 %v1196, %v7125
        %v7127 = vand.u32 %v7126, 4294901760
        %v7128 = vsub.f32 %v7126, %v7127
        %v7129 = vand.u32 %v7128, 4294901760
        %7130 = vmatmul.mubr.f32.gmra.mxu0 %v7129
        %v7131 = vpop.f32.mrf.mxu0
        %v7132 = vadd.f32 0.0, %v7131
        %v7133 = vpop.f32.mrf.mxu0
        %v7134 = vadd.f32 0.0, %v7133
        %7135 = vmatprep.mubr.f32.mxu0 0.0
        %v7136 = vand.u32 %v1199, 4294901760
        %v7137 = vsub.f32 %v1199, %v7136
        %v7138 = vand.u32 %v7137, 4294901760
        %v7139 = vsub.f32 %v7137, %v7138
        %v7140 = vand.u32 %v7139, 4294901760
        %7141 = vmatmul.mubr.f32.gmra.mxu0 %v7140
        %v7142 = vpop.f32.mrf.mxu0
        %v7143 = vadd.f32 0.0, %v7142
        %v7144 = vpop.f32.mrf.mxu0
        %v7145 = vadd.f32 0.0, %v7144
        %7146 = vmatprep.mubr.f32.mxu0 0.0
        %v7147 = vand.u32 %v1202, 4294901760
        %v7148 = vsub.f32 %v1202, %v7147
        %v7149 = vand.u32 %v7148, 4294901760
        %v7150 = vsub.f32 %v7148, %v7149
        %v7151 = vand.u32 %v7150, 4294901760
        %7152 = vmatmul.mubr.f32.gmra.mxu0 %v7151
        %v7153 = vpop.f32.mrf.mxu0
        %v7154 = vadd.f32 0.0, %v7153
        %v7155 = vpop.f32.mrf.mxu0
        %v7156 = vadd.f32 0.0, %v7155
        %7157 = vmatprep.mubr.f32.mxu0 0.0
        %v7158 = vand.u32 %v1205, 4294901760
        %v7159 = vsub.f32 %v1205, %v7158
        %v7160 = vand.u32 %v7159, 4294901760
        %v7161 = vsub.f32 %v7159, %v7160
        %v7162 = vand.u32 %v7161, 4294901760
        %7163 = vmatmul.mubr.f32.gmra.mxu0 %v7162
        %v7164 = vpop.f32.mrf.mxu0
        %v7165 = vadd.f32 0.0, %v7164
        %v7166 = vpop.f32.mrf.mxu0
        %v7167 = vadd.f32 0.0, %v7166
        %7168 = vmatprep.mubr.f32.mxu0 0.0
        %v7169 = vand.u32 %v1208, 4294901760
        %v7170 = vsub.f32 %v1208, %v7169
        %v7171 = vand.u32 %v7170, 4294901760
        %v7172 = vsub.f32 %v7170, %v7171
        %v7173 = vand.u32 %v7172, 4294901760
        %7174 = vmatmul.mubr.f32.gmra.mxu0 %v7173
        %v7175 = vpop.f32.mrf.mxu0
        %v7176 = vadd.f32 0.0, %v7175
        %v7177 = vpop.f32.mrf.mxu0
        %v7178 = vadd.f32 0.0, %v7177
        %7179 = vmatprep.mubr.f32.mxu0 0.0
        %v7180 = vand.u32 %v1211, 4294901760
        %v7181 = vsub.f32 %v1211, %v7180
        %v7182 = vand.u32 %v7181, 4294901760
        %v7183 = vsub.f32 %v7181, %v7182
        %v7184 = vand.u32 %v7183, 4294901760
        %7185 = vmatmul.mubr.f32.gmra.mxu0 %v7184
        %v7186 = vpop.f32.mrf.mxu0
        %v7187 = vadd.f32 0.0, %v7186
        %v7188 = vpop.f32.mrf.mxu0
        %v7189 = vadd.f32 0.0, %v7188
        %7190 = vmatprep.mubr.f32.mxu0 0.0
        %v7191 = vand.u32 %v1214, 4294901760
        %v7192 = vsub.f32 %v1214, %v7191
        %v7193 = vand.u32 %v7192, 4294901760
        %v7194 = vsub.f32 %v7192, %v7193
        %v7195 = vand.u32 %v7194, 4294901760
        %7196 = vmatmul.mubr.f32.gmra.mxu0 %v7195
        %v7197 = vpop.f32.mrf.mxu0
        %v7198 = vadd.f32 0.0, %v7197
        %v7199 = vpop.f32.mrf.mxu0
        %v7200 = vadd.f32 0.0, %v7199
        %7201 = vmatprep.mubr.f32.mxu0 0.0
        %v7202 = vand.u32 %v1217, 4294901760
        %v7203 = vsub.f32 %v1217, %v7202
        %v7204 = vand.u32 %v7203, 4294901760
        %v7205 = vsub.f32 %v7203, %v7204
        %v7206 = vand.u32 %v7205, 4294901760
        %7207 = vmatmul.mubr.f32.gmra.mxu0 %v7206
        %v7208 = vpop.f32.mrf.mxu0
        %v7209 = vadd.f32 0.0, %v7208
        %v7210 = vpop.f32.mrf.mxu0
        %v7211 = vadd.f32 0.0, %v7210
        %7212 = vmatprep.mubr.f32.mxu0 0.0
        %v7213 = vand.u32 %v1220, 4294901760
        %v7214 = vsub.f32 %v1220, %v7213
        %v7215 = vand.u32 %v7214, 4294901760
        %v7216 = vsub.f32 %v7214, %v7215
        %v7217 = vand.u32 %v7216, 4294901760
        %7218 = vmatmul.mubr.f32.gmra.mxu0 %v7217
        %v7219 = vpop.f32.mrf.mxu0
        %v7220 = vadd.f32 0.0, %v7219
        %v7221 = vpop.f32.mrf.mxu0
        %v7222 = vadd.f32 0.0, %v7221
        %7223 = vmatprep.mubr.f32.mxu0 0.0
        %v7224 = vand.u32 %v1223, 4294901760
        %v7225 = vsub.f32 %v1223, %v7224
        %v7226 = vand.u32 %v7225, 4294901760
        %v7227 = vsub.f32 %v7225, %v7226
        %v7228 = vand.u32 %v7227, 4294901760
        %7229 = vmatmul.mubr.f32.gmra.mxu0 %v7228
        %v7230 = vpop.f32.mrf.mxu0
        %v7231 = vadd.f32 0.0, %v7230
        %v7232 = vpop.f32.mrf.mxu0
        %v7233 = vadd.f32 0.0, %v7232
        %7234 = vdwg.mxu0
        %7235 = vmatprep.subr.mxu0 0.0
        %7236 = vmatpush1.msra.mxu0 0.0
        %7237 = vmatprep.subr.mxu0 0.0
        %7238 = vmatpush1.msra.mxu0 0.0
        %7239 = vmatprep.subr.mxu0 0.0
        %7240 = vmatpush1.msra.mxu0 0.0
        %7241 = vmatprep.subr.mxu0 0.0
        %7242 = vmatpush1.msra.mxu0 0.0
        %7243 = vmatprep.subr.mxu0 0.0
        %7244 = vmatpush1.msra.mxu0 0.0
        %7245 = vmatprep.subr.mxu0 0.0
        %7246 = vmatpush1.msra.mxu0 0.0
        %7247 = vmatprep.subr.mxu0 0.0
        %7248 = vmatpush1.msra.mxu0 0.0
        %7249 = vmatprep.subr.mxu0 0.0
        %7250 = vmatpush1.msra.mxu0 0.0
        %7251 = vmatprep.subr.mxu0 0.0
        %7252 = vmatpush1.msra.mxu0 0.0
        %7253 = vmatprep.subr.mxu0 0.0
        %7254 = vmatpush1.msra.mxu0 0.0
        %7255 = vmatprep.subr.mxu0 0.0
        %7256 = vmatpush1.msra.mxu0 0.0
        %7257 = vmatprep.subr.mxu0 0.0
        %7258 = vmatpush1.msra.mxu0 0.0
        %7259 = vmatprep.subr.mxu0 0.0
        %7260 = vmatpush1.msra.mxu0 0.0
        %7261 = vmatprep.subr.mxu0 0.0
        %7262 = vmatpush1.msra.mxu0 0.0
        %v7263 = vand.u32 %v6857, 4294901760
        %v7264 = vsub.f32 %v6857, %v7263
        %v7265 = vand.u32 %v7264, 4294901760
        %v7266 = vsub.f32 %v7264, %v7265
        %v7267 = vand.u32 %v7266, 4294901760
        %7268 = vmatprep.subr.mxu0 %v7267
        %v7269 = vand.u32 %v6856, 4294901760
        %v7270 = vsub.f32 %v6856, %v7269
        %v7271 = vand.u32 %v7270, 4294901760
        %v7272 = vsub.f32 %v7270, %v7271
        %v7273 = vand.u32 %v7272, 4294901760
        %7274 = vmatpush1.msra.mxu0 %v7273
        %v7275 = vand.u32 %v6855, 4294901760
        %v7276 = vsub.f32 %v6855, %v7275
        %v7277 = vand.u32 %v7276, 4294901760
        %v7278 = vsub.f32 %v7276, %v7277
        %v7279 = vand.u32 %v7278, 4294901760
        %7280 = vmatprep.subr.mxu0 %v7279
        %v7281 = vand.u32 %v6854, 4294901760
        %v7282 = vsub.f32 %v6854, %v7281
        %v7283 = vand.u32 %v7282, 4294901760
        %v7284 = vsub.f32 %v7282, %v7283
        %v7285 = vand.u32 %v7284, 4294901760
        %7286 = vmatpush1.msra.mxu0 %v7285
        %7287 = vmatprep.subr.mxu0 0.0
        %7288 = vmatpush2.msra.mxu0 0.0
        %7289 = vmatprep.subr.mxu0 0.0
        %7290 = vmatpush2.msra.mxu0 0.0
        %7291 = vmatprep.subr.mxu0 0.0
        %7292 = vmatpush2.msra.mxu0 0.0
        %7293 = vmatprep.subr.mxu0 0.0
        %7294 = vmatpush2.msra.mxu0 0.0
        %7295 = vmatprep.subr.mxu0 0.0
        %7296 = vmatpush2.msra.mxu0 0.0
        %7297 = vmatprep.subr.mxu0 0.0
        %7298 = vmatpush2.msra.mxu0 0.0
        %7299 = vmatprep.subr.mxu0 0.0
        %7300 = vmatpush2.msra.mxu0 0.0
        %7301 = vmatprep.subr.mxu0 0.0
        %7302 = vmatpush2.msra.mxu0 0.0
        %7303 = vmatprep.subr.mxu0 0.0
        %7304 = vmatpush2.msra.mxu0 0.0
        %7305 = vmatprep.subr.mxu0 0.0
        %7306 = vmatpush2.msra.mxu0 0.0
        %7307 = vmatprep.subr.mxu0 0.0
        %7308 = vmatpush2.msra.mxu0 0.0
        %7309 = vmatprep.subr.mxu0 0.0
        %7310 = vmatpush2.msra.mxu0 0.0
        %7311 = vmatprep.subr.mxu0 0.0
        %7312 = vmatpush2.msra.mxu0 0.0
        %7313 = vmatprep.subr.mxu0 0.0
        %7314 = vmatpush2.msra.mxu0 0.0
        %7315 = vmatprep.subr.mxu0 0.0
        %7316 = vmatpush2.msra.mxu0 0.0
        %7317 = vmatprep.subr.mxu0 0.0
        %7318 = vmatpush2.msra.mxu0 0.0
        %7319 = vmatprep.mubr.f32.mxu0 0.0
        %v7320 = vand.u32 %v1142, 4294901760
        %7321 = vmatmul.mubr.f32.gmra.mxu0 %v7320
        %v7322 = vpop.f32.mrf.mxu0
        %v7323 = vadd.f32 %v6934, %v7322
        %v7324 = vpop.f32.mrf.mxu0
        %v7325 = vadd.f32 %v6936, %v7324
        %7326 = vmatprep.mubr.f32.mxu0 0.0
        %v7327 = vand.u32 %v1145, 4294901760
        %7328 = vmatmul.mubr.f32.gmra.mxu0 %v7327
        %v7329 = vpop.f32.mrf.mxu0
        %v7330 = vadd.f32 %v6945, %v7329
        %v7331 = vpop.f32.mrf.mxu0
        %v7332 = vadd.f32 %v6947, %v7331
        %7333 = vmatprep.mubr.f32.mxu0 0.0
        %v7334 = vand.u32 %v1148, 4294901760
        %7335 = vmatmul.mubr.f32.gmra.mxu0 %v7334
        %v7336 = vpop.f32.mrf.mxu0
        %v7337 = vadd.f32 %v6956, %v7336
        %v7338 = vpop.f32.mrf.mxu0
        %v7339 = vadd.f32 %v6958, %v7338
        %7340 = vmatprep.mubr.f32.mxu0 0.0
        %v7341 = vand.u32 %v1151, 4294901760
        %7342 = vmatmul.mubr.f32.gmra.mxu0 %v7341
        %v7343 = vpop.f32.mrf.mxu0
        %v7344 = vadd.f32 %v6967, %v7343
        %v7345 = vpop.f32.mrf.mxu0
        %v7346 = vadd.f32 %v6969, %v7345
        %7347 = vmatprep.mubr.f32.mxu0 0.0
        %v7348 = vand.u32 %v1154, 4294901760
        %7349 = vmatmul.mubr.f32.gmra.mxu0 %v7348
        %v7350 = vpop.f32.mrf.mxu0
        %v7351 = vadd.f32 %v6978, %v7350
        %v7352 = vpop.f32.mrf.mxu0
        %v7353 = vadd.f32 %v6980, %v7352
        %7354 = vmatprep.mubr.f32.mxu0 0.0
        %v7355 = vand.u32 %v1157, 4294901760
        %7356 = vmatmul.mubr.f32.gmra.mxu0 %v7355
        %v7357 = vpop.f32.mrf.mxu0
        %v7358 = vadd.f32 %v6989, %v7357
        %v7359 = vpop.f32.mrf.mxu0
        %v7360 = vadd.f32 %v6991, %v7359
        %7361 = vmatprep.mubr.f32.mxu0 0.0
        %v7362 = vand.u32 %v1160, 4294901760
        %7363 = vmatmul.mubr.f32.gmra.mxu0 %v7362
        %v7364 = vpop.f32.mrf.mxu0
        %v7365 = vadd.f32 %v7000, %v7364
        %v7366 = vpop.f32.mrf.mxu0
        %v7367 = vadd.f32 %v7002, %v7366
        %7368 = vmatprep.mubr.f32.mxu0 0.0
        %v7369 = vand.u32 %v1163, 4294901760
        %7370 = vmatmul.mubr.f32.gmra.mxu0 %v7369
        %v7371 = vpop.f32.mrf.mxu0
        %v7372 = vadd.f32 %v7011, %v7371
        %v7373 = vpop.f32.mrf.mxu0
        %v7374 = vadd.f32 %v7013, %v7373
        %7375 = vmatprep.mubr.f32.mxu0 0.0
        %v7376 = vand.u32 %v1166, 4294901760
        %7377 = vmatmul.mubr.f32.gmra.mxu0 %v7376
        %v7378 = vpop.f32.mrf.mxu0
        %v7379 = vadd.f32 %v7022, %v7378
        %v7380 = vpop.f32.mrf.mxu0
        %v7381 = vadd.f32 %v7024, %v7380
        %7382 = vmatprep.mubr.f32.mxu0 0.0
        %v7383 = vand.u32 %v1169, 4294901760
        %7384 = vmatmul.mubr.f32.gmra.mxu0 %v7383
        %v7385 = vpop.f32.mrf.mxu0
        %v7386 = vadd.f32 %v7033, %v7385
        %v7387 = vpop.f32.mrf.mxu0
        %v7388 = vadd.f32 %v7035, %v7387
        %7389 = vmatprep.mubr.f32.mxu0 0.0
        %v7390 = vand.u32 %v1172, 4294901760
        %7391 = vmatmul.mubr.f32.gmra.mxu0 %v7390
        %v7392 = vpop.f32.mrf.mxu0
        %v7393 = vadd.f32 %v7044, %v7392
        %v7394 = vpop.f32.mrf.mxu0
        %v7395 = vadd.f32 %v7046, %v7394
        %7396 = vmatprep.mubr.f32.mxu0 0.0
        %v7397 = vand.u32 %v1175, 4294901760
        %7398 = vmatmul.mubr.f32.gmra.mxu0 %v7397
        %v7399 = vpop.f32.mrf.mxu0
        %v7400 = vadd.f32 %v7055, %v7399
        %v7401 = vpop.f32.mrf.mxu0
        %v7402 = vadd.f32 %v7057, %v7401
        %7403 = vmatprep.mubr.f32.mxu0 0.0
        %v7404 = vand.u32 %v1178, 4294901760
        %7405 = vmatmul.mubr.f32.gmra.mxu0 %v7404
        %v7406 = vpop.f32.mrf.mxu0
        %v7407 = vadd.f32 %v7066, %v7406
        %v7408 = vpop.f32.mrf.mxu0
        %v7409 = vadd.f32 %v7068, %v7408
        %7410 = vmatprep.mubr.f32.mxu0 0.0
        %v7411 = vand.u32 %v1181, 4294901760
        %7412 = vmatmul.mubr.f32.gmra.mxu0 %v7411
        %v7413 = vpop.f32.mrf.mxu0
        %v7414 = vadd.f32 %v7077, %v7413
        %v7415 = vpop.f32.mrf.mxu0
        %v7416 = vadd.f32 %v7079, %v7415
        %7417 = vmatprep.mubr.f32.mxu0 0.0
        %v7418 = vand.u32 %v1184, 4294901760
        %7419 = vmatmul.mubr.f32.gmra.mxu0 %v7418
        %v7420 = vpop.f32.mrf.mxu0
        %v7421 = vadd.f32 %v7088, %v7420
        %v7422 = vpop.f32.mrf.mxu0
        %v7423 = vadd.f32 %v7090, %v7422
        %7424 = vmatprep.mubr.f32.mxu0 0.0
        %v7425 = vand.u32 %v1187, 4294901760
        %7426 = vmatmul.mubr.f32.gmra.mxu0 %v7425
        %v7427 = vpop.f32.mrf.mxu0
        %v7428 = vadd.f32 %v7099, %v7427
        %v7429 = vpop.f32.mrf.mxu0
        %v7430 = vadd.f32 %v7101, %v7429
        %7431 = vmatprep.mubr.f32.mxu0 0.0
        %v7432 = vand.u32 %v1190, 4294901760
        %7433 = vmatmul.mubr.f32.gmra.mxu0 %v7432
        %v7434 = vpop.f32.mrf.mxu0
        %v7435 = vadd.f32 %v7110, %v7434
        %v7436 = vpop.f32.mrf.mxu0
        %v7437 = vadd.f32 %v7112, %v7436
        %7438 = vmatprep.mubr.f32.mxu0 0.0
        %v7439 = vand.u32 %v1193, 4294901760
        %7440 = vmatmul.mubr.f32.gmra.mxu0 %v7439
        %v7441 = vpop.f32.mrf.mxu0
        %v7442 = vadd.f32 %v7121, %v7441
        %v7443 = vpop.f32.mrf.mxu0
        %v7444 = vadd.f32 %v7123, %v7443
        %7445 = vmatprep.mubr.f32.mxu0 0.0
        %v7446 = vand.u32 %v1196, 4294901760
        %7447 = vmatmul.mubr.f32.gmra.mxu0 %v7446
        %v7448 = vpop.f32.mrf.mxu0
        %v7449 = vadd.f32 %v7132, %v7448
        %v7450 = vpop.f32.mrf.mxu0
        %v7451 = vadd.f32 %v7134, %v7450
        %7452 = vmatprep.mubr.f32.mxu0 0.0
        %v7453 = vand.u32 %v1199, 4294901760
        %7454 = vmatmul.mubr.f32.gmra.mxu0 %v7453
        %v7455 = vpop.f32.mrf.mxu0
        %v7456 = vadd.f32 %v7143, %v7455
        %v7457 = vpop.f32.mrf.mxu0
        %v7458 = vadd.f32 %v7145, %v7457
        %7459 = vmatprep.mubr.f32.mxu0 0.0
        %v7460 = vand.u32 %v1202, 4294901760
        %7461 = vmatmul.mubr.f32.gmra.mxu0 %v7460
        %v7462 = vpop.f32.mrf.mxu0
        %v7463 = vadd.f32 %v7154, %v7462
        %v7464 = vpop.f32.mrf.mxu0
        %v7465 = vadd.f32 %v7156, %v7464
        %7466 = vmatprep.mubr.f32.mxu0 0.0
        %v7467 = vand.u32 %v1205, 4294901760
        %7468 = vmatmul.mubr.f32.gmra.mxu0 %v7467
        %v7469 = vpop.f32.mrf.mxu0
        %v7470 = vadd.f32 %v7165, %v7469
        %v7471 = vpop.f32.mrf.mxu0
        %v7472 = vadd.f32 %v7167, %v7471
        %7473 = vmatprep.mubr.f32.mxu0 0.0
        %v7474 = vand.u32 %v1208, 4294901760
        %7475 = vmatmul.mubr.f32.gmra.mxu0 %v7474
        %v7476 = vpop.f32.mrf.mxu0
        %v7477 = vadd.f32 %v7176, %v7476
        %v7478 = vpop.f32.mrf.mxu0
        %v7479 = vadd.f32 %v7178, %v7478
        %7480 = vmatprep.mubr.f32.mxu0 0.0
        %v7481 = vand.u32 %v1211, 4294901760
        %7482 = vmatmul.mubr.f32.gmra.mxu0 %v7481
        %v7483 = vpop.f32.mrf.mxu0
        %v7484 = vadd.f32 %v7187, %v7483
        %v7485 = vpop.f32.mrf.mxu0
        %v7486 = vadd.f32 %v7189, %v7485
        %7487 = vmatprep.mubr.f32.mxu0 0.0
        %v7488 = vand.u32 %v1214, 4294901760
        %7489 = vmatmul.mubr.f32.gmra.mxu0 %v7488
        %v7490 = vpop.f32.mrf.mxu0
        %v7491 = vadd.f32 %v7198, %v7490
        %v7492 = vpop.f32.mrf.mxu0
        %v7493 = vadd.f32 %v7200, %v7492
        %7494 = vmatprep.mubr.f32.mxu0 0.0
        %v7495 = vand.u32 %v1217, 4294901760
        %7496 = vmatmul.mubr.f32.gmra.mxu0 %v7495
        %v7497 = vpop.f32.mrf.mxu0
        %v7498 = vadd.f32 %v7209, %v7497
        %v7499 = vpop.f32.mrf.mxu0
        %v7500 = vadd.f32 %v7211, %v7499
        %7501 = vmatprep.mubr.f32.mxu0 0.0
        %v7502 = vand.u32 %v1220, 4294901760
        %7503 = vmatmul.mubr.f32.gmra.mxu0 %v7502
        %v7504 = vpop.f32.mrf.mxu0
        %v7505 = vadd.f32 %v7220, %v7504
        %v7506 = vpop.f32.mrf.mxu0
        %v7507 = vadd.f32 %v7222, %v7506
        %7508 = vmatprep.mubr.f32.mxu0 0.0
        %v7509 = vand.u32 %v1223, 4294901760
        %7510 = vmatmul.mubr.f32.gmra.mxu0 %v7509
        %v7511 = vpop.f32.mrf.mxu0
        %v7512 = vadd.f32 %v7231, %v7511
        %v7513 = vpop.f32.mrf.mxu0
        %v7514 = vadd.f32 %v7233, %v7513
        %7515 = vdwg.mxu0
        %7516 = vmatprep.subr.mxu0 0.0
        %7517 = vmatpush1.msra.mxu0 0.0
        %7518 = vmatprep.subr.mxu0 0.0
        %7519 = vmatpush1.msra.mxu0 0.0
        %7520 = vmatprep.subr.mxu0 0.0
        %7521 = vmatpush1.msra.mxu0 0.0
        %7522 = vmatprep.subr.mxu0 0.0
        %7523 = vmatpush1.msra.mxu0 0.0
        %7524 = vmatprep.subr.mxu0 0.0
        %7525 = vmatpush1.msra.mxu0 0.0
        %7526 = vmatprep.subr.mxu0 0.0
        %7527 = vmatpush1.msra.mxu0 0.0
        %7528 = vmatprep.subr.mxu0 0.0
        %7529 = vmatpush1.msra.mxu0 0.0
        %7530 = vmatprep.subr.mxu0 0.0
        %7531 = vmatpush1.msra.mxu0 0.0
        %7532 = vmatprep.subr.mxu0 0.0
        %7533 = vmatpush1.msra.mxu0 0.0
        %7534 = vmatprep.subr.mxu0 0.0
        %7535 = vmatpush1.msra.mxu0 0.0
        %7536 = vmatprep.subr.mxu0 0.0
        %7537 = vmatpush1.msra.mxu0 0.0
        %7538 = vmatprep.subr.mxu0 0.0
        %7539 = vmatpush1.msra.mxu0 0.0
        %7540 = vmatprep.subr.mxu0 0.0
        %7541 = vmatpush1.msra.mxu0 0.0
        %7542 = vmatprep.subr.mxu0 0.0
        %7543 = vmatpush1.msra.mxu0 0.0
        %v7544 = vand.u32 %v6857, 4294901760
        %v7545 = vsub.f32 %v6857, %v7544
        %7546 = vmatprep.subr.mxu0 %v7545
        %v7547 = vand.u32 %v6856, 4294901760
        %v7548 = vsub.f32 %v6856, %v7547
        %7549 = vmatpush1.msra.mxu0 %v7548
        %v7550 = vand.u32 %v6855, 4294901760
        %v7551 = vsub.f32 %v6855, %v7550
        %7552 = vmatprep.subr.mxu0 %v7551
        %v7553 = vand.u32 %v6854, 4294901760
        %v7554 = vsub.f32 %v6854, %v7553
        %7555 = vmatpush1.msra.mxu0 %v7554
        %7556 = vmatprep.subr.mxu0 0.0
        %7557 = vmatpush2.msra.mxu0 0.0
        %7558 = vmatprep.subr.mxu0 0.0
        %7559 = vmatpush2.msra.mxu0 0.0
        %7560 = vmatprep.subr.mxu0 0.0
        %7561 = vmatpush2.msra.mxu0 0.0
        %7562 = vmatprep.subr.mxu0 0.0
        %7563 = vmatpush2.msra.mxu0 0.0
        %7564 = vmatprep.subr.mxu0 0.0
        %7565 = vmatpush2.msra.mxu0 0.0
        %7566 = vmatprep.subr.mxu0 0.0
        %7567 = vmatpush2.msra.mxu0 0.0
        %7568 = vmatprep.subr.mxu0 0.0
        %7569 = vmatpush2.msra.mxu0 0.0
        %7570 = vmatprep.subr.mxu0 0.0
        %7571 = vmatpush2.msra.mxu0 0.0
        %7572 = vmatprep.subr.mxu0 0.0
        %7573 = vmatpush2.msra.mxu0 0.0
        %7574 = vmatprep.subr.mxu0 0.0
        %7575 = vmatpush2.msra.mxu0 0.0
        %7576 = vmatprep.subr.mxu0 0.0
        %7577 = vmatpush2.msra.mxu0 0.0
        %7578 = vmatprep.subr.mxu0 0.0
        %7579 = vmatpush2.msra.mxu0 0.0
        %7580 = vmatprep.subr.mxu0 0.0
        %7581 = vmatpush2.msra.mxu0 0.0
        %7582 = vmatprep.subr.mxu0 0.0
        %7583 = vmatpush2.msra.mxu0 0.0
        %7584 = vmatprep.subr.mxu0 0.0
        %7585 = vmatpush2.msra.mxu0 0.0
        %7586 = vmatprep.subr.mxu0 0.0
        %7587 = vmatpush2.msra.mxu0 0.0
        %7588 = vmatprep.mubr.f32.mxu0 0.0
        %v7589 = vand.u32 %v1142, 4294901760
        %v7590 = vsub.f32 %v1142, %v7589
        %7591 = vmatmul.mubr.f32.gmra.mxu0 %v7590
        %v7592 = vpop.f32.mrf.mxu0
        %v7593 = vadd.f32 %v7323, %v7592
        %v7594 = vpop.f32.mrf.mxu0
        %v7595 = vadd.f32 %v7325, %v7594
        %7596 = vmatprep.mubr.f32.mxu0 0.0
        %v7597 = vand.u32 %v1145, 4294901760
        %v7598 = vsub.f32 %v1145, %v7597
        %7599 = vmatmul.mubr.f32.gmra.mxu0 %v7598
        %v7600 = vpop.f32.mrf.mxu0
        %v7601 = vadd.f32 %v7330, %v7600
        %v7602 = vpop.f32.mrf.mxu0
        %v7603 = vadd.f32 %v7332, %v7602
        %7604 = vmatprep.mubr.f32.mxu0 0.0
        %v7605 = vand.u32 %v1148, 4294901760
        %v7606 = vsub.f32 %v1148, %v7605
        %7607 = vmatmul.mubr.f32.gmra.mxu0 %v7606
        %v7608 = vpop.f32.mrf.mxu0
        %v7609 = vadd.f32 %v7337, %v7608
        %v7610 = vpop.f32.mrf.mxu0
        %v7611 = vadd.f32 %v7339, %v7610
        %7612 = vmatprep.mubr.f32.mxu0 0.0
        %v7613 = vand.u32 %v1151, 4294901760
        %v7614 = vsub.f32 %v1151, %v7613
        %7615 = vmatmul.mubr.f32.gmra.mxu0 %v7614
        %v7616 = vpop.f32.mrf.mxu0
        %v7617 = vadd.f32 %v7344, %v7616
        %v7618 = vpop.f32.mrf.mxu0
        %v7619 = vadd.f32 %v7346, %v7618
        %7620 = vmatprep.mubr.f32.mxu0 0.0
        %v7621 = vand.u32 %v1154, 4294901760
        %v7622 = vsub.f32 %v1154, %v7621
        %7623 = vmatmul.mubr.f32.gmra.mxu0 %v7622
        %v7624 = vpop.f32.mrf.mxu0
        %v7625 = vadd.f32 %v7351, %v7624
        %v7626 = vpop.f32.mrf.mxu0
        %v7627 = vadd.f32 %v7353, %v7626
        %7628 = vmatprep.mubr.f32.mxu0 0.0
        %v7629 = vand.u32 %v1157, 4294901760
        %v7630 = vsub.f32 %v1157, %v7629
        %7631 = vmatmul.mubr.f32.gmra.mxu0 %v7630
        %v7632 = vpop.f32.mrf.mxu0
        %v7633 = vadd.f32 %v7358, %v7632
        %v7634 = vpop.f32.mrf.mxu0
        %v7635 = vadd.f32 %v7360, %v7634
        %7636 = vmatprep.mubr.f32.mxu0 0.0
        %v7637 = vand.u32 %v1160, 4294901760
        %v7638 = vsub.f32 %v1160, %v7637
        %7639 = vmatmul.mubr.f32.gmra.mxu0 %v7638
        %v7640 = vpop.f32.mrf.mxu0
        %v7641 = vadd.f32 %v7365, %v7640
        %v7642 = vpop.f32.mrf.mxu0
        %v7643 = vadd.f32 %v7367, %v7642
        %7644 = vmatprep.mubr.f32.mxu0 0.0
        %v7645 = vand.u32 %v1163, 4294901760
        %v7646 = vsub.f32 %v1163, %v7645
        %7647 = vmatmul.mubr.f32.gmra.mxu0 %v7646
        %v7648 = vpop.f32.mrf.mxu0
        %v7649 = vadd.f32 %v7372, %v7648
        %v7650 = vpop.f32.mrf.mxu0
        %v7651 = vadd.f32 %v7374, %v7650
        %7652 = vmatprep.mubr.f32.mxu0 0.0
        %v7653 = vand.u32 %v1166, 4294901760
        %v7654 = vsub.f32 %v1166, %v7653
        %7655 = vmatmul.mubr.f32.gmra.mxu0 %v7654
        %v7656 = vpop.f32.mrf.mxu0
        %v7657 = vadd.f32 %v7379, %v7656
        %v7658 = vpop.f32.mrf.mxu0
        %v7659 = vadd.f32 %v7381, %v7658
        %7660 = vmatprep.mubr.f32.mxu0 0.0
        %v7661 = vand.u32 %v1169, 4294901760
        %v7662 = vsub.f32 %v1169, %v7661
        %7663 = vmatmul.mubr.f32.gmra.mxu0 %v7662
        %v7664 = vpop.f32.mrf.mxu0
        %v7665 = vadd.f32 %v7386, %v7664
        %v7666 = vpop.f32.mrf.mxu0
        %v7667 = vadd.f32 %v7388, %v7666
        %7668 = vmatprep.mubr.f32.mxu0 0.0
        %v7669 = vand.u32 %v1172, 4294901760
        %v7670 = vsub.f32 %v1172, %v7669
        %7671 = vmatmul.mubr.f32.gmra.mxu0 %v7670
        %v7672 = vpop.f32.mrf.mxu0
        %v7673 = vadd.f32 %v7393, %v7672
        %v7674 = vpop.f32.mrf.mxu0
        %v7675 = vadd.f32 %v7395, %v7674
        %7676 = vmatprep.mubr.f32.mxu0 0.0
        %v7677 = vand.u32 %v1175, 4294901760
        %v7678 = vsub.f32 %v1175, %v7677
        %7679 = vmatmul.mubr.f32.gmra.mxu0 %v7678
        %v7680 = vpop.f32.mrf.mxu0
        %v7681 = vadd.f32 %v7400, %v7680
        %v7682 = vpop.f32.mrf.mxu0
        %v7683 = vadd.f32 %v7402, %v7682
        %7684 = vmatprep.mubr.f32.mxu0 0.0
        %v7685 = vand.u32 %v1178, 4294901760
        %v7686 = vsub.f32 %v1178, %v7685
        %7687 = vmatmul.mubr.f32.gmra.mxu0 %v7686
        %v7688 = vpop.f32.mrf.mxu0
        %v7689 = vadd.f32 %v7407, %v7688
        %v7690 = vpop.f32.mrf.mxu0
        %v7691 = vadd.f32 %v7409, %v7690
        %7692 = vmatprep.mubr.f32.mxu0 0.0
        %v7693 = vand.u32 %v1181, 4294901760
        %v7694 = vsub.f32 %v1181, %v7693
        %7695 = vmatmul.mubr.f32.gmra.mxu0 %v7694
        %v7696 = vpop.f32.mrf.mxu0
        %v7697 = vadd.f32 %v7414, %v7696
        %v7698 = vpop.f32.mrf.mxu0
        %v7699 = vadd.f32 %v7416, %v7698
        %7700 = vmatprep.mubr.f32.mxu0 0.0
        %v7701 = vand.u32 %v1184, 4294901760
        %v7702 = vsub.f32 %v1184, %v7701
        %7703 = vmatmul.mubr.f32.gmra.mxu0 %v7702
        %v7704 = vpop.f32.mrf.mxu0
        %v7705 = vadd.f32 %v7421, %v7704
        %v7706 = vpop.f32.mrf.mxu0
        %v7707 = vadd.f32 %v7423, %v7706
        %7708 = vmatprep.mubr.f32.mxu0 0.0
        %v7709 = vand.u32 %v1187, 4294901760
        %v7710 = vsub.f32 %v1187, %v7709
        %7711 = vmatmul.mubr.f32.gmra.mxu0 %v7710
        %v7712 = vpop.f32.mrf.mxu0
        %v7713 = vadd.f32 %v7428, %v7712
        %v7714 = vpop.f32.mrf.mxu0
        %v7715 = vadd.f32 %v7430, %v7714
        %7716 = vmatprep.mubr.f32.mxu0 0.0
        %v7717 = vand.u32 %v1190, 4294901760
        %v7718 = vsub.f32 %v1190, %v7717
        %7719 = vmatmul.mubr.f32.gmra.mxu0 %v7718
        %v7720 = vpop.f32.mrf.mxu0
        %v7721 = vadd.f32 %v7435, %v7720
        %v7722 = vpop.f32.mrf.mxu0
        %v7723 = vadd.f32 %v7437, %v7722
        %7724 = vmatprep.mubr.f32.mxu0 0.0
        %v7725 = vand.u32 %v1193, 4294901760
        %v7726 = vsub.f32 %v1193, %v7725
        %7727 = vmatmul.mubr.f32.gmra.mxu0 %v7726
        %v7728 = vpop.f32.mrf.mxu0
        %v7729 = vadd.f32 %v7442, %v7728
        %v7730 = vpop.f32.mrf.mxu0
        %v7731 = vadd.f32 %v7444, %v7730
        %7732 = vmatprep.mubr.f32.mxu0 0.0
        %v7733 = vand.u32 %v1196, 4294901760
        %v7734 = vsub.f32 %v1196, %v7733
        %7735 = vmatmul.mubr.f32.gmra.mxu0 %v7734
        %v7736 = vpop.f32.mrf.mxu0
        %v7737 = vadd.f32 %v7449, %v7736
        %v7738 = vpop.f32.mrf.mxu0
        %v7739 = vadd.f32 %v7451, %v7738
        %7740 = vmatprep.mubr.f32.mxu0 0.0
        %v7741 = vand.u32 %v1199, 4294901760
        %v7742 = vsub.f32 %v1199, %v7741
        %7743 = vmatmul.mubr.f32.gmra.mxu0 %v7742
        %v7744 = vpop.f32.mrf.mxu0
        %v7745 = vadd.f32 %v7456, %v7744
        %v7746 = vpop.f32.mrf.mxu0
        %v7747 = vadd.f32 %v7458, %v7746
        %7748 = vmatprep.mubr.f32.mxu0 0.0
        %v7749 = vand.u32 %v1202, 4294901760
        %v7750 = vsub.f32 %v1202, %v7749
        %7751 = vmatmul.mubr.f32.gmra.mxu0 %v7750
        %v7752 = vpop.f32.mrf.mxu0
        %v7753 = vadd.f32 %v7463, %v7752
        %v7754 = vpop.f32.mrf.mxu0
        %v7755 = vadd.f32 %v7465, %v7754
        %7756 = vmatprep.mubr.f32.mxu0 0.0
        %v7757 = vand.u32 %v1205, 4294901760
        %v7758 = vsub.f32 %v1205, %v7757
        %7759 = vmatmul.mubr.f32.gmra.mxu0 %v7758
        %v7760 = vpop.f32.mrf.mxu0
        %v7761 = vadd.f32 %v7470, %v7760
        %v7762 = vpop.f32.mrf.mxu0
        %v7763 = vadd.f32 %v7472, %v7762
        %7764 = vmatprep.mubr.f32.mxu0 0.0
        %v7765 = vand.u32 %v1208, 4294901760
        %v7766 = vsub.f32 %v1208, %v7765
        %7767 = vmatmul.mubr.f32.gmra.mxu0 %v7766
        %v7768 = vpop.f32.mrf.mxu0
        %v7769 = vadd.f32 %v7477, %v7768
        %v7770 = vpop.f32.mrf.mxu0
        %v7771 = vadd.f32 %v7479, %v7770
        %7772 = vmatprep.mubr.f32.mxu0 0.0
        %v7773 = vand.u32 %v1211, 4294901760
        %v7774 = vsub.f32 %v1211, %v7773
        %7775 = vmatmul.mubr.f32.gmra.mxu0 %v7774
        %v7776 = vpop.f32.mrf.mxu0
        %v7777 = vadd.f32 %v7484, %v7776
        %v7778 = vpop.f32.mrf.mxu0
        %v7779 = vadd.f32 %v7486, %v7778
        %7780 = vmatprep.mubr.f32.mxu0 0.0
        %v7781 = vand.u32 %v1214, 4294901760
        %v7782 = vsub.f32 %v1214, %v7781
        %7783 = vmatmul.mubr.f32.gmra.mxu0 %v7782
        %v7784 = vpop.f32.mrf.mxu0
        %v7785 = vadd.f32 %v7491, %v7784
        %v7786 = vpop.f32.mrf.mxu0
        %v7787 = vadd.f32 %v7493, %v7786
        %7788 = vmatprep.mubr.f32.mxu0 0.0
        %v7789 = vand.u32 %v1217, 4294901760
        %v7790 = vsub.f32 %v1217, %v7789
        %7791 = vmatmul.mubr.f32.gmra.mxu0 %v7790
        %v7792 = vpop.f32.mrf.mxu0
        %v7793 = vadd.f32 %v7498, %v7792
        %v7794 = vpop.f32.mrf.mxu0
        %v7795 = vadd.f32 %v7500, %v7794
        %7796 = vmatprep.mubr.f32.mxu0 0.0
        %v7797 = vand.u32 %v1220, 4294901760
        %v7798 = vsub.f32 %v1220, %v7797
        %7799 = vmatmul.mubr.f32.gmra.mxu0 %v7798
        %v7800 = vpop.f32.mrf.mxu0
        %v7801 = vadd.f32 %v7505, %v7800
        %v7802 = vpop.f32.mrf.mxu0
        %v7803 = vadd.f32 %v7507, %v7802
        %7804 = vmatprep.mubr.f32.mxu0 0.0
        %v7805 = vand.u32 %v1223, 4294901760
        %v7806 = vsub.f32 %v1223, %v7805
        %7807 = vmatmul.mubr.f32.gmra.mxu0 %v7806
        %v7808 = vpop.f32.mrf.mxu0
        %v7809 = vadd.f32 %v7512, %v7808
        %v7810 = vpop.f32.mrf.mxu0
        %v7811 = vadd.f32 %v7514, %v7810
        %7812 = vdwg.mxu0
        %7813 = vmatprep.subr.mxu0 0.0
        %7814 = vmatpush1.msra.mxu0 0.0
        %7815 = vmatprep.subr.mxu0 0.0
        %7816 = vmatpush1.msra.mxu0 0.0
        %7817 = vmatprep.subr.mxu0 0.0
        %7818 = vmatpush1.msra.mxu0 0.0
        %7819 = vmatprep.subr.mxu0 0.0
        %7820 = vmatpush1.msra.mxu0 0.0
        %7821 = vmatprep.subr.mxu0 0.0
        %7822 = vmatpush1.msra.mxu0 0.0
        %7823 = vmatprep.subr.mxu0 0.0
        %7824 = vmatpush1.msra.mxu0 0.0
        %7825 = vmatprep.subr.mxu0 0.0
        %7826 = vmatpush1.msra.mxu0 0.0
        %7827 = vmatprep.subr.mxu0 0.0
        %7828 = vmatpush1.msra.mxu0 0.0
        %7829 = vmatprep.subr.mxu0 0.0
        %7830 = vmatpush1.msra.mxu0 0.0
        %7831 = vmatprep.subr.mxu0 0.0
        %7832 = vmatpush1.msra.mxu0 0.0
        %7833 = vmatprep.subr.mxu0 0.0
        %7834 = vmatpush1.msra.mxu0 0.0
        %7835 = vmatprep.subr.mxu0 0.0
        %7836 = vmatpush1.msra.mxu0 0.0
        %7837 = vmatprep.subr.mxu0 0.0
        %7838 = vmatpush1.msra.mxu0 0.0
        %7839 = vmatprep.subr.mxu0 0.0
        %7840 = vmatpush1.msra.mxu0 0.0
        %v7841 = vand.u32 %v6857, 4294901760
        %7842 = vmatprep.subr.mxu0 %v7841
        %v7843 = vand.u32 %v6856, 4294901760
        %7844 = vmatpush1.msra.mxu0 %v7843
        %v7845 = vand.u32 %v6855, 4294901760
        %7846 = vmatprep.subr.mxu0 %v7845
        %v7847 = vand.u32 %v6854, 4294901760
        %7848 = vmatpush1.msra.mxu0 %v7847
        %7849 = vmatprep.subr.mxu0 0.0
        %7850 = vmatpush2.msra.mxu0 0.0
        %7851 = vmatprep.subr.mxu0 0.0
        %7852 = vmatpush2.msra.mxu0 0.0
        %7853 = vmatprep.subr.mxu0 0.0
        %7854 = vmatpush2.msra.mxu0 0.0
        %7855 = vmatprep.subr.mxu0 0.0
        %7856 = vmatpush2.msra.mxu0 0.0
        %7857 = vmatprep.subr.mxu0 0.0
        %7858 = vmatpush2.msra.mxu0 0.0
        %7859 = vmatprep.subr.mxu0 0.0
        %7860 = vmatpush2.msra.mxu0 0.0
        %7861 = vmatprep.subr.mxu0 0.0
        %7862 = vmatpush2.msra.mxu0 0.0
        %7863 = vmatprep.subr.mxu0 0.0
        %7864 = vmatpush2.msra.mxu0 0.0
        %7865 = vmatprep.subr.mxu0 0.0
        %7866 = vmatpush2.msra.mxu0 0.0
        %7867 = vmatprep.subr.mxu0 0.0
        %7868 = vmatpush2.msra.mxu0 0.0
        %7869 = vmatprep.subr.mxu0 0.0
        %7870 = vmatpush2.msra.mxu0 0.0
        %7871 = vmatprep.subr.mxu0 0.0
        %7872 = vmatpush2.msra.mxu0 0.0
        %7873 = vmatprep.subr.mxu0 0.0
        %7874 = vmatpush2.msra.mxu0 0.0
        %7875 = vmatprep.subr.mxu0 0.0
        %7876 = vmatpush2.msra.mxu0 0.0
        %7877 = vmatprep.subr.mxu0 0.0
        %7878 = vmatpush2.msra.mxu0 0.0
        %7879 = vmatprep.subr.mxu0 0.0
        %7880 = vmatpush2.msra.mxu0 0.0
        %7881 = vmatprep.mubr.f32.mxu0 0.0
        %v7882 = vand.u32 %v1142, 4294901760
        %v7883 = vsub.f32 %v1142, %v7882
        %v7884 = vand.u32 %v7883, 4294901760
        %7885 = vmatmul.mubr.f32.gmra.mxu0 %v7884
        %v7886 = vpop.f32.mrf.mxu0
        %v7887 = vadd.f32 %v7593, %v7886
        %v7888 = vpop.f32.mrf.mxu0
        %v7889 = vadd.f32 %v7595, %v7888
        %7890 = vmatprep.mubr.f32.mxu0 0.0
        %v7891 = vand.u32 %v1145, 4294901760
        %v7892 = vsub.f32 %v1145, %v7891
        %v7893 = vand.u32 %v7892, 4294901760
        %7894 = vmatmul.mubr.f32.gmra.mxu0 %v7893
        %v7895 = vpop.f32.mrf.mxu0
        %v7896 = vadd.f32 %v7601, %v7895
        %v7897 = vpop.f32.mrf.mxu0
        %v7898 = vadd.f32 %v7603, %v7897
        %7899 = vmatprep.mubr.f32.mxu0 0.0
        %v7900 = vand.u32 %v1148, 4294901760
        %v7901 = vsub.f32 %v1148, %v7900
        %v7902 = vand.u32 %v7901, 4294901760
        %7903 = vmatmul.mubr.f32.gmra.mxu0 %v7902
        %v7904 = vpop.f32.mrf.mxu0
        %v7905 = vadd.f32 %v7609, %v7904
        %v7906 = vpop.f32.mrf.mxu0
        %v7907 = vadd.f32 %v7611, %v7906
        %7908 = vmatprep.mubr.f32.mxu0 0.0
        %v7909 = vand.u32 %v1151, 4294901760
        %v7910 = vsub.f32 %v1151, %v7909
        %v7911 = vand.u32 %v7910, 4294901760
        %7912 = vmatmul.mubr.f32.gmra.mxu0 %v7911
        %v7913 = vpop.f32.mrf.mxu0
        %v7914 = vadd.f32 %v7617, %v7913
        %v7915 = vpop.f32.mrf.mxu0
        %v7916 = vadd.f32 %v7619, %v7915
        %7917 = vmatprep.mubr.f32.mxu0 0.0
        %v7918 = vand.u32 %v1154, 4294901760
        %v7919 = vsub.f32 %v1154, %v7918
        %v7920 = vand.u32 %v7919, 4294901760
        %7921 = vmatmul.mubr.f32.gmra.mxu0 %v7920
        %v7922 = vpop.f32.mrf.mxu0
        %v7923 = vadd.f32 %v7625, %v7922
        %v7924 = vpop.f32.mrf.mxu0
        %v7925 = vadd.f32 %v7627, %v7924
        %7926 = vmatprep.mubr.f32.mxu0 0.0
        %v7927 = vand.u32 %v1157, 4294901760
        %v7928 = vsub.f32 %v1157, %v7927
        %v7929 = vand.u32 %v7928, 4294901760
        %7930 = vmatmul.mubr.f32.gmra.mxu0 %v7929
        %v7931 = vpop.f32.mrf.mxu0
        %v7932 = vadd.f32 %v7633, %v7931
        %v7933 = vpop.f32.mrf.mxu0
        %v7934 = vadd.f32 %v7635, %v7933
        %7935 = vmatprep.mubr.f32.mxu0 0.0
        %v7936 = vand.u32 %v1160, 4294901760
        %v7937 = vsub.f32 %v1160, %v7936
        %v7938 = vand.u32 %v7937, 4294901760
        %7939 = vmatmul.mubr.f32.gmra.mxu0 %v7938
        %v7940 = vpop.f32.mrf.mxu0
        %v7941 = vadd.f32 %v7641, %v7940
        %v7942 = vpop.f32.mrf.mxu0
        %v7943 = vadd.f32 %v7643, %v7942
        %7944 = vmatprep.mubr.f32.mxu0 0.0
        %v7945 = vand.u32 %v1163, 4294901760
        %v7946 = vsub.f32 %v1163, %v7945
        %v7947 = vand.u32 %v7946, 4294901760
        %7948 = vmatmul.mubr.f32.gmra.mxu0 %v7947
        %v7949 = vpop.f32.mrf.mxu0
        %v7950 = vadd.f32 %v7649, %v7949
        %v7951 = vpop.f32.mrf.mxu0
        %v7952 = vadd.f32 %v7651, %v7951
        %7953 = vmatprep.mubr.f32.mxu0 0.0
        %v7954 = vand.u32 %v1166, 4294901760
        %v7955 = vsub.f32 %v1166, %v7954
        %v7956 = vand.u32 %v7955, 4294901760
        %7957 = vmatmul.mubr.f32.gmra.mxu0 %v7956
        %v7958 = vpop.f32.mrf.mxu0
        %v7959 = vadd.f32 %v7657, %v7958
        %v7960 = vpop.f32.mrf.mxu0
        %v7961 = vadd.f32 %v7659, %v7960
        %7962 = vmatprep.mubr.f32.mxu0 0.0
        %v7963 = vand.u32 %v1169, 4294901760
        %v7964 = vsub.f32 %v1169, %v7963
        %v7965 = vand.u32 %v7964, 4294901760
        %7966 = vmatmul.mubr.f32.gmra.mxu0 %v7965
        %v7967 = vpop.f32.mrf.mxu0
        %v7968 = vadd.f32 %v7665, %v7967
        %v7969 = vpop.f32.mrf.mxu0
        %v7970 = vadd.f32 %v7667, %v7969
        %7971 = vmatprep.mubr.f32.mxu0 0.0
        %v7972 = vand.u32 %v1172, 4294901760
        %v7973 = vsub.f32 %v1172, %v7972
        %v7974 = vand.u32 %v7973, 4294901760
        %7975 = vmatmul.mubr.f32.gmra.mxu0 %v7974
        %v7976 = vpop.f32.mrf.mxu0
        %v7977 = vadd.f32 %v7673, %v7976
        %v7978 = vpop.f32.mrf.mxu0
        %v7979 = vadd.f32 %v7675, %v7978
        %7980 = vmatprep.mubr.f32.mxu0 0.0
        %v7981 = vand.u32 %v1175, 4294901760
        %v7982 = vsub.f32 %v1175, %v7981
        %v7983 = vand.u32 %v7982, 4294901760
        %7984 = vmatmul.mubr.f32.gmra.mxu0 %v7983
        %v7985 = vpop.f32.mrf.mxu0
        %v7986 = vadd.f32 %v7681, %v7985
        %v7987 = vpop.f32.mrf.mxu0
        %v7988 = vadd.f32 %v7683, %v7987
        %7989 = vmatprep.mubr.f32.mxu0 0.0
        %v7990 = vand.u32 %v1178, 4294901760
        %v7991 = vsub.f32 %v1178, %v7990
        %v7992 = vand.u32 %v7991, 4294901760
        %7993 = vmatmul.mubr.f32.gmra.mxu0 %v7992
        %v7994 = vpop.f32.mrf.mxu0
        %v7995 = vadd.f32 %v7689, %v7994
        %v7996 = vpop.f32.mrf.mxu0
        %v7997 = vadd.f32 %v7691, %v7996
        %7998 = vmatprep.mubr.f32.mxu0 0.0
        %v7999 = vand.u32 %v1181, 4294901760
        %v8000 = vsub.f32 %v1181, %v7999
        %v8001 = vand.u32 %v8000, 4294901760
        %8002 = vmatmul.mubr.f32.gmra.mxu0 %v8001
        %v8003 = vpop.f32.mrf.mxu0
        %v8004 = vadd.f32 %v7697, %v8003
        %v8005 = vpop.f32.mrf.mxu0
        %v8006 = vadd.f32 %v7699, %v8005
        %8007 = vmatprep.mubr.f32.mxu0 0.0
        %v8008 = vand.u32 %v1184, 4294901760
        %v8009 = vsub.f32 %v1184, %v8008
        %v8010 = vand.u32 %v8009, 4294901760
        %8011 = vmatmul.mubr.f32.gmra.mxu0 %v8010
        %v8012 = vpop.f32.mrf.mxu0
        %v8013 = vadd.f32 %v7705, %v8012
        %v8014 = vpop.f32.mrf.mxu0
        %v8015 = vadd.f32 %v7707, %v8014
        %8016 = vmatprep.mubr.f32.mxu0 0.0
        %v8017 = vand.u32 %v1187, 4294901760
        %v8018 = vsub.f32 %v1187, %v8017
        %v8019 = vand.u32 %v8018, 4294901760
        %8020 = vmatmul.mubr.f32.gmra.mxu0 %v8019
        %v8021 = vpop.f32.mrf.mxu0
        %v8022 = vadd.f32 %v7713, %v8021
        %v8023 = vpop.f32.mrf.mxu0
        %v8024 = vadd.f32 %v7715, %v8023
        %8025 = vmatprep.mubr.f32.mxu0 0.0
        %v8026 = vand.u32 %v1190, 4294901760
        %v8027 = vsub.f32 %v1190, %v8026
        %v8028 = vand.u32 %v8027, 4294901760
        %8029 = vmatmul.mubr.f32.gmra.mxu0 %v8028
        %v8030 = vpop.f32.mrf.mxu0
        %v8031 = vadd.f32 %v7721, %v8030
        %v8032 = vpop.f32.mrf.mxu0
        %v8033 = vadd.f32 %v7723, %v8032
        %8034 = vmatprep.mubr.f32.mxu0 0.0
        %v8035 = vand.u32 %v1193, 4294901760
        %v8036 = vsub.f32 %v1193, %v8035
        %v8037 = vand.u32 %v8036, 4294901760
        %8038 = vmatmul.mubr.f32.gmra.mxu0 %v8037
        %v8039 = vpop.f32.mrf.mxu0
        %v8040 = vadd.f32 %v7729, %v8039
        %v8041 = vpop.f32.mrf.mxu0
        %v8042 = vadd.f32 %v7731, %v8041
        %8043 = vmatprep.mubr.f32.mxu0 0.0
        %v8044 = vand.u32 %v1196, 4294901760
        %v8045 = vsub.f32 %v1196, %v8044
        %v8046 = vand.u32 %v8045, 4294901760
        %8047 = vmatmul.mubr.f32.gmra.mxu0 %v8046
        %v8048 = vpop.f32.mrf.mxu0
        %v8049 = vadd.f32 %v7737, %v8048
        %v8050 = vpop.f32.mrf.mxu0
        %v8051 = vadd.f32 %v7739, %v8050
        %8052 = vmatprep.mubr.f32.mxu0 0.0
        %v8053 = vand.u32 %v1199, 4294901760
        %v8054 = vsub.f32 %v1199, %v8053
        %v8055 = vand.u32 %v8054, 4294901760
        %8056 = vmatmul.mubr.f32.gmra.mxu0 %v8055
        %v8057 = vpop.f32.mrf.mxu0
        %v8058 = vadd.f32 %v7745, %v8057
        %v8059 = vpop.f32.mrf.mxu0
        %v8060 = vadd.f32 %v7747, %v8059
        %8061 = vmatprep.mubr.f32.mxu0 0.0
        %v8062 = vand.u32 %v1202, 4294901760
        %v8063 = vsub.f32 %v1202, %v8062
        %v8064 = vand.u32 %v8063, 4294901760
        %8065 = vmatmul.mubr.f32.gmra.mxu0 %v8064
        %v8066 = vpop.f32.mrf.mxu0
        %v8067 = vadd.f32 %v7753, %v8066
        %v8068 = vpop.f32.mrf.mxu0
        %v8069 = vadd.f32 %v7755, %v8068
        %8070 = vmatprep.mubr.f32.mxu0 0.0
        %v8071 = vand.u32 %v1205, 4294901760
        %v8072 = vsub.f32 %v1205, %v8071
        %v8073 = vand.u32 %v8072, 4294901760
        %8074 = vmatmul.mubr.f32.gmra.mxu0 %v8073
        %v8075 = vpop.f32.mrf.mxu0
        %v8076 = vadd.f32 %v7761, %v8075
        %v8077 = vpop.f32.mrf.mxu0
        %v8078 = vadd.f32 %v7763, %v8077
        %8079 = vmatprep.mubr.f32.mxu0 0.0
        %v8080 = vand.u32 %v1208, 4294901760
        %v8081 = vsub.f32 %v1208, %v8080
        %v8082 = vand.u32 %v8081, 4294901760
        %8083 = vmatmul.mubr.f32.gmra.mxu0 %v8082
        %v8084 = vpop.f32.mrf.mxu0
        %v8085 = vadd.f32 %v7769, %v8084
        %v8086 = vpop.f32.mrf.mxu0
        %v8087 = vadd.f32 %v7771, %v8086
        %8088 = vmatprep.mubr.f32.mxu0 0.0
        %v8089 = vand.u32 %v1211, 4294901760
        %v8090 = vsub.f32 %v1211, %v8089
        %v8091 = vand.u32 %v8090, 4294901760
        %8092 = vmatmul.mubr.f32.gmra.mxu0 %v8091
        %v8093 = vpop.f32.mrf.mxu0
        %v8094 = vadd.f32 %v7777, %v8093
        %v8095 = vpop.f32.mrf.mxu0
        %v8096 = vadd.f32 %v7779, %v8095
        %8097 = vmatprep.mubr.f32.mxu0 0.0
        %v8098 = vand.u32 %v1214, 4294901760
        %v8099 = vsub.f32 %v1214, %v8098
        %v8100 = vand.u32 %v8099, 4294901760
        %8101 = vmatmul.mubr.f32.gmra.mxu0 %v8100
        %v8102 = vpop.f32.mrf.mxu0
        %v8103 = vadd.f32 %v7785, %v8102
        %v8104 = vpop.f32.mrf.mxu0
        %v8105 = vadd.f32 %v7787, %v8104
        %8106 = vmatprep.mubr.f32.mxu0 0.0
        %v8107 = vand.u32 %v1217, 4294901760
        %v8108 = vsub.f32 %v1217, %v8107
        %v8109 = vand.u32 %v8108, 4294901760
        %8110 = vmatmul.mubr.f32.gmra.mxu0 %v8109
        %v8111 = vpop.f32.mrf.mxu0
        %v8112 = vadd.f32 %v7793, %v8111
        %v8113 = vpop.f32.mrf.mxu0
        %v8114 = vadd.f32 %v7795, %v8113
        %8115 = vmatprep.mubr.f32.mxu0 0.0
        %v8116 = vand.u32 %v1220, 4294901760
        %v8117 = vsub.f32 %v1220, %v8116
        %v8118 = vand.u32 %v8117, 4294901760
        %8119 = vmatmul.mubr.f32.gmra.mxu0 %v8118
        %v8120 = vpop.f32.mrf.mxu0
        %v8121 = vadd.f32 %v7801, %v8120
        %v8122 = vpop.f32.mrf.mxu0
        %v8123 = vadd.f32 %v7803, %v8122
        %8124 = vmatprep.mubr.f32.mxu0 0.0
        %v8125 = vand.u32 %v1223, 4294901760
        %v8126 = vsub.f32 %v1223, %v8125
        %v8127 = vand.u32 %v8126, 4294901760
        %8128 = vmatmul.mubr.f32.gmra.mxu0 %v8127
        %v8129 = vpop.f32.mrf.mxu0
        %v8130 = vadd.f32 %v7809, %v8129
        %v8131 = vpop.f32.mrf.mxu0
        %v8132 = vadd.f32 %v7811, %v8131
        %8133 = vdwg.mxu0
        %8134 = vmatprep.subr.mxu0 0.0
        %8135 = vmatpush1.msra.mxu0 0.0
        %8136 = vmatprep.subr.mxu0 0.0
        %8137 = vmatpush1.msra.mxu0 0.0
        %8138 = vmatprep.subr.mxu0 0.0
        %8139 = vmatpush1.msra.mxu0 0.0
        %8140 = vmatprep.subr.mxu0 0.0
        %8141 = vmatpush1.msra.mxu0 0.0
        %8142 = vmatprep.subr.mxu0 0.0
        %8143 = vmatpush1.msra.mxu0 0.0
        %8144 = vmatprep.subr.mxu0 0.0
        %8145 = vmatpush1.msra.mxu0 0.0
        %8146 = vmatprep.subr.mxu0 0.0
        %8147 = vmatpush1.msra.mxu0 0.0
        %8148 = vmatprep.subr.mxu0 0.0
        %8149 = vmatpush1.msra.mxu0 0.0
        %8150 = vmatprep.subr.mxu0 0.0
        %8151 = vmatpush1.msra.mxu0 0.0
        %8152 = vmatprep.subr.mxu0 0.0
        %8153 = vmatpush1.msra.mxu0 0.0
        %8154 = vmatprep.subr.mxu0 0.0
        %8155 = vmatpush1.msra.mxu0 0.0
        %8156 = vmatprep.subr.mxu0 0.0
        %8157 = vmatpush1.msra.mxu0 0.0
        %8158 = vmatprep.subr.mxu0 0.0
        %8159 = vmatpush1.msra.mxu0 0.0
        %8160 = vmatprep.subr.mxu0 0.0
        %8161 = vmatpush1.msra.mxu0 0.0
        %v8162 = vand.u32 %v6857, 4294901760
        %v8163 = vsub.f32 %v6857, %v8162
        %v8164 = vand.u32 %v8163, 4294901760
        %8165 = vmatprep.subr.mxu0 %v8164
        %v8166 = vand.u32 %v6856, 4294901760
        %v8167 = vsub.f32 %v6856, %v8166
        %v8168 = vand.u32 %v8167, 4294901760
        %8169 = vmatpush1.msra.mxu0 %v8168
        %v8170 = vand.u32 %v6855, 4294901760
        %v8171 = vsub.f32 %v6855, %v8170
        %v8172 = vand.u32 %v8171, 4294901760
        %8173 = vmatprep.subr.mxu0 %v8172
        %v8174 = vand.u32 %v6854, 4294901760
        %v8175 = vsub.f32 %v6854, %v8174
        %v8176 = vand.u32 %v8175, 4294901760
        %8177 = vmatpush1.msra.mxu0 %v8176
        %8178 = vmatprep.subr.mxu0 0.0
        %8179 = vmatpush2.msra.mxu0 0.0
        %8180 = vmatprep.subr.mxu0 0.0
        %8181 = vmatpush2.msra.mxu0 0.0
        %8182 = vmatprep.subr.mxu0 0.0
        %8183 = vmatpush2.msra.mxu0 0.0
        %8184 = vmatprep.subr.mxu0 0.0
        %8185 = vmatpush2.msra.mxu0 0.0
        %8186 = vmatprep.subr.mxu0 0.0
        %8187 = vmatpush2.msra.mxu0 0.0
        %8188 = vmatprep.subr.mxu0 0.0
        %8189 = vmatpush2.msra.mxu0 0.0
        %8190 = vmatprep.subr.mxu0 0.0
        %8191 = vmatpush2.msra.mxu0 0.0
        %8192 = vmatprep.subr.mxu0 0.0
        %8193 = vmatpush2.msra.mxu0 0.0
        %8194 = vmatprep.subr.mxu0 0.0
        %8195 = vmatpush2.msra.mxu0 0.0
        %8196 = vmatprep.subr.mxu0 0.0
        %8197 = vmatpush2.msra.mxu0 0.0
        %8198 = vmatprep.subr.mxu0 0.0
        %8199 = vmatpush2.msra.mxu0 0.0
        %8200 = vmatprep.subr.mxu0 0.0
        %8201 = vmatpush2.msra.mxu0 0.0
        %8202 = vmatprep.subr.mxu0 0.0
        %8203 = vmatpush2.msra.mxu0 0.0
        %8204 = vmatprep.subr.mxu0 0.0
        %8205 = vmatpush2.msra.mxu0 0.0
        %8206 = vmatprep.subr.mxu0 0.0
        %8207 = vmatpush2.msra.mxu0 0.0
        %8208 = vmatprep.subr.mxu0 0.0
        %8209 = vmatpush2.msra.mxu0 0.0
        %8210 = vmatprep.mubr.f32.mxu0 0.0
        %v8211 = vand.u32 %v1142, 4294901760
        %8212 = vmatmul.mubr.f32.gmra.mxu0 %v8211
        %v8213 = vpop.f32.mrf.mxu0
        %v8214 = vadd.f32 %v7887, %v8213
        %v8215 = vpop.f32.mrf.mxu0
        %v8216 = vadd.f32 %v7889, %v8215
        %8217 = vmatprep.mubr.f32.mxu0 0.0
        %v8218 = vand.u32 %v1145, 4294901760
        %8219 = vmatmul.mubr.f32.gmra.mxu0 %v8218
        %v8220 = vpop.f32.mrf.mxu0
        %v8221 = vadd.f32 %v7896, %v8220
        %v8222 = vpop.f32.mrf.mxu0
        %v8223 = vadd.f32 %v7898, %v8222
        %8224 = vmatprep.mubr.f32.mxu0 0.0
        %v8225 = vand.u32 %v1148, 4294901760
        %8226 = vmatmul.mubr.f32.gmra.mxu0 %v8225
        %v8227 = vpop.f32.mrf.mxu0
        %v8228 = vadd.f32 %v7905, %v8227
        %v8229 = vpop.f32.mrf.mxu0
        %v8230 = vadd.f32 %v7907, %v8229
        %8231 = vmatprep.mubr.f32.mxu0 0.0
        %v8232 = vand.u32 %v1151, 4294901760
        %8233 = vmatmul.mubr.f32.gmra.mxu0 %v8232
        %v8234 = vpop.f32.mrf.mxu0
        %v8235 = vadd.f32 %v7914, %v8234
        %v8236 = vpop.f32.mrf.mxu0
        %v8237 = vadd.f32 %v7916, %v8236
        %8238 = vmatprep.mubr.f32.mxu0 0.0
        %v8239 = vand.u32 %v1154, 4294901760
        %8240 = vmatmul.mubr.f32.gmra.mxu0 %v8239
        %v8241 = vpop.f32.mrf.mxu0
        %v8242 = vadd.f32 %v7923, %v8241
        %v8243 = vpop.f32.mrf.mxu0
        %v8244 = vadd.f32 %v7925, %v8243
        %8245 = vmatprep.mubr.f32.mxu0 0.0
        %v8246 = vand.u32 %v1157, 4294901760
        %8247 = vmatmul.mubr.f32.gmra.mxu0 %v8246
        %v8248 = vpop.f32.mrf.mxu0
        %v8249 = vadd.f32 %v7932, %v8248
        %v8250 = vpop.f32.mrf.mxu0
        %v8251 = vadd.f32 %v7934, %v8250
        %8252 = vmatprep.mubr.f32.mxu0 0.0
        %v8253 = vand.u32 %v1160, 4294901760
        %8254 = vmatmul.mubr.f32.gmra.mxu0 %v8253
        %v8255 = vpop.f32.mrf.mxu0
        %v8256 = vadd.f32 %v7941, %v8255
        %v8257 = vpop.f32.mrf.mxu0
        %v8258 = vadd.f32 %v7943, %v8257
        %8259 = vmatprep.mubr.f32.mxu0 0.0
        %v8260 = vand.u32 %v1163, 4294901760
        %8261 = vmatmul.mubr.f32.gmra.mxu0 %v8260
        %v8262 = vpop.f32.mrf.mxu0
        %v8263 = vadd.f32 %v7950, %v8262
        %v8264 = vpop.f32.mrf.mxu0
        %v8265 = vadd.f32 %v7952, %v8264
        %8266 = vmatprep.mubr.f32.mxu0 0.0
        %v8267 = vand.u32 %v1166, 4294901760
        %8268 = vmatmul.mubr.f32.gmra.mxu0 %v8267
        %v8269 = vpop.f32.mrf.mxu0
        %v8270 = vadd.f32 %v7959, %v8269
        %v8271 = vpop.f32.mrf.mxu0
        %v8272 = vadd.f32 %v7961, %v8271
        %8273 = vmatprep.mubr.f32.mxu0 0.0
        %v8274 = vand.u32 %v1169, 4294901760
        %8275 = vmatmul.mubr.f32.gmra.mxu0 %v8274
        %v8276 = vpop.f32.mrf.mxu0
        %v8277 = vadd.f32 %v7968, %v8276
        %v8278 = vpop.f32.mrf.mxu0
        %v8279 = vadd.f32 %v7970, %v8278
        %8280 = vmatprep.mubr.f32.mxu0 0.0
        %v8281 = vand.u32 %v1172, 4294901760
        %8282 = vmatmul.mubr.f32.gmra.mxu0 %v8281
        %v8283 = vpop.f32.mrf.mxu0
        %v8284 = vadd.f32 %v7977, %v8283
        %v8285 = vpop.f32.mrf.mxu0
        %v8286 = vadd.f32 %v7979, %v8285
        %8287 = vmatprep.mubr.f32.mxu0 0.0
        %v8288 = vand.u32 %v1175, 4294901760
        %8289 = vmatmul.mubr.f32.gmra.mxu0 %v8288
        %v8290 = vpop.f32.mrf.mxu0
        %v8291 = vadd.f32 %v7986, %v8290
        %v8292 = vpop.f32.mrf.mxu0
        %v8293 = vadd.f32 %v7988, %v8292
        %8294 = vmatprep.mubr.f32.mxu0 0.0
        %v8295 = vand.u32 %v1178, 4294901760
        %8296 = vmatmul.mubr.f32.gmra.mxu0 %v8295
        %v8297 = vpop.f32.mrf.mxu0
        %v8298 = vadd.f32 %v7995, %v8297
        %v8299 = vpop.f32.mrf.mxu0
        %v8300 = vadd.f32 %v7997, %v8299
        %8301 = vmatprep.mubr.f32.mxu0 0.0
        %v8302 = vand.u32 %v1181, 4294901760
        %8303 = vmatmul.mubr.f32.gmra.mxu0 %v8302
        %v8304 = vpop.f32.mrf.mxu0
        %v8305 = vadd.f32 %v8004, %v8304
        %v8306 = vpop.f32.mrf.mxu0
        %v8307 = vadd.f32 %v8006, %v8306
        %8308 = vmatprep.mubr.f32.mxu0 0.0
        %v8309 = vand.u32 %v1184, 4294901760
        %8310 = vmatmul.mubr.f32.gmra.mxu0 %v8309
        %v8311 = vpop.f32.mrf.mxu0
        %v8312 = vadd.f32 %v8013, %v8311
        %v8313 = vpop.f32.mrf.mxu0
        %v8314 = vadd.f32 %v8015, %v8313
        %8315 = vmatprep.mubr.f32.mxu0 0.0
        %v8316 = vand.u32 %v1187, 4294901760
        %8317 = vmatmul.mubr.f32.gmra.mxu0 %v8316
        %v8318 = vpop.f32.mrf.mxu0
        %v8319 = vadd.f32 %v8022, %v8318
        %v8320 = vpop.f32.mrf.mxu0
        %v8321 = vadd.f32 %v8024, %v8320
        %8322 = vmatprep.mubr.f32.mxu0 0.0
        %v8323 = vand.u32 %v1190, 4294901760
        %8324 = vmatmul.mubr.f32.gmra.mxu0 %v8323
        %v8325 = vpop.f32.mrf.mxu0
        %v8326 = vadd.f32 %v8031, %v8325
        %v8327 = vpop.f32.mrf.mxu0
        %v8328 = vadd.f32 %v8033, %v8327
        %8329 = vmatprep.mubr.f32.mxu0 0.0
        %v8330 = vand.u32 %v1193, 4294901760
        %8331 = vmatmul.mubr.f32.gmra.mxu0 %v8330
        %v8332 = vpop.f32.mrf.mxu0
        %v8333 = vadd.f32 %v8040, %v8332
        %v8334 = vpop.f32.mrf.mxu0
        %v8335 = vadd.f32 %v8042, %v8334
        %8336 = vmatprep.mubr.f32.mxu0 0.0
        %v8337 = vand.u32 %v1196, 4294901760
        %8338 = vmatmul.mubr.f32.gmra.mxu0 %v8337
        %v8339 = vpop.f32.mrf.mxu0
        %v8340 = vadd.f32 %v8049, %v8339
        %v8341 = vpop.f32.mrf.mxu0
        %v8342 = vadd.f32 %v8051, %v8341
        %8343 = vmatprep.mubr.f32.mxu0 0.0
        %v8344 = vand.u32 %v1199, 4294901760
        %8345 = vmatmul.mubr.f32.gmra.mxu0 %v8344
        %v8346 = vpop.f32.mrf.mxu0
        %v8347 = vadd.f32 %v8058, %v8346
        %v8348 = vpop.f32.mrf.mxu0
        %v8349 = vadd.f32 %v8060, %v8348
        %8350 = vmatprep.mubr.f32.mxu0 0.0
        %v8351 = vand.u32 %v1202, 4294901760
        %8352 = vmatmul.mubr.f32.gmra.mxu0 %v8351
        %v8353 = vpop.f32.mrf.mxu0
        %v8354 = vadd.f32 %v8067, %v8353
        %v8355 = vpop.f32.mrf.mxu0
        %v8356 = vadd.f32 %v8069, %v8355
        %8357 = vmatprep.mubr.f32.mxu0 0.0
        %v8358 = vand.u32 %v1205, 4294901760
        %8359 = vmatmul.mubr.f32.gmra.mxu0 %v8358
        %v8360 = vpop.f32.mrf.mxu0
        %v8361 = vadd.f32 %v8076, %v8360
        %v8362 = vpop.f32.mrf.mxu0
        %v8363 = vadd.f32 %v8078, %v8362
        %8364 = vmatprep.mubr.f32.mxu0 0.0
        %v8365 = vand.u32 %v1208, 4294901760
        %8366 = vmatmul.mubr.f32.gmra.mxu0 %v8365
        %v8367 = vpop.f32.mrf.mxu0
        %v8368 = vadd.f32 %v8085, %v8367
        %v8369 = vpop.f32.mrf.mxu0
        %v8370 = vadd.f32 %v8087, %v8369
        %8371 = vmatprep.mubr.f32.mxu0 0.0
        %v8372 = vand.u32 %v1211, 4294901760
        %8373 = vmatmul.mubr.f32.gmra.mxu0 %v8372
        %v8374 = vpop.f32.mrf.mxu0
        %v8375 = vadd.f32 %v8094, %v8374
        %v8376 = vpop.f32.mrf.mxu0
        %v8377 = vadd.f32 %v8096, %v8376
        %8378 = vmatprep.mubr.f32.mxu0 0.0
        %v8379 = vand.u32 %v1214, 4294901760
        %8380 = vmatmul.mubr.f32.gmra.mxu0 %v8379
        %v8381 = vpop.f32.mrf.mxu0
        %v8382 = vadd.f32 %v8103, %v8381
        %v8383 = vpop.f32.mrf.mxu0
        %v8384 = vadd.f32 %v8105, %v8383
        %8385 = vmatprep.mubr.f32.mxu0 0.0
        %v8386 = vand.u32 %v1217, 4294901760
        %8387 = vmatmul.mubr.f32.gmra.mxu0 %v8386
        %v8388 = vpop.f32.mrf.mxu0
        %v8389 = vadd.f32 %v8112, %v8388
        %v8390 = vpop.f32.mrf.mxu0
        %v8391 = vadd.f32 %v8114, %v8390
        %8392 = vmatprep.mubr.f32.mxu0 0.0
        %v8393 = vand.u32 %v1220, 4294901760
        %8394 = vmatmul.mubr.f32.gmra.mxu0 %v8393
        %v8395 = vpop.f32.mrf.mxu0
        %v8396 = vadd.f32 %v8121, %v8395
        %v8397 = vpop.f32.mrf.mxu0
        %v8398 = vadd.f32 %v8123, %v8397
        %8399 = vmatprep.mubr.f32.mxu0 0.0
        %v8400 = vand.u32 %v1223, 4294901760
        %8401 = vmatmul.mubr.f32.gmra.mxu0 %v8400
        %v8402 = vpop.f32.mrf.mxu0
        %v8403 = vadd.f32 %v8130, %v8402
        %v8404 = vpop.f32.mrf.mxu0
        %v8405 = vadd.f32 %v8132, %v8404
        %8406 = vdwg.mxu0
        %8407 = vmatprep.subr.mxu0 0.0
        %8408 = vmatpush1.msra.mxu0 0.0
        %8409 = vmatprep.subr.mxu0 0.0
        %8410 = vmatpush1.msra.mxu0 0.0
        %8411 = vmatprep.subr.mxu0 0.0
        %8412 = vmatpush1.msra.mxu0 0.0
        %8413 = vmatprep.subr.mxu0 0.0
        %8414 = vmatpush1.msra.mxu0 0.0
        %8415 = vmatprep.subr.mxu0 0.0
        %8416 = vmatpush1.msra.mxu0 0.0
        %8417 = vmatprep.subr.mxu0 0.0
        %8418 = vmatpush1.msra.mxu0 0.0
        %8419 = vmatprep.subr.mxu0 0.0
        %8420 = vmatpush1.msra.mxu0 0.0
        %8421 = vmatprep.subr.mxu0 0.0
        %8422 = vmatpush1.msra.mxu0 0.0
        %8423 = vmatprep.subr.mxu0 0.0
        %8424 = vmatpush1.msra.mxu0 0.0
        %8425 = vmatprep.subr.mxu0 0.0
        %8426 = vmatpush1.msra.mxu0 0.0
        %8427 = vmatprep.subr.mxu0 0.0
        %8428 = vmatpush1.msra.mxu0 0.0
        %8429 = vmatprep.subr.mxu0 0.0
        %8430 = vmatpush1.msra.mxu0 0.0
        %8431 = vmatprep.subr.mxu0 0.0
        %8432 = vmatpush1.msra.mxu0 0.0
        %8433 = vmatprep.subr.mxu0 0.0
        %8434 = vmatpush1.msra.mxu0 0.0
        %v8435 = vand.u32 %v6857, 4294901760
        %8436 = vmatprep.subr.mxu0 %v8435
        %v8437 = vand.u32 %v6856, 4294901760
        %8438 = vmatpush1.msra.mxu0 %v8437
        %v8439 = vand.u32 %v6855, 4294901760
        %8440 = vmatprep.subr.mxu0 %v8439
        %v8441 = vand.u32 %v6854, 4294901760
        %8442 = vmatpush1.msra.mxu0 %v8441
        %8443 = vmatprep.subr.mxu0 0.0
        %8444 = vmatpush2.msra.mxu0 0.0
        %8445 = vmatprep.subr.mxu0 0.0
        %8446 = vmatpush2.msra.mxu0 0.0
        %8447 = vmatprep.subr.mxu0 0.0
        %8448 = vmatpush2.msra.mxu0 0.0
        %8449 = vmatprep.subr.mxu0 0.0
        %8450 = vmatpush2.msra.mxu0 0.0
        %8451 = vmatprep.subr.mxu0 0.0
        %8452 = vmatpush2.msra.mxu0 0.0
        %8453 = vmatprep.subr.mxu0 0.0
        %8454 = vmatpush2.msra.mxu0 0.0
        %8455 = vmatprep.subr.mxu0 0.0
        %8456 = vmatpush2.msra.mxu0 0.0
        %8457 = vmatprep.subr.mxu0 0.0
        %8458 = vmatpush2.msra.mxu0 0.0
        %8459 = vmatprep.subr.mxu0 0.0
        %8460 = vmatpush2.msra.mxu0 0.0
        %8461 = vmatprep.subr.mxu0 0.0
        %8462 = vmatpush2.msra.mxu0 0.0
        %8463 = vmatprep.subr.mxu0 0.0
        %8464 = vmatpush2.msra.mxu0 0.0
        %8465 = vmatprep.subr.mxu0 0.0
        %8466 = vmatpush2.msra.mxu0 0.0
        %8467 = vmatprep.subr.mxu0 0.0
        %8468 = vmatpush2.msra.mxu0 0.0
        %8469 = vmatprep.subr.mxu0 0.0
        %8470 = vmatpush2.msra.mxu0 0.0
        %8471 = vmatprep.subr.mxu0 0.0
        %8472 = vmatpush2.msra.mxu0 0.0
        %8473 = vmatprep.subr.mxu0 0.0
        %8474 = vmatpush2.msra.mxu0 0.0
        %8475 = vmatprep.mubr.f32.mxu0 0.0
        %v8476 = vand.u32 %v1142, 4294901760
        %8477 = vmatmul.mubr.f32.gmra.mxu0 %v8476
        %v8478 = vpop.f32.mrf.mxu0
        %v8479 = vadd.f32 %v8214, %v8478
        %v8480 = vpop.f32.mrf.mxu0
        %v8481 = vadd.f32 %v8216, %v8480
        %8482 = vmatprep.mubr.f32.mxu0 0.0
        %v8483 = vand.u32 %v1145, 4294901760
        %8484 = vmatmul.mubr.f32.gmra.mxu0 %v8483
        %v8485 = vpop.f32.mrf.mxu0
        %v8486 = vadd.f32 %v8221, %v8485
        %v8487 = vpop.f32.mrf.mxu0
        %v8488 = vadd.f32 %v8223, %v8487
        %8489 = vmatprep.mubr.f32.mxu0 0.0
        %v8490 = vand.u32 %v1148, 4294901760
        %8491 = vmatmul.mubr.f32.gmra.mxu0 %v8490
        %v8492 = vpop.f32.mrf.mxu0
        %v8493 = vadd.f32 %v8228, %v8492
        %v8494 = vpop.f32.mrf.mxu0
        %v8495 = vadd.f32 %v8230, %v8494
        %8496 = vmatprep.mubr.f32.mxu0 0.0
        %v8497 = vand.u32 %v1151, 4294901760
        %8498 = vmatmul.mubr.f32.gmra.mxu0 %v8497
        %v8499 = vpop.f32.mrf.mxu0
        %v8500 = vadd.f32 %v8235, %v8499
        %v8501 = vpop.f32.mrf.mxu0
        %v8502 = vadd.f32 %v8237, %v8501
        %8503 = vmatprep.mubr.f32.mxu0 0.0
        %v8504 = vand.u32 %v1154, 4294901760
        %8505 = vmatmul.mubr.f32.gmra.mxu0 %v8504
        %v8506 = vpop.f32.mrf.mxu0
        %v8507 = vadd.f32 %v8242, %v8506
        %v8508 = vpop.f32.mrf.mxu0
        %v8509 = vadd.f32 %v8244, %v8508
        %8510 = vmatprep.mubr.f32.mxu0 0.0
        %v8511 = vand.u32 %v1157, 4294901760
        %8512 = vmatmul.mubr.f32.gmra.mxu0 %v8511
        %v8513 = vpop.f32.mrf.mxu0
        %v8514 = vadd.f32 %v8249, %v8513
        %v8515 = vpop.f32.mrf.mxu0
        %v8516 = vadd.f32 %v8251, %v8515
        %8517 = vmatprep.mubr.f32.mxu0 0.0
        %v8518 = vand.u32 %v1160, 4294901760
        %8519 = vmatmul.mubr.f32.gmra.mxu0 %v8518
        %v8520 = vpop.f32.mrf.mxu0
        %v8521 = vadd.f32 %v8256, %v8520
        %v8522 = vpop.f32.mrf.mxu0
        %v8523 = vadd.f32 %v8258, %v8522
        %8524 = vmatprep.mubr.f32.mxu0 0.0
        %v8525 = vand.u32 %v1163, 4294901760
        %8526 = vmatmul.mubr.f32.gmra.mxu0 %v8525
        %v8527 = vpop.f32.mrf.mxu0
        %v8528 = vadd.f32 %v8263, %v8527
        %v8529 = vpop.f32.mrf.mxu0
        %v8530 = vadd.f32 %v8265, %v8529
        %8531 = vmatprep.mubr.f32.mxu0 0.0
        %v8532 = vand.u32 %v1166, 4294901760
        %8533 = vmatmul.mubr.f32.gmra.mxu0 %v8532
        %v8534 = vpop.f32.mrf.mxu0
        %v8535 = vadd.f32 %v8270, %v8534
        %v8536 = vpop.f32.mrf.mxu0
        %v8537 = vadd.f32 %v8272, %v8536
        %8538 = vmatprep.mubr.f32.mxu0 0.0
        %v8539 = vand.u32 %v1169, 4294901760
        %8540 = vmatmul.mubr.f32.gmra.mxu0 %v8539
        %v8541 = vpop.f32.mrf.mxu0
        %v8542 = vadd.f32 %v8277, %v8541
        %v8543 = vpop.f32.mrf.mxu0
        %v8544 = vadd.f32 %v8279, %v8543
        %8545 = vmatprep.mubr.f32.mxu0 0.0
        %v8546 = vand.u32 %v1172, 4294901760
        %8547 = vmatmul.mubr.f32.gmra.mxu0 %v8546
        %v8548 = vpop.f32.mrf.mxu0
        %v8549 = vadd.f32 %v8284, %v8548
        %v8550 = vpop.f32.mrf.mxu0
        %v8551 = vadd.f32 %v8286, %v8550
        %8552 = vmatprep.mubr.f32.mxu0 0.0
        %v8553 = vand.u32 %v1175, 4294901760
        %8554 = vmatmul.mubr.f32.gmra.mxu0 %v8553
        %v8555 = vpop.f32.mrf.mxu0
        %v8556 = vadd.f32 %v8291, %v8555
        %v8557 = vpop.f32.mrf.mxu0
        %v8558 = vadd.f32 %v8293, %v8557
        %8559 = vmatprep.mubr.f32.mxu0 0.0
        %v8560 = vand.u32 %v1178, 4294901760
        %8561 = vmatmul.mubr.f32.gmra.mxu0 %v8560
        %v8562 = vpop.f32.mrf.mxu0
        %v8563 = vadd.f32 %v8298, %v8562
        %v8564 = vpop.f32.mrf.mxu0
        %v8565 = vadd.f32 %v8300, %v8564
        %8566 = vmatprep.mubr.f32.mxu0 0.0
        %v8567 = vand.u32 %v1181, 4294901760
        %8568 = vmatmul.mubr.f32.gmra.mxu0 %v8567
        %v8569 = vpop.f32.mrf.mxu0
        %v8570 = vadd.f32 %v8305, %v8569
        %v8571 = vpop.f32.mrf.mxu0
        %v8572 = vadd.f32 %v8307, %v8571
        %8573 = vmatprep.mubr.f32.mxu0 0.0
        %v8574 = vand.u32 %v1184, 4294901760
        %8575 = vmatmul.mubr.f32.gmra.mxu0 %v8574
        %v8576 = vpop.f32.mrf.mxu0
        %v8577 = vadd.f32 %v8312, %v8576
        %v8578 = vpop.f32.mrf.mxu0
        %v8579 = vadd.f32 %v8314, %v8578
        %8580 = vmatprep.mubr.f32.mxu0 0.0
        %v8581 = vand.u32 %v1187, 4294901760
        %8582 = vmatmul.mubr.f32.gmra.mxu0 %v8581
        %v8583 = vpop.f32.mrf.mxu0
        %v8584 = vadd.f32 %v8319, %v8583
        %v8585 = vpop.f32.mrf.mxu0
        %v8586 = vadd.f32 %v8321, %v8585
        %8587 = vmatprep.mubr.f32.mxu0 0.0
        %v8588 = vand.u32 %v1190, 4294901760
        %8589 = vmatmul.mubr.f32.gmra.mxu0 %v8588
        %v8590 = vpop.f32.mrf.mxu0
        %v8591 = vadd.f32 %v8326, %v8590
        %v8592 = vpop.f32.mrf.mxu0
        %v8593 = vadd.f32 %v8328, %v8592
        %8594 = vmatprep.mubr.f32.mxu0 0.0
        %v8595 = vand.u32 %v1193, 4294901760
        %8596 = vmatmul.mubr.f32.gmra.mxu0 %v8595
        %v8597 = vpop.f32.mrf.mxu0
        %v8598 = vadd.f32 %v8333, %v8597
        %v8599 = vpop.f32.mrf.mxu0
        %v8600 = vadd.f32 %v8335, %v8599
        %8601 = vmatprep.mubr.f32.mxu0 0.0
        %v8602 = vand.u32 %v1196, 4294901760
        %8603 = vmatmul.mubr.f32.gmra.mxu0 %v8602
        %v8604 = vpop.f32.mrf.mxu0
        %v8605 = vadd.f32 %v8340, %v8604
        %v8606 = vpop.f32.mrf.mxu0
        %v8607 = vadd.f32 %v8342, %v8606
        %8608 = vmatprep.mubr.f32.mxu0 0.0
        %v8609 = vand.u32 %v1199, 4294901760
        %8610 = vmatmul.mubr.f32.gmra.mxu0 %v8609
        %v8611 = vpop.f32.mrf.mxu0
        %v8612 = vadd.f32 %v8347, %v8611
        %v8613 = vpop.f32.mrf.mxu0
        %v8614 = vadd.f32 %v8349, %v8613
        %8615 = vmatprep.mubr.f32.mxu0 0.0
        %v8616 = vand.u32 %v1202, 4294901760
        %8617 = vmatmul.mubr.f32.gmra.mxu0 %v8616
        %v8618 = vpop.f32.mrf.mxu0
        %v8619 = vadd.f32 %v8354, %v8618
        %v8620 = vpop.f32.mrf.mxu0
        %v8621 = vadd.f32 %v8356, %v8620
        %8622 = vmatprep.mubr.f32.mxu0 0.0
        %v8623 = vand.u32 %v1205, 4294901760
        %8624 = vmatmul.mubr.f32.gmra.mxu0 %v8623
        %v8625 = vpop.f32.mrf.mxu0
        %v8626 = vadd.f32 %v8361, %v8625
        %v8627 = vpop.f32.mrf.mxu0
        %v8628 = vadd.f32 %v8363, %v8627
        %8629 = vmatprep.mubr.f32.mxu0 0.0
        %v8630 = vand.u32 %v1208, 4294901760
        %8631 = vmatmul.mubr.f32.gmra.mxu0 %v8630
        %v8632 = vpop.f32.mrf.mxu0
        %v8633 = vadd.f32 %v8368, %v8632
        %v8634 = vpop.f32.mrf.mxu0
        %v8635 = vadd.f32 %v8370, %v8634
        %8636 = vmatprep.mubr.f32.mxu0 0.0
        %v8637 = vand.u32 %v1211, 4294901760
        %8638 = vmatmul.mubr.f32.gmra.mxu0 %v8637
        %v8639 = vpop.f32.mrf.mxu0
        %v8640 = vadd.f32 %v8375, %v8639
        %v8641 = vpop.f32.mrf.mxu0
        %v8642 = vadd.f32 %v8377, %v8641
        %8643 = vmatprep.mubr.f32.mxu0 0.0
        %v8644 = vand.u32 %v1214, 4294901760
        %8645 = vmatmul.mubr.f32.gmra.mxu0 %v8644
        %v8646 = vpop.f32.mrf.mxu0
        %v8647 = vadd.f32 %v8382, %v8646
        %v8648 = vpop.f32.mrf.mxu0
        %v8649 = vadd.f32 %v8384, %v8648
        %8650 = vmatprep.mubr.f32.mxu0 0.0
        %v8651 = vand.u32 %v1217, 4294901760
        %8652 = vmatmul.mubr.f32.gmra.mxu0 %v8651
        %v8653 = vpop.f32.mrf.mxu0
        %v8654 = vadd.f32 %v8389, %v8653
        %v8655 = vpop.f32.mrf.mxu0
        %v8656 = vadd.f32 %v8391, %v8655
        %8657 = vmatprep.mubr.f32.mxu0 0.0
        %v8658 = vand.u32 %v1220, 4294901760
        %8659 = vmatmul.mubr.f32.gmra.mxu0 %v8658
        %v8660 = vpop.f32.mrf.mxu0
        %v8661 = vadd.f32 %v8396, %v8660
        %v8662 = vpop.f32.mrf.mxu0
        %v8663 = vadd.f32 %v8398, %v8662
        %8664 = vmatprep.mubr.f32.mxu0 0.0
        %v8665 = vand.u32 %v1223, 4294901760
        %8666 = vmatmul.mubr.f32.gmra.mxu0 %v8665
        %v8667 = vpop.f32.mrf.mxu0
        %v8668 = vadd.f32 %v8403, %v8667
        %v8669 = vpop.f32.mrf.mxu0
        %v8670 = vadd.f32 %v8405, %v8669
        %8671 = vdwg.mxu0
        %s8672 = scalar_lea.vmem %s215, 1344 [#allocation9]
        %8673 = vst [vmem:[%s8672] sm:$0xff] %v8479
        %8674 = vst.msk [vmem:[%s8672 + $0x8] sm:$0xff] %vm1090, %v8481
        %8675 = vst [vmem:[%s8672 + $0x10] sm:$0xff] %v8486
        %8676 = vst.msk [vmem:[%s8672 + $0x18] sm:$0xff] %vm1090, %v8488
        %8677 = vst [vmem:[%s8672 + $0x20] sm:$0xff] %v8493
        %8678 = vst.msk [vmem:[%s8672 + $0x28] sm:$0xff] %vm1090, %v8495
        %8679 = vst [vmem:[%s8672 + $0x30] sm:$0xff] %v8500
        %8680 = vst.msk [vmem:[%s8672 + $0x38] sm:$0xff] %vm1090, %v8502
        %8681 = vst [vmem:[%s8672 + $0x40] sm:$0xff] %v8507
        %8682 = vst.msk [vmem:[%s8672 + $0x48] sm:$0xff] %vm1090, %v8509
        %8683 = vst [vmem:[%s8672 + $0x50] sm:$0xff] %v8514
        %8684 = vst.msk [vmem:[%s8672 + $0x58] sm:$0xff] %vm1090, %v8516
        %8685 = vst [vmem:[%s8672 + $0x60] sm:$0xff] %v8521
        %8686 = vst.msk [vmem:[%s8672 + $0x68] sm:$0xff] %vm1090, %v8523
        %8687 = vst [vmem:[%s8672 + $0x70] sm:$0xff] %v8528
        %8688 = vst.msk [vmem:[%s8672 + $0x78] sm:$0xff] %vm1090, %v8530
        %8689 = vst [vmem:[%s8672 + $0x80] sm:$0xff] %v8535
        %8690 = vst.msk [vmem:[%s8672 + $0x88] sm:$0xff] %vm1090, %v8537
        %8691 = vst [vmem:[%s8672 + $0x90] sm:$0xff] %v8542
        %8692 = vst.msk [vmem:[%s8672 + $0x98] sm:$0xff] %vm1090, %v8544
        %8693 = vst [vmem:[%s8672 + $0xa0] sm:$0xff] %v8549
        %8694 = vst.msk [vmem:[%s8672 + $0xa8] sm:$0xff] %vm1090, %v8551
        %8695 = vst [vmem:[%s8672 + $0xb0] sm:$0xff] %v8556
        %8696 = vst.msk [vmem:[%s8672 + $0xb8] sm:$0xff] %vm1090, %v8558
        %8697 = vst [vmem:[%s8672 + $0xc0] sm:$0xff] %v8563
        %8698 = vst.msk [vmem:[%s8672 + $0xc8] sm:$0xff] %vm1090, %v8565
        %8699 = vst [vmem:[%s8672 + $0xd0] sm:$0xff] %v8570
        %8700 = vst.msk [vmem:[%s8672 + $0xd8] sm:$0xff] %vm1090, %v8572
        %8701 = vst [vmem:[%s8672 + $0xe0] sm:$0xff] %v8577
        %8702 = vst.msk [vmem:[%s8672 + $0xe8] sm:$0xff] %vm1090, %v8579
        %8703 = vst [vmem:[%s8672 + $0xf0] sm:$0xff] %v8584
        %8704 = vst.msk [vmem:[%s8672 + $0xf8] sm:$0xff] %vm1090, %v8586
        %8705 = vst [vmem:[%s8672 + $0x100] sm:$0xff] %v8591
        %8706 = vst.msk [vmem:[%s8672 + $0x108] sm:$0xff] %vm1090, %v8593
        %8707 = vst [vmem:[%s8672 + $0x110] sm:$0xff] %v8598
        %8708 = vst.msk [vmem:[%s8672 + $0x118] sm:$0xff] %vm1090, %v8600
        %8709 = vst [vmem:[%s8672 + $0x120] sm:$0xff] %v8605
        %8710 = vst.msk [vmem:[%s8672 + $0x128] sm:$0xff] %vm1090, %v8607
        %8711 = vst [vmem:[%s8672 + $0x130] sm:$0xff] %v8612
        %8712 = vst.msk [vmem:[%s8672 + $0x138] sm:$0xff] %vm1090, %v8614
        %8713 = vst [vmem:[%s8672 + $0x140] sm:$0xff] %v8619
        %8714 = vst.msk [vmem:[%s8672 + $0x148] sm:$0xff] %vm1090, %v8621
        %8715 = vst [vmem:[%s8672 + $0x150] sm:$0xff] %v8626
        %8716 = vst.msk [vmem:[%s8672 + $0x158] sm:$0xff] %vm1090, %v8628
        %8717 = vst [vmem:[%s8672 + $0x160] sm:$0xff] %v8633
        %8718 = vst.msk [vmem:[%s8672 + $0x168] sm:$0xff] %vm1090, %v8635
        %8719 = vst [vmem:[%s8672 + $0x170] sm:$0xff] %v8640
        %8720 = vst.msk [vmem:[%s8672 + $0x178] sm:$0xff] %vm1090, %v8642
        %8721 = vst [vmem:[%s8672 + $0x180] sm:$0xff] %v8647
        %8722 = vst.msk [vmem:[%s8672 + $0x188] sm:$0xff] %vm1090, %v8649
        %8723 = vst [vmem:[%s8672 + $0x190] sm:$0xff] %v8654
        %8724 = vst.msk [vmem:[%s8672 + $0x198] sm:$0xff] %vm1090, %v8656
        %8725 = vst [vmem:[%s8672 + $0x1a0] sm:$0xff] %v8661
        %8726 = vst.msk [vmem:[%s8672 + $0x1a8] sm:$0xff] %vm1090, %v8663
        %8727 = vst [vmem:[%s8672 + $0x1b0] sm:$0xff] %v8668
        %8728 = vst.msk [vmem:[%s8672 + $0x1b8] sm:$0xff] %vm1090, %v8670
        %s8729 = sand.u32 %s95, 1
        %s8730 = scalar_lea.sflag [#allocation5], %s8729
        %s8731 = sand.u32 %s95, 1
        %s8732 = smul.addr %s8731, 1792
        %s8733 = scalar_lea.vmem [#allocation9], %s8732
        // Predicated region
        $region45: #{pre_transformer_forward.1} parent=31 // pred_check
          %p8734 = pneg %p105
        $region46: #{pre_transformer_forward.1} parent=31 // pred_check_branch
          %8736 = sbr.rel (%p8734) target = $region48
        $region47: #{pre_transformer_forward.1} parent=31 // pred_region
          %s8737 = smul.u32 4, %s19
          %s8739 = ssub.s32 28672, 28672
          %8740 = vsyncadd %s8730, %s8739
          %s8741 = smul.addr %s8737, 56
          %s8742 = smul.addr %s8741, 128
          %s8743 = scalar_lea.hbm %s3, %s8742
          %s8744 = sshll.u32 %s8733, 4
          %s8745 = int_to_ptr.vmem [resolvable:$true] %s8744
          %8750 = dma.vmem_to_hbm [thread:$0]  %s8745, 28672, %s8743, %s8730, 256, 256, 16
        $region48: #{pre_transformer_forward.1} parent=31 // pred_fallthru
          _
      $region32: #{pre_transformer_forward.1} parent=5 // pred_fallthru
        _
      %p8751 = scmp.le.s32.totalorder 2, %s14
      // Predicated region
      $region49: #{pre_transformer_forward.1} parent=5 // pred_check
        %p8752 = pneg %p8751
      $region50: #{pre_transformer_forward.1} parent=5 // pred_check_branch
        %8754 = sbr.rel (%p8752) target = $region52
      $region51: #{pre_transformer_forward.1} parent=5 // pred_region
        %s8755 = ssub.s32 %s14, 2
        // Predicated region
        $region53: #{pre_transformer_forward.1} parent=51 // pred_check
          %p8756 = pneg %p111
        $region54: #{pre_transformer_forward.1} parent=51 // pred_check_branch
          %8758 = sbr.rel (%p8756) target = $region56
        $region55: #{pre_transformer_forward.1} parent=51 // pred_region
          %s8759 = sand.u32 %s96, 1
          %s8760 = scalar_lea.sflag [#allocation5], %s8759
          %s8761 = sand.u32 %s96, 1
          %s8762 = smul.addr %s8761, 1792
          %s8763 = scalar_lea.vmem [#allocation9], %s8762
          %8764 = dma.done %s8760, 28672
        $region56: #{pre_transformer_forward.1} parent=51 // pred_fallthru
          _
      $region52: #{pre_transformer_forward.1} parent=5 // pred_fallthru
        _
    $region6: #{pre_transformer_forward.1} parent=1 // loop_footer
      %s18 = sadd.s32 1, %s14
    $region7: #{pre_transformer_forward.1} parent=1 // loop_footer_branch
      %13 = sbr.rel target = $region3
    $region8: #{pre_transformer_forward.1} parent=1 // loop_exit
      _
    %8765 = vsyncpa [#allocation4], 1
    %s8766 = scalar_lea.sflag [#allocation4], 1
    %8767 = vsyncpa %s8766, 1
    %8768 = vsyncpa [#allocation7], 1
    %8769 = vsyncpa [#allocation5], 1
    %s8770 = scalar_lea.sflag [#allocation5], 1
    %8771 = vsyncpa %s8770, 1

</llo_original>
